<compile_context>
chip_gen: v7x
topology: tpu7x:2x2x1
jax: 0.10.0
libtpu: 0.0.40
codegen_flags: <defaults>
</compile_context>

<pallas_src>
import jax
import jax.numpy as jnp
from jax import lax
from jax.experimental import pallas as pl
from jax.experimental.pallas import tpu as pltpu

LANE = 128  # TPU lane width


def _round_up(x, m):
    return (x + m - 1) // m * m


def _make_residual_kernel(n, ho, wo, cout_p, use_1x1conv):
    """Kernel factory; shapes / branch structure are static Python config."""
    r = n * ho * wo

    def body(x1_ref, w1_ref, s1_ref, sh1_ref, w2_ref, s2_ref, sh2_ref,
             xsc_ref, w3_ref, b3_ref, out_ref, y1p_ref):
        # ---- conv1 (9 shifted-tap matmuls, bf16 x bf16 -> f32) + bn1 + relu ----
        acc1 = jnp.zeros((r, cout_p), jnp.float32)
        for k in range(9):
            acc1 = acc1 + jnp.dot(x1_ref[k], w1_ref[k],
                                  preferred_element_type=jnp.float32)
        y1 = jnp.maximum(acc1 * s1_ref[...] + sh1_ref[...], 0.0)

        # Stage y1 into a zero-padded (N, Ho+2, Wo+2, C) VMEM scratch so conv2's
        # taps are plain static slices (conv2 always has stride 1, pad 1).
        y1p_ref[...] = jnp.zeros((n, ho + 2, wo + 2, cout_p), jnp.float32)
        y1p_ref[:, 1:ho + 1, 1:wo + 1, :] = y1.reshape(n, ho, wo, cout_p)

        # ---- conv2 (3x3, stride 1) + bn2 ----
        acc2 = jnp.zeros((r, cout_p), jnp.float32)
        for kh in range(3):
            for kw in range(3):
                tap = (y1p_ref[:, kh:kh + ho, kw:kw + wo, :]
                       .reshape(r, cout_p).astype(jnp.bfloat16))
                acc2 = acc2 + jnp.dot(tap, w2_ref[kh * 3 + kw],
                                      preferred_element_type=jnp.float32)
        y2 = acc2 * s2_ref[...] + sh2_ref[...]

        # ---- shortcut branch ----
        if use_1x1conv:
            sc = jnp.dot(xsc_ref[...], w3_ref[...],
                         preferred_element_type=jnp.float32) + b3_ref[...]
        else:
            sc = xsc_ref[...]

        out_ref[...] = jnp.maximum(y2 + sc, 0.0)

    if use_1x1conv:
        def kernel(x1, w1, s1, sh1, w2, s2, sh2, xsc, w3, b3, out, y1p):
            body(x1, w1, s1, sh1, w2, s2, sh2, xsc, w3, b3, out, y1p)
    else:
        def kernel(x1, w1, s1, sh1, w2, s2, sh2, xsc, out, y1p):
            body(x1, w1, s1, sh1, w2, s2, sh2, xsc, None, None, out, y1p)
    return kernel


def residual_forward(x, params, *, stride=1, use_1x1conv=False, eps=1e-5):
    """x: (N, Cin, H, W) f32; params in PyTorch layout. Returns (N, Cout, Ho, Wo) f32."""
    n, cin, h, w = x.shape
    cout = params["conv1_w"].shape[0]
    s = stride
    ho = (h + 2 - 3) // s + 1
    wo = (w + 2 - 3) // s + 1
    r = n * ho * wo
    cin_p = _round_up(cin, LANE)
    cout_p = _round_up(cout, LANE)

    if not use_1x1conv:
        assert cin == cout and s == 1, "identity shortcut requires Cin==Cout, stride==1"

    # ---------------- wrapper-side layout plumbing ----------------
    # NHWC, channel-padded to the lane width, spatially padded for conv1.
    x_nhwc = jnp.pad(jnp.transpose(x, (0, 2, 3, 1)),
                     ((0, 0), (0, 0), (0, 0), (0, cin_p - cin)))
    x_sp_bf = jnp.pad(x_nhwc, ((0, 0), (1, 1), (1, 1), (0, 0))).astype(jnp.bfloat16)

    # conv1 tap slabs (9, R, Cin_p): shifted + strided windows, flattened lane-dense.
    taps = []
    for kh in range(3):
        for kw in range(3):
            t = x_sp_bf[:, kh:kh + (ho - 1) * s + 1:s, kw:kw + (wo - 1) * s + 1:s, :]
            taps.append(t.reshape(r, cin_p))
    x1_taps = jnp.stack(taps, axis=0)

    # Conv weights as per-tap (Cin_p, Cout_p) bf16 matrices.
    def conv_w_taps(wt, ci_p, co_p):
        co, ci, kh, kw = wt.shape
        m = jnp.transpose(wt, (2, 3, 1, 0)).reshape(kh * kw, ci, co)
        m = jnp.pad(m, ((0, 0), (0, ci_p - ci), (0, co_p - co)))
        return m.astype(jnp.bfloat16)

    w1 = conv_w_taps(params["conv1_w"], cin_p, cout_p)
    w2 = conv_w_taps(params["conv2_w"], cout_p, cout_p)

    # Fold conv bias + inference BatchNorm into per-channel scale / shift (f32).
    def fold_bn(bias, gamma, beta, mean, var):
        inv = gamma * lax.rsqrt(var + eps)
        scale = jnp.pad(inv, (0, cout_p - cout)).reshape(1, cout_p)
        shift = jnp.pad(beta + inv * (bias - mean),
                        (0, cout_p - cout)).reshape(1, cout_p)
        return scale.astype(jnp.float32), shift.astype(jnp.float32)

    s1, sh1 = fold_bn(params["conv1_b"], params["bn1_gamma"], params["bn1_beta"],
                      params["bn1_mean"], params["bn1_var"])
    s2, sh2 = fold_bn(params["conv2_b"], params["bn2_gamma"], params["bn2_beta"],
                      params["bn2_mean"], params["bn2_var"])

    # Shortcut input: strided spatial subsample, flattened lane-dense.
    x_sub = x_nhwc[:, ::s, ::s, :].reshape(r, cin_p)

    operands = [x1_taps, w1, s1, sh1, w2, s2, sh2]
    if use_1x1conv:
        w3 = jnp.pad(jnp.transpose(params["conv3_w"][:, :, 0, 0], (1, 0)),
                     ((0, cin_p - cin), (0, cout_p - cout))).astype(jnp.bfloat16)
        b3 = jnp.pad(params["conv3_b"], (0, cout_p - cout)).reshape(1, cout_p)
        operands += [x_sub.astype(jnp.bfloat16), w3, b3.astype(jnp.float32)]
    else:
        operands += [x_sub]  # identity shortcut stays f32

    kernel = _make_residual_kernel(n, ho, wo, cout_p, use_1x1conv)
    vmem_spec = pl.BlockSpec(memory_space=pltpu.MemorySpace.VMEM)

    out_flat = pl.pallas_call(
        kernel,
        out_shape=jax.ShapeDtypeStruct((r, cout_p), jnp.float32),
        in_specs=[vmem_spec] * len(operands),
        out_specs=vmem_spec,
        scratch_shapes=[pltpu.VMEM((n, ho + 2, wo + 2, cout_p), jnp.float32)],
    )(*operands)

    out = out_flat.reshape(n, ho, wo, cout_p)[:, :, :, :cout]
    return jnp.transpose(out, (0, 3, 1, 2))


def _reference_residual(x, params, *, stride=1, use_1x1conv=False, eps=1e-5):
    """Pure-JAX/XLA reference mirroring the PyTorch forward (inference-mode BN),
    with matched bf16-operand / f32-accumulate matmul precision."""
    hp = lax.Precision.HIGHEST

    def conv(xv, wv, bv, s, pad):
        y = lax.conv_general_dilated(
            xv.astype(jnp.bfloat16), wv.astype(jnp.bfloat16),
            window_strides=(s, s), padding=[(pad, pad), (pad, pad)],
            dimension_numbers=("NCHW", "OIHW", "NCHW"),
            preferred_element_type=jnp.float32, precision=hp)
        return y + bv[None, :, None, None]

    def bn(yv, g, be, m, v):
        inv = g * lax.rsqrt(v + eps)
        return yv * inv[None, :, None, None] + (be - m * inv)[None, :, None, None]

    y = jax.nn.relu(bn(conv(x, params["conv1_w"], params["conv1_b"], stride, 1),
                       params["bn1_gamma"], params["bn1_beta"],
                       params["bn1_mean"], params["bn1_var"]))
    y = bn(conv(y, params["conv2_w"], params["conv2_b"], 1, 1),
           params["bn2_gamma"], params["bn2_beta"],
           params["bn2_mean"], params["bn2_var"])
    sc = conv(x, params["conv3_w"], params["conv3_b"], stride, 0) if use_1x1conv else x
    return jax.nn.relu(y + sc)


def _make_params(key, cin, cout, use_1x1conv):
    ks = jax.random.split(key, 16)

    def nrm(k, shape, scale=0.1):
        return scale * jax.random.normal(k, shape, jnp.float32)

    p = {
        "conv1_w": nrm(ks[0], (cout, cin, 3, 3)),
        "conv1_b": nrm(ks[1], (cout,)),
        "conv2_w": nrm(ks[2], (cout, cout, 3, 3)),
        "conv2_b": nrm(ks[3], (cout,)),
        "bn1_gamma": 1.0 + nrm(ks[4], (cout,)),
        "bn1_beta": nrm(ks[5], (cout,)),
        "bn1_mean": nrm(ks[6], (cout,)),
        "bn1_var": 0.5 + jax.random.uniform(ks[7], (cout,), jnp.float32),
        "bn2_gamma": 1.0 + nrm(ks[8], (cout,)),
        "bn2_beta": nrm(ks[9], (cout,)),
        "bn2_mean": nrm(ks[10], (cout,)),
        "bn2_var": 0.5 + jax.random.uniform(ks[11], (cout,), jnp.float32),
    }
    if use_1x1conv:
        p["conv3_w"] = nrm(ks[12], (cout, cin, 1, 1))
        p["conv3_b"] = nrm(ks[13], (cout,))
    return p


if __name__ == "__main__":
    key = jax.random.PRNGKey(0)
    kx, kp1, kp2 = jax.random.split(key, 3)
    x = jax.random.normal(kx, (2, 4, 16, 16), jnp.float32)

    # Config A: identity shortcut (4 -> 4 channels, stride 1).
    params_a = _make_params(kp1, 4, 4, use_1x1conv=False)
    out_a = jax.block_until_ready(
        residual_forward(x, params_a, stride=1, use_1x1conv=False))
    ref_a = _reference_residual(x, params_a, stride=1, use_1x1conv=False)
    assert out_a.shape == (2, 4, 16, 16)
    assert jnp.allclose(out_a, ref_a, rtol=5e-3, atol=5e-3), \
        float(jnp.max(jnp.abs(out_a - ref_a)))

    # Config B: 1x1-conv shortcut with downsampling (4 -> 8 channels, stride 2).
    params_b = _make_params(kp2, 4, 8, use_1x1conv=True)
    out_b = jax.block_until_ready(
        residual_forward(x, params_b, stride=2, use_1x1conv=True))
    ref_b = _reference_residual(x, params_b, stride=2, use_1x1conv=True)
    assert out_b.shape == (2, 8, 8, 8)
    assert jnp.allclose(out_b, ref_b, rtol=5e-3, atol=5e-3), \
        float(jnp.max(jnp.abs(out_b - ref_b)))

    print("KERNEL_OK")
</pallas_src>

<mosaic_0001>
module attributes {stable_mosaic.version = 11 : i64} {
  func.func @kernel(%arg0: memref<9x512x128xbf16, #tpu.memory_space<vmem>>, %arg1: memref<9x128x128xbf16, #tpu.memory_space<vmem>>, %arg2: memref<1x128xf32, #tpu.memory_space<vmem>>, %arg3: memref<1x128xf32, #tpu.memory_space<vmem>>, %arg4: memref<9x128x128xbf16, #tpu.memory_space<vmem>>, %arg5: memref<1x128xf32, #tpu.memory_space<vmem>>, %arg6: memref<1x128xf32, #tpu.memory_space<vmem>>, %arg7: memref<512x128xf32, #tpu.memory_space<vmem>>, %arg8: memref<512x128xf32, #tpu.memory_space<vmem>>, %arg9: memref<2x18x18x128xf32, #tpu.memory_space<vmem>>) attributes {dimension_semantics = [], scalar_prefetch = 0 : i64, scratch_operands = 1 : i64, tpu.core_type = #tpu.core_type<tc>} {
    %cst = arith.constant 0.000000e+00 : f32
    %0 = vector.broadcast %cst : f32 to vector<512x128xf32>
    %c0 = arith.constant 0 : index
    %c0_0 = arith.constant 0 : index
    %c0_1 = arith.constant 0 : index
    %1 = vector.load %arg0[%c0, %c0_0, %c0_1] : memref<9x512x128xbf16, #tpu.memory_space<vmem>>, vector<1x512x128xbf16>
    %2 = vector.shape_cast %1 : vector<1x512x128xbf16> to vector<512x128xbf16>
    %c0_2 = arith.constant 0 : index
    %c0_3 = arith.constant 0 : index
    %c0_4 = arith.constant 0 : index
    %3 = vector.load %arg1[%c0_2, %c0_3, %c0_4] : memref<9x128x128xbf16, #tpu.memory_space<vmem>>, vector<1x128x128xbf16>
    %4 = vector.shape_cast %3 : vector<1x128x128xbf16> to vector<128x128xbf16>
    %cst_5 = arith.constant dense<0.000000e+00> : vector<512x128xf32>
    %5 = tpu.matmul %2, %4, %cst_5 {dimension_numbers = #tpu.dot_dimension_numbers<[1], [0], [0], [1], [0, 0, 1, 1], [], []>} : vector<512x128xbf16>, vector<128x128xbf16>, vector<512x128xf32> -> vector<512x128xf32>
    %6 = arith.addf %0, %5 : vector<512x128xf32>
    %c1 = arith.constant 1 : index
    %c0_6 = arith.constant 0 : index
    %c0_7 = arith.constant 0 : index
    %7 = vector.load %arg0[%c1, %c0_6, %c0_7] : memref<9x512x128xbf16, #tpu.memory_space<vmem>>, vector<1x512x128xbf16>
    %8 = vector.shape_cast %7 : vector<1x512x128xbf16> to vector<512x128xbf16>
    %c1_8 = arith.constant 1 : index
    %c0_9 = arith.constant 0 : index
    %c0_10 = arith.constant 0 : index
    %9 = vector.load %arg1[%c1_8, %c0_9, %c0_10] : memref<9x128x128xbf16, #tpu.memory_space<vmem>>, vector<1x128x128xbf16>
    %10 = vector.shape_cast %9 : vector<1x128x128xbf16> to vector<128x128xbf16>
    %cst_11 = arith.constant dense<0.000000e+00> : vector<512x128xf32>
    %11 = tpu.matmul %8, %10, %cst_11 {dimension_numbers = #tpu.dot_dimension_numbers<[1], [0], [0], [1], [0, 0, 1, 1], [], []>} : vector<512x128xbf16>, vector<128x128xbf16>, vector<512x128xf32> -> vector<512x128xf32>
    %12 = arith.addf %6, %11 : vector<512x128xf32>
    %c2 = arith.constant 2 : index
    %c0_12 = arith.constant 0 : index
    %c0_13 = arith.constant 0 : index
    %13 = vector.load %arg0[%c2, %c0_12, %c0_13] : memref<9x512x128xbf16, #tpu.memory_space<vmem>>, vector<1x512x128xbf16>
    %14 = vector.shape_cast %13 : vector<1x512x128xbf16> to vector<512x128xbf16>
    %c2_14 = arith.constant 2 : index
    %c0_15 = arith.constant 0 : index
    %c0_16 = arith.constant 0 : index
    %15 = vector.load %arg1[%c2_14, %c0_15, %c0_16] : memref<9x128x128xbf16, #tpu.memory_space<vmem>>, vector<1x128x128xbf16>
    %16 = vector.shape_cast %15 : vector<1x128x128xbf16> to vector<128x128xbf16>
    %cst_17 = arith.constant dense<0.000000e+00> : vector<512x128xf32>
    %17 = tpu.matmul %14, %16, %cst_17 {dimension_numbers = #tpu.dot_dimension_numbers<[1], [0], [0], [1], [0, 0, 1, 1], [], []>} : vector<512x128xbf16>, vector<128x128xbf16>, vector<512x128xf32> -> vector<512x128xf32>
    %18 = arith.addf %12, %17 : vector<512x128xf32>
    %c3 = arith.constant 3 : index
    %c0_18 = arith.constant 0 : index
    %c0_19 = arith.constant 0 : index
    %19 = vector.load %arg0[%c3, %c0_18, %c0_19] : memref<9x512x128xbf16, #tpu.memory_space<vmem>>, vector<1x512x128xbf16>
    %20 = vector.shape_cast %19 : vector<1x512x128xbf16> to vector<512x128xbf16>
    %c3_20 = arith.constant 3 : index
    %c0_21 = arith.constant 0 : index
    %c0_22 = arith.constant 0 : index
    %21 = vector.load %arg1[%c3_20, %c0_21, %c0_22] : memref<9x128x128xbf16, #tpu.memory_space<vmem>>, vector<1x128x128xbf16>
    %22 = vector.shape_cast %21 : vector<1x128x128xbf16> to vector<128x128xbf16>
    %cst_23 = arith.constant dense<0.000000e+00> : vector<512x128xf32>
    %23 = tpu.matmul %20, %22, %cst_23 {dimension_numbers = #tpu.dot_dimension_numbers<[1], [0], [0], [1], [0, 0, 1, 1], [], []>} : vector<512x128xbf16>, vector<128x128xbf16>, vector<512x128xf32> -> vector<512x128xf32>
    %24 = arith.addf %18, %23 : vector<512x128xf32>
    %c4 = arith.constant 4 : index
    %c0_24 = arith.constant 0 : index
    %c0_25 = arith.constant 0 : index
    %25 = vector.load %arg0[%c4, %c0_24, %c0_25] : memref<9x512x128xbf16, #tpu.memory_space<vmem>>, vector<1x512x128xbf16>
    %26 = vector.shape_cast %25 : vector<1x512x128xbf16> to vector<512x128xbf16>
    %c4_26 = arith.constant 4 : index
    %c0_27 = arith.constant 0 : index
    %c0_28 = arith.constant 0 : index
    %27 = vector.load %arg1[%c4_26, %c0_27, %c0_28] : memref<9x128x128xbf16, #tpu.memory_space<vmem>>, vector<1x128x128xbf16>
    %28 = vector.shape_cast %27 : vector<1x128x128xbf16> to vector<128x128xbf16>
    %cst_29 = arith.constant dense<0.000000e+00> : vector<512x128xf32>
    %29 = tpu.matmul %26, %28, %cst_29 {dimension_numbers = #tpu.dot_dimension_numbers<[1], [0], [0], [1], [0, 0, 1, 1], [], []>} : vector<512x128xbf16>, vector<128x128xbf16>, vector<512x128xf32> -> vector<512x128xf32>
    %30 = arith.addf %24, %29 : vector<512x128xf32>
    %c5 = arith.constant 5 : index
    %c0_30 = arith.constant 0 : index
    %c0_31 = arith.constant 0 : index
    %31 = vector.load %arg0[%c5, %c0_30, %c0_31] : memref<9x512x128xbf16, #tpu.memory_space<vmem>>, vector<1x512x128xbf16>
    %32 = vector.shape_cast %31 : vector<1x512x128xbf16> to vector<512x128xbf16>
    %c5_32 = arith.constant 5 : index
    %c0_33 = arith.constant 0 : index
    %c0_34 = arith.constant 0 : index
    %33 = vector.load %arg1[%c5_32, %c0_33, %c0_34] : memref<9x128x128xbf16, #tpu.memory_space<vmem>>, vector<1x128x128xbf16>
    %34 = vector.shape_cast %33 : vector<1x128x128xbf16> to vector<128x128xbf16>
    %cst_35 = arith.constant dense<0.000000e+00> : vector<512x128xf32>
    %35 = tpu.matmul %32, %34, %cst_35 {dimension_numbers = #tpu.dot_dimension_numbers<[1], [0], [0], [1], [0, 0, 1, 1], [], []>} : vector<512x128xbf16>, vector<128x128xbf16>, vector<512x128xf32> -> vector<512x128xf32>
    %36 = arith.addf %30, %35 : vector<512x128xf32>
    %c6 = arith.constant 6 : index
    %c0_36 = arith.constant 0 : index
    %c0_37 = arith.constant 0 : index
    %37 = vector.load %arg0[%c6, %c0_36, %c0_37] : memref<9x512x128xbf16, #tpu.memory_space<vmem>>, vector<1x512x128xbf16>
    %38 = vector.shape_cast %37 : vector<1x512x128xbf16> to vector<512x128xbf16>
    %c6_38 = arith.constant 6 : index
    %c0_39 = arith.constant 0 : index
    %c0_40 = arith.constant 0 : index
    %39 = vector.load %arg1[%c6_38, %c0_39, %c0_40] : memref<9x128x128xbf16, #tpu.memory_space<vmem>>, vector<1x128x128xbf16>
    %40 = vector.shape_cast %39 : vector<1x128x128xbf16> to vector<128x128xbf16>
    %cst_41 = arith.constant dense<0.000000e+00> : vector<512x128xf32>
    %41 = tpu.matmul %38, %40, %cst_41 {dimension_numbers = #tpu.dot_dimension_numbers<[1], [0], [0], [1], [0, 0, 1, 1], [], []>} : vector<512x128xbf16>, vector<128x128xbf16>, vector<512x128xf32> -> vector<512x128xf32>
    %42 = arith.addf %36, %41 : vector<512x128xf32>
    %c7 = arith.constant 7 : index
    %c0_42 = arith.constant 0 : index
    %c0_43 = arith.constant 0 : index
    %43 = vector.load %arg0[%c7, %c0_42, %c0_43] : memref<9x512x128xbf16, #tpu.memory_space<vmem>>, vector<1x512x128xbf16>
    %44 = vector.shape_cast %43 : vector<1x512x128xbf16> to vector<512x128xbf16>
    %c7_44 = arith.constant 7 : index
    %c0_45 = arith.constant 0 : index
    %c0_46 = arith.constant 0 : index
    %45 = vector.load %arg1[%c7_44, %c0_45, %c0_46] : memref<9x128x128xbf16, #tpu.memory_space<vmem>>, vector<1x128x128xbf16>
    %46 = vector.shape_cast %45 : vector<1x128x128xbf16> to vector<128x128xbf16>
    %cst_47 = arith.constant dense<0.000000e+00> : vector<512x128xf32>
    %47 = tpu.matmul %44, %46, %cst_47 {dimension_numbers = #tpu.dot_dimension_numbers<[1], [0], [0], [1], [0, 0, 1, 1], [], []>} : vector<512x128xbf16>, vector<128x128xbf16>, vector<512x128xf32> -> vector<512x128xf32>
    %48 = arith.addf %42, %47 : vector<512x128xf32>
    %c8 = arith.constant 8 : index
    %c0_48 = arith.constant 0 : index
    %c0_49 = arith.constant 0 : index
    %49 = vector.load %arg0[%c8, %c0_48, %c0_49] : memref<9x512x128xbf16, #tpu.memory_space<vmem>>, vector<1x512x128xbf16>
    %50 = vector.shape_cast %49 : vector<1x512x128xbf16> to vector<512x128xbf16>
    %c8_50 = arith.constant 8 : index
    %c0_51 = arith.constant 0 : index
    %c0_52 = arith.constant 0 : index
    %51 = vector.load %arg1[%c8_50, %c0_51, %c0_52] : memref<9x128x128xbf16, #tpu.memory_space<vmem>>, vector<1x128x128xbf16>
    %52 = vector.shape_cast %51 : vector<1x128x128xbf16> to vector<128x128xbf16>
    %cst_53 = arith.constant dense<0.000000e+00> : vector<512x128xf32>
    %53 = tpu.matmul %50, %52, %cst_53 {dimension_numbers = #tpu.dot_dimension_numbers<[1], [0], [0], [1], [0, 0, 1, 1], [], []>} : vector<512x128xbf16>, vector<128x128xbf16>, vector<512x128xf32> -> vector<512x128xf32>
    %54 = arith.addf %48, %53 : vector<512x128xf32>
    %c0_54 = arith.constant 0 : index
    %c0_55 = arith.constant 0 : index
    %55 = vector.load %arg2[%c0_54, %c0_55] : memref<1x128xf32, #tpu.memory_space<vmem>>, vector<1x128xf32>
    %56 = vector.broadcast %55 : vector<1x128xf32> to vector<512x128xf32>
    %57 = arith.mulf %54, %56 : vector<512x128xf32>
    %c0_56 = arith.constant 0 : index
    %c0_57 = arith.constant 0 : index
    %58 = vector.load %arg3[%c0_56, %c0_57] : memref<1x128xf32, #tpu.memory_space<vmem>>, vector<1x128xf32>
    %59 = vector.broadcast %58 : vector<1x128xf32> to vector<512x128xf32>
    %60 = arith.addf %57, %59 : vector<512x128xf32>
    %cst_58 = arith.constant 0.000000e+00 : f32
    %61 = vector.broadcast %cst_58 : f32 to vector<512x128xf32>
    %62 = arith.maximumf %60, %61 : vector<512x128xf32>
    %cst_59 = arith.constant 0.000000e+00 : f32
    %63 = vector.broadcast %cst_59 : f32 to vector<2x18x18x128xf32>
    %c0_60 = arith.constant 0 : index
    %c0_61 = arith.constant 0 : index
    %c0_62 = arith.constant 0 : index
    %c0_63 = arith.constant 0 : index
    %64 = vector.load %arg9[%c0_60, %c0_61, %c0_62, %c0_63] : memref<2x18x18x128xf32, #tpu.memory_space<vmem>>, vector<2x18x18x128xf32>
    tpu.vector_store %arg9[%c0_60, %c0_61, %c0_62, %c0_63], %63 {strides = array<i32>} : memref<2x18x18x128xf32, #tpu.memory_space<vmem>>, vector<2x18x18x128xf32>,
    %65 = vector.shape_cast %62 : vector<512x128xf32> to vector<2x16x16x128xf32>
    %c0_64 = arith.constant 0 : index
    %c1_65 = arith.constant 1 : index
    %c1_66 = arith.constant 1 : index
    %c0_67 = arith.constant 0 : index
    %66 = vector.load %arg9[%c0_64, %c1_65, %c1_66, %c0_67] : memref<2x18x18x128xf32, #tpu.memory_space<vmem>>, vector<2x16x16x128xf32>
    tpu.vector_store %arg9[%c0_64, %c1_65, %c1_66, %c0_67], %65 {strides = array<i32>} : memref<2x18x18x128xf32, #tpu.memory_space<vmem>>, vector<2x16x16x128xf32>,
    %cst_68 = arith.constant 0.000000e+00 : f32
    %67 = vector.broadcast %cst_68 : f32 to vector<512x128xf32>
    %c0_69 = arith.constant 0 : index
    %c0_70 = arith.constant 0 : index
    %c0_71 = arith.constant 0 : index
    %c0_72 = arith.constant 0 : index
    %68 = vector.load %arg9[%c0_69, %c0_70, %c0_71, %c0_72] : memref<2x18x18x128xf32, #tpu.memory_space<vmem>>, vector<2x16x16x128xf32>
    %69 = vector.shape_cast %68 : vector<2x16x16x128xf32> to vector<512x128xf32>
    %70 = arith.truncf %69 : vector<512x128xf32> to vector<512x128xbf16>
    %c0_73 = arith.constant 0 : index
    %c0_74 = arith.constant 0 : index
    %c0_75 = arith.constant 0 : index
    %71 = vector.load %arg4[%c0_73, %c0_74, %c0_75] : memref<9x128x128xbf16, #tpu.memory_space<vmem>>, vector<1x128x128xbf16>
    %72 = vector.shape_cast %71 : vector<1x128x128xbf16> to vector<128x128xbf16>
    %cst_76 = arith.constant dense<0.000000e+00> : vector<512x128xf32>
    %73 = tpu.matmul %70, %72, %cst_76 {dimension_numbers = #tpu.dot_dimension_numbers<[1], [0], [0], [1], [0, 0, 1, 1], [], []>} : vector<512x128xbf16>, vector<128x128xbf16>, vector<512x128xf32> -> vector<512x128xf32>
    %74 = arith.addf %67, %73 : vector<512x128xf32>
    %c0_77 = arith.constant 0 : index
    %c0_78 = arith.constant 0 : index
    %c1_79 = arith.constant 1 : index
    %c0_80 = arith.constant 0 : index
    %75 = vector.load %arg9[%c0_77, %c0_78, %c1_79, %c0_80] : memref<2x18x18x128xf32, #tpu.memory_space<vmem>>, vector<2x16x16x128xf32>
    %76 = vector.shape_cast %75 : vector<2x16x16x128xf32> to vector<512x128xf32>
    %77 = arith.truncf %76 : vector<512x128xf32> to vector<512x128xbf16>
    %c1_81 = arith.constant 1 : index
    %c0_82 = arith.constant 0 : index
    %c0_83 = arith.constant 0 : index
    %78 = vector.load %arg4[%c1_81, %c0_82, %c0_83] : memref<9x128x128xbf16, #tpu.memory_space<vmem>>, vector<1x128x128xbf16>
    %79 = vector.shape_cast %78 : vector<1x128x128xbf16> to vector<128x128xbf16>
    %cst_84 = arith.constant dense<0.000000e+00> : vector<512x128xf32>
    %80 = tpu.matmul %77, %79, %cst_84 {dimension_numbers = #tpu.dot_dimension_numbers<[1], [0], [0], [1], [0, 0, 1, 1], [], []>} : vector<512x128xbf16>, vector<128x128xbf16>, vector<512x128xf32> -> vector<512x128xf32>
    %81 = arith.addf %74, %80 : vector<512x128xf32>
    %c0_85 = arith.constant 0 : index
    %c0_86 = arith.constant 0 : index
    %c2_87 = arith.constant 2 : index
    %c0_88 = arith.constant 0 : index
    %82 = vector.load %arg9[%c0_85, %c0_86, %c2_87, %c0_88] : memref<2x18x18x128xf32, #tpu.memory_space<vmem>>, vector<2x16x16x128xf32>
    %83 = vector.shape_cast %82 : vector<2x16x16x128xf32> to vector<512x128xf32>
    %84 = arith.truncf %83 : vector<512x128xf32> to vector<512x128xbf16>
    %c2_89 = arith.constant 2 : index
    %c0_90 = arith.constant 0 : index
    %c0_91 = arith.constant 0 : index
    %85 = vector.load %arg4[%c2_89, %c0_90, %c0_91] : memref<9x128x128xbf16, #tpu.memory_space<vmem>>, vector<1x128x128xbf16>
    %86 = vector.shape_cast %85 : vector<1x128x128xbf16> to vector<128x128xbf16>
    %cst_92 = arith.constant dense<0.000000e+00> : vector<512x128xf32>
    %87 = tpu.matmul %84, %86, %cst_92 {dimension_numbers = #tpu.dot_dimension_numbers<[1], [0], [0], [1], [0, 0, 1, 1], [], []>} : vector<512x128xbf16>, vector<128x128xbf16>, vector<512x128xf32> -> vector<512x128xf32>
    %88 = arith.addf %81, %87 : vector<512x128xf32>
    %c0_93 = arith.constant 0 : index
    %c1_94 = arith.constant 1 : index
    %c0_95 = arith.constant 0 : index
    %c0_96 = arith.constant 0 : index
    %89 = vector.load %arg9[%c0_93, %c1_94, %c0_95, %c0_96] : memref<2x18x18x128xf32, #tpu.memory_space<vmem>>, vector<2x16x16x128xf32>
    %90 = vector.shape_cast %89 : vector<2x16x16x128xf32> to vector<512x128xf32>
    %91 = arith.truncf %90 : vector<512x128xf32> to vector<512x128xbf16>
    %c3_97 = arith.constant 3 : index
    %c0_98 = arith.constant 0 : index
    %c0_99 = arith.constant 0 : index
    %92 = vector.load %arg4[%c3_97, %c0_98, %c0_99] : memref<9x128x128xbf16, #tpu.memory_space<vmem>>, vector<1x128x128xbf16>
    %93 = vector.shape_cast %92 : vector<1x128x128xbf16> to vector<128x128xbf16>
    %cst_100 = arith.constant dense<0.000000e+00> : vector<512x128xf32>
    %94 = tpu.matmul %91, %93, %cst_100 {dimension_numbers = #tpu.dot_dimension_numbers<[1], [0], [0], [1], [0, 0, 1, 1], [], []>} : vector<512x128xbf16>, vector<128x128xbf16>, vector<512x128xf32> -> vector<512x128xf32>
    %95 = arith.addf %88, %94 : vector<512x128xf32>
    %c0_101 = arith.constant 0 : index
    %c1_102 = arith.constant 1 : index
    %c1_103 = arith.constant 1 : index
    %c0_104 = arith.constant 0 : index
    %96 = vector.load %arg9[%c0_101, %c1_102, %c1_103, %c0_104] : memref<2x18x18x128xf32, #tpu.memory_space<vmem>>, vector<2x16x16x128xf32>
    %97 = vector.shape_cast %96 : vector<2x16x16x128xf32> to vector<512x128xf32>
    %98 = arith.truncf %97 : vector<512x128xf32> to vector<512x128xbf16>
    %c4_105 = arith.constant 4 : index
    %c0_106 = arith.constant 0 : index
    %c0_107 = arith.constant 0 : index
    %99 = vector.load %arg4[%c4_105, %c0_106, %c0_107] : memref<9x128x128xbf16, #tpu.memory_space<vmem>>, vector<1x128x128xbf16>
    %100 = vector.shape_cast %99 : vector<1x128x128xbf16> to vector<128x128xbf16>
    %cst_108 = arith.constant dense<0.000000e+00> : vector<512x128xf32>
    %101 = tpu.matmul %98, %100, %cst_108 {dimension_numbers = #tpu.dot_dimension_numbers<[1], [0], [0], [1], [0, 0, 1, 1], [], []>} : vector<512x128xbf16>, vector<128x128xbf16>, vector<512x128xf32> -> vector<512x128xf32>
    %102 = arith.addf %95, %101 : vector<512x128xf32>
    %c0_109 = arith.constant 0 : index
    %c1_110 = arith.constant 1 : index
    %c2_111 = arith.constant 2 : index
    %c0_112 = arith.constant 0 : index
    %103 = vector.load %arg9[%c0_109, %c1_110, %c2_111, %c0_112] : memref<2x18x18x128xf32, #tpu.memory_space<vmem>>, vector<2x16x16x128xf32>
    %104 = vector.shape_cast %103 : vector<2x16x16x128xf32> to vector<512x128xf32>
    %105 = arith.truncf %104 : vector<512x128xf32> to vector<512x128xbf16>
    %c5_113 = arith.constant 5 : index
    %c0_114 = arith.constant 0 : index
    %c0_115 = arith.constant 0 : index
    %106 = vector.load %arg4[%c5_113, %c0_114, %c0_115] : memref<9x128x128xbf16, #tpu.memory_space<vmem>>, vector<1x128x128xbf16>
    %107 = vector.shape_cast %106 : vector<1x128x128xbf16> to vector<128x128xbf16>
    %cst_116 = arith.constant dense<0.000000e+00> : vector<512x128xf32>
    %108 = tpu.matmul %105, %107, %cst_116 {dimension_numbers = #tpu.dot_dimension_numbers<[1], [0], [0], [1], [0, 0, 1, 1], [], []>} : vector<512x128xbf16>, vector<128x128xbf16>, vector<512x128xf32> -> vector<512x128xf32>
    %109 = arith.addf %102, %108 : vector<512x128xf32>
    %c0_117 = arith.constant 0 : index
    %c2_118 = arith.constant 2 : index
    %c0_119 = arith.constant 0 : index
    %c0_120 = arith.constant 0 : index
    %110 = vector.load %arg9[%c0_117, %c2_118, %c0_119, %c0_120] : memref<2x18x18x128xf32, #tpu.memory_space<vmem>>, vector<2x16x16x128xf32>
    %111 = vector.shape_cast %110 : vector<2x16x16x128xf32> to vector<512x128xf32>
    %112 = arith.truncf %111 : vector<512x128xf32> to vector<512x128xbf16>
    %c6_121 = arith.constant 6 : index
    %c0_122 = arith.constant 0 : index
    %c0_123 = arith.constant 0 : index
    %113 = vector.load %arg4[%c6_121, %c0_122, %c0_123] : memref<9x128x128xbf16, #tpu.memory_space<vmem>>, vector<1x128x128xbf16>
    %114 = vector.shape_cast %113 : vector<1x128x128xbf16> to vector<128x128xbf16>
    %cst_124 = arith.constant dense<0.000000e+00> : vector<512x128xf32>
    %115 = tpu.matmul %112, %114, %cst_124 {dimension_numbers = #tpu.dot_dimension_numbers<[1], [0], [0], [1], [0, 0, 1, 1], [], []>} : vector<512x128xbf16>, vector<128x128xbf16>, vector<512x128xf32> -> vector<512x128xf32>
    %116 = arith.addf %109, %115 : vector<512x128xf32>
    %c0_125 = arith.constant 0 : index
    %c2_126 = arith.constant 2 : index
    %c1_127 = arith.constant 1 : index
    %c0_128 = arith.constant 0 : index
    %117 = vector.load %arg9[%c0_125, %c2_126, %c1_127, %c0_128] : memref<2x18x18x128xf32, #tpu.memory_space<vmem>>, vector<2x16x16x128xf32>
    %118 = vector.shape_cast %117 : vector<2x16x16x128xf32> to vector<512x128xf32>
    %119 = arith.truncf %118 : vector<512x128xf32> to vector<512x128xbf16>
    %c7_129 = arith.constant 7 : index
    %c0_130 = arith.constant 0 : index
    %c0_131 = arith.constant 0 : index
    %120 = vector.load %arg4[%c7_129, %c0_130, %c0_131] : memref<9x128x128xbf16, #tpu.memory_space<vmem>>, vector<1x128x128xbf16>
    %121 = vector.shape_cast %120 : vector<1x128x128xbf16> to vector<128x128xbf16>
    %cst_132 = arith.constant dense<0.000000e+00> : vector<512x128xf32>
    %122 = tpu.matmul %119, %121, %cst_132 {dimension_numbers = #tpu.dot_dimension_numbers<[1], [0], [0], [1], [0, 0, 1, 1], [], []>} : vector<512x128xbf16>, vector<128x128xbf16>, vector<512x128xf32> -> vector<512x128xf32>
    %123 = arith.addf %116, %122 : vector<512x128xf32>
    %c0_133 = arith.constant 0 : index
    %c2_134 = arith.constant 2 : index
    %c2_135 = arith.constant 2 : index
    %c0_136 = arith.constant 0 : index
    %124 = vector.load %arg9[%c0_133, %c2_134, %c2_135, %c0_136] : memref<2x18x18x128xf32, #tpu.memory_space<vmem>>, vector<2x16x16x128xf32>
    %125 = vector.shape_cast %124 : vector<2x16x16x128xf32> to vector<512x128xf32>
    %126 = arith.truncf %125 : vector<512x128xf32> to vector<512x128xbf16>
    %c8_137 = arith.constant 8 : index
    %c0_138 = arith.constant 0 : index
    %c0_139 = arith.constant 0 : index
    %127 = vector.load %arg4[%c8_137, %c0_138, %c0_139] : memref<9x128x128xbf16, #tpu.memory_space<vmem>>, vector<1x128x128xbf16>
    %128 = vector.shape_cast %127 : vector<1x128x128xbf16> to vector<128x128xbf16>
    %cst_140 = arith.constant dense<0.000000e+00> : vector<512x128xf32>
    %129 = tpu.matmul %126, %128, %cst_140 {dimension_numbers = #tpu.dot_dimension_numbers<[1], [0], [0], [1], [0, 0, 1, 1], [], []>} : vector<512x128xbf16>, vector<128x128xbf16>, vector<512x128xf32> -> vector<512x128xf32>
    %130 = arith.addf %123, %129 : vector<512x128xf32>
    %c0_141 = arith.constant 0 : index
    %c0_142 = arith.constant 0 : index
    %131 = vector.load %arg5[%c0_141, %c0_142] : memref<1x128xf32, #tpu.memory_space<vmem>>, vector<1x128xf32>
    %132 = vector.broadcast %131 : vector<1x128xf32> to vector<512x128xf32>
    %133 = arith.mulf %130, %132 : vector<512x128xf32>
    %c0_143 = arith.constant 0 : index
    %c0_144 = arith.constant 0 : index
    %134 = vector.load %arg6[%c0_143, %c0_144] : memref<1x128xf32, #tpu.memory_space<vmem>>, vector<1x128xf32>
    %135 = vector.broadcast %134 : vector<1x128xf32> to vector<512x128xf32>
    %136 = arith.addf %133, %135 : vector<512x128xf32>
    %c0_145 = arith.constant 0 : index
    %c0_146 = arith.constant 0 : index
    %137 = vector.load %arg7[%c0_145, %c0_146] : memref<512x128xf32, #tpu.memory_space<vmem>>, vector<512x128xf32>
    %138 = arith.addf %136, %137 : vector<512x128xf32>
    %cst_147 = arith.constant 0.000000e+00 : f32
    %139 = vector.broadcast %cst_147 : f32 to vector<512x128xf32>
    %140 = arith.maximumf %138, %139 : vector<512x128xf32>
    %c0_148 = arith.constant 0 : index
    %c0_149 = arith.constant 0 : index
    %141 = vector.load %arg8[%c0_148, %c0_149] : memref<512x128xf32, #tpu.memory_space<vmem>>, vector<512x128xf32>
    tpu.vector_store %arg8[%c0_148, %c0_149], %140 {strides = array<i32>} : memref<512x128xf32, #tpu.memory_space<vmem>>, vector<512x128xf32>,
    return
  }
}

</mosaic_0001>

<llo_original>
// kernel: tpu_custom_call.1
$region0: #{tpu_custom_call.1}
  #allocation0 [shape = 'u32[]', space=smem, size = 0x4, offset = 0x4, fixed_abs, tag = 'smem constant byte address 0x4 - core index']
  #allocation1 [shape = 'u32[144,128]{1,0:T(1,128)}', space=vmem, size = 0x12000, scoped, tag = 'internal scratch']
  #allocation2 [shape = 'f32[2,18,18,128]{3,2,1,0:T(8,128)}', space=vmem, size = 0x6c000, scoped, tag = 'scratch operand']
  %s0 = inlined_call_operand.hbm [shape: bf16[9,512,128], index: 0, kind: input, shape index: {}]
  %s1 = inlined_call_operand.hbm [shape: bf16[9,128,128], index: 1, kind: input, shape index: {}]
  %s2 = inlined_call_operand.hbm [shape: f32[1,128], index: 2, kind: input, shape index: {}]
  %s3 = inlined_call_operand.hbm [shape: f32[1,128], index: 3, kind: input, shape index: {}]
  %s4 = inlined_call_operand.hbm [shape: bf16[9,128,128], index: 4, kind: input, shape index: {}]
  %s5 = inlined_call_operand.hbm [shape: f32[1,128], index: 5, kind: input, shape index: {}]
  %s6 = inlined_call_operand.hbm [shape: f32[1,128], index: 6, kind: input, shape index: {}]
  %s7 = inlined_call_operand.hbm [shape: f32[512,128], index: 7, kind: input, shape index: {}]
  %s8 = inlined_call_operand.hbm [shape: f32[512,128], index: 8, kind: output, shape index: {}]
  %s9 = sld [smem:[#allocation0]]
  $region74: #{tpu_custom_call.1} parent=0
    _
  %s11 = ssub.s32 1, %s9
  %s12 = scalar_select 0, %s11, %s9
  $region1: #{tpu_custom_call.1} parent=0
    #allocation3 [shape = 'u8[1179648]{0}', space=vmem, size = 0x120000, scoped, tag = 'input window, operand 0, single buffered']
    #allocation4 [shape = 's32[1]{0}', space=sflag, size = 0x4, scoped, tag = 'scoped memory for tpu_custom_call.1']
    #allocation5 [shape = 's32[1]{0}', space=sflag, size = 0x4, scoped, tag = 'scoped memory for tpu_custom_call.1']
    #allocation6 [shape = 'u8[294912]{0}', space=vmem, size = 0x48000, scoped, tag = 'input window, operand 1, single buffered']
    #allocation7 [shape = 's32[1]{0}', space=sflag, size = 0x4, scoped, tag = 'scoped memory for tpu_custom_call.1']
    #allocation8 [shape = 'u8[512]{0}', space=vmem, size = 0x400, scoped, tag = 'input window, operand 2, single buffered']
    #allocation9 [shape = 'u8[512]{0}', space=vmem, size = 0x400, scoped, tag = 'input window, operand 3, single buffered']
    #allocation10 [shape = 's32[1]{0}', space=sflag, size = 0x4, scoped, tag = 'scoped memory for tpu_custom_call.1']
    #allocation11 [shape = 'u8[294912]{0}', space=vmem, size = 0x48000, scoped, tag = 'input window, operand 4, single buffered']
    #allocation12 [shape = 'u8[512]{0}', space=vmem, size = 0x400, scoped, tag = 'input window, operand 5, single buffered']
    #allocation13 [shape = 's32[1]{0}', space=sflag, size = 0x4, scoped, tag = 'scoped memory for tpu_custom_call.1']
    #allocation14 [shape = 'u8[512]{0}', space=vmem, size = 0x400, scoped, tag = 'input window, operand 6, single buffered']
    #allocation15 [shape = 'u8[262144]{0}', space=vmem, size = 0x40000, scoped, tag = 'input window, operand 7, single buffered']
    #allocation16 [shape = 's32[1]{0}', space=sflag, size = 0x4, scoped, tag = 'scoped memory for tpu_custom_call.1']
    #allocation17 [shape = 'u8[262144]{0}', space=vmem, size = 0x40000, scoped, tag = 'output window, operand 0, single buffered']
    %13 = vsyncpa [#allocation4], 0
    %14 = vsyncpa [#allocation7], 0
    %15 = vsyncpa [#allocation10], 0
    %16 = vsyncpa [#allocation13], 0
    %17 = vsyncpa [#allocation16], 0
    %18 = vsyncpa [#allocation5], 0
    // Predicated region
    $region2: #{tpu_custom_call.1} parent=1 // pred_check
      _
    $region3: #{tpu_custom_call.1} parent=1 // pred_check_branch
      %20 = sbr.rel (0) target = $region5
    $region4: #{tpu_custom_call.1} parent=1 // pred_region
      %s22 = ssub.s32 36864, 36864
      %23 = vsyncadd [#allocation4], %s22
      %s24 = sshll.u32 [#allocation3], 4
      %s25 = int_to_ptr.vmem [resolvable:$true] %s24
      %30 = dma.hbm_to_vmem [thread:$0]  %s0, 36864, %s25, [#allocation4], 64, 64, 4
    $region5: #{tpu_custom_call.1} parent=1 // pred_fallthru
      _
    // Predicated region
    $region6: #{tpu_custom_call.1} parent=1 // pred_check
      _
    $region7: #{tpu_custom_call.1} parent=1 // pred_check_branch
      %32 = sbr.rel (0) target = $region9
    $region8: #{tpu_custom_call.1} parent=1 // pred_region
      %s34 = ssub.s32 9216, 9216
      %35 = vsyncadd [#allocation7], %s34
      %s36 = sshll.u32 [#allocation6], 4
      %s37 = int_to_ptr.vmem [resolvable:$true] %s36
      %42 = dma.hbm_to_vmem [thread:$0]  %s1, 9216, %s37, [#allocation7], 64, 64, 4
    $region9: #{tpu_custom_call.1} parent=1 // pred_fallthru
      _
    // Predicated region
    $region10: #{tpu_custom_call.1} parent=1 // pred_check
      _
    $region11: #{tpu_custom_call.1} parent=1 // pred_check_branch
      %44 = sbr.rel (0) target = $region13
    $region12: #{tpu_custom_call.1} parent=1 // pred_region
      %s46 = ssub.s32 16, 16
      %47 = vsyncadd [#allocation7], %s46
      %s49 = sshll.u32 [#allocation8], 4
      %s50 = int_to_ptr.vmem [resolvable:$true] %s49
      %52 = dma.hbm_to_vmem [thread:$0]  %s2, 16, %s50, [#allocation7]
    $region13: #{tpu_custom_call.1} parent=1 // pred_fallthru
      _
    // Predicated region
    $region14: #{tpu_custom_call.1} parent=1 // pred_check
      _
    $region15: #{tpu_custom_call.1} parent=1 // pred_check_branch
      %54 = sbr.rel (0) target = $region17
    $region16: #{tpu_custom_call.1} parent=1 // pred_region
      %s56 = ssub.s32 16, 16
      %57 = vsyncadd [#allocation10], %s56
      %s59 = sshll.u32 [#allocation9], 4
      %s60 = int_to_ptr.vmem [resolvable:$true] %s59
      %62 = dma.hbm_to_vmem [thread:$0]  %s3, 16, %s60, [#allocation10]
    $region17: #{tpu_custom_call.1} parent=1 // pred_fallthru
      _
    // Predicated region
    $region18: #{tpu_custom_call.1} parent=1 // pred_check
      _
    $region19: #{tpu_custom_call.1} parent=1 // pred_check_branch
      %64 = sbr.rel (0) target = $region21
    $region20: #{tpu_custom_call.1} parent=1 // pred_region
      %s66 = ssub.s32 9216, 9216
      %67 = vsyncadd [#allocation10], %s66
      %s68 = sshll.u32 [#allocation11], 4
      %s69 = int_to_ptr.vmem [resolvable:$true] %s68
      %74 = dma.hbm_to_vmem [thread:$0]  %s4, 9216, %s69, [#allocation10], 64, 64, 4
    $region21: #{tpu_custom_call.1} parent=1 // pred_fallthru
      _
    // Predicated region
    $region22: #{tpu_custom_call.1} parent=1 // pred_check
      _
    $region23: #{tpu_custom_call.1} parent=1 // pred_check_branch
      %76 = sbr.rel (0) target = $region25
    $region24: #{tpu_custom_call.1} parent=1 // pred_region
      %s78 = ssub.s32 16, 16
      %79 = vsyncadd [#allocation13], %s78
      %s81 = sshll.u32 [#allocation12], 4
      %s82 = int_to_ptr.vmem [resolvable:$true] %s81
      %84 = dma.hbm_to_vmem [thread:$0]  %s5, 16, %s82, [#allocation13]
    $region25: #{tpu_custom_call.1} parent=1 // pred_fallthru
      _
    // Predicated region
    $region26: #{tpu_custom_call.1} parent=1 // pred_check
      _
    $region27: #{tpu_custom_call.1} parent=1 // pred_check_branch
      %86 = sbr.rel (0) target = $region29
    $region28: #{tpu_custom_call.1} parent=1 // pred_region
      %s88 = ssub.s32 16, 16
      %89 = vsyncadd [#allocation13], %s88
      %s91 = sshll.u32 [#allocation14], 4
      %s92 = int_to_ptr.vmem [resolvable:$true] %s91
      %94 = dma.hbm_to_vmem [thread:$0]  %s6, 16, %s92, [#allocation13]
    $region29: #{tpu_custom_call.1} parent=1 // pred_fallthru
      _
    // Predicated region
    $region30: #{tpu_custom_call.1} parent=1 // pred_check
      _
    $region31: #{tpu_custom_call.1} parent=1 // pred_check_branch
      %96 = sbr.rel (0) target = $region33
    $region32: #{tpu_custom_call.1} parent=1 // pred_region
      %s98 = ssub.s32 8192, 8192
      %99 = vsyncadd [#allocation16], %s98
      %s100 = sshll.u32 [#allocation15], 4
      %s101 = int_to_ptr.vmem [resolvable:$true] %s100
      %106 = dma.hbm_to_vmem [thread:$0]  %s7, 8192, %s101, [#allocation16], 128, 128, 8
    $region33: #{tpu_custom_call.1} parent=1 // pred_fallthru
      _
    // Predicated region
    $region34: #{tpu_custom_call.1} parent=1 // pred_check
      _
    $region35: #{tpu_custom_call.1} parent=1 // pred_check_branch
      %108 = sbr.rel (0) target = $region37
    $region36: #{tpu_custom_call.1} parent=1 // pred_region
      %109 = dma.done [#allocation4], 36864
    $region37: #{tpu_custom_call.1} parent=1 // pred_fallthru
      _
    // Predicated region
    $region38: #{tpu_custom_call.1} parent=1 // pred_check
      _
    $region39: #{tpu_custom_call.1} parent=1 // pred_check_branch
      %111 = sbr.rel (0) target = $region41
    $region40: #{tpu_custom_call.1} parent=1 // pred_region
      %112 = dma.done [#allocation7], 9216
    $region41: #{tpu_custom_call.1} parent=1 // pred_fallthru
      _
    // Predicated region
    $region42: #{tpu_custom_call.1} parent=1 // pred_check
      _
    $region43: #{tpu_custom_call.1} parent=1 // pred_check_branch
      %114 = sbr.rel (0) target = $region45
    $region44: #{tpu_custom_call.1} parent=1 // pred_region
      %115 = dma.done [#allocation7], 16
    $region45: #{tpu_custom_call.1} parent=1 // pred_fallthru
      _
    // Predicated region
    $region46: #{tpu_custom_call.1} parent=1 // pred_check
      _
    $region47: #{tpu_custom_call.1} parent=1 // pred_check_branch
      %117 = sbr.rel (0) target = $region49
    $region48: #{tpu_custom_call.1} parent=1 // pred_region
      %118 = dma.done [#allocation10], 16
    $region49: #{tpu_custom_call.1} parent=1 // pred_fallthru
      _
    // Predicated region
    $region50: #{tpu_custom_call.1} parent=1 // pred_check
      _
    $region51: #{tpu_custom_call.1} parent=1 // pred_check_branch
      %120 = sbr.rel (0) target = $region53
    $region52: #{tpu_custom_call.1} parent=1 // pred_region
      %121 = dma.done [#allocation10], 9216
    $region53: #{tpu_custom_call.1} parent=1 // pred_fallthru
      _
    // Predicated region
    $region54: #{tpu_custom_call.1} parent=1 // pred_check
      _
    $region55: #{tpu_custom_call.1} parent=1 // pred_check_branch
      %123 = sbr.rel (0) target = $region57
    $region56: #{tpu_custom_call.1} parent=1 // pred_region
      %124 = dma.done [#allocation13], 16
    $region57: #{tpu_custom_call.1} parent=1 // pred_fallthru
      _
    // Predicated region
    $region58: #{tpu_custom_call.1} parent=1 // pred_check
      _
    $region59: #{tpu_custom_call.1} parent=1 // pred_check_branch
      %126 = sbr.rel (0) target = $region61
    $region60: #{tpu_custom_call.1} parent=1 // pred_region
      %127 = dma.done [#allocation13], 16
    $region61: #{tpu_custom_call.1} parent=1 // pred_fallthru
      _
    // Predicated region
    $region62: #{tpu_custom_call.1} parent=1 // pred_check
      _
    $region63: #{tpu_custom_call.1} parent=1 // pred_check_branch
      %129 = sbr.rel (0) target = $region65
    $region64: #{tpu_custom_call.1} parent=1 // pred_region
      %130 = dma.done [#allocation16], 8192
    $region65: #{tpu_custom_call.1} parent=1 // pred_fallthru
      _
    %v132 = vld [vmem:[#allocation3] sm:$0xf]
    %v133 = vld [vmem:[#allocation3 + $0x4] sm:$0xf]
    %v134 = vld [vmem:[#allocation3 + $0x8] sm:$0xf]
    %v135 = vld [vmem:[#allocation3 + $0xc] sm:$0xf]
    %v136 = vld [vmem:[#allocation3 + $0x10] sm:$0xf]
    %v137 = vld [vmem:[#allocation3 + $0x14] sm:$0xf]
    %v138 = vld [vmem:[#allocation3 + $0x18] sm:$0xf]
    %v139 = vld [vmem:[#allocation3 + $0x1c] sm:$0xf]
    %v140 = vld [vmem:[#allocation3 + $0x20] sm:$0xf]
    %v141 = vld [vmem:[#allocation3 + $0x24] sm:$0xf]
    %v142 = vld [vmem:[#allocation3 + $0x28] sm:$0xf]
    %v143 = vld [vmem:[#allocation3 + $0x2c] sm:$0xf]
    %v144 = vld [vmem:[#allocation3 + $0x30] sm:$0xf]
    %v145 = vld [vmem:[#allocation3 + $0x34] sm:$0xf]
    %v146 = vld [vmem:[#allocation3 + $0x38] sm:$0xf]
    %v147 = vld [vmem:[#allocation3 + $0x3c] sm:$0xf]
    %v148 = vld [vmem:[#allocation3 + $0x40] sm:$0xf]
    %v149 = vld [vmem:[#allocation3 + $0x44] sm:$0xf]
    %v150 = vld [vmem:[#allocation3 + $0x48] sm:$0xf]
    %v151 = vld [vmem:[#allocation3 + $0x4c] sm:$0xf]
    %v152 = vld [vmem:[#allocation3 + $0x50] sm:$0xf]
    %v153 = vld [vmem:[#allocation3 + $0x54] sm:$0xf]
    %v154 = vld [vmem:[#allocation3 + $0x58] sm:$0xf]
    %v155 = vld [vmem:[#allocation3 + $0x5c] sm:$0xf]
    %v156 = vld [vmem:[#allocation3 + $0x60] sm:$0xf]
    %v157 = vld [vmem:[#allocation3 + $0x64] sm:$0xf]
    %v158 = vld [vmem:[#allocation3 + $0x68] sm:$0xf]
    %v159 = vld [vmem:[#allocation3 + $0x6c] sm:$0xf]
    %v160 = vld [vmem:[#allocation3 + $0x70] sm:$0xf]
    %v161 = vld [vmem:[#allocation3 + $0x74] sm:$0xf]
    %v162 = vld [vmem:[#allocation3 + $0x78] sm:$0xf]
    %v163 = vld [vmem:[#allocation3 + $0x7c] sm:$0xf]
    %v164 = vld [vmem:[#allocation3 + $0x80] sm:$0xf]
    %v165 = vld [vmem:[#allocation3 + $0x84] sm:$0xf]
    %v166 = vld [vmem:[#allocation3 + $0x88] sm:$0xf]
    %v167 = vld [vmem:[#allocation3 + $0x8c] sm:$0xf]
    %v168 = vld [vmem:[#allocation3 + $0x90] sm:$0xf]
    %v169 = vld [vmem:[#allocation3 + $0x94] sm:$0xf]
    %v170 = vld [vmem:[#allocation3 + $0x98] sm:$0xf]
    %v171 = vld [vmem:[#allocation3 + $0x9c] sm:$0xf]
    %v172 = vld [vmem:[#allocation3 + $0xa0] sm:$0xf]
    %v173 = vld [vmem:[#allocation3 + $0xa4] sm:$0xf]
    %v174 = vld [vmem:[#allocation3 + $0xa8] sm:$0xf]
    %v175 = vld [vmem:[#allocation3 + $0xac] sm:$0xf]
    %v176 = vld [vmem:[#allocation3 + $0xb0] sm:$0xf]
    %v177 = vld [vmem:[#allocation3 + $0xb4] sm:$0xf]
    %v178 = vld [vmem:[#allocation3 + $0xb8] sm:$0xf]
    %v179 = vld [vmem:[#allocation3 + $0xbc] sm:$0xf]
    %v180 = vld [vmem:[#allocation3 + $0xc0] sm:$0xf]
    %v181 = vld [vmem:[#allocation3 + $0xc4] sm:$0xf]
    %v182 = vld [vmem:[#allocation3 + $0xc8] sm:$0xf]
    %v183 = vld [vmem:[#allocation3 + $0xcc] sm:$0xf]
    %v184 = vld [vmem:[#allocation3 + $0xd0] sm:$0xf]
    %v185 = vld [vmem:[#allocation3 + $0xd4] sm:$0xf]
    %v186 = vld [vmem:[#allocation3 + $0xd8] sm:$0xf]
    %v187 = vld [vmem:[#allocation3 + $0xdc] sm:$0xf]
    %v188 = vld [vmem:[#allocation3 + $0xe0] sm:$0xf]
    %v189 = vld [vmem:[#allocation3 + $0xe4] sm:$0xf]
    %v190 = vld [vmem:[#allocation3 + $0xe8] sm:$0xf]
    %v191 = vld [vmem:[#allocation3 + $0xec] sm:$0xf]
    %v192 = vld [vmem:[#allocation3 + $0xf0] sm:$0xf]
    %v193 = vld [vmem:[#allocation3 + $0xf4] sm:$0xf]
    %v194 = vld [vmem:[#allocation3 + $0xf8] sm:$0xf]
    %v195 = vld [vmem:[#allocation3 + $0xfc] sm:$0xf]
    %v196 = vld [vmem:[#allocation6] sm:$0xf]
    %v197 = vld [vmem:[#allocation6 + $0x4] sm:$0xf]
    %v198 = vld [vmem:[#allocation6 + $0x8] sm:$0xf]
    %v199 = vld [vmem:[#allocation6 + $0xc] sm:$0xf]
    %v200 = vld [vmem:[#allocation6 + $0x10] sm:$0xf]
    %v201 = vld [vmem:[#allocation6 + $0x14] sm:$0xf]
    %v202 = vld [vmem:[#allocation6 + $0x18] sm:$0xf]
    %v203 = vld [vmem:[#allocation6 + $0x1c] sm:$0xf]
    %v204 = vld [vmem:[#allocation6 + $0x20] sm:$0xf]
    %v205 = vld [vmem:[#allocation6 + $0x24] sm:$0xf]
    %v206 = vld [vmem:[#allocation6 + $0x28] sm:$0xf]
    %v207 = vld [vmem:[#allocation6 + $0x2c] sm:$0xf]
    %v208 = vld [vmem:[#allocation6 + $0x30] sm:$0xf]
    %v209 = vld [vmem:[#allocation6 + $0x34] sm:$0xf]
    %v210 = vld [vmem:[#allocation6 + $0x38] sm:$0xf]
    %v211 = vld [vmem:[#allocation6 + $0x3c] sm:$0xf]
    %s212 = scalar_lea.vmem [#allocation3], 256
    %v213 = vld [vmem:[%s212] sm:$0xf]
    %v214 = vld [vmem:[%s212 + $0x4] sm:$0xf]
    %v215 = vld [vmem:[%s212 + $0x8] sm:$0xf]
    %v216 = vld [vmem:[%s212 + $0xc] sm:$0xf]
    %v217 = vld [vmem:[%s212 + $0x10] sm:$0xf]
    %v218 = vld [vmem:[%s212 + $0x14] sm:$0xf]
    %v219 = vld [vmem:[%s212 + $0x18] sm:$0xf]
    %v220 = vld [vmem:[%s212 + $0x1c] sm:$0xf]
    %v221 = vld [vmem:[%s212 + $0x20] sm:$0xf]
    %v222 = vld [vmem:[%s212 + $0x24] sm:$0xf]
    %v223 = vld [vmem:[%s212 + $0x28] sm:$0xf]
    %v224 = vld [vmem:[%s212 + $0x2c] sm:$0xf]
    %v225 = vld [vmem:[%s212 + $0x30] sm:$0xf]
    %v226 = vld [vmem:[%s212 + $0x34] sm:$0xf]
    %v227 = vld [vmem:[%s212 + $0x38] sm:$0xf]
    %v228 = vld [vmem:[%s212 + $0x3c] sm:$0xf]
    %v229 = vld [vmem:[%s212 + $0x40] sm:$0xf]
    %v230 = vld [vmem:[%s212 + $0x44] sm:$0xf]
    %v231 = vld [vmem:[%s212 + $0x48] sm:$0xf]
    %v232 = vld [vmem:[%s212 + $0x4c] sm:$0xf]
    %v233 = vld [vmem:[%s212 + $0x50] sm:$0xf]
    %v234 = vld [vmem:[%s212 + $0x54] sm:$0xf]
    %v235 = vld [vmem:[%s212 + $0x58] sm:$0xf]
    %v236 = vld [vmem:[%s212 + $0x5c] sm:$0xf]
    %v237 = vld [vmem:[%s212 + $0x60] sm:$0xf]
    %v238 = vld [vmem:[%s212 + $0x64] sm:$0xf]
    %v239 = vld [vmem:[%s212 + $0x68] sm:$0xf]
    %v240 = vld [vmem:[%s212 + $0x6c] sm:$0xf]
    %v241 = vld [vmem:[%s212 + $0x70] sm:$0xf]
    %v242 = vld [vmem:[%s212 + $0x74] sm:$0xf]
    %v243 = vld [vmem:[%s212 + $0x78] sm:$0xf]
    %v244 = vld [vmem:[%s212 + $0x7c] sm:$0xf]
    %v245 = vld [vmem:[%s212 + $0x80] sm:$0xf]
    %v246 = vld [vmem:[%s212 + $0x84] sm:$0xf]
    %v247 = vld [vmem:[%s212 + $0x88] sm:$0xf]
    %v248 = vld [vmem:[%s212 + $0x8c] sm:$0xf]
    %v249 = vld [vmem:[%s212 + $0x90] sm:$0xf]
    %v250 = vld [vmem:[%s212 + $0x94] sm:$0xf]
    %v251 = vld [vmem:[%s212 + $0x98] sm:$0xf]
    %v252 = vld [vmem:[%s212 + $0x9c] sm:$0xf]
    %v253 = vld [vmem:[%s212 + $0xa0] sm:$0xf]
    %v254 = vld [vmem:[%s212 + $0xa4] sm:$0xf]
    %v255 = vld [vmem:[%s212 + $0xa8] sm:$0xf]
    %v256 = vld [vmem:[%s212 + $0xac] sm:$0xf]
    %v257 = vld [vmem:[%s212 + $0xb0] sm:$0xf]
    %v258 = vld [vmem:[%s212 + $0xb4] sm:$0xf]
    %v259 = vld [vmem:[%s212 + $0xb8] sm:$0xf]
    %v260 = vld [vmem:[%s212 + $0xbc] sm:$0xf]
    %v261 = vld [vmem:[%s212 + $0xc0] sm:$0xf]
    %v262 = vld [vmem:[%s212 + $0xc4] sm:$0xf]
    %v263 = vld [vmem:[%s212 + $0xc8] sm:$0xf]
    %v264 = vld [vmem:[%s212 + $0xcc] sm:$0xf]
    %v265 = vld [vmem:[%s212 + $0xd0] sm:$0xf]
    %v266 = vld [vmem:[%s212 + $0xd4] sm:$0xf]
    %v267 = vld [vmem:[%s212 + $0xd8] sm:$0xf]
    %v268 = vld [vmem:[%s212 + $0xdc] sm:$0xf]
    %v269 = vld [vmem:[%s212 + $0xe0] sm:$0xf]
    %v270 = vld [vmem:[%s212 + $0xe4] sm:$0xf]
    %v271 = vld [vmem:[%s212 + $0xe8] sm:$0xf]
    %v272 = vld [vmem:[%s212 + $0xec] sm:$0xf]
    %v273 = vld [vmem:[%s212 + $0xf0] sm:$0xf]
    %v274 = vld [vmem:[%s212 + $0xf4] sm:$0xf]
    %v275 = vld [vmem:[%s212 + $0xf8] sm:$0xf]
    %v276 = vld [vmem:[%s212 + $0xfc] sm:$0xf]
    %s277 = scalar_lea.vmem [#allocation6], 64
    %v278 = vld [vmem:[%s277] sm:$0xf]
    %v279 = vld [vmem:[%s277 + $0x4] sm:$0xf]
    %v280 = vld [vmem:[%s277 + $0x8] sm:$0xf]
    %v281 = vld [vmem:[%s277 + $0xc] sm:$0xf]
    %v282 = vld [vmem:[%s277 + $0x10] sm:$0xf]
    %v283 = vld [vmem:[%s277 + $0x14] sm:$0xf]
    %v284 = vld [vmem:[%s277 + $0x18] sm:$0xf]
    %v285 = vld [vmem:[%s277 + $0x1c] sm:$0xf]
    %v286 = vld [vmem:[%s277 + $0x20] sm:$0xf]
    %v287 = vld [vmem:[%s277 + $0x24] sm:$0xf]
    %v288 = vld [vmem:[%s277 + $0x28] sm:$0xf]
    %v289 = vld [vmem:[%s277 + $0x2c] sm:$0xf]
    %v290 = vld [vmem:[%s277 + $0x30] sm:$0xf]
    %v291 = vld [vmem:[%s277 + $0x34] sm:$0xf]
    %v292 = vld [vmem:[%s277 + $0x38] sm:$0xf]
    %v293 = vld [vmem:[%s277 + $0x3c] sm:$0xf]
    %v358 = vunpack.c.l.b16 %v213
    %v359 = vunpack.c.l.b16 %v214
    %v360 = vunpack.c.l.b16 %v215
    %v361 = vunpack.c.l.b16 %v216
    %v362 = vunpack.c.l.b16 %v217
    %v363 = vunpack.c.l.b16 %v218
    %v364 = vunpack.c.l.b16 %v219
    %v365 = vunpack.c.l.b16 %v220
    %v366 = vunpack.c.l.b16 %v221
    %v367 = vunpack.c.l.b16 %v222
    %v368 = vunpack.c.l.b16 %v223
    %v369 = vunpack.c.l.b16 %v224
    %v370 = vunpack.c.l.b16 %v225
    %v371 = vunpack.c.l.b16 %v226
    %v372 = vunpack.c.l.b16 %v227
    %v373 = vunpack.c.l.b16 %v228
    %v374 = vunpack.c.l.b16 %v229
    %v375 = vunpack.c.l.b16 %v230
    %v376 = vunpack.c.l.b16 %v231
    %v377 = vunpack.c.l.b16 %v232
    %v378 = vunpack.c.l.b16 %v233
    %v379 = vunpack.c.l.b16 %v234
    %v380 = vunpack.c.l.b16 %v235
    %v381 = vunpack.c.l.b16 %v236
    %v382 = vunpack.c.l.b16 %v237
    %v383 = vunpack.c.l.b16 %v238
    %v384 = vunpack.c.l.b16 %v239
    %v385 = vunpack.c.l.b16 %v240
    %v386 = vunpack.c.l.b16 %v241
    %v387 = vunpack.c.l.b16 %v242
    %v388 = vunpack.c.l.b16 %v243
    %v389 = vunpack.c.l.b16 %v244
    %v390 = vunpack.c.l.b16 %v245
    %v391 = vunpack.c.l.b16 %v246
    %v392 = vunpack.c.l.b16 %v247
    %v393 = vunpack.c.l.b16 %v248
    %v394 = vunpack.c.l.b16 %v249
    %v395 = vunpack.c.l.b16 %v250
    %v396 = vunpack.c.l.b16 %v251
    %v397 = vunpack.c.l.b16 %v252
    %v398 = vunpack.c.l.b16 %v253
    %v399 = vunpack.c.l.b16 %v254
    %v400 = vunpack.c.l.b16 %v255
    %v401 = vunpack.c.l.b16 %v256
    %v402 = vunpack.c.l.b16 %v257
    %v403 = vunpack.c.l.b16 %v258
    %v404 = vunpack.c.l.b16 %v259
    %v405 = vunpack.c.l.b16 %v260
    %v406 = vunpack.c.l.b16 %v261
    %v407 = vunpack.c.l.b16 %v262
    %v408 = vunpack.c.l.b16 %v263
    %v409 = vunpack.c.l.b16 %v264
    %v410 = vunpack.c.l.b16 %v265
    %v411 = vunpack.c.l.b16 %v266
    %v412 = vunpack.c.l.b16 %v267
    %v413 = vunpack.c.l.b16 %v268
    %v414 = vunpack.c.l.b16 %v269
    %v415 = vunpack.c.l.b16 %v270
    %v416 = vunpack.c.l.b16 %v271
    %v417 = vunpack.c.l.b16 %v272
    %v418 = vunpack.c.l.b16 %v273
    %v419 = vunpack.c.l.b16 %v274
    %v420 = vunpack.c.l.b16 %v275
    %v421 = vunpack.c.l.b16 %v276
    %v422 = vpack.c.b16 %v359, %v358
    %v423 = vpack.c.b16 %v361, %v360
    %v424 = vpack.c.b16 %v363, %v362
    %v425 = vpack.c.b16 %v365, %v364
    %v426 = vpack.c.b16 %v367, %v366
    %v427 = vpack.c.b16 %v369, %v368
    %v428 = vpack.c.b16 %v371, %v370
    %v429 = vpack.c.b16 %v373, %v372
    %v430 = vpack.c.b16 %v375, %v374
    %v431 = vpack.c.b16 %v377, %v376
    %v432 = vpack.c.b16 %v379, %v378
    %v433 = vpack.c.b16 %v381, %v380
    %v434 = vpack.c.b16 %v383, %v382
    %v435 = vpack.c.b16 %v385, %v384
    %v436 = vpack.c.b16 %v387, %v386
    %v437 = vpack.c.b16 %v389, %v388
    %v438 = vpack.c.b16 %v391, %v390
    %v439 = vpack.c.b16 %v393, %v392
    %v440 = vpack.c.b16 %v395, %v394
    %v441 = vpack.c.b16 %v397, %v396
    %v442 = vpack.c.b16 %v399, %v398
    %v443 = vpack.c.b16 %v401, %v400
    %v444 = vpack.c.b16 %v403, %v402
    %v445 = vpack.c.b16 %v405, %v404
    %v446 = vpack.c.b16 %v407, %v406
    %v447 = vpack.c.b16 %v409, %v408
    %v448 = vpack.c.b16 %v411, %v410
    %v449 = vpack.c.b16 %v413, %v412
    %v450 = vpack.c.b16 %v415, %v414
    %v451 = vpack.c.b16 %v417, %v416
    %v452 = vpack.c.b16 %v419, %v418
    %v453 = vpack.c.b16 %v421, %v420
    %v502 = vunpack.c.l.b16 %v278
    %v503 = vunpack.c.l.b16 %v279
    %v504 = vunpack.c.l.b16 %v280
    %v505 = vunpack.c.l.b16 %v281
    %v506 = vunpack.c.l.b16 %v282
    %v507 = vunpack.c.l.b16 %v283
    %v508 = vunpack.c.l.b16 %v284
    %v509 = vunpack.c.l.b16 %v285
    %v510 = vunpack.c.l.b16 %v286
    %v511 = vunpack.c.l.b16 %v287
    %v512 = vunpack.c.l.b16 %v288
    %v513 = vunpack.c.l.b16 %v289
    %v514 = vunpack.c.l.b16 %v290
    %v515 = vunpack.c.l.b16 %v291
    %v516 = vunpack.c.l.b16 %v292
    %v517 = vunpack.c.l.b16 %v293
    %v518 = vpack.c.b16 %v503, %v502
    %v519 = vpack.c.b16 %v505, %v504
    %v520 = vpack.c.b16 %v507, %v506
    %v521 = vpack.c.b16 %v509, %v508
    %v522 = vpack.c.b16 %v511, %v510
    %v523 = vpack.c.b16 %v513, %v512
    %v524 = vpack.c.b16 %v515, %v514
    %v525 = vpack.c.b16 %v517, %v516
    %534 = vmatprep.subr.bf16.mxu0 0
    %535 = vmatpush1.bf16.msra.mxu0 %v518
    %536 = vmatprep.subr.bf16.mxu0 0
    %537 = vmatpush1.bf16.msra.mxu0 %v519
    %538 = vmatprep.subr.bf16.mxu0 0
    %539 = vmatpush1.bf16.msra.mxu0 %v520
    %540 = vmatprep.subr.bf16.mxu0 0
    %541 = vmatpush1.bf16.msra.mxu0 %v521
    %542 = vmatprep.subr.bf16.mxu0 0
    %543 = vmatpush1.bf16.msra.mxu0 %v522
    %544 = vmatprep.subr.bf16.mxu0 0
    %545 = vmatpush1.bf16.msra.mxu0 %v523
    %546 = vmatprep.subr.bf16.mxu0 0
    %547 = vmatpush1.bf16.msra.mxu0 %v524
    %548 = vmatprep.subr.bf16.mxu0 0
    %549 = vmatpush1.bf16.msra.mxu0 %v525
    %550 = vmatprep.subr.bf16.mxu0 0
    %551 = vmatpush1.bf16.msra.mxu0 0
    %552 = vmatprep.subr.bf16.mxu0 0
    %553 = vmatpush1.bf16.msra.mxu0 0
    %554 = vmatprep.subr.bf16.mxu0 0
    %555 = vmatpush1.bf16.msra.mxu0 0
    %556 = vmatprep.subr.bf16.mxu0 0
    %557 = vmatpush1.bf16.msra.mxu0 0
    %558 = vmatprep.subr.bf16.mxu0 0
    %559 = vmatpush1.bf16.msra.mxu0 0
    %560 = vmatprep.subr.bf16.mxu0 0
    %561 = vmatpush1.bf16.msra.mxu0 0
    %562 = vmatprep.subr.bf16.mxu0 0
    %563 = vmatpush1.bf16.msra.mxu0 0
    %564 = vmatprep.subr.bf16.mxu0 0
    %565 = vmatpush1.bf16.msra.mxu0 0
    %566 = vmatprep.mubr.bf16.mxu0 0
    %567 = vmatmul.mubr.bf16.gmra.mrb[0].mxu0 %v422
    %v568 = vpop.f32.mrb[0].mxu0
    %v569 = vadd.f32 0.0, %v568
    %v570 = vpop.f32.mrb[0].mxu0
    %v571 = vpop.f32.mrb[0].mxu0
    %v572 = vadd.f32 0.0, %v571
    %v573 = vpop.f32.mrb[0].mxu0
    %574 = vmatprep.mubr.bf16.mxu0 0
    %575 = vmatmul.mubr.bf16.gmra.mrb[0].mxu0 %v423
    %v576 = vpop.f32.mrb[0].mxu0
    %v577 = vadd.f32 0.0, %v576
    %v578 = vpop.f32.mrb[0].mxu0
    %v579 = vpop.f32.mrb[0].mxu0
    %v580 = vadd.f32 0.0, %v579
    %v581 = vpop.f32.mrb[0].mxu0
    %582 = vmatprep.mubr.bf16.mxu0 0
    %583 = vmatmul.mubr.bf16.gmra.mrb[0].mxu0 %v424
    %v584 = vpop.f32.mrb[0].mxu0
    %v585 = vadd.f32 0.0, %v584
    %v586 = vpop.f32.mrb[0].mxu0
    %v587 = vpop.f32.mrb[0].mxu0
    %v588 = vadd.f32 0.0, %v587
    %v589 = vpop.f32.mrb[0].mxu0
    %590 = vmatprep.mubr.bf16.mxu0 0
    %591 = vmatmul.mubr.bf16.gmra.mrb[0].mxu0 %v425
    %v592 = vpop.f32.mrb[0].mxu0
    %v593 = vadd.f32 0.0, %v592
    %v594 = vpop.f32.mrb[0].mxu0
    %v595 = vpop.f32.mrb[0].mxu0
    %v596 = vadd.f32 0.0, %v595
    %v597 = vpop.f32.mrb[0].mxu0
    %598 = vmatprep.mubr.bf16.mxu0 0
    %599 = vmatmul.mubr.bf16.gmra.mrb[0].mxu0 %v426
    %v600 = vpop.f32.mrb[0].mxu0
    %v601 = vadd.f32 0.0, %v600
    %v602 = vpop.f32.mrb[0].mxu0
    %v603 = vpop.f32.mrb[0].mxu0
    %v604 = vadd.f32 0.0, %v603
    %v605 = vpop.f32.mrb[0].mxu0
    %606 = vmatprep.mubr.bf16.mxu0 0
    %607 = vmatmul.mubr.bf16.gmra.mrb[0].mxu0 %v427
    %v608 = vpop.f32.mrb[0].mxu0
    %v609 = vadd.f32 0.0, %v608
    %v610 = vpop.f32.mrb[0].mxu0
    %v611 = vpop.f32.mrb[0].mxu0
    %v612 = vadd.f32 0.0, %v611
    %v613 = vpop.f32.mrb[0].mxu0
    %614 = vmatprep.mubr.bf16.mxu0 0
    %615 = vmatmul.mubr.bf16.gmra.mrb[0].mxu0 %v428
    %v616 = vpop.f32.mrb[0].mxu0
    %v617 = vadd.f32 0.0, %v616
    %v618 = vpop.f32.mrb[0].mxu0
    %v619 = vpop.f32.mrb[0].mxu0
    %v620 = vadd.f32 0.0, %v619
    %v621 = vpop.f32.mrb[0].mxu0
    %622 = vmatprep.mubr.bf16.mxu0 0
    %623 = vmatmul.mubr.bf16.gmra.mrb[0].mxu0 %v429
    %v624 = vpop.f32.mrb[0].mxu0
    %v625 = vadd.f32 0.0, %v624
    %v626 = vpop.f32.mrb[0].mxu0
    %v627 = vpop.f32.mrb[0].mxu0
    %v628 = vadd.f32 0.0, %v627
    %v629 = vpop.f32.mrb[0].mxu0
    %630 = vmatprep.mubr.bf16.mxu0 0
    %631 = vmatmul.mubr.bf16.gmra.mrb[0].mxu0 %v430
    %v632 = vpop.f32.mrb[0].mxu0
    %v633 = vadd.f32 0.0, %v632
    %v634 = vpop.f32.mrb[0].mxu0
    %v635 = vpop.f32.mrb[0].mxu0
    %v636 = vadd.f32 0.0, %v635
    %v637 = vpop.f32.mrb[0].mxu0
    %638 = vmatprep.mubr.bf16.mxu0 0
    %639 = vmatmul.mubr.bf16.gmra.mrb[0].mxu0 %v431
    %v640 = vpop.f32.mrb[0].mxu0
    %v641 = vadd.f32 0.0, %v640
    %v642 = vpop.f32.mrb[0].mxu0
    %v643 = vpop.f32.mrb[0].mxu0
    %v644 = vadd.f32 0.0, %v643
    %v645 = vpop.f32.mrb[0].mxu0
    %646 = vmatprep.mubr.bf16.mxu0 0
    %647 = vmatmul.mubr.bf16.gmra.mrb[0].mxu0 %v432
    %v648 = vpop.f32.mrb[0].mxu0
    %v649 = vadd.f32 0.0, %v648
    %v650 = vpop.f32.mrb[0].mxu0
    %v651 = vpop.f32.mrb[0].mxu0
    %v652 = vadd.f32 0.0, %v651
    %v653 = vpop.f32.mrb[0].mxu0
    %654 = vmatprep.mubr.bf16.mxu0 0
    %655 = vmatmul.mubr.bf16.gmra.mrb[0].mxu0 %v433
    %v656 = vpop.f32.mrb[0].mxu0
    %v657 = vadd.f32 0.0, %v656
    %v658 = vpop.f32.mrb[0].mxu0
    %v659 = vpop.f32.mrb[0].mxu0
    %v660 = vadd.f32 0.0, %v659
    %v661 = vpop.f32.mrb[0].mxu0
    %662 = vmatprep.mubr.bf16.mxu0 0
    %663 = vmatmul.mubr.bf16.gmra.mrb[0].mxu0 %v434
    %v664 = vpop.f32.mrb[0].mxu0
    %v665 = vadd.f32 0.0, %v664
    %v666 = vpop.f32.mrb[0].mxu0
    %v667 = vpop.f32.mrb[0].mxu0
    %v668 = vadd.f32 0.0, %v667
    %v669 = vpop.f32.mrb[0].mxu0
    %670 = vmatprep.mubr.bf16.mxu0 0
    %671 = vmatmul.mubr.bf16.gmra.mrb[0].mxu0 %v435
    %v672 = vpop.f32.mrb[0].mxu0
    %v673 = vadd.f32 0.0, %v672
    %v674 = vpop.f32.mrb[0].mxu0
    %v675 = vpop.f32.mrb[0].mxu0
    %v676 = vadd.f32 0.0, %v675
    %v677 = vpop.f32.mrb[0].mxu0
    %678 = vmatprep.mubr.bf16.mxu0 0
    %679 = vmatmul.mubr.bf16.gmra.mrb[0].mxu0 %v436
    %v680 = vpop.f32.mrb[0].mxu0
    %v681 = vadd.f32 0.0, %v680
    %v682 = vpop.f32.mrb[0].mxu0
    %v683 = vpop.f32.mrb[0].mxu0
    %v684 = vadd.f32 0.0, %v683
    %v685 = vpop.f32.mrb[0].mxu0
    %686 = vmatprep.mubr.bf16.mxu0 0
    %687 = vmatmul.mubr.bf16.gmra.mrb[0].mxu0 %v437
    %v688 = vpop.f32.mrb[0].mxu0
    %v689 = vadd.f32 0.0, %v688
    %v690 = vpop.f32.mrb[0].mxu0
    %v691 = vpop.f32.mrb[0].mxu0
    %v692 = vadd.f32 0.0, %v691
    %v693 = vpop.f32.mrb[0].mxu0
    %694 = vmatprep.mubr.bf16.mxu0 0
    %695 = vmatmul.mubr.bf16.gmra.mrb[0].mxu0 %v438
    %v696 = vpop.f32.mrb[0].mxu0
    %v697 = vadd.f32 0.0, %v696
    %v698 = vpop.f32.mrb[0].mxu0
    %v699 = vpop.f32.mrb[0].mxu0
    %v700 = vadd.f32 0.0, %v699
    %v701 = vpop.f32.mrb[0].mxu0
    %702 = vmatprep.mubr.bf16.mxu0 0
    %703 = vmatmul.mubr.bf16.gmra.mrb[0].mxu0 %v439
    %v704 = vpop.f32.mrb[0].mxu0
    %v705 = vadd.f32 0.0, %v704
    %v706 = vpop.f32.mrb[0].mxu0
    %v707 = vpop.f32.mrb[0].mxu0
    %v708 = vadd.f32 0.0, %v707
    %v709 = vpop.f32.mrb[0].mxu0
    %710 = vmatprep.mubr.bf16.mxu0 0
    %711 = vmatmul.mubr.bf16.gmra.mrb[0].mxu0 %v440
    %v712 = vpop.f32.mrb[0].mxu0
    %v713 = vadd.f32 0.0, %v712
    %v714 = vpop.f32.mrb[0].mxu0
    %v715 = vpop.f32.mrb[0].mxu0
    %v716 = vadd.f32 0.0, %v715
    %v717 = vpop.f32.mrb[0].mxu0
    %718 = vmatprep.mubr.bf16.mxu0 0
    %719 = vmatmul.mubr.bf16.gmra.mrb[0].mxu0 %v441
    %v720 = vpop.f32.mrb[0].mxu0
    %v721 = vadd.f32 0.0, %v720
    %v722 = vpop.f32.mrb[0].mxu0
    %v723 = vpop.f32.mrb[0].mxu0
    %v724 = vadd.f32 0.0, %v723
    %v725 = vpop.f32.mrb[0].mxu0
    %726 = vmatprep.mubr.bf16.mxu0 0
    %727 = vmatmul.mubr.bf16.gmra.mrb[0].mxu0 %v442
    %v728 = vpop.f32.mrb[0].mxu0
    %v729 = vadd.f32 0.0, %v728
    %v730 = vpop.f32.mrb[0].mxu0
    %v731 = vpop.f32.mrb[0].mxu0
    %v732 = vadd.f32 0.0, %v731
    %v733 = vpop.f32.mrb[0].mxu0
    %734 = vmatprep.mubr.bf16.mxu0 0
    %735 = vmatmul.mubr.bf16.gmra.mrb[0].mxu0 %v443
    %v736 = vpop.f32.mrb[0].mxu0
    %v737 = vadd.f32 0.0, %v736
    %v738 = vpop.f32.mrb[0].mxu0
    %v739 = vpop.f32.mrb[0].mxu0
    %v740 = vadd.f32 0.0, %v739
    %v741 = vpop.f32.mrb[0].mxu0
    %742 = vmatprep.mubr.bf16.mxu0 0
    %743 = vmatmul.mubr.bf16.gmra.mrb[0].mxu0 %v444
    %v744 = vpop.f32.mrb[0].mxu0
    %v745 = vadd.f32 0.0, %v744
    %v746 = vpop.f32.mrb[0].mxu0
    %v747 = vpop.f32.mrb[0].mxu0
    %v748 = vadd.f32 0.0, %v747
    %v749 = vpop.f32.mrb[0].mxu0
    %750 = vmatprep.mubr.bf16.mxu0 0
    %751 = vmatmul.mubr.bf16.gmra.mrb[0].mxu0 %v445
    %v752 = vpop.f32.mrb[0].mxu0
    %v753 = vadd.f32 0.0, %v752
    %v754 = vpop.f32.mrb[0].mxu0
    %v755 = vpop.f32.mrb[0].mxu0
    %v756 = vadd.f32 0.0, %v755
    %v757 = vpop.f32.mrb[0].mxu0
    %758 = vmatprep.mubr.bf16.mxu0 0
    %759 = vmatmul.mubr.bf16.gmra.mrb[0].mxu0 %v446
    %v760 = vpop.f32.mrb[0].mxu0
    %v761 = vadd.f32 0.0, %v760
    %v762 = vpop.f32.mrb[0].mxu0
    %v763 = vpop.f32.mrb[0].mxu0
    %v764 = vadd.f32 0.0, %v763
    %v765 = vpop.f32.mrb[0].mxu0
    %766 = vmatprep.mubr.bf16.mxu0 0
    %767 = vmatmul.mubr.bf16.gmra.mrb[0].mxu0 %v447
    %v768 = vpop.f32.mrb[0].mxu0
    %v769 = vadd.f32 0.0, %v768
    %v770 = vpop.f32.mrb[0].mxu0
    %v771 = vpop.f32.mrb[0].mxu0
    %v772 = vadd.f32 0.0, %v771
    %v773 = vpop.f32.mrb[0].mxu0
    %774 = vmatprep.mubr.bf16.mxu0 0
    %775 = vmatmul.mubr.bf16.gmra.mrb[0].mxu0 %v448
    %v776 = vpop.f32.mrb[0].mxu0
    %v777 = vadd.f32 0.0, %v776
    %v778 = vpop.f32.mrb[0].mxu0
    %v779 = vpop.f32.mrb[0].mxu0
    %v780 = vadd.f32 0.0, %v779
    %v781 = vpop.f32.mrb[0].mxu0
    %782 = vmatprep.mubr.bf16.mxu0 0
    %783 = vmatmul.mubr.bf16.gmra.mrb[0].mxu0 %v449
    %v784 = vpop.f32.mrb[0].mxu0
    %v785 = vadd.f32 0.0, %v784
    %v786 = vpop.f32.mrb[0].mxu0
    %v787 = vpop.f32.mrb[0].mxu0
    %v788 = vadd.f32 0.0, %v787
    %v789 = vpop.f32.mrb[0].mxu0
    %790 = vmatprep.mubr.bf16.mxu0 0
    %791 = vmatmul.mubr.bf16.gmra.mrb[0].mxu0 %v450
    %v792 = vpop.f32.mrb[0].mxu0
    %v793 = vadd.f32 0.0, %v792
    %v794 = vpop.f32.mrb[0].mxu0
    %v795 = vpop.f32.mrb[0].mxu0
    %v796 = vadd.f32 0.0, %v795
    %v797 = vpop.f32.mrb[0].mxu0
    %798 = vmatprep.mubr.bf16.mxu0 0
    %799 = vmatmul.mubr.bf16.gmra.mrb[0].mxu0 %v451
    %v800 = vpop.f32.mrb[0].mxu0
    %v801 = vadd.f32 0.0, %v800
    %v802 = vpop.f32.mrb[0].mxu0
    %v803 = vpop.f32.mrb[0].mxu0
    %v804 = vadd.f32 0.0, %v803
    %v805 = vpop.f32.mrb[0].mxu0
    %806 = vmatprep.mubr.bf16.mxu0 0
    %807 = vmatmul.mubr.bf16.gmra.mrb[0].mxu0 %v452
    %v808 = vpop.f32.mrb[0].mxu0
    %v809 = vadd.f32 0.0, %v808
    %v810 = vpop.f32.mrb[0].mxu0
    %v811 = vpop.f32.mrb[0].mxu0
    %v812 = vadd.f32 0.0, %v811
    %v813 = vpop.f32.mrb[0].mxu0
    %814 = vmatprep.mubr.bf16.mxu0 0
    %815 = vmatmul.mubr.bf16.gmra.mrb[0].mxu0 %v453
    %v816 = vpop.f32.mrb[0].mxu0
    %v817 = vadd.f32 0.0, %v816
    %v818 = vpop.f32.mrb[0].mxu0
    %v819 = vpop.f32.mrb[0].mxu0
    %v820 = vadd.f32 0.0, %v819
    %v821 = vpop.f32.mrb[0].mxu0
    %822 = vdwg.mxu0
    %v887 = vunpack.c.l.b16 %v132
    %v888 = vunpack.c.l.b16 %v133
    %v889 = vunpack.c.l.b16 %v134
    %v890 = vunpack.c.l.b16 %v135
    %v891 = vunpack.c.l.b16 %v136
    %v892 = vunpack.c.l.b16 %v137
    %v893 = vunpack.c.l.b16 %v138
    %v894 = vunpack.c.l.b16 %v139
    %v895 = vunpack.c.l.b16 %v140
    %v896 = vunpack.c.l.b16 %v141
    %v897 = vunpack.c.l.b16 %v142
    %v898 = vunpack.c.l.b16 %v143
    %v899 = vunpack.c.l.b16 %v144
    %v900 = vunpack.c.l.b16 %v145
    %v901 = vunpack.c.l.b16 %v146
    %v902 = vunpack.c.l.b16 %v147
    %v903 = vunpack.c.l.b16 %v148
    %v904 = vunpack.c.l.b16 %v149
    %v905 = vunpack.c.l.b16 %v150
    %v906 = vunpack.c.l.b16 %v151
    %v907 = vunpack.c.l.b16 %v152
    %v908 = vunpack.c.l.b16 %v153
    %v909 = vunpack.c.l.b16 %v154
    %v910 = vunpack.c.l.b16 %v155
    %v911 = vunpack.c.l.b16 %v156
    %v912 = vunpack.c.l.b16 %v157
    %v913 = vunpack.c.l.b16 %v158
    %v914 = vunpack.c.l.b16 %v159
    %v915 = vunpack.c.l.b16 %v160
    %v916 = vunpack.c.l.b16 %v161
    %v917 = vunpack.c.l.b16 %v162
    %v918 = vunpack.c.l.b16 %v163
    %v919 = vunpack.c.l.b16 %v164
    %v920 = vunpack.c.l.b16 %v165
    %v921 = vunpack.c.l.b16 %v166
    %v922 = vunpack.c.l.b16 %v167
    %v923 = vunpack.c.l.b16 %v168
    %v924 = vunpack.c.l.b16 %v169
    %v925 = vunpack.c.l.b16 %v170
    %v926 = vunpack.c.l.b16 %v171
    %v927 = vunpack.c.l.b16 %v172
    %v928 = vunpack.c.l.b16 %v173
    %v929 = vunpack.c.l.b16 %v174
    %v930 = vunpack.c.l.b16 %v175
    %v931 = vunpack.c.l.b16 %v176
    %v932 = vunpack.c.l.b16 %v177
    %v933 = vunpack.c.l.b16 %v178
    %v934 = vunpack.c.l.b16 %v179
    %v935 = vunpack.c.l.b16 %v180
    %v936 = vunpack.c.l.b16 %v181
    %v937 = vunpack.c.l.b16 %v182
    %v938 = vunpack.c.l.b16 %v183
    %v939 = vunpack.c.l.b16 %v184
    %v940 = vunpack.c.l.b16 %v185
    %v941 = vunpack.c.l.b16 %v186
    %v942 = vunpack.c.l.b16 %v187
    %v943 = vunpack.c.l.b16 %v188
    %v944 = vunpack.c.l.b16 %v189
    %v945 = vunpack.c.l.b16 %v190
    %v946 = vunpack.c.l.b16 %v191
    %v947 = vunpack.c.l.b16 %v192
    %v948 = vunpack.c.l.b16 %v193
    %v949 = vunpack.c.l.b16 %v194
    %v950 = vunpack.c.l.b16 %v195
    %v951 = vpack.c.b16 %v888, %v887
    %v952 = vpack.c.b16 %v890, %v889
    %v953 = vpack.c.b16 %v892, %v891
    %v954 = vpack.c.b16 %v894, %v893
    %v955 = vpack.c.b16 %v896, %v895
    %v956 = vpack.c.b16 %v898, %v897
    %v957 = vpack.c.b16 %v900, %v899
    %v958 = vpack.c.b16 %v902, %v901
    %v959 = vpack.c.b16 %v904, %v903
    %v960 = vpack.c.b16 %v906, %v905
    %v961 = vpack.c.b16 %v908, %v907
    %v962 = vpack.c.b16 %v910, %v909
    %v963 = vpack.c.b16 %v912, %v911
    %v964 = vpack.c.b16 %v914, %v913
    %v965 = vpack.c.b16 %v916, %v915
    %v966 = vpack.c.b16 %v918, %v917
    %v967 = vpack.c.b16 %v920, %v919
    %v968 = vpack.c.b16 %v922, %v921
    %v969 = vpack.c.b16 %v924, %v923
    %v970 = vpack.c.b16 %v926, %v925
    %v971 = vpack.c.b16 %v928, %v927
    %v972 = vpack.c.b16 %v930, %v929
    %v973 = vpack.c.b16 %v932, %v931
    %v974 = vpack.c.b16 %v934, %v933
    %v975 = vpack.c.b16 %v936, %v935
    %v976 = vpack.c.b16 %v938, %v937
    %v977 = vpack.c.b16 %v940, %v939
    %v978 = vpack.c.b16 %v942, %v941
    %v979 = vpack.c.b16 %v944, %v943
    %v980 = vpack.c.b16 %v946, %v945
    %v981 = vpack.c.b16 %v948, %v947
    %v982 = vpack.c.b16 %v950, %v949
    %v1031 = vunpack.c.l.b16 %v196
    %v1032 = vunpack.c.l.b16 %v197
    %v1033 = vunpack.c.l.b16 %v198
    %v1034 = vunpack.c.l.b16 %v199
    %v1035 = vunpack.c.l.b16 %v200
    %v1036 = vunpack.c.l.b16 %v201
    %v1037 = vunpack.c.l.b16 %v202
    %v1038 = vunpack.c.l.b16 %v203
    %v1039 = vunpack.c.l.b16 %v204
    %v1040 = vunpack.c.l.b16 %v205
    %v1041 = vunpack.c.l.b16 %v206
    %v1042 = vunpack.c.l.b16 %v207
    %v1043 = vunpack.c.l.b16 %v208
    %v1044 = vunpack.c.l.b16 %v209
    %v1045 = vunpack.c.l.b16 %v210
    %v1046 = vunpack.c.l.b16 %v211
    %v1047 = vpack.c.b16 %v1032, %v1031
    %v1048 = vpack.c.b16 %v1034, %v1033
    %v1049 = vpack.c.b16 %v1036, %v1035
    %v1050 = vpack.c.b16 %v1038, %v1037
    %v1051 = vpack.c.b16 %v1040, %v1039
    %v1052 = vpack.c.b16 %v1042, %v1041
    %v1053 = vpack.c.b16 %v1044, %v1043
    %v1054 = vpack.c.b16 %v1046, %v1045
    %1063 = vmatprep.subr.bf16.mxu0 0
    %1064 = vmatpush1.bf16.msra.mxu0 %v1047
    %1065 = vmatprep.subr.bf16.mxu0 0
    %1066 = vmatpush1.bf16.msra.mxu0 %v1048
    %1067 = vmatprep.subr.bf16.mxu0 0
    %1068 = vmatpush1.bf16.msra.mxu0 %v1049
    %1069 = vmatprep.subr.bf16.mxu0 0
    %1070 = vmatpush1.bf16.msra.mxu0 %v1050
    %1071 = vmatprep.subr.bf16.mxu0 0
    %1072 = vmatpush1.bf16.msra.mxu0 %v1051
    %1073 = vmatprep.subr.bf16.mxu0 0
    %1074 = vmatpush1.bf16.msra.mxu0 %v1052
    %1075 = vmatprep.subr.bf16.mxu0 0
    %1076 = vmatpush1.bf16.msra.mxu0 %v1053
    %1077 = vmatprep.subr.bf16.mxu0 0
    %1078 = vmatpush1.bf16.msra.mxu0 %v1054
    %1079 = vmatprep.subr.bf16.mxu0 0
    %1080 = vmatpush1.bf16.msra.mxu0 0
    %1081 = vmatprep.subr.bf16.mxu0 0
    %1082 = vmatpush1.bf16.msra.mxu0 0
    %1083 = vmatprep.subr.bf16.mxu0 0
    %1084 = vmatpush1.bf16.msra.mxu0 0
    %1085 = vmatprep.subr.bf16.mxu0 0
    %1086 = vmatpush1.bf16.msra.mxu0 0
    %1087 = vmatprep.subr.bf16.mxu0 0
    %1088 = vmatpush1.bf16.msra.mxu0 0
    %1089 = vmatprep.subr.bf16.mxu0 0
    %1090 = vmatpush1.bf16.msra.mxu0 0
    %1091 = vmatprep.subr.bf16.mxu0 0
    %1092 = vmatpush1.bf16.msra.mxu0 0
    %1093 = vmatprep.subr.bf16.mxu0 0
    %1094 = vmatpush1.bf16.msra.mxu0 0
    %1095 = vmatprep.mubr.bf16.mxu0 0
    %1096 = vmatmul.mubr.bf16.gmra.mrb[0].mxu0 %v951
    %v1097 = vpop.f32.mrb[0].mxu0
    %v1098 = vadd.f32 %v569, %v1097
    %v1099 = vpop.f32.mrb[0].mxu0
    %v1100 = vpop.f32.mrb[0].mxu0
    %v1101 = vadd.f32 %v572, %v1100
    %v1102 = vpop.f32.mrb[0].mxu0
    %1103 = vmatprep.mubr.bf16.mxu0 0
    %1104 = vmatmul.mubr.bf16.gmra.mrb[0].mxu0 %v952
    %v1105 = vpop.f32.mrb[0].mxu0
    %v1106 = vadd.f32 %v577, %v1105
    %v1107 = vpop.f32.mrb[0].mxu0
    %v1108 = vpop.f32.mrb[0].mxu0
    %v1109 = vadd.f32 %v580, %v1108
    %v1110 = vpop.f32.mrb[0].mxu0
    %1111 = vmatprep.mubr.bf16.mxu0 0
    %1112 = vmatmul.mubr.bf16.gmra.mrb[0].mxu0 %v953
    %v1113 = vpop.f32.mrb[0].mxu0
    %v1114 = vadd.f32 %v585, %v1113
    %v1115 = vpop.f32.mrb[0].mxu0
    %v1116 = vpop.f32.mrb[0].mxu0
    %v1117 = vadd.f32 %v588, %v1116
    %v1118 = vpop.f32.mrb[0].mxu0
    %1119 = vmatprep.mubr.bf16.mxu0 0
    %1120 = vmatmul.mubr.bf16.gmra.mrb[0].mxu0 %v954
    %v1121 = vpop.f32.mrb[0].mxu0
    %v1122 = vadd.f32 %v593, %v1121
    %v1123 = vpop.f32.mrb[0].mxu0
    %v1124 = vpop.f32.mrb[0].mxu0
    %v1125 = vadd.f32 %v596, %v1124
    %v1126 = vpop.f32.mrb[0].mxu0
    %1127 = vmatprep.mubr.bf16.mxu0 0
    %1128 = vmatmul.mubr.bf16.gmra.mrb[0].mxu0 %v955
    %v1129 = vpop.f32.mrb[0].mxu0
    %v1130 = vadd.f32 %v601, %v1129
    %v1131 = vpop.f32.mrb[0].mxu0
    %v1132 = vpop.f32.mrb[0].mxu0
    %v1133 = vadd.f32 %v604, %v1132
    %v1134 = vpop.f32.mrb[0].mxu0
    %1135 = vmatprep.mubr.bf16.mxu0 0
    %1136 = vmatmul.mubr.bf16.gmra.mrb[0].mxu0 %v956
    %v1137 = vpop.f32.mrb[0].mxu0
    %v1138 = vadd.f32 %v609, %v1137
    %v1139 = vpop.f32.mrb[0].mxu0
    %v1140 = vpop.f32.mrb[0].mxu0
    %v1141 = vadd.f32 %v612, %v1140
    %v1142 = vpop.f32.mrb[0].mxu0
    %1143 = vmatprep.mubr.bf16.mxu0 0
    %1144 = vmatmul.mubr.bf16.gmra.mrb[0].mxu0 %v957
    %v1145 = vpop.f32.mrb[0].mxu0
    %v1146 = vadd.f32 %v617, %v1145
    %v1147 = vpop.f32.mrb[0].mxu0
    %v1148 = vpop.f32.mrb[0].mxu0
    %v1149 = vadd.f32 %v620, %v1148
    %v1150 = vpop.f32.mrb[0].mxu0
    %1151 = vmatprep.mubr.bf16.mxu0 0
    %1152 = vmatmul.mubr.bf16.gmra.mrb[0].mxu0 %v958
    %v1153 = vpop.f32.mrb[0].mxu0
    %v1154 = vadd.f32 %v625, %v1153
    %v1155 = vpop.f32.mrb[0].mxu0
    %v1156 = vpop.f32.mrb[0].mxu0
    %v1157 = vadd.f32 %v628, %v1156
    %v1158 = vpop.f32.mrb[0].mxu0
    %1159 = vmatprep.mubr.bf16.mxu0 0
    %1160 = vmatmul.mubr.bf16.gmra.mrb[0].mxu0 %v959
    %v1161 = vpop.f32.mrb[0].mxu0
    %v1162 = vadd.f32 %v633, %v1161
    %v1163 = vpop.f32.mrb[0].mxu0
    %v1164 = vpop.f32.mrb[0].mxu0
    %v1165 = vadd.f32 %v636, %v1164
    %v1166 = vpop.f32.mrb[0].mxu0
    %1167 = vmatprep.mubr.bf16.mxu0 0
    %1168 = vmatmul.mubr.bf16.gmra.mrb[0].mxu0 %v960
    %v1169 = vpop.f32.mrb[0].mxu0
    %v1170 = vadd.f32 %v641, %v1169
    %v1171 = vpop.f32.mrb[0].mxu0
    %v1172 = vpop.f32.mrb[0].mxu0
    %v1173 = vadd.f32 %v644, %v1172
    %v1174 = vpop.f32.mrb[0].mxu0
    %1175 = vmatprep.mubr.bf16.mxu0 0
    %1176 = vmatmul.mubr.bf16.gmra.mrb[0].mxu0 %v961
    %v1177 = vpop.f32.mrb[0].mxu0
    %v1178 = vadd.f32 %v649, %v1177
    %v1179 = vpop.f32.mrb[0].mxu0
    %v1180 = vpop.f32.mrb[0].mxu0
    %v1181 = vadd.f32 %v652, %v1180
    %v1182 = vpop.f32.mrb[0].mxu0
    %1183 = vmatprep.mubr.bf16.mxu0 0
    %1184 = vmatmul.mubr.bf16.gmra.mrb[0].mxu0 %v962
    %v1185 = vpop.f32.mrb[0].mxu0
    %v1186 = vadd.f32 %v657, %v1185
    %v1187 = vpop.f32.mrb[0].mxu0
    %v1188 = vpop.f32.mrb[0].mxu0
    %v1189 = vadd.f32 %v660, %v1188
    %v1190 = vpop.f32.mrb[0].mxu0
    %1191 = vmatprep.mubr.bf16.mxu0 0
    %1192 = vmatmul.mubr.bf16.gmra.mrb[0].mxu0 %v963
    %v1193 = vpop.f32.mrb[0].mxu0
    %v1194 = vadd.f32 %v665, %v1193
    %v1195 = vpop.f32.mrb[0].mxu0
    %v1196 = vpop.f32.mrb[0].mxu0
    %v1197 = vadd.f32 %v668, %v1196
    %v1198 = vpop.f32.mrb[0].mxu0
    %1199 = vmatprep.mubr.bf16.mxu0 0
    %1200 = vmatmul.mubr.bf16.gmra.mrb[0].mxu0 %v964
    %v1201 = vpop.f32.mrb[0].mxu0
    %v1202 = vadd.f32 %v673, %v1201
    %v1203 = vpop.f32.mrb[0].mxu0
    %v1204 = vpop.f32.mrb[0].mxu0
    %v1205 = vadd.f32 %v676, %v1204
    %v1206 = vpop.f32.mrb[0].mxu0
    %1207 = vmatprep.mubr.bf16.mxu0 0
    %1208 = vmatmul.mubr.bf16.gmra.mrb[0].mxu0 %v965
    %v1209 = vpop.f32.mrb[0].mxu0
    %v1210 = vadd.f32 %v681, %v1209
    %v1211 = vpop.f32.mrb[0].mxu0
    %v1212 = vpop.f32.mrb[0].mxu0
    %v1213 = vadd.f32 %v684, %v1212
    %v1214 = vpop.f32.mrb[0].mxu0
    %1215 = vmatprep.mubr.bf16.mxu0 0
    %1216 = vmatmul.mubr.bf16.gmra.mrb[0].mxu0 %v966
    %v1217 = vpop.f32.mrb[0].mxu0
    %v1218 = vadd.f32 %v689, %v1217
    %v1219 = vpop.f32.mrb[0].mxu0
    %v1220 = vpop.f32.mrb[0].mxu0
    %v1221 = vadd.f32 %v692, %v1220
    %v1222 = vpop.f32.mrb[0].mxu0
    %1223 = vmatprep.mubr.bf16.mxu0 0
    %1224 = vmatmul.mubr.bf16.gmra.mrb[0].mxu0 %v967
    %v1225 = vpop.f32.mrb[0].mxu0
    %v1226 = vadd.f32 %v697, %v1225
    %v1227 = vpop.f32.mrb[0].mxu0
    %v1228 = vpop.f32.mrb[0].mxu0
    %v1229 = vadd.f32 %v700, %v1228
    %v1230 = vpop.f32.mrb[0].mxu0
    %1231 = vmatprep.mubr.bf16.mxu0 0
    %1232 = vmatmul.mubr.bf16.gmra.mrb[0].mxu0 %v968
    %v1233 = vpop.f32.mrb[0].mxu0
    %v1234 = vadd.f32 %v705, %v1233
    %v1235 = vpop.f32.mrb[0].mxu0
    %v1236 = vpop.f32.mrb[0].mxu0
    %v1237 = vadd.f32 %v708, %v1236
    %v1238 = vpop.f32.mrb[0].mxu0
    %1239 = vmatprep.mubr.bf16.mxu0 0
    %1240 = vmatmul.mubr.bf16.gmra.mrb[0].mxu0 %v969
    %v1241 = vpop.f32.mrb[0].mxu0
    %v1242 = vadd.f32 %v713, %v1241
    %v1243 = vpop.f32.mrb[0].mxu0
    %v1244 = vpop.f32.mrb[0].mxu0
    %v1245 = vadd.f32 %v716, %v1244
    %v1246 = vpop.f32.mrb[0].mxu0
    %1247 = vmatprep.mubr.bf16.mxu0 0
    %1248 = vmatmul.mubr.bf16.gmra.mrb[0].mxu0 %v970
    %v1249 = vpop.f32.mrb[0].mxu0
    %v1250 = vadd.f32 %v721, %v1249
    %v1251 = vpop.f32.mrb[0].mxu0
    %v1252 = vpop.f32.mrb[0].mxu0
    %v1253 = vadd.f32 %v724, %v1252
    %v1254 = vpop.f32.mrb[0].mxu0
    %1255 = vmatprep.mubr.bf16.mxu0 0
    %1256 = vmatmul.mubr.bf16.gmra.mrb[0].mxu0 %v971
    %v1257 = vpop.f32.mrb[0].mxu0
    %v1258 = vadd.f32 %v729, %v1257
    %v1259 = vpop.f32.mrb[0].mxu0
    %v1260 = vpop.f32.mrb[0].mxu0
    %v1261 = vadd.f32 %v732, %v1260
    %v1262 = vpop.f32.mrb[0].mxu0
    %1263 = vmatprep.mubr.bf16.mxu0 0
    %1264 = vmatmul.mubr.bf16.gmra.mrb[0].mxu0 %v972
    %v1265 = vpop.f32.mrb[0].mxu0
    %v1266 = vadd.f32 %v737, %v1265
    %v1267 = vpop.f32.mrb[0].mxu0
    %v1268 = vpop.f32.mrb[0].mxu0
    %v1269 = vadd.f32 %v740, %v1268
    %v1270 = vpop.f32.mrb[0].mxu0
    %1271 = vmatprep.mubr.bf16.mxu0 0
    %1272 = vmatmul.mubr.bf16.gmra.mrb[0].mxu0 %v973
    %v1273 = vpop.f32.mrb[0].mxu0
    %v1274 = vadd.f32 %v745, %v1273
    %v1275 = vpop.f32.mrb[0].mxu0
    %v1276 = vpop.f32.mrb[0].mxu0
    %v1277 = vadd.f32 %v748, %v1276
    %v1278 = vpop.f32.mrb[0].mxu0
    %1279 = vmatprep.mubr.bf16.mxu0 0
    %1280 = vmatmul.mubr.bf16.gmra.mrb[0].mxu0 %v974
    %v1281 = vpop.f32.mrb[0].mxu0
    %v1282 = vadd.f32 %v753, %v1281
    %v1283 = vpop.f32.mrb[0].mxu0
    %v1284 = vpop.f32.mrb[0].mxu0
    %v1285 = vadd.f32 %v756, %v1284
    %v1286 = vpop.f32.mrb[0].mxu0
    %1287 = vmatprep.mubr.bf16.mxu0 0
    %1288 = vmatmul.mubr.bf16.gmra.mrb[0].mxu0 %v975
    %v1289 = vpop.f32.mrb[0].mxu0
    %v1290 = vadd.f32 %v761, %v1289
    %v1291 = vpop.f32.mrb[0].mxu0
    %v1292 = vpop.f32.mrb[0].mxu0
    %v1293 = vadd.f32 %v764, %v1292
    %v1294 = vpop.f32.mrb[0].mxu0
    %1295 = vmatprep.mubr.bf16.mxu0 0
    %1296 = vmatmul.mubr.bf16.gmra.mrb[0].mxu0 %v976
    %v1297 = vpop.f32.mrb[0].mxu0
    %v1298 = vadd.f32 %v769, %v1297
    %v1299 = vpop.f32.mrb[0].mxu0
    %v1300 = vpop.f32.mrb[0].mxu0
    %v1301 = vadd.f32 %v772, %v1300
    %v1302 = vpop.f32.mrb[0].mxu0
    %1303 = vmatprep.mubr.bf16.mxu0 0
    %1304 = vmatmul.mubr.bf16.gmra.mrb[0].mxu0 %v977
    %v1305 = vpop.f32.mrb[0].mxu0
    %v1306 = vadd.f32 %v777, %v1305
    %v1307 = vpop.f32.mrb[0].mxu0
    %v1308 = vpop.f32.mrb[0].mxu0
    %v1309 = vadd.f32 %v780, %v1308
    %v1310 = vpop.f32.mrb[0].mxu0
    %1311 = vmatprep.mubr.bf16.mxu0 0
    %1312 = vmatmul.mubr.bf16.gmra.mrb[0].mxu0 %v978
    %v1313 = vpop.f32.mrb[0].mxu0
    %v1314 = vadd.f32 %v785, %v1313
    %v1315 = vpop.f32.mrb[0].mxu0
    %v1316 = vpop.f32.mrb[0].mxu0
    %v1317 = vadd.f32 %v788, %v1316
    %v1318 = vpop.f32.mrb[0].mxu0
    %1319 = vmatprep.mubr.bf16.mxu0 0
    %1320 = vmatmul.mubr.bf16.gmra.mrb[0].mxu0 %v979
    %v1321 = vpop.f32.mrb[0].mxu0
    %v1322 = vadd.f32 %v793, %v1321
    %v1323 = vpop.f32.mrb[0].mxu0
    %v1324 = vpop.f32.mrb[0].mxu0
    %v1325 = vadd.f32 %v796, %v1324
    %v1326 = vpop.f32.mrb[0].mxu0
    %1327 = vmatprep.mubr.bf16.mxu0 0
    %1328 = vmatmul.mubr.bf16.gmra.mrb[0].mxu0 %v980
    %v1329 = vpop.f32.mrb[0].mxu0
    %v1330 = vadd.f32 %v801, %v1329
    %v1331 = vpop.f32.mrb[0].mxu0
    %v1332 = vpop.f32.mrb[0].mxu0
    %v1333 = vadd.f32 %v804, %v1332
    %v1334 = vpop.f32.mrb[0].mxu0
    %1335 = vmatprep.mubr.bf16.mxu0 0
    %1336 = vmatmul.mubr.bf16.gmra.mrb[0].mxu0 %v981
    %v1337 = vpop.f32.mrb[0].mxu0
    %v1338 = vadd.f32 %v809, %v1337
    %v1339 = vpop.f32.mrb[0].mxu0
    %v1340 = vpop.f32.mrb[0].mxu0
    %v1341 = vadd.f32 %v812, %v1340
    %v1342 = vpop.f32.mrb[0].mxu0
    %1343 = vmatprep.mubr.bf16.mxu0 0
    %1344 = vmatmul.mubr.bf16.gmra.mrb[0].mxu0 %v982
    %v1345 = vpop.f32.mrb[0].mxu0
    %v1346 = vadd.f32 %v817, %v1345
    %v1347 = vpop.f32.mrb[0].mxu0
    %v1348 = vpop.f32.mrb[0].mxu0
    %v1349 = vadd.f32 %v820, %v1348
    %v1350 = vpop.f32.mrb[0].mxu0
    %1351 = vdwg.mxu0
    %s1352 = scalar_lea.vmem [#allocation3], 512
    %v1353 = vld [vmem:[%s1352] sm:$0xf]
    %v1354 = vld [vmem:[%s1352 + $0x4] sm:$0xf]
    %v1355 = vld [vmem:[%s1352 + $0x8] sm:$0xf]
    %v1356 = vld [vmem:[%s1352 + $0xc] sm:$0xf]
    %v1357 = vld [vmem:[%s1352 + $0x10] sm:$0xf]
    %v1358 = vld [vmem:[%s1352 + $0x14] sm:$0xf]
    %v1359 = vld [vmem:[%s1352 + $0x18] sm:$0xf]
    %v1360 = vld [vmem:[%s1352 + $0x1c] sm:$0xf]
    %v1361 = vld [vmem:[%s1352 + $0x20] sm:$0xf]
    %v1362 = vld [vmem:[%s1352 + $0x24] sm:$0xf]
    %v1363 = vld [vmem:[%s1352 + $0x28] sm:$0xf]
    %v1364 = vld [vmem:[%s1352 + $0x2c] sm:$0xf]
    %v1365 = vld [vmem:[%s1352 + $0x30] sm:$0xf]
    %v1366 = vld [vmem:[%s1352 + $0x34] sm:$0xf]
    %v1367 = vld [vmem:[%s1352 + $0x38] sm:$0xf]
    %v1368 = vld [vmem:[%s1352 + $0x3c] sm:$0xf]
    %v1369 = vld [vmem:[%s1352 + $0x40] sm:$0xf]
    %v1370 = vld [vmem:[%s1352 + $0x44] sm:$0xf]
    %v1371 = vld [vmem:[%s1352 + $0x48] sm:$0xf]
    %v1372 = vld [vmem:[%s1352 + $0x4c] sm:$0xf]
    %v1373 = vld [vmem:[%s1352 + $0x50] sm:$0xf]
    %v1374 = vld [vmem:[%s1352 + $0x54] sm:$0xf]
    %v1375 = vld [vmem:[%s1352 + $0x58] sm:$0xf]
    %v1376 = vld [vmem:[%s1352 + $0x5c] sm:$0xf]
    %v1377 = vld [vmem:[%s1352 + $0x60] sm:$0xf]
    %v1378 = vld [vmem:[%s1352 + $0x64] sm:$0xf]
    %v1379 = vld [vmem:[%s1352 + $0x68] sm:$0xf]
    %v1380 = vld [vmem:[%s1352 + $0x6c] sm:$0xf]
    %v1381 = vld [vmem:[%s1352 + $0x70] sm:$0xf]
    %v1382 = vld [vmem:[%s1352 + $0x74] sm:$0xf]
    %v1383 = vld [vmem:[%s1352 + $0x78] sm:$0xf]
    %v1384 = vld [vmem:[%s1352 + $0x7c] sm:$0xf]
    %v1385 = vld [vmem:[%s1352 + $0x80] sm:$0xf]
    %v1386 = vld [vmem:[%s1352 + $0x84] sm:$0xf]
    %v1387 = vld [vmem:[%s1352 + $0x88] sm:$0xf]
    %v1388 = vld [vmem:[%s1352 + $0x8c] sm:$0xf]
    %v1389 = vld [vmem:[%s1352 + $0x90] sm:$0xf]
    %v1390 = vld [vmem:[%s1352 + $0x94] sm:$0xf]
    %v1391 = vld [vmem:[%s1352 + $0x98] sm:$0xf]
    %v1392 = vld [vmem:[%s1352 + $0x9c] sm:$0xf]
    %v1393 = vld [vmem:[%s1352 + $0xa0] sm:$0xf]
    %v1394 = vld [vmem:[%s1352 + $0xa4] sm:$0xf]
    %v1395 = vld [vmem:[%s1352 + $0xa8] sm:$0xf]
    %v1396 = vld [vmem:[%s1352 + $0xac] sm:$0xf]
    %v1397 = vld [vmem:[%s1352 + $0xb0] sm:$0xf]
    %v1398 = vld [vmem:[%s1352 + $0xb4] sm:$0xf]
    %v1399 = vld [vmem:[%s1352 + $0xb8] sm:$0xf]
    %v1400 = vld [vmem:[%s1352 + $0xbc] sm:$0xf]
    %v1401 = vld [vmem:[%s1352 + $0xc0] sm:$0xf]
    %v1402 = vld [vmem:[%s1352 + $0xc4] sm:$0xf]
    %v1403 = vld [vmem:[%s1352 + $0xc8] sm:$0xf]
    %v1404 = vld [vmem:[%s1352 + $0xcc] sm:$0xf]
    %v1405 = vld [vmem:[%s1352 + $0xd0] sm:$0xf]
    %v1406 = vld [vmem:[%s1352 + $0xd4] sm:$0xf]
    %v1407 = vld [vmem:[%s1352 + $0xd8] sm:$0xf]
    %v1408 = vld [vmem:[%s1352 + $0xdc] sm:$0xf]
    %v1409 = vld [vmem:[%s1352 + $0xe0] sm:$0xf]
    %v1410 = vld [vmem:[%s1352 + $0xe4] sm:$0xf]
    %v1411 = vld [vmem:[%s1352 + $0xe8] sm:$0xf]
    %v1412 = vld [vmem:[%s1352 + $0xec] sm:$0xf]
    %v1413 = vld [vmem:[%s1352 + $0xf0] sm:$0xf]
    %v1414 = vld [vmem:[%s1352 + $0xf4] sm:$0xf]
    %v1415 = vld [vmem:[%s1352 + $0xf8] sm:$0xf]
    %v1416 = vld [vmem:[%s1352 + $0xfc] sm:$0xf]
    %s1417 = scalar_lea.vmem [#allocation6], 128
    %v1418 = vld [vmem:[%s1417] sm:$0xf]
    %v1419 = vld [vmem:[%s1417 + $0x4] sm:$0xf]
    %v1420 = vld [vmem:[%s1417 + $0x8] sm:$0xf]
    %v1421 = vld [vmem:[%s1417 + $0xc] sm:$0xf]
    %v1422 = vld [vmem:[%s1417 + $0x10] sm:$0xf]
    %v1423 = vld [vmem:[%s1417 + $0x14] sm:$0xf]
    %v1424 = vld [vmem:[%s1417 + $0x18] sm:$0xf]
    %v1425 = vld [vmem:[%s1417 + $0x1c] sm:$0xf]
    %v1426 = vld [vmem:[%s1417 + $0x20] sm:$0xf]
    %v1427 = vld [vmem:[%s1417 + $0x24] sm:$0xf]
    %v1428 = vld [vmem:[%s1417 + $0x28] sm:$0xf]
    %v1429 = vld [vmem:[%s1417 + $0x2c] sm:$0xf]
    %v1430 = vld [vmem:[%s1417 + $0x30] sm:$0xf]
    %v1431 = vld [vmem:[%s1417 + $0x34] sm:$0xf]
    %v1432 = vld [vmem:[%s1417 + $0x38] sm:$0xf]
    %v1433 = vld [vmem:[%s1417 + $0x3c] sm:$0xf]
    %v1498 = vunpack.c.l.b16 %v1353
    %v1499 = vunpack.c.l.b16 %v1354
    %v1500 = vunpack.c.l.b16 %v1355
    %v1501 = vunpack.c.l.b16 %v1356
    %v1502 = vunpack.c.l.b16 %v1357
    %v1503 = vunpack.c.l.b16 %v1358
    %v1504 = vunpack.c.l.b16 %v1359
    %v1505 = vunpack.c.l.b16 %v1360
    %v1506 = vunpack.c.l.b16 %v1361
    %v1507 = vunpack.c.l.b16 %v1362
    %v1508 = vunpack.c.l.b16 %v1363
    %v1509 = vunpack.c.l.b16 %v1364
    %v1510 = vunpack.c.l.b16 %v1365
    %v1511 = vunpack.c.l.b16 %v1366
    %v1512 = vunpack.c.l.b16 %v1367
    %v1513 = vunpack.c.l.b16 %v1368
    %v1514 = vunpack.c.l.b16 %v1369
    %v1515 = vunpack.c.l.b16 %v1370
    %v1516 = vunpack.c.l.b16 %v1371
    %v1517 = vunpack.c.l.b16 %v1372
    %v1518 = vunpack.c.l.b16 %v1373
    %v1519 = vunpack.c.l.b16 %v1374
    %v1520 = vunpack.c.l.b16 %v1375
    %v1521 = vunpack.c.l.b16 %v1376
    %v1522 = vunpack.c.l.b16 %v1377
    %v1523 = vunpack.c.l.b16 %v1378
    %v1524 = vunpack.c.l.b16 %v1379
    %v1525 = vunpack.c.l.b16 %v1380
    %v1526 = vunpack.c.l.b16 %v1381
    %v1527 = vunpack.c.l.b16 %v1382
    %v1528 = vunpack.c.l.b16 %v1383
    %v1529 = vunpack.c.l.b16 %v1384
    %v1530 = vunpack.c.l.b16 %v1385
    %v1531 = vunpack.c.l.b16 %v1386
    %v1532 = vunpack.c.l.b16 %v1387
    %v1533 = vunpack.c.l.b16 %v1388
    %v1534 = vunpack.c.l.b16 %v1389
    %v1535 = vunpack.c.l.b16 %v1390
    %v1536 = vunpack.c.l.b16 %v1391
    %v1537 = vunpack.c.l.b16 %v1392
    %v1538 = vunpack.c.l.b16 %v1393
    %v1539 = vunpack.c.l.b16 %v1394
    %v1540 = vunpack.c.l.b16 %v1395
    %v1541 = vunpack.c.l.b16 %v1396
    %v1542 = vunpack.c.l.b16 %v1397
    %v1543 = vunpack.c.l.b16 %v1398
    %v1544 = vunpack.c.l.b16 %v1399
    %v1545 = vunpack.c.l.b16 %v1400
    %v1546 = vunpack.c.l.b16 %v1401
    %v1547 = vunpack.c.l.b16 %v1402
    %v1548 = vunpack.c.l.b16 %v1403
    %v1549 = vunpack.c.l.b16 %v1404
    %v1550 = vunpack.c.l.b16 %v1405
    %v1551 = vunpack.c.l.b16 %v1406
    %v1552 = vunpack.c.l.b16 %v1407
    %v1553 = vunpack.c.l.b16 %v1408
    %v1554 = vunpack.c.l.b16 %v1409
    %v1555 = vunpack.c.l.b16 %v1410
    %v1556 = vunpack.c.l.b16 %v1411
    %v1557 = vunpack.c.l.b16 %v1412
    %v1558 = vunpack.c.l.b16 %v1413
    %v1559 = vunpack.c.l.b16 %v1414
    %v1560 = vunpack.c.l.b16 %v1415
    %v1561 = vunpack.c.l.b16 %v1416
    %v1562 = vpack.c.b16 %v1499, %v1498
    %v1563 = vpack.c.b16 %v1501, %v1500
    %v1564 = vpack.c.b16 %v1503, %v1502
    %v1565 = vpack.c.b16 %v1505, %v1504
    %v1566 = vpack.c.b16 %v1507, %v1506
    %v1567 = vpack.c.b16 %v1509, %v1508
    %v1568 = vpack.c.b16 %v1511, %v1510
    %v1569 = vpack.c.b16 %v1513, %v1512
    %v1570 = vpack.c.b16 %v1515, %v1514
    %v1571 = vpack.c.b16 %v1517, %v1516
    %v1572 = vpack.c.b16 %v1519, %v1518
    %v1573 = vpack.c.b16 %v1521, %v1520
    %v1574 = vpack.c.b16 %v1523, %v1522
    %v1575 = vpack.c.b16 %v1525, %v1524
    %v1576 = vpack.c.b16 %v1527, %v1526
    %v1577 = vpack.c.b16 %v1529, %v1528
    %v1578 = vpack.c.b16 %v1531, %v1530
    %v1579 = vpack.c.b16 %v1533, %v1532
    %v1580 = vpack.c.b16 %v1535, %v1534
    %v1581 = vpack.c.b16 %v1537, %v1536
    %v1582 = vpack.c.b16 %v1539, %v1538
    %v1583 = vpack.c.b16 %v1541, %v1540
    %v1584 = vpack.c.b16 %v1543, %v1542
    %v1585 = vpack.c.b16 %v1545, %v1544
    %v1586 = vpack.c.b16 %v1547, %v1546
    %v1587 = vpack.c.b16 %v1549, %v1548
    %v1588 = vpack.c.b16 %v1551, %v1550
    %v1589 = vpack.c.b16 %v1553, %v1552
    %v1590 = vpack.c.b16 %v1555, %v1554
    %v1591 = vpack.c.b16 %v1557, %v1556
    %v1592 = vpack.c.b16 %v1559, %v1558
    %v1593 = vpack.c.b16 %v1561, %v1560
    %v1642 = vunpack.c.l.b16 %v1418
    %v1643 = vunpack.c.l.b16 %v1419
    %v1644 = vunpack.c.l.b16 %v1420
    %v1645 = vunpack.c.l.b16 %v1421
    %v1646 = vunpack.c.l.b16 %v1422
    %v1647 = vunpack.c.l.b16 %v1423
    %v1648 = vunpack.c.l.b16 %v1424
    %v1649 = vunpack.c.l.b16 %v1425
    %v1650 = vunpack.c.l.b16 %v1426
    %v1651 = vunpack.c.l.b16 %v1427
    %v1652 = vunpack.c.l.b16 %v1428
    %v1653 = vunpack.c.l.b16 %v1429
    %v1654 = vunpack.c.l.b16 %v1430
    %v1655 = vunpack.c.l.b16 %v1431
    %v1656 = vunpack.c.l.b16 %v1432
    %v1657 = vunpack.c.l.b16 %v1433
    %v1658 = vpack.c.b16 %v1643, %v1642
    %v1659 = vpack.c.b16 %v1645, %v1644
    %v1660 = vpack.c.b16 %v1647, %v1646
    %v1661 = vpack.c.b16 %v1649, %v1648
    %v1662 = vpack.c.b16 %v1651, %v1650
    %v1663 = vpack.c.b16 %v1653, %v1652
    %v1664 = vpack.c.b16 %v1655, %v1654
    %v1665 = vpack.c.b16 %v1657, %v1656
    %1674 = vmatprep.subr.bf16.mxu0 0
    %1675 = vmatpush1.bf16.msra.mxu0 %v1658
    %1676 = vmatprep.subr.bf16.mxu0 0
    %1677 = vmatpush1.bf16.msra.mxu0 %v1659
    %1678 = vmatprep.subr.bf16.mxu0 0
    %1679 = vmatpush1.bf16.msra.mxu0 %v1660
    %1680 = vmatprep.subr.bf16.mxu0 0
    %1681 = vmatpush1.bf16.msra.mxu0 %v1661
    %1682 = vmatprep.subr.bf16.mxu0 0
    %1683 = vmatpush1.bf16.msra.mxu0 %v1662
    %1684 = vmatprep.subr.bf16.mxu0 0
    %1685 = vmatpush1.bf16.msra.mxu0 %v1663
    %1686 = vmatprep.subr.bf16.mxu0 0
    %1687 = vmatpush1.bf16.msra.mxu0 %v1664
    %1688 = vmatprep.subr.bf16.mxu0 0
    %1689 = vmatpush1.bf16.msra.mxu0 %v1665
    %1690 = vmatprep.subr.bf16.mxu0 0
    %1691 = vmatpush1.bf16.msra.mxu0 0
    %1692 = vmatprep.subr.bf16.mxu0 0
    %1693 = vmatpush1.bf16.msra.mxu0 0
    %1694 = vmatprep.subr.bf16.mxu0 0
    %1695 = vmatpush1.bf16.msra.mxu0 0
    %1696 = vmatprep.subr.bf16.mxu0 0
    %1697 = vmatpush1.bf16.msra.mxu0 0
    %1698 = vmatprep.subr.bf16.mxu0 0
    %1699 = vmatpush1.bf16.msra.mxu0 0
    %1700 = vmatprep.subr.bf16.mxu0 0
    %1701 = vmatpush1.bf16.msra.mxu0 0
    %1702 = vmatprep.subr.bf16.mxu0 0
    %1703 = vmatpush1.bf16.msra.mxu0 0
    %1704 = vmatprep.subr.bf16.mxu0 0
    %1705 = vmatpush1.bf16.msra.mxu0 0
    %1706 = vmatprep.mubr.bf16.mxu0 0
    %1707 = vmatmul.mubr.bf16.gmra.mrb[0].mxu0 %v1562
    %v1708 = vpop.f32.mrb[0].mxu0
    %v1709 = vadd.f32 0.0, %v1708
    %v1710 = vpop.f32.mrb[0].mxu0
    %v1711 = vpop.f32.mrb[0].mxu0
    %v1712 = vadd.f32 0.0, %v1711
    %v1713 = vpop.f32.mrb[0].mxu0
    %1714 = vmatprep.mubr.bf16.mxu0 0
    %1715 = vmatmul.mubr.bf16.gmra.mrb[0].mxu0 %v1563
    %v1716 = vpop.f32.mrb[0].mxu0
    %v1717 = vadd.f32 0.0, %v1716
    %v1718 = vpop.f32.mrb[0].mxu0
    %v1719 = vpop.f32.mrb[0].mxu0
    %v1720 = vadd.f32 0.0, %v1719
    %v1721 = vpop.f32.mrb[0].mxu0
    %1722 = vmatprep.mubr.bf16.mxu0 0
    %1723 = vmatmul.mubr.bf16.gmra.mrb[0].mxu0 %v1564
    %v1724 = vpop.f32.mrb[0].mxu0
    %v1725 = vadd.f32 0.0, %v1724
    %v1726 = vpop.f32.mrb[0].mxu0
    %v1727 = vpop.f32.mrb[0].mxu0
    %v1728 = vadd.f32 0.0, %v1727
    %v1729 = vpop.f32.mrb[0].mxu0
    %1730 = vmatprep.mubr.bf16.mxu0 0
    %1731 = vmatmul.mubr.bf16.gmra.mrb[0].mxu0 %v1565
    %v1732 = vpop.f32.mrb[0].mxu0
    %v1733 = vadd.f32 0.0, %v1732
    %v1734 = vpop.f32.mrb[0].mxu0
    %v1735 = vpop.f32.mrb[0].mxu0
    %v1736 = vadd.f32 0.0, %v1735
    %v1737 = vpop.f32.mrb[0].mxu0
    %1738 = vmatprep.mubr.bf16.mxu0 0
    %1739 = vmatmul.mubr.bf16.gmra.mrb[0].mxu0 %v1566
    %v1740 = vpop.f32.mrb[0].mxu0
    %v1741 = vadd.f32 0.0, %v1740
    %v1742 = vpop.f32.mrb[0].mxu0
    %v1743 = vpop.f32.mrb[0].mxu0
    %v1744 = vadd.f32 0.0, %v1743
    %v1745 = vpop.f32.mrb[0].mxu0
    %1746 = vmatprep.mubr.bf16.mxu0 0
    %1747 = vmatmul.mubr.bf16.gmra.mrb[0].mxu0 %v1567
    %v1748 = vpop.f32.mrb[0].mxu0
    %v1749 = vadd.f32 0.0, %v1748
    %v1750 = vpop.f32.mrb[0].mxu0
    %v1751 = vpop.f32.mrb[0].mxu0
    %v1752 = vadd.f32 0.0, %v1751
    %v1753 = vpop.f32.mrb[0].mxu0
    %1754 = vmatprep.mubr.bf16.mxu0 0
    %1755 = vmatmul.mubr.bf16.gmra.mrb[0].mxu0 %v1568
    %v1756 = vpop.f32.mrb[0].mxu0
    %v1757 = vadd.f32 0.0, %v1756
    %v1758 = vpop.f32.mrb[0].mxu0
    %v1759 = vpop.f32.mrb[0].mxu0
    %v1760 = vadd.f32 0.0, %v1759
    %v1761 = vpop.f32.mrb[0].mxu0
    %1762 = vmatprep.mubr.bf16.mxu0 0
    %1763 = vmatmul.mubr.bf16.gmra.mrb[0].mxu0 %v1569
    %v1764 = vpop.f32.mrb[0].mxu0
    %v1765 = vadd.f32 0.0, %v1764
    %v1766 = vpop.f32.mrb[0].mxu0
    %v1767 = vpop.f32.mrb[0].mxu0
    %v1768 = vadd.f32 0.0, %v1767
    %v1769 = vpop.f32.mrb[0].mxu0
    %1770 = vmatprep.mubr.bf16.mxu0 0
    %1771 = vmatmul.mubr.bf16.gmra.mrb[0].mxu0 %v1570
    %v1772 = vpop.f32.mrb[0].mxu0
    %v1773 = vadd.f32 0.0, %v1772
    %v1774 = vpop.f32.mrb[0].mxu0
    %v1775 = vpop.f32.mrb[0].mxu0
    %v1776 = vadd.f32 0.0, %v1775
    %v1777 = vpop.f32.mrb[0].mxu0
    %1778 = vmatprep.mubr.bf16.mxu0 0
    %1779 = vmatmul.mubr.bf16.gmra.mrb[0].mxu0 %v1571
    %v1780 = vpop.f32.mrb[0].mxu0
    %v1781 = vadd.f32 0.0, %v1780
    %v1782 = vpop.f32.mrb[0].mxu0
    %v1783 = vpop.f32.mrb[0].mxu0
    %v1784 = vadd.f32 0.0, %v1783
    %v1785 = vpop.f32.mrb[0].mxu0
    %1786 = vmatprep.mubr.bf16.mxu0 0
    %1787 = vmatmul.mubr.bf16.gmra.mrb[0].mxu0 %v1572
    %v1788 = vpop.f32.mrb[0].mxu0
    %v1789 = vadd.f32 0.0, %v1788
    %v1790 = vpop.f32.mrb[0].mxu0
    %v1791 = vpop.f32.mrb[0].mxu0
    %v1792 = vadd.f32 0.0, %v1791
    %v1793 = vpop.f32.mrb[0].mxu0
    %1794 = vmatprep.mubr.bf16.mxu0 0
    %1795 = vmatmul.mubr.bf16.gmra.mrb[0].mxu0 %v1573
    %v1796 = vpop.f32.mrb[0].mxu0
    %v1797 = vadd.f32 0.0, %v1796
    %v1798 = vpop.f32.mrb[0].mxu0
    %v1799 = vpop.f32.mrb[0].mxu0
    %v1800 = vadd.f32 0.0, %v1799
    %v1801 = vpop.f32.mrb[0].mxu0
    %1802 = vmatprep.mubr.bf16.mxu0 0
    %1803 = vmatmul.mubr.bf16.gmra.mrb[0].mxu0 %v1574
    %v1804 = vpop.f32.mrb[0].mxu0
    %v1805 = vadd.f32 0.0, %v1804
    %v1806 = vpop.f32.mrb[0].mxu0
    %v1807 = vpop.f32.mrb[0].mxu0
    %v1808 = vadd.f32 0.0, %v1807
    %v1809 = vpop.f32.mrb[0].mxu0
    %1810 = vmatprep.mubr.bf16.mxu0 0
    %1811 = vmatmul.mubr.bf16.gmra.mrb[0].mxu0 %v1575
    %v1812 = vpop.f32.mrb[0].mxu0
    %v1813 = vadd.f32 0.0, %v1812
    %v1814 = vpop.f32.mrb[0].mxu0
    %v1815 = vpop.f32.mrb[0].mxu0
    %v1816 = vadd.f32 0.0, %v1815
    %v1817 = vpop.f32.mrb[0].mxu0
    %1818 = vmatprep.mubr.bf16.mxu0 0
    %1819 = vmatmul.mubr.bf16.gmra.mrb[0].mxu0 %v1576
    %v1820 = vpop.f32.mrb[0].mxu0
    %v1821 = vadd.f32 0.0, %v1820
    %v1822 = vpop.f32.mrb[0].mxu0
    %v1823 = vpop.f32.mrb[0].mxu0
    %v1824 = vadd.f32 0.0, %v1823
    %v1825 = vpop.f32.mrb[0].mxu0
    %1826 = vmatprep.mubr.bf16.mxu0 0
    %1827 = vmatmul.mubr.bf16.gmra.mrb[0].mxu0 %v1577
    %v1828 = vpop.f32.mrb[0].mxu0
    %v1829 = vadd.f32 0.0, %v1828
    %v1830 = vpop.f32.mrb[0].mxu0
    %v1831 = vpop.f32.mrb[0].mxu0
    %v1832 = vadd.f32 0.0, %v1831
    %v1833 = vpop.f32.mrb[0].mxu0
    %1834 = vmatprep.mubr.bf16.mxu0 0
    %1835 = vmatmul.mubr.bf16.gmra.mrb[0].mxu0 %v1578
    %v1836 = vpop.f32.mrb[0].mxu0
    %v1837 = vadd.f32 0.0, %v1836
    %v1838 = vpop.f32.mrb[0].mxu0
    %v1839 = vpop.f32.mrb[0].mxu0
    %v1840 = vadd.f32 0.0, %v1839
    %v1841 = vpop.f32.mrb[0].mxu0
    %1842 = vmatprep.mubr.bf16.mxu0 0
    %1843 = vmatmul.mubr.bf16.gmra.mrb[0].mxu0 %v1579
    %v1844 = vpop.f32.mrb[0].mxu0
    %v1845 = vadd.f32 0.0, %v1844
    %v1846 = vpop.f32.mrb[0].mxu0
    %v1847 = vpop.f32.mrb[0].mxu0
    %v1848 = vadd.f32 0.0, %v1847
    %v1849 = vpop.f32.mrb[0].mxu0
    %1850 = vmatprep.mubr.bf16.mxu0 0
    %1851 = vmatmul.mubr.bf16.gmra.mrb[0].mxu0 %v1580
    %v1852 = vpop.f32.mrb[0].mxu0
    %v1853 = vadd.f32 0.0, %v1852
    %v1854 = vpop.f32.mrb[0].mxu0
    %v1855 = vpop.f32.mrb[0].mxu0
    %v1856 = vadd.f32 0.0, %v1855
    %v1857 = vpop.f32.mrb[0].mxu0
    %1858 = vmatprep.mubr.bf16.mxu0 0
    %1859 = vmatmul.mubr.bf16.gmra.mrb[0].mxu0 %v1581
    %v1860 = vpop.f32.mrb[0].mxu0
    %v1861 = vadd.f32 0.0, %v1860
    %v1862 = vpop.f32.mrb[0].mxu0
    %v1863 = vpop.f32.mrb[0].mxu0
    %v1864 = vadd.f32 0.0, %v1863
    %v1865 = vpop.f32.mrb[0].mxu0
    %1866 = vmatprep.mubr.bf16.mxu0 0
    %1867 = vmatmul.mubr.bf16.gmra.mrb[0].mxu0 %v1582
    %v1868 = vpop.f32.mrb[0].mxu0
    %v1869 = vadd.f32 0.0, %v1868
    %v1870 = vpop.f32.mrb[0].mxu0
    %v1871 = vpop.f32.mrb[0].mxu0
    %v1872 = vadd.f32 0.0, %v1871
    %v1873 = vpop.f32.mrb[0].mxu0
    %1874 = vmatprep.mubr.bf16.mxu0 0
    %1875 = vmatmul.mubr.bf16.gmra.mrb[0].mxu0 %v1583
    %v1876 = vpop.f32.mrb[0].mxu0
    %v1877 = vadd.f32 0.0, %v1876
    %v1878 = vpop.f32.mrb[0].mxu0
    %v1879 = vpop.f32.mrb[0].mxu0
    %v1880 = vadd.f32 0.0, %v1879
    %v1881 = vpop.f32.mrb[0].mxu0
    %1882 = vmatprep.mubr.bf16.mxu0 0
    %1883 = vmatmul.mubr.bf16.gmra.mrb[0].mxu0 %v1584
    %v1884 = vpop.f32.mrb[0].mxu0
    %v1885 = vadd.f32 0.0, %v1884
    %v1886 = vpop.f32.mrb[0].mxu0
    %v1887 = vpop.f32.mrb[0].mxu0
    %v1888 = vadd.f32 0.0, %v1887
    %v1889 = vpop.f32.mrb[0].mxu0
    %1890 = vmatprep.mubr.bf16.mxu0 0
    %1891 = vmatmul.mubr.bf16.gmra.mrb[0].mxu0 %v1585
    %v1892 = vpop.f32.mrb[0].mxu0
    %v1893 = vadd.f32 0.0, %v1892
    %v1894 = vpop.f32.mrb[0].mxu0
    %v1895 = vpop.f32.mrb[0].mxu0
    %v1896 = vadd.f32 0.0, %v1895
    %v1897 = vpop.f32.mrb[0].mxu0
    %1898 = vmatprep.mubr.bf16.mxu0 0
    %1899 = vmatmul.mubr.bf16.gmra.mrb[0].mxu0 %v1586
    %v1900 = vpop.f32.mrb[0].mxu0
    %v1901 = vadd.f32 0.0, %v1900
    %v1902 = vpop.f32.mrb[0].mxu0
    %v1903 = vpop.f32.mrb[0].mxu0
    %v1904 = vadd.f32 0.0, %v1903
    %v1905 = vpop.f32.mrb[0].mxu0
    %1906 = vmatprep.mubr.bf16.mxu0 0
    %1907 = vmatmul.mubr.bf16.gmra.mrb[0].mxu0 %v1587
    %v1908 = vpop.f32.mrb[0].mxu0
    %v1909 = vadd.f32 0.0, %v1908
    %v1910 = vpop.f32.mrb[0].mxu0
    %v1911 = vpop.f32.mrb[0].mxu0
    %v1912 = vadd.f32 0.0, %v1911
    %v1913 = vpop.f32.mrb[0].mxu0
    %1914 = vmatprep.mubr.bf16.mxu0 0
    %1915 = vmatmul.mubr.bf16.gmra.mrb[0].mxu0 %v1588
    %v1916 = vpop.f32.mrb[0].mxu0
    %v1917 = vadd.f32 0.0, %v1916
    %v1918 = vpop.f32.mrb[0].mxu0
    %v1919 = vpop.f32.mrb[0].mxu0
    %v1920 = vadd.f32 0.0, %v1919
    %v1921 = vpop.f32.mrb[0].mxu0
    %1922 = vmatprep.mubr.bf16.mxu0 0
    %1923 = vmatmul.mubr.bf16.gmra.mrb[0].mxu0 %v1589
    %v1924 = vpop.f32.mrb[0].mxu0
    %v1925 = vadd.f32 0.0, %v1924
    %v1926 = vpop.f32.mrb[0].mxu0
    %v1927 = vpop.f32.mrb[0].mxu0
    %v1928 = vadd.f32 0.0, %v1927
    %v1929 = vpop.f32.mrb[0].mxu0
    %1930 = vmatprep.mubr.bf16.mxu0 0
    %1931 = vmatmul.mubr.bf16.gmra.mrb[0].mxu0 %v1590
    %v1932 = vpop.f32.mrb[0].mxu0
    %v1933 = vadd.f32 0.0, %v1932
    %v1934 = vpop.f32.mrb[0].mxu0
    %v1935 = vpop.f32.mrb[0].mxu0
    %v1936 = vadd.f32 0.0, %v1935
    %v1937 = vpop.f32.mrb[0].mxu0
    %1938 = vmatprep.mubr.bf16.mxu0 0
    %1939 = vmatmul.mubr.bf16.gmra.mrb[0].mxu0 %v1591
    %v1940 = vpop.f32.mrb[0].mxu0
    %v1941 = vadd.f32 0.0, %v1940
    %v1942 = vpop.f32.mrb[0].mxu0
    %v1943 = vpop.f32.mrb[0].mxu0
    %v1944 = vadd.f32 0.0, %v1943
    %v1945 = vpop.f32.mrb[0].mxu0
    %1946 = vmatprep.mubr.bf16.mxu0 0
    %1947 = vmatmul.mubr.bf16.gmra.mrb[0].mxu0 %v1592
    %v1948 = vpop.f32.mrb[0].mxu0
    %v1949 = vadd.f32 0.0, %v1948
    %v1950 = vpop.f32.mrb[0].mxu0
    %v1951 = vpop.f32.mrb[0].mxu0
    %v1952 = vadd.f32 0.0, %v1951
    %v1953 = vpop.f32.mrb[0].mxu0
    %1954 = vmatprep.mubr.bf16.mxu0 0
    %1955 = vmatmul.mubr.bf16.gmra.mrb[0].mxu0 %v1593
    %v1956 = vpop.f32.mrb[0].mxu0
    %v1957 = vadd.f32 0.0, %v1956
    %v1958 = vpop.f32.mrb[0].mxu0
    %v1959 = vpop.f32.mrb[0].mxu0
    %v1960 = vadd.f32 0.0, %v1959
    %v1961 = vpop.f32.mrb[0].mxu0
    %1962 = vdwg.mxu0
    %v1963 = vadd.f32 %v1098, %v1709
    %v1964 = vadd.f32 %v1101, %v1712
    %v1965 = vadd.f32 %v1106, %v1717
    %v1966 = vadd.f32 %v1109, %v1720
    %v1967 = vadd.f32 %v1114, %v1725
    %v1968 = vadd.f32 %v1117, %v1728
    %v1969 = vadd.f32 %v1122, %v1733
    %v1970 = vadd.f32 %v1125, %v1736
    %v1971 = vadd.f32 %v1130, %v1741
    %v1972 = vadd.f32 %v1133, %v1744
    %v1973 = vadd.f32 %v1138, %v1749
    %v1974 = vadd.f32 %v1141, %v1752
    %v1975 = vadd.f32 %v1146, %v1757
    %v1976 = vadd.f32 %v1149, %v1760
    %v1977 = vadd.f32 %v1154, %v1765
    %v1978 = vadd.f32 %v1157, %v1768
    %v1979 = vadd.f32 %v1162, %v1773
    %v1980 = vadd.f32 %v1165, %v1776
    %v1981 = vadd.f32 %v1170, %v1781
    %v1982 = vadd.f32 %v1173, %v1784
    %v1983 = vadd.f32 %v1178, %v1789
    %v1984 = vadd.f32 %v1181, %v1792
    %v1985 = vadd.f32 %v1186, %v1797
    %v1986 = vadd.f32 %v1189, %v1800
    %v1987 = vadd.f32 %v1194, %v1805
    %v1988 = vadd.f32 %v1197, %v1808
    %v1989 = vadd.f32 %v1202, %v1813
    %v1990 = vadd.f32 %v1205, %v1816
    %v1991 = vadd.f32 %v1210, %v1821
    %v1992 = vadd.f32 %v1213, %v1824
    %v1993 = vadd.f32 %v1218, %v1829
    %v1994 = vadd.f32 %v1221, %v1832
    %v1995 = vadd.f32 %v1226, %v1837
    %v1996 = vadd.f32 %v1229, %v1840
    %v1997 = vadd.f32 %v1234, %v1845
    %v1998 = vadd.f32 %v1237, %v1848
    %v1999 = vadd.f32 %v1242, %v1853
    %v2000 = vadd.f32 %v1245, %v1856
    %v2001 = vadd.f32 %v1250, %v1861
    %v2002 = vadd.f32 %v1253, %v1864
    %v2003 = vadd.f32 %v1258, %v1869
    %v2004 = vadd.f32 %v1261, %v1872
    %v2005 = vadd.f32 %v1266, %v1877
    %v2006 = vadd.f32 %v1269, %v1880
    %v2007 = vadd.f32 %v1274, %v1885
    %v2008 = vadd.f32 %v1277, %v1888
    %v2009 = vadd.f32 %v1282, %v1893
    %v2010 = vadd.f32 %v1285, %v1896
    %v2011 = vadd.f32 %v1290, %v1901
    %v2012 = vadd.f32 %v1293, %v1904
    %v2013 = vadd.f32 %v1298, %v1909
    %v2014 = vadd.f32 %v1301, %v1912
    %v2015 = vadd.f32 %v1306, %v1917
    %v2016 = vadd.f32 %v1309, %v1920
    %v2017 = vadd.f32 %v1314, %v1925
    %v2018 = vadd.f32 %v1317, %v1928
    %v2019 = vadd.f32 %v1322, %v1933
    %v2020 = vadd.f32 %v1325, %v1936
    %v2021 = vadd.f32 %v1330, %v1941
    %v2022 = vadd.f32 %v1333, %v1944
    %v2023 = vadd.f32 %v1338, %v1949
    %v2024 = vadd.f32 %v1341, %v1952
    %v2025 = vadd.f32 %v1346, %v1957
    %v2026 = vadd.f32 %v1349, %v1960
    %s2027 = scalar_lea.vmem [#allocation3], 768
    %v2028 = vld [vmem:[%s2027] sm:$0xf]
    %v2029 = vld [vmem:[%s2027 + $0x4] sm:$0xf]
    %v2030 = vld [vmem:[%s2027 + $0x8] sm:$0xf]
    %v2031 = vld [vmem:[%s2027 + $0xc] sm:$0xf]
    %v2032 = vld [vmem:[%s2027 + $0x10] sm:$0xf]
    %v2033 = vld [vmem:[%s2027 + $0x14] sm:$0xf]
    %v2034 = vld [vmem:[%s2027 + $0x18] sm:$0xf]
    %v2035 = vld [vmem:[%s2027 + $0x1c] sm:$0xf]
    %v2036 = vld [vmem:[%s2027 + $0x20] sm:$0xf]
    %v2037 = vld [vmem:[%s2027 + $0x24] sm:$0xf]
    %v2038 = vld [vmem:[%s2027 + $0x28] sm:$0xf]
    %v2039 = vld [vmem:[%s2027 + $0x2c] sm:$0xf]
    %v2040 = vld [vmem:[%s2027 + $0x30] sm:$0xf]
    %v2041 = vld [vmem:[%s2027 + $0x34] sm:$0xf]
    %v2042 = vld [vmem:[%s2027 + $0x38] sm:$0xf]
    %v2043 = vld [vmem:[%s2027 + $0x3c] sm:$0xf]
    %v2044 = vld [vmem:[%s2027 + $0x40] sm:$0xf]
    %v2045 = vld [vmem:[%s2027 + $0x44] sm:$0xf]
    %v2046 = vld [vmem:[%s2027 + $0x48] sm:$0xf]
    %v2047 = vld [vmem:[%s2027 + $0x4c] sm:$0xf]
    %v2048 = vld [vmem:[%s2027 + $0x50] sm:$0xf]
    %v2049 = vld [vmem:[%s2027 + $0x54] sm:$0xf]
    %v2050 = vld [vmem:[%s2027 + $0x58] sm:$0xf]
    %v2051 = vld [vmem:[%s2027 + $0x5c] sm:$0xf]
    %v2052 = vld [vmem:[%s2027 + $0x60] sm:$0xf]
    %v2053 = vld [vmem:[%s2027 + $0x64] sm:$0xf]
    %v2054 = vld [vmem:[%s2027 + $0x68] sm:$0xf]
    %v2055 = vld [vmem:[%s2027 + $0x6c] sm:$0xf]
    %v2056 = vld [vmem:[%s2027 + $0x70] sm:$0xf]
    %v2057 = vld [vmem:[%s2027 + $0x74] sm:$0xf]
    %v2058 = vld [vmem:[%s2027 + $0x78] sm:$0xf]
    %v2059 = vld [vmem:[%s2027 + $0x7c] sm:$0xf]
    %v2060 = vld [vmem:[%s2027 + $0x80] sm:$0xf]
    %v2061 = vld [vmem:[%s2027 + $0x84] sm:$0xf]
    %v2062 = vld [vmem:[%s2027 + $0x88] sm:$0xf]
    %v2063 = vld [vmem:[%s2027 + $0x8c] sm:$0xf]
    %v2064 = vld [vmem:[%s2027 + $0x90] sm:$0xf]
    %v2065 = vld [vmem:[%s2027 + $0x94] sm:$0xf]
    %v2066 = vld [vmem:[%s2027 + $0x98] sm:$0xf]
    %v2067 = vld [vmem:[%s2027 + $0x9c] sm:$0xf]
    %v2068 = vld [vmem:[%s2027 + $0xa0] sm:$0xf]
    %v2069 = vld [vmem:[%s2027 + $0xa4] sm:$0xf]
    %v2070 = vld [vmem:[%s2027 + $0xa8] sm:$0xf]
    %v2071 = vld [vmem:[%s2027 + $0xac] sm:$0xf]
    %v2072 = vld [vmem:[%s2027 + $0xb0] sm:$0xf]
    %v2073 = vld [vmem:[%s2027 + $0xb4] sm:$0xf]
    %v2074 = vld [vmem:[%s2027 + $0xb8] sm:$0xf]
    %v2075 = vld [vmem:[%s2027 + $0xbc] sm:$0xf]
    %v2076 = vld [vmem:[%s2027 + $0xc0] sm:$0xf]
    %v2077 = vld [vmem:[%s2027 + $0xc4] sm:$0xf]
    %v2078 = vld [vmem:[%s2027 + $0xc8] sm:$0xf]
    %v2079 = vld [vmem:[%s2027 + $0xcc] sm:$0xf]
    %v2080 = vld [vmem:[%s2027 + $0xd0] sm:$0xf]
    %v2081 = vld [vmem:[%s2027 + $0xd4] sm:$0xf]
    %v2082 = vld [vmem:[%s2027 + $0xd8] sm:$0xf]
    %v2083 = vld [vmem:[%s2027 + $0xdc] sm:$0xf]
    %v2084 = vld [vmem:[%s2027 + $0xe0] sm:$0xf]
    %v2085 = vld [vmem:[%s2027 + $0xe4] sm:$0xf]
    %v2086 = vld [vmem:[%s2027 + $0xe8] sm:$0xf]
    %v2087 = vld [vmem:[%s2027 + $0xec] sm:$0xf]
    %v2088 = vld [vmem:[%s2027 + $0xf0] sm:$0xf]
    %v2089 = vld [vmem:[%s2027 + $0xf4] sm:$0xf]
    %v2090 = vld [vmem:[%s2027 + $0xf8] sm:$0xf]
    %v2091 = vld [vmem:[%s2027 + $0xfc] sm:$0xf]
    %s2092 = scalar_lea.vmem [#allocation6], 192
    %v2093 = vld [vmem:[%s2092] sm:$0xf]
    %v2094 = vld [vmem:[%s2092 + $0x4] sm:$0xf]
    %v2095 = vld [vmem:[%s2092 + $0x8] sm:$0xf]
    %v2096 = vld [vmem:[%s2092 + $0xc] sm:$0xf]
    %v2097 = vld [vmem:[%s2092 + $0x10] sm:$0xf]
    %v2098 = vld [vmem:[%s2092 + $0x14] sm:$0xf]
    %v2099 = vld [vmem:[%s2092 + $0x18] sm:$0xf]
    %v2100 = vld [vmem:[%s2092 + $0x1c] sm:$0xf]
    %v2101 = vld [vmem:[%s2092 + $0x20] sm:$0xf]
    %v2102 = vld [vmem:[%s2092 + $0x24] sm:$0xf]
    %v2103 = vld [vmem:[%s2092 + $0x28] sm:$0xf]
    %v2104 = vld [vmem:[%s2092 + $0x2c] sm:$0xf]
    %v2105 = vld [vmem:[%s2092 + $0x30] sm:$0xf]
    %v2106 = vld [vmem:[%s2092 + $0x34] sm:$0xf]
    %v2107 = vld [vmem:[%s2092 + $0x38] sm:$0xf]
    %v2108 = vld [vmem:[%s2092 + $0x3c] sm:$0xf]
    %v2173 = vunpack.c.l.b16 %v2028
    %v2174 = vunpack.c.l.b16 %v2029
    %v2175 = vunpack.c.l.b16 %v2030
    %v2176 = vunpack.c.l.b16 %v2031
    %v2177 = vunpack.c.l.b16 %v2032
    %v2178 = vunpack.c.l.b16 %v2033
    %v2179 = vunpack.c.l.b16 %v2034
    %v2180 = vunpack.c.l.b16 %v2035
    %v2181 = vunpack.c.l.b16 %v2036
    %v2182 = vunpack.c.l.b16 %v2037
    %v2183 = vunpack.c.l.b16 %v2038
    %v2184 = vunpack.c.l.b16 %v2039
    %v2185 = vunpack.c.l.b16 %v2040
    %v2186 = vunpack.c.l.b16 %v2041
    %v2187 = vunpack.c.l.b16 %v2042
    %v2188 = vunpack.c.l.b16 %v2043
    %v2189 = vunpack.c.l.b16 %v2044
    %v2190 = vunpack.c.l.b16 %v2045
    %v2191 = vunpack.c.l.b16 %v2046
    %v2192 = vunpack.c.l.b16 %v2047
    %v2193 = vunpack.c.l.b16 %v2048
    %v2194 = vunpack.c.l.b16 %v2049
    %v2195 = vunpack.c.l.b16 %v2050
    %v2196 = vunpack.c.l.b16 %v2051
    %v2197 = vunpack.c.l.b16 %v2052
    %v2198 = vunpack.c.l.b16 %v2053
    %v2199 = vunpack.c.l.b16 %v2054
    %v2200 = vunpack.c.l.b16 %v2055
    %v2201 = vunpack.c.l.b16 %v2056
    %v2202 = vunpack.c.l.b16 %v2057
    %v2203 = vunpack.c.l.b16 %v2058
    %v2204 = vunpack.c.l.b16 %v2059
    %v2205 = vunpack.c.l.b16 %v2060
    %v2206 = vunpack.c.l.b16 %v2061
    %v2207 = vunpack.c.l.b16 %v2062
    %v2208 = vunpack.c.l.b16 %v2063
    %v2209 = vunpack.c.l.b16 %v2064
    %v2210 = vunpack.c.l.b16 %v2065
    %v2211 = vunpack.c.l.b16 %v2066
    %v2212 = vunpack.c.l.b16 %v2067
    %v2213 = vunpack.c.l.b16 %v2068
    %v2214 = vunpack.c.l.b16 %v2069
    %v2215 = vunpack.c.l.b16 %v2070
    %v2216 = vunpack.c.l.b16 %v2071
    %v2217 = vunpack.c.l.b16 %v2072
    %v2218 = vunpack.c.l.b16 %v2073
    %v2219 = vunpack.c.l.b16 %v2074
    %v2220 = vunpack.c.l.b16 %v2075
    %v2221 = vunpack.c.l.b16 %v2076
    %v2222 = vunpack.c.l.b16 %v2077
    %v2223 = vunpack.c.l.b16 %v2078
    %v2224 = vunpack.c.l.b16 %v2079
    %v2225 = vunpack.c.l.b16 %v2080
    %v2226 = vunpack.c.l.b16 %v2081
    %v2227 = vunpack.c.l.b16 %v2082
    %v2228 = vunpack.c.l.b16 %v2083
    %v2229 = vunpack.c.l.b16 %v2084
    %v2230 = vunpack.c.l.b16 %v2085
    %v2231 = vunpack.c.l.b16 %v2086
    %v2232 = vunpack.c.l.b16 %v2087
    %v2233 = vunpack.c.l.b16 %v2088
    %v2234 = vunpack.c.l.b16 %v2089
    %v2235 = vunpack.c.l.b16 %v2090
    %v2236 = vunpack.c.l.b16 %v2091
    %v2237 = vpack.c.b16 %v2174, %v2173
    %v2238 = vpack.c.b16 %v2176, %v2175
    %v2239 = vpack.c.b16 %v2178, %v2177
    %v2240 = vpack.c.b16 %v2180, %v2179
    %v2241 = vpack.c.b16 %v2182, %v2181
    %v2242 = vpack.c.b16 %v2184, %v2183
    %v2243 = vpack.c.b16 %v2186, %v2185
    %v2244 = vpack.c.b16 %v2188, %v2187
    %v2245 = vpack.c.b16 %v2190, %v2189
    %v2246 = vpack.c.b16 %v2192, %v2191
    %v2247 = vpack.c.b16 %v2194, %v2193
    %v2248 = vpack.c.b16 %v2196, %v2195
    %v2249 = vpack.c.b16 %v2198, %v2197
    %v2250 = vpack.c.b16 %v2200, %v2199
    %v2251 = vpack.c.b16 %v2202, %v2201
    %v2252 = vpack.c.b16 %v2204, %v2203
    %v2253 = vpack.c.b16 %v2206, %v2205
    %v2254 = vpack.c.b16 %v2208, %v2207
    %v2255 = vpack.c.b16 %v2210, %v2209
    %v2256 = vpack.c.b16 %v2212, %v2211
    %v2257 = vpack.c.b16 %v2214, %v2213
    %v2258 = vpack.c.b16 %v2216, %v2215
    %v2259 = vpack.c.b16 %v2218, %v2217
    %v2260 = vpack.c.b16 %v2220, %v2219
    %v2261 = vpack.c.b16 %v2222, %v2221
    %v2262 = vpack.c.b16 %v2224, %v2223
    %v2263 = vpack.c.b16 %v2226, %v2225
    %v2264 = vpack.c.b16 %v2228, %v2227
    %v2265 = vpack.c.b16 %v2230, %v2229
    %v2266 = vpack.c.b16 %v2232, %v2231
    %v2267 = vpack.c.b16 %v2234, %v2233
    %v2268 = vpack.c.b16 %v2236, %v2235
    %v2317 = vunpack.c.l.b16 %v2093
    %v2318 = vunpack.c.l.b16 %v2094
    %v2319 = vunpack.c.l.b16 %v2095
    %v2320 = vunpack.c.l.b16 %v2096
    %v2321 = vunpack.c.l.b16 %v2097
    %v2322 = vunpack.c.l.b16 %v2098
    %v2323 = vunpack.c.l.b16 %v2099
    %v2324 = vunpack.c.l.b16 %v2100
    %v2325 = vunpack.c.l.b16 %v2101
    %v2326 = vunpack.c.l.b16 %v2102
    %v2327 = vunpack.c.l.b16 %v2103
    %v2328 = vunpack.c.l.b16 %v2104
    %v2329 = vunpack.c.l.b16 %v2105
    %v2330 = vunpack.c.l.b16 %v2106
    %v2331 = vunpack.c.l.b16 %v2107
    %v2332 = vunpack.c.l.b16 %v2108
    %v2333 = vpack.c.b16 %v2318, %v2317
    %v2334 = vpack.c.b16 %v2320, %v2319
    %v2335 = vpack.c.b16 %v2322, %v2321
    %v2336 = vpack.c.b16 %v2324, %v2323
    %v2337 = vpack.c.b16 %v2326, %v2325
    %v2338 = vpack.c.b16 %v2328, %v2327
    %v2339 = vpack.c.b16 %v2330, %v2329
    %v2340 = vpack.c.b16 %v2332, %v2331
    %2349 = vmatprep.subr.bf16.mxu0 0
    %2350 = vmatpush1.bf16.msra.mxu0 %v2333
    %2351 = vmatprep.subr.bf16.mxu0 0
    %2352 = vmatpush1.bf16.msra.mxu0 %v2334
    %2353 = vmatprep.subr.bf16.mxu0 0
    %2354 = vmatpush1.bf16.msra.mxu0 %v2335
    %2355 = vmatprep.subr.bf16.mxu0 0
    %2356 = vmatpush1.bf16.msra.mxu0 %v2336
    %2357 = vmatprep.subr.bf16.mxu0 0
    %2358 = vmatpush1.bf16.msra.mxu0 %v2337
    %2359 = vmatprep.subr.bf16.mxu0 0
    %2360 = vmatpush1.bf16.msra.mxu0 %v2338
    %2361 = vmatprep.subr.bf16.mxu0 0
    %2362 = vmatpush1.bf16.msra.mxu0 %v2339
    %2363 = vmatprep.subr.bf16.mxu0 0
    %2364 = vmatpush1.bf16.msra.mxu0 %v2340
    %2365 = vmatprep.subr.bf16.mxu0 0
    %2366 = vmatpush1.bf16.msra.mxu0 0
    %2367 = vmatprep.subr.bf16.mxu0 0
    %2368 = vmatpush1.bf16.msra.mxu0 0
    %2369 = vmatprep.subr.bf16.mxu0 0
    %2370 = vmatpush1.bf16.msra.mxu0 0
    %2371 = vmatprep.subr.bf16.mxu0 0
    %2372 = vmatpush1.bf16.msra.mxu0 0
    %2373 = vmatprep.subr.bf16.mxu0 0
    %2374 = vmatpush1.bf16.msra.mxu0 0
    %2375 = vmatprep.subr.bf16.mxu0 0
    %2376 = vmatpush1.bf16.msra.mxu0 0
    %2377 = vmatprep.subr.bf16.mxu0 0
    %2378 = vmatpush1.bf16.msra.mxu0 0
    %2379 = vmatprep.subr.bf16.mxu0 0
    %2380 = vmatpush1.bf16.msra.mxu0 0
    %2381 = vmatprep.mubr.bf16.mxu0 0
    %2382 = vmatmul.mubr.bf16.gmra.mrb[0].mxu0 %v2237
    %v2383 = vpop.f32.mrb[0].mxu0
    %v2384 = vadd.f32 0.0, %v2383
    %v2385 = vpop.f32.mrb[0].mxu0
    %v2386 = vpop.f32.mrb[0].mxu0
    %v2387 = vadd.f32 0.0, %v2386
    %v2388 = vpop.f32.mrb[0].mxu0
    %2389 = vmatprep.mubr.bf16.mxu0 0
    %2390 = vmatmul.mubr.bf16.gmra.mrb[0].mxu0 %v2238
    %v2391 = vpop.f32.mrb[0].mxu0
    %v2392 = vadd.f32 0.0, %v2391
    %v2393 = vpop.f32.mrb[0].mxu0
    %v2394 = vpop.f32.mrb[0].mxu0
    %v2395 = vadd.f32 0.0, %v2394
    %v2396 = vpop.f32.mrb[0].mxu0
    %2397 = vmatprep.mubr.bf16.mxu0 0
    %2398 = vmatmul.mubr.bf16.gmra.mrb[0].mxu0 %v2239
    %v2399 = vpop.f32.mrb[0].mxu0
    %v2400 = vadd.f32 0.0, %v2399
    %v2401 = vpop.f32.mrb[0].mxu0
    %v2402 = vpop.f32.mrb[0].mxu0
    %v2403 = vadd.f32 0.0, %v2402
    %v2404 = vpop.f32.mrb[0].mxu0
    %2405 = vmatprep.mubr.bf16.mxu0 0
    %2406 = vmatmul.mubr.bf16.gmra.mrb[0].mxu0 %v2240
    %v2407 = vpop.f32.mrb[0].mxu0
    %v2408 = vadd.f32 0.0, %v2407
    %v2409 = vpop.f32.mrb[0].mxu0
    %v2410 = vpop.f32.mrb[0].mxu0
    %v2411 = vadd.f32 0.0, %v2410
    %v2412 = vpop.f32.mrb[0].mxu0
    %2413 = vmatprep.mubr.bf16.mxu0 0
    %2414 = vmatmul.mubr.bf16.gmra.mrb[0].mxu0 %v2241
    %v2415 = vpop.f32.mrb[0].mxu0
    %v2416 = vadd.f32 0.0, %v2415
    %v2417 = vpop.f32.mrb[0].mxu0
    %v2418 = vpop.f32.mrb[0].mxu0
    %v2419 = vadd.f32 0.0, %v2418
    %v2420 = vpop.f32.mrb[0].mxu0
    %2421 = vmatprep.mubr.bf16.mxu0 0
    %2422 = vmatmul.mubr.bf16.gmra.mrb[0].mxu0 %v2242
    %v2423 = vpop.f32.mrb[0].mxu0
    %v2424 = vadd.f32 0.0, %v2423
    %v2425 = vpop.f32.mrb[0].mxu0
    %v2426 = vpop.f32.mrb[0].mxu0
    %v2427 = vadd.f32 0.0, %v2426
    %v2428 = vpop.f32.mrb[0].mxu0
    %2429 = vmatprep.mubr.bf16.mxu0 0
    %2430 = vmatmul.mubr.bf16.gmra.mrb[0].mxu0 %v2243
    %v2431 = vpop.f32.mrb[0].mxu0
    %v2432 = vadd.f32 0.0, %v2431
    %v2433 = vpop.f32.mrb[0].mxu0
    %v2434 = vpop.f32.mrb[0].mxu0
    %v2435 = vadd.f32 0.0, %v2434
    %v2436 = vpop.f32.mrb[0].mxu0
    %2437 = vmatprep.mubr.bf16.mxu0 0
    %2438 = vmatmul.mubr.bf16.gmra.mrb[0].mxu0 %v2244
    %v2439 = vpop.f32.mrb[0].mxu0
    %v2440 = vadd.f32 0.0, %v2439
    %v2441 = vpop.f32.mrb[0].mxu0
    %v2442 = vpop.f32.mrb[0].mxu0
    %v2443 = vadd.f32 0.0, %v2442
    %v2444 = vpop.f32.mrb[0].mxu0
    %2445 = vmatprep.mubr.bf16.mxu0 0
    %2446 = vmatmul.mubr.bf16.gmra.mrb[0].mxu0 %v2245
    %v2447 = vpop.f32.mrb[0].mxu0
    %v2448 = vadd.f32 0.0, %v2447
    %v2449 = vpop.f32.mrb[0].mxu0
    %v2450 = vpop.f32.mrb[0].mxu0
    %v2451 = vadd.f32 0.0, %v2450
    %v2452 = vpop.f32.mrb[0].mxu0
    %2453 = vmatprep.mubr.bf16.mxu0 0
    %2454 = vmatmul.mubr.bf16.gmra.mrb[0].mxu0 %v2246
    %v2455 = vpop.f32.mrb[0].mxu0
    %v2456 = vadd.f32 0.0, %v2455
    %v2457 = vpop.f32.mrb[0].mxu0
    %v2458 = vpop.f32.mrb[0].mxu0
    %v2459 = vadd.f32 0.0, %v2458
    %v2460 = vpop.f32.mrb[0].mxu0
    %2461 = vmatprep.mubr.bf16.mxu0 0
    %2462 = vmatmul.mubr.bf16.gmra.mrb[0].mxu0 %v2247
    %v2463 = vpop.f32.mrb[0].mxu0
    %v2464 = vadd.f32 0.0, %v2463
    %v2465 = vpop.f32.mrb[0].mxu0
    %v2466 = vpop.f32.mrb[0].mxu0
    %v2467 = vadd.f32 0.0, %v2466
    %v2468 = vpop.f32.mrb[0].mxu0
    %2469 = vmatprep.mubr.bf16.mxu0 0
    %2470 = vmatmul.mubr.bf16.gmra.mrb[0].mxu0 %v2248
    %v2471 = vpop.f32.mrb[0].mxu0
    %v2472 = vadd.f32 0.0, %v2471
    %v2473 = vpop.f32.mrb[0].mxu0
    %v2474 = vpop.f32.mrb[0].mxu0
    %v2475 = vadd.f32 0.0, %v2474
    %v2476 = vpop.f32.mrb[0].mxu0
    %2477 = vmatprep.mubr.bf16.mxu0 0
    %2478 = vmatmul.mubr.bf16.gmra.mrb[0].mxu0 %v2249
    %v2479 = vpop.f32.mrb[0].mxu0
    %v2480 = vadd.f32 0.0, %v2479
    %v2481 = vpop.f32.mrb[0].mxu0
    %v2482 = vpop.f32.mrb[0].mxu0
    %v2483 = vadd.f32 0.0, %v2482
    %v2484 = vpop.f32.mrb[0].mxu0
    %2485 = vmatprep.mubr.bf16.mxu0 0
    %2486 = vmatmul.mubr.bf16.gmra.mrb[0].mxu0 %v2250
    %v2487 = vpop.f32.mrb[0].mxu0
    %v2488 = vadd.f32 0.0, %v2487
    %v2489 = vpop.f32.mrb[0].mxu0
    %v2490 = vpop.f32.mrb[0].mxu0
    %v2491 = vadd.f32 0.0, %v2490
    %v2492 = vpop.f32.mrb[0].mxu0
    %2493 = vmatprep.mubr.bf16.mxu0 0
    %2494 = vmatmul.mubr.bf16.gmra.mrb[0].mxu0 %v2251
    %v2495 = vpop.f32.mrb[0].mxu0
    %v2496 = vadd.f32 0.0, %v2495
    %v2497 = vpop.f32.mrb[0].mxu0
    %v2498 = vpop.f32.mrb[0].mxu0
    %v2499 = vadd.f32 0.0, %v2498
    %v2500 = vpop.f32.mrb[0].mxu0
    %2501 = vmatprep.mubr.bf16.mxu0 0
    %2502 = vmatmul.mubr.bf16.gmra.mrb[0].mxu0 %v2252
    %v2503 = vpop.f32.mrb[0].mxu0
    %v2504 = vadd.f32 0.0, %v2503
    %v2505 = vpop.f32.mrb[0].mxu0
    %v2506 = vpop.f32.mrb[0].mxu0
    %v2507 = vadd.f32 0.0, %v2506
    %v2508 = vpop.f32.mrb[0].mxu0
    %2509 = vmatprep.mubr.bf16.mxu0 0
    %2510 = vmatmul.mubr.bf16.gmra.mrb[0].mxu0 %v2253
    %v2511 = vpop.f32.mrb[0].mxu0
    %v2512 = vadd.f32 0.0, %v2511
    %v2513 = vpop.f32.mrb[0].mxu0
    %v2514 = vpop.f32.mrb[0].mxu0
    %v2515 = vadd.f32 0.0, %v2514
    %v2516 = vpop.f32.mrb[0].mxu0
    %2517 = vmatprep.mubr.bf16.mxu0 0
    %2518 = vmatmul.mubr.bf16.gmra.mrb[0].mxu0 %v2254
    %v2519 = vpop.f32.mrb[0].mxu0
    %v2520 = vadd.f32 0.0, %v2519
    %v2521 = vpop.f32.mrb[0].mxu0
    %v2522 = vpop.f32.mrb[0].mxu0
    %v2523 = vadd.f32 0.0, %v2522
    %v2524 = vpop.f32.mrb[0].mxu0
    %2525 = vmatprep.mubr.bf16.mxu0 0
    %2526 = vmatmul.mubr.bf16.gmra.mrb[0].mxu0 %v2255
    %v2527 = vpop.f32.mrb[0].mxu0
    %v2528 = vadd.f32 0.0, %v2527
    %v2529 = vpop.f32.mrb[0].mxu0
    %v2530 = vpop.f32.mrb[0].mxu0
    %v2531 = vadd.f32 0.0, %v2530
    %v2532 = vpop.f32.mrb[0].mxu0
    %2533 = vmatprep.mubr.bf16.mxu0 0
    %2534 = vmatmul.mubr.bf16.gmra.mrb[0].mxu0 %v2256
    %v2535 = vpop.f32.mrb[0].mxu0
    %v2536 = vadd.f32 0.0, %v2535
    %v2537 = vpop.f32.mrb[0].mxu0
    %v2538 = vpop.f32.mrb[0].mxu0
    %v2539 = vadd.f32 0.0, %v2538
    %v2540 = vpop.f32.mrb[0].mxu0
    %2541 = vmatprep.mubr.bf16.mxu0 0
    %2542 = vmatmul.mubr.bf16.gmra.mrb[0].mxu0 %v2257
    %v2543 = vpop.f32.mrb[0].mxu0
    %v2544 = vadd.f32 0.0, %v2543
    %v2545 = vpop.f32.mrb[0].mxu0
    %v2546 = vpop.f32.mrb[0].mxu0
    %v2547 = vadd.f32 0.0, %v2546
    %v2548 = vpop.f32.mrb[0].mxu0
    %2549 = vmatprep.mubr.bf16.mxu0 0
    %2550 = vmatmul.mubr.bf16.gmra.mrb[0].mxu0 %v2258
    %v2551 = vpop.f32.mrb[0].mxu0
    %v2552 = vadd.f32 0.0, %v2551
    %v2553 = vpop.f32.mrb[0].mxu0
    %v2554 = vpop.f32.mrb[0].mxu0
    %v2555 = vadd.f32 0.0, %v2554
    %v2556 = vpop.f32.mrb[0].mxu0
    %2557 = vmatprep.mubr.bf16.mxu0 0
    %2558 = vmatmul.mubr.bf16.gmra.mrb[0].mxu0 %v2259
    %v2559 = vpop.f32.mrb[0].mxu0
    %v2560 = vadd.f32 0.0, %v2559
    %v2561 = vpop.f32.mrb[0].mxu0
    %v2562 = vpop.f32.mrb[0].mxu0
    %v2563 = vadd.f32 0.0, %v2562
    %v2564 = vpop.f32.mrb[0].mxu0
    %2565 = vmatprep.mubr.bf16.mxu0 0
    %2566 = vmatmul.mubr.bf16.gmra.mrb[0].mxu0 %v2260
    %v2567 = vpop.f32.mrb[0].mxu0
    %v2568 = vadd.f32 0.0, %v2567
    %v2569 = vpop.f32.mrb[0].mxu0
    %v2570 = vpop.f32.mrb[0].mxu0
    %v2571 = vadd.f32 0.0, %v2570
    %v2572 = vpop.f32.mrb[0].mxu0
    %2573 = vmatprep.mubr.bf16.mxu0 0
    %2574 = vmatmul.mubr.bf16.gmra.mrb[0].mxu0 %v2261
    %v2575 = vpop.f32.mrb[0].mxu0
    %v2576 = vadd.f32 0.0, %v2575
    %v2577 = vpop.f32.mrb[0].mxu0
    %v2578 = vpop.f32.mrb[0].mxu0
    %v2579 = vadd.f32 0.0, %v2578
    %v2580 = vpop.f32.mrb[0].mxu0
    %2581 = vmatprep.mubr.bf16.mxu0 0
    %2582 = vmatmul.mubr.bf16.gmra.mrb[0].mxu0 %v2262
    %v2583 = vpop.f32.mrb[0].mxu0
    %v2584 = vadd.f32 0.0, %v2583
    %v2585 = vpop.f32.mrb[0].mxu0
    %v2586 = vpop.f32.mrb[0].mxu0
    %v2587 = vadd.f32 0.0, %v2586
    %v2588 = vpop.f32.mrb[0].mxu0
    %2589 = vmatprep.mubr.bf16.mxu0 0
    %2590 = vmatmul.mubr.bf16.gmra.mrb[0].mxu0 %v2263
    %v2591 = vpop.f32.mrb[0].mxu0
    %v2592 = vadd.f32 0.0, %v2591
    %v2593 = vpop.f32.mrb[0].mxu0
    %v2594 = vpop.f32.mrb[0].mxu0
    %v2595 = vadd.f32 0.0, %v2594
    %v2596 = vpop.f32.mrb[0].mxu0
    %2597 = vmatprep.mubr.bf16.mxu0 0
    %2598 = vmatmul.mubr.bf16.gmra.mrb[0].mxu0 %v2264
    %v2599 = vpop.f32.mrb[0].mxu0
    %v2600 = vadd.f32 0.0, %v2599
    %v2601 = vpop.f32.mrb[0].mxu0
    %v2602 = vpop.f32.mrb[0].mxu0
    %v2603 = vadd.f32 0.0, %v2602
    %v2604 = vpop.f32.mrb[0].mxu0
    %2605 = vmatprep.mubr.bf16.mxu0 0
    %2606 = vmatmul.mubr.bf16.gmra.mrb[0].mxu0 %v2265
    %v2607 = vpop.f32.mrb[0].mxu0
    %v2608 = vadd.f32 0.0, %v2607
    %v2609 = vpop.f32.mrb[0].mxu0
    %v2610 = vpop.f32.mrb[0].mxu0
    %v2611 = vadd.f32 0.0, %v2610
    %v2612 = vpop.f32.mrb[0].mxu0
    %2613 = vmatprep.mubr.bf16.mxu0 0
    %2614 = vmatmul.mubr.bf16.gmra.mrb[0].mxu0 %v2266
    %v2615 = vpop.f32.mrb[0].mxu0
    %v2616 = vadd.f32 0.0, %v2615
    %v2617 = vpop.f32.mrb[0].mxu0
    %v2618 = vpop.f32.mrb[0].mxu0
    %v2619 = vadd.f32 0.0, %v2618
    %v2620 = vpop.f32.mrb[0].mxu0
    %2621 = vmatprep.mubr.bf16.mxu0 0
    %2622 = vmatmul.mubr.bf16.gmra.mrb[0].mxu0 %v2267
    %v2623 = vpop.f32.mrb[0].mxu0
    %v2624 = vadd.f32 0.0, %v2623
    %v2625 = vpop.f32.mrb[0].mxu0
    %v2626 = vpop.f32.mrb[0].mxu0
    %v2627 = vadd.f32 0.0, %v2626
    %v2628 = vpop.f32.mrb[0].mxu0
    %2629 = vmatprep.mubr.bf16.mxu0 0
    %2630 = vmatmul.mubr.bf16.gmra.mrb[0].mxu0 %v2268
    %v2631 = vpop.f32.mrb[0].mxu0
    %v2632 = vadd.f32 0.0, %v2631
    %v2633 = vpop.f32.mrb[0].mxu0
    %v2634 = vpop.f32.mrb[0].mxu0
    %v2635 = vadd.f32 0.0, %v2634
    %v2636 = vpop.f32.mrb[0].mxu0
    %2637 = vdwg.mxu0
    %v2638 = vadd.f32 %v1963, %v2384
    %v2639 = vadd.f32 %v1964, %v2387
    %v2640 = vadd.f32 %v1965, %v2392
    %v2641 = vadd.f32 %v1966, %v2395
    %v2642 = vadd.f32 %v1967, %v2400
    %v2643 = vadd.f32 %v1968, %v2403
    %v2644 = vadd.f32 %v1969, %v2408
    %v2645 = vadd.f32 %v1970, %v2411
    %v2646 = vadd.f32 %v1971, %v2416
    %v2647 = vadd.f32 %v1972, %v2419
    %v2648 = vadd.f32 %v1973, %v2424
    %v2649 = vadd.f32 %v1974, %v2427
    %v2650 = vadd.f32 %v1975, %v2432
    %v2651 = vadd.f32 %v1976, %v2435
    %v2652 = vadd.f32 %v1977, %v2440
    %v2653 = vadd.f32 %v1978, %v2443
    %v2654 = vadd.f32 %v1979, %v2448
    %v2655 = vadd.f32 %v1980, %v2451
    %v2656 = vadd.f32 %v1981, %v2456
    %v2657 = vadd.f32 %v1982, %v2459
    %v2658 = vadd.f32 %v1983, %v2464
    %v2659 = vadd.f32 %v1984, %v2467
    %v2660 = vadd.f32 %v1985, %v2472
    %v2661 = vadd.f32 %v1986, %v2475
    %v2662 = vadd.f32 %v1987, %v2480
    %v2663 = vadd.f32 %v1988, %v2483
    %v2664 = vadd.f32 %v1989, %v2488
    %v2665 = vadd.f32 %v1990, %v2491
    %v2666 = vadd.f32 %v1991, %v2496
    %v2667 = vadd.f32 %v1992, %v2499
    %v2668 = vadd.f32 %v1993, %v2504
    %v2669 = vadd.f32 %v1994, %v2507
    %v2670 = vadd.f32 %v1995, %v2512
    %v2671 = vadd.f32 %v1996, %v2515
    %v2672 = vadd.f32 %v1997, %v2520
    %v2673 = vadd.f32 %v1998, %v2523
    %v2674 = vadd.f32 %v1999, %v2528
    %v2675 = vadd.f32 %v2000, %v2531
    %v2676 = vadd.f32 %v2001, %v2536
    %v2677 = vadd.f32 %v2002, %v2539
    %v2678 = vadd.f32 %v2003, %v2544
    %v2679 = vadd.f32 %v2004, %v2547
    %v2680 = vadd.f32 %v2005, %v2552
    %v2681 = vadd.f32 %v2006, %v2555
    %v2682 = vadd.f32 %v2007, %v2560
    %v2683 = vadd.f32 %v2008, %v2563
    %v2684 = vadd.f32 %v2009, %v2568
    %v2685 = vadd.f32 %v2010, %v2571
    %v2686 = vadd.f32 %v2011, %v2576
    %v2687 = vadd.f32 %v2012, %v2579
    %v2688 = vadd.f32 %v2013, %v2584
    %v2689 = vadd.f32 %v2014, %v2587
    %v2690 = vadd.f32 %v2015, %v2592
    %v2691 = vadd.f32 %v2016, %v2595
    %v2692 = vadd.f32 %v2017, %v2600
    %v2693 = vadd.f32 %v2018, %v2603
    %v2694 = vadd.f32 %v2019, %v2608
    %v2695 = vadd.f32 %v2020, %v2611
    %v2696 = vadd.f32 %v2021, %v2616
    %v2697 = vadd.f32 %v2022, %v2619
    %v2698 = vadd.f32 %v2023, %v2624
    %v2699 = vadd.f32 %v2024, %v2627
    %v2700 = vadd.f32 %v2025, %v2632
    %v2701 = vadd.f32 %v2026, %v2635
    %s2702 = scalar_lea.vmem [#allocation3], 1024
    %v2703 = vld [vmem:[%s2702] sm:$0xf]
    %v2704 = vld [vmem:[%s2702 + $0x4] sm:$0xf]
    %v2705 = vld [vmem:[%s2702 + $0x8] sm:$0xf]
    %v2706 = vld [vmem:[%s2702 + $0xc] sm:$0xf]
    %v2707 = vld [vmem:[%s2702 + $0x10] sm:$0xf]
    %v2708 = vld [vmem:[%s2702 + $0x14] sm:$0xf]
    %v2709 = vld [vmem:[%s2702 + $0x18] sm:$0xf]
    %v2710 = vld [vmem:[%s2702 + $0x1c] sm:$0xf]
    %v2711 = vld [vmem:[%s2702 + $0x20] sm:$0xf]
    %v2712 = vld [vmem:[%s2702 + $0x24] sm:$0xf]
    %v2713 = vld [vmem:[%s2702 + $0x28] sm:$0xf]
    %v2714 = vld [vmem:[%s2702 + $0x2c] sm:$0xf]
    %v2715 = vld [vmem:[%s2702 + $0x30] sm:$0xf]
    %v2716 = vld [vmem:[%s2702 + $0x34] sm:$0xf]
    %v2717 = vld [vmem:[%s2702 + $0x38] sm:$0xf]
    %v2718 = vld [vmem:[%s2702 + $0x3c] sm:$0xf]
    %v2719 = vld [vmem:[%s2702 + $0x40] sm:$0xf]
    %v2720 = vld [vmem:[%s2702 + $0x44] sm:$0xf]
    %v2721 = vld [vmem:[%s2702 + $0x48] sm:$0xf]
    %v2722 = vld [vmem:[%s2702 + $0x4c] sm:$0xf]
    %v2723 = vld [vmem:[%s2702 + $0x50] sm:$0xf]
    %v2724 = vld [vmem:[%s2702 + $0x54] sm:$0xf]
    %v2725 = vld [vmem:[%s2702 + $0x58] sm:$0xf]
    %v2726 = vld [vmem:[%s2702 + $0x5c] sm:$0xf]
    %v2727 = vld [vmem:[%s2702 + $0x60] sm:$0xf]
    %v2728 = vld [vmem:[%s2702 + $0x64] sm:$0xf]
    %v2729 = vld [vmem:[%s2702 + $0x68] sm:$0xf]
    %v2730 = vld [vmem:[%s2702 + $0x6c] sm:$0xf]
    %v2731 = vld [vmem:[%s2702 + $0x70] sm:$0xf]
    %v2732 = vld [vmem:[%s2702 + $0x74] sm:$0xf]
    %v2733 = vld [vmem:[%s2702 + $0x78] sm:$0xf]
    %v2734 = vld [vmem:[%s2702 + $0x7c] sm:$0xf]
    %v2735 = vld [vmem:[%s2702 + $0x80] sm:$0xf]
    %v2736 = vld [vmem:[%s2702 + $0x84] sm:$0xf]
    %v2737 = vld [vmem:[%s2702 + $0x88] sm:$0xf]
    %v2738 = vld [vmem:[%s2702 + $0x8c] sm:$0xf]
    %v2739 = vld [vmem:[%s2702 + $0x90] sm:$0xf]
    %v2740 = vld [vmem:[%s2702 + $0x94] sm:$0xf]
    %v2741 = vld [vmem:[%s2702 + $0x98] sm:$0xf]
    %v2742 = vld [vmem:[%s2702 + $0x9c] sm:$0xf]
    %v2743 = vld [vmem:[%s2702 + $0xa0] sm:$0xf]
    %v2744 = vld [vmem:[%s2702 + $0xa4] sm:$0xf]
    %v2745 = vld [vmem:[%s2702 + $0xa8] sm:$0xf]
    %v2746 = vld [vmem:[%s2702 + $0xac] sm:$0xf]
    %v2747 = vld [vmem:[%s2702 + $0xb0] sm:$0xf]
    %v2748 = vld [vmem:[%s2702 + $0xb4] sm:$0xf]
    %v2749 = vld [vmem:[%s2702 + $0xb8] sm:$0xf]
    %v2750 = vld [vmem:[%s2702 + $0xbc] sm:$0xf]
    %v2751 = vld [vmem:[%s2702 + $0xc0] sm:$0xf]
    %v2752 = vld [vmem:[%s2702 + $0xc4] sm:$0xf]
    %v2753 = vld [vmem:[%s2702 + $0xc8] sm:$0xf]
    %v2754 = vld [vmem:[%s2702 + $0xcc] sm:$0xf]
    %v2755 = vld [vmem:[%s2702 + $0xd0] sm:$0xf]
    %v2756 = vld [vmem:[%s2702 + $0xd4] sm:$0xf]
    %v2757 = vld [vmem:[%s2702 + $0xd8] sm:$0xf]
    %v2758 = vld [vmem:[%s2702 + $0xdc] sm:$0xf]
    %v2759 = vld [vmem:[%s2702 + $0xe0] sm:$0xf]
    %v2760 = vld [vmem:[%s2702 + $0xe4] sm:$0xf]
    %v2761 = vld [vmem:[%s2702 + $0xe8] sm:$0xf]
    %v2762 = vld [vmem:[%s2702 + $0xec] sm:$0xf]
    %v2763 = vld [vmem:[%s2702 + $0xf0] sm:$0xf]
    %v2764 = vld [vmem:[%s2702 + $0xf4] sm:$0xf]
    %v2765 = vld [vmem:[%s2702 + $0xf8] sm:$0xf]
    %v2766 = vld [vmem:[%s2702 + $0xfc] sm:$0xf]
    %s2767 = scalar_lea.vmem [#allocation6], 256
    %v2768 = vld [vmem:[%s2767] sm:$0xf]
    %v2769 = vld [vmem:[%s2767 + $0x4] sm:$0xf]
    %v2770 = vld [vmem:[%s2767 + $0x8] sm:$0xf]
    %v2771 = vld [vmem:[%s2767 + $0xc] sm:$0xf]
    %v2772 = vld [vmem:[%s2767 + $0x10] sm:$0xf]
    %v2773 = vld [vmem:[%s2767 + $0x14] sm:$0xf]
    %v2774 = vld [vmem:[%s2767 + $0x18] sm:$0xf]
    %v2775 = vld [vmem:[%s2767 + $0x1c] sm:$0xf]
    %v2776 = vld [vmem:[%s2767 + $0x20] sm:$0xf]
    %v2777 = vld [vmem:[%s2767 + $0x24] sm:$0xf]
    %v2778 = vld [vmem:[%s2767 + $0x28] sm:$0xf]
    %v2779 = vld [vmem:[%s2767 + $0x2c] sm:$0xf]
    %v2780 = vld [vmem:[%s2767 + $0x30] sm:$0xf]
    %v2781 = vld [vmem:[%s2767 + $0x34] sm:$0xf]
    %v2782 = vld [vmem:[%s2767 + $0x38] sm:$0xf]
    %v2783 = vld [vmem:[%s2767 + $0x3c] sm:$0xf]
    %v2848 = vunpack.c.l.b16 %v2703
    %v2849 = vunpack.c.l.b16 %v2704
    %v2850 = vunpack.c.l.b16 %v2705
    %v2851 = vunpack.c.l.b16 %v2706
    %v2852 = vunpack.c.l.b16 %v2707
    %v2853 = vunpack.c.l.b16 %v2708
    %v2854 = vunpack.c.l.b16 %v2709
    %v2855 = vunpack.c.l.b16 %v2710
    %v2856 = vunpack.c.l.b16 %v2711
    %v2857 = vunpack.c.l.b16 %v2712
    %v2858 = vunpack.c.l.b16 %v2713
    %v2859 = vunpack.c.l.b16 %v2714
    %v2860 = vunpack.c.l.b16 %v2715
    %v2861 = vunpack.c.l.b16 %v2716
    %v2862 = vunpack.c.l.b16 %v2717
    %v2863 = vunpack.c.l.b16 %v2718
    %v2864 = vunpack.c.l.b16 %v2719
    %v2865 = vunpack.c.l.b16 %v2720
    %v2866 = vunpack.c.l.b16 %v2721
    %v2867 = vunpack.c.l.b16 %v2722
    %v2868 = vunpack.c.l.b16 %v2723
    %v2869 = vunpack.c.l.b16 %v2724
    %v2870 = vunpack.c.l.b16 %v2725
    %v2871 = vunpack.c.l.b16 %v2726
    %v2872 = vunpack.c.l.b16 %v2727
    %v2873 = vunpack.c.l.b16 %v2728
    %v2874 = vunpack.c.l.b16 %v2729
    %v2875 = vunpack.c.l.b16 %v2730
    %v2876 = vunpack.c.l.b16 %v2731
    %v2877 = vunpack.c.l.b16 %v2732
    %v2878 = vunpack.c.l.b16 %v2733
    %v2879 = vunpack.c.l.b16 %v2734
    %v2880 = vunpack.c.l.b16 %v2735
    %v2881 = vunpack.c.l.b16 %v2736
    %v2882 = vunpack.c.l.b16 %v2737
    %v2883 = vunpack.c.l.b16 %v2738
    %v2884 = vunpack.c.l.b16 %v2739
    %v2885 = vunpack.c.l.b16 %v2740
    %v2886 = vunpack.c.l.b16 %v2741
    %v2887 = vunpack.c.l.b16 %v2742
    %v2888 = vunpack.c.l.b16 %v2743
    %v2889 = vunpack.c.l.b16 %v2744
    %v2890 = vunpack.c.l.b16 %v2745
    %v2891 = vunpack.c.l.b16 %v2746
    %v2892 = vunpack.c.l.b16 %v2747
    %v2893 = vunpack.c.l.b16 %v2748
    %v2894 = vunpack.c.l.b16 %v2749
    %v2895 = vunpack.c.l.b16 %v2750
    %v2896 = vunpack.c.l.b16 %v2751
    %v2897 = vunpack.c.l.b16 %v2752
    %v2898 = vunpack.c.l.b16 %v2753
    %v2899 = vunpack.c.l.b16 %v2754
    %v2900 = vunpack.c.l.b16 %v2755
    %v2901 = vunpack.c.l.b16 %v2756
    %v2902 = vunpack.c.l.b16 %v2757
    %v2903 = vunpack.c.l.b16 %v2758
    %v2904 = vunpack.c.l.b16 %v2759
    %v2905 = vunpack.c.l.b16 %v2760
    %v2906 = vunpack.c.l.b16 %v2761
    %v2907 = vunpack.c.l.b16 %v2762
    %v2908 = vunpack.c.l.b16 %v2763
    %v2909 = vunpack.c.l.b16 %v2764
    %v2910 = vunpack.c.l.b16 %v2765
    %v2911 = vunpack.c.l.b16 %v2766
    %v2912 = vpack.c.b16 %v2849, %v2848
    %v2913 = vpack.c.b16 %v2851, %v2850
    %v2914 = vpack.c.b16 %v2853, %v2852
    %v2915 = vpack.c.b16 %v2855, %v2854
    %v2916 = vpack.c.b16 %v2857, %v2856
    %v2917 = vpack.c.b16 %v2859, %v2858
    %v2918 = vpack.c.b16 %v2861, %v2860
    %v2919 = vpack.c.b16 %v2863, %v2862
    %v2920 = vpack.c.b16 %v2865, %v2864
    %v2921 = vpack.c.b16 %v2867, %v2866
    %v2922 = vpack.c.b16 %v2869, %v2868
    %v2923 = vpack.c.b16 %v2871, %v2870
    %v2924 = vpack.c.b16 %v2873, %v2872
    %v2925 = vpack.c.b16 %v2875, %v2874
    %v2926 = vpack.c.b16 %v2877, %v2876
    %v2927 = vpack.c.b16 %v2879, %v2878
    %v2928 = vpack.c.b16 %v2881, %v2880
    %v2929 = vpack.c.b16 %v2883, %v2882
    %v2930 = vpack.c.b16 %v2885, %v2884
    %v2931 = vpack.c.b16 %v2887, %v2886
    %v2932 = vpack.c.b16 %v2889, %v2888
    %v2933 = vpack.c.b16 %v2891, %v2890
    %v2934 = vpack.c.b16 %v2893, %v2892
    %v2935 = vpack.c.b16 %v2895, %v2894
    %v2936 = vpack.c.b16 %v2897, %v2896
    %v2937 = vpack.c.b16 %v2899, %v2898
    %v2938 = vpack.c.b16 %v2901, %v2900
    %v2939 = vpack.c.b16 %v2903, %v2902
    %v2940 = vpack.c.b16 %v2905, %v2904
    %v2941 = vpack.c.b16 %v2907, %v2906
    %v2942 = vpack.c.b16 %v2909, %v2908
    %v2943 = vpack.c.b16 %v2911, %v2910
    %v2992 = vunpack.c.l.b16 %v2768
    %v2993 = vunpack.c.l.b16 %v2769
    %v2994 = vunpack.c.l.b16 %v2770
    %v2995 = vunpack.c.l.b16 %v2771
    %v2996 = vunpack.c.l.b16 %v2772
    %v2997 = vunpack.c.l.b16 %v2773
    %v2998 = vunpack.c.l.b16 %v2774
    %v2999 = vunpack.c.l.b16 %v2775
    %v3000 = vunpack.c.l.b16 %v2776
    %v3001 = vunpack.c.l.b16 %v2777
    %v3002 = vunpack.c.l.b16 %v2778
    %v3003 = vunpack.c.l.b16 %v2779
    %v3004 = vunpack.c.l.b16 %v2780
    %v3005 = vunpack.c.l.b16 %v2781
    %v3006 = vunpack.c.l.b16 %v2782
    %v3007 = vunpack.c.l.b16 %v2783
    %v3008 = vpack.c.b16 %v2993, %v2992
    %v3009 = vpack.c.b16 %v2995, %v2994
    %v3010 = vpack.c.b16 %v2997, %v2996
    %v3011 = vpack.c.b16 %v2999, %v2998
    %v3012 = vpack.c.b16 %v3001, %v3000
    %v3013 = vpack.c.b16 %v3003, %v3002
    %v3014 = vpack.c.b16 %v3005, %v3004
    %v3015 = vpack.c.b16 %v3007, %v3006
    %3024 = vmatprep.subr.bf16.mxu0 0
    %3025 = vmatpush1.bf16.msra.mxu0 %v3008
    %3026 = vmatprep.subr.bf16.mxu0 0
    %3027 = vmatpush1.bf16.msra.mxu0 %v3009
    %3028 = vmatprep.subr.bf16.mxu0 0
    %3029 = vmatpush1.bf16.msra.mxu0 %v3010
    %3030 = vmatprep.subr.bf16.mxu0 0
    %3031 = vmatpush1.bf16.msra.mxu0 %v3011
    %3032 = vmatprep.subr.bf16.mxu0 0
    %3033 = vmatpush1.bf16.msra.mxu0 %v3012
    %3034 = vmatprep.subr.bf16.mxu0 0
    %3035 = vmatpush1.bf16.msra.mxu0 %v3013
    %3036 = vmatprep.subr.bf16.mxu0 0
    %3037 = vmatpush1.bf16.msra.mxu0 %v3014
    %3038 = vmatprep.subr.bf16.mxu0 0
    %3039 = vmatpush1.bf16.msra.mxu0 %v3015
    %3040 = vmatprep.subr.bf16.mxu0 0
    %3041 = vmatpush1.bf16.msra.mxu0 0
    %3042 = vmatprep.subr.bf16.mxu0 0
    %3043 = vmatpush1.bf16.msra.mxu0 0
    %3044 = vmatprep.subr.bf16.mxu0 0
    %3045 = vmatpush1.bf16.msra.mxu0 0
    %3046 = vmatprep.subr.bf16.mxu0 0
    %3047 = vmatpush1.bf16.msra.mxu0 0
    %3048 = vmatprep.subr.bf16.mxu0 0
    %3049 = vmatpush1.bf16.msra.mxu0 0
    %3050 = vmatprep.subr.bf16.mxu0 0
    %3051 = vmatpush1.bf16.msra.mxu0 0
    %3052 = vmatprep.subr.bf16.mxu0 0
    %3053 = vmatpush1.bf16.msra.mxu0 0
    %3054 = vmatprep.subr.bf16.mxu0 0
    %3055 = vmatpush1.bf16.msra.mxu0 0
    %3056 = vmatprep.mubr.bf16.mxu0 0
    %3057 = vmatmul.mubr.bf16.gmra.mrb[0].mxu0 %v2912
    %v3058 = vpop.f32.mrb[0].mxu0
    %v3059 = vadd.f32 0.0, %v3058
    %v3060 = vpop.f32.mrb[0].mxu0
    %v3061 = vpop.f32.mrb[0].mxu0
    %v3062 = vadd.f32 0.0, %v3061
    %v3063 = vpop.f32.mrb[0].mxu0
    %3064 = vmatprep.mubr.bf16.mxu0 0
    %3065 = vmatmul.mubr.bf16.gmra.mrb[0].mxu0 %v2913
    %v3066 = vpop.f32.mrb[0].mxu0
    %v3067 = vadd.f32 0.0, %v3066
    %v3068 = vpop.f32.mrb[0].mxu0
    %v3069 = vpop.f32.mrb[0].mxu0
    %v3070 = vadd.f32 0.0, %v3069
    %v3071 = vpop.f32.mrb[0].mxu0
    %3072 = vmatprep.mubr.bf16.mxu0 0
    %3073 = vmatmul.mubr.bf16.gmra.mrb[0].mxu0 %v2914
    %v3074 = vpop.f32.mrb[0].mxu0
    %v3075 = vadd.f32 0.0, %v3074
    %v3076 = vpop.f32.mrb[0].mxu0
    %v3077 = vpop.f32.mrb[0].mxu0
    %v3078 = vadd.f32 0.0, %v3077
    %v3079 = vpop.f32.mrb[0].mxu0
    %3080 = vmatprep.mubr.bf16.mxu0 0
    %3081 = vmatmul.mubr.bf16.gmra.mrb[0].mxu0 %v2915
    %v3082 = vpop.f32.mrb[0].mxu0
    %v3083 = vadd.f32 0.0, %v3082
    %v3084 = vpop.f32.mrb[0].mxu0
    %v3085 = vpop.f32.mrb[0].mxu0
    %v3086 = vadd.f32 0.0, %v3085
    %v3087 = vpop.f32.mrb[0].mxu0
    %3088 = vmatprep.mubr.bf16.mxu0 0
    %3089 = vmatmul.mubr.bf16.gmra.mrb[0].mxu0 %v2916
    %v3090 = vpop.f32.mrb[0].mxu0
    %v3091 = vadd.f32 0.0, %v3090
    %v3092 = vpop.f32.mrb[0].mxu0
    %v3093 = vpop.f32.mrb[0].mxu0
    %v3094 = vadd.f32 0.0, %v3093
    %v3095 = vpop.f32.mrb[0].mxu0
    %3096 = vmatprep.mubr.bf16.mxu0 0
    %3097 = vmatmul.mubr.bf16.gmra.mrb[0].mxu0 %v2917
    %v3098 = vpop.f32.mrb[0].mxu0
    %v3099 = vadd.f32 0.0, %v3098
    %v3100 = vpop.f32.mrb[0].mxu0
    %v3101 = vpop.f32.mrb[0].mxu0
    %v3102 = vadd.f32 0.0, %v3101
    %v3103 = vpop.f32.mrb[0].mxu0
    %3104 = vmatprep.mubr.bf16.mxu0 0
    %3105 = vmatmul.mubr.bf16.gmra.mrb[0].mxu0 %v2918
    %v3106 = vpop.f32.mrb[0].mxu0
    %v3107 = vadd.f32 0.0, %v3106
    %v3108 = vpop.f32.mrb[0].mxu0
    %v3109 = vpop.f32.mrb[0].mxu0
    %v3110 = vadd.f32 0.0, %v3109
    %v3111 = vpop.f32.mrb[0].mxu0
    %3112 = vmatprep.mubr.bf16.mxu0 0
    %3113 = vmatmul.mubr.bf16.gmra.mrb[0].mxu0 %v2919
    %v3114 = vpop.f32.mrb[0].mxu0
    %v3115 = vadd.f32 0.0, %v3114
    %v3116 = vpop.f32.mrb[0].mxu0
    %v3117 = vpop.f32.mrb[0].mxu0
    %v3118 = vadd.f32 0.0, %v3117
    %v3119 = vpop.f32.mrb[0].mxu0
    %3120 = vmatprep.mubr.bf16.mxu0 0
    %3121 = vmatmul.mubr.bf16.gmra.mrb[0].mxu0 %v2920
    %v3122 = vpop.f32.mrb[0].mxu0
    %v3123 = vadd.f32 0.0, %v3122
    %v3124 = vpop.f32.mrb[0].mxu0
    %v3125 = vpop.f32.mrb[0].mxu0
    %v3126 = vadd.f32 0.0, %v3125
    %v3127 = vpop.f32.mrb[0].mxu0
    %3128 = vmatprep.mubr.bf16.mxu0 0
    %3129 = vmatmul.mubr.bf16.gmra.mrb[0].mxu0 %v2921
    %v3130 = vpop.f32.mrb[0].mxu0
    %v3131 = vadd.f32 0.0, %v3130
    %v3132 = vpop.f32.mrb[0].mxu0
    %v3133 = vpop.f32.mrb[0].mxu0
    %v3134 = vadd.f32 0.0, %v3133
    %v3135 = vpop.f32.mrb[0].mxu0
    %3136 = vmatprep.mubr.bf16.mxu0 0
    %3137 = vmatmul.mubr.bf16.gmra.mrb[0].mxu0 %v2922
    %v3138 = vpop.f32.mrb[0].mxu0
    %v3139 = vadd.f32 0.0, %v3138
    %v3140 = vpop.f32.mrb[0].mxu0
    %v3141 = vpop.f32.mrb[0].mxu0
    %v3142 = vadd.f32 0.0, %v3141
    %v3143 = vpop.f32.mrb[0].mxu0
    %3144 = vmatprep.mubr.bf16.mxu0 0
    %3145 = vmatmul.mubr.bf16.gmra.mrb[0].mxu0 %v2923
    %v3146 = vpop.f32.mrb[0].mxu0
    %v3147 = vadd.f32 0.0, %v3146
    %v3148 = vpop.f32.mrb[0].mxu0
    %v3149 = vpop.f32.mrb[0].mxu0
    %v3150 = vadd.f32 0.0, %v3149
    %v3151 = vpop.f32.mrb[0].mxu0
    %3152 = vmatprep.mubr.bf16.mxu0 0
    %3153 = vmatmul.mubr.bf16.gmra.mrb[0].mxu0 %v2924
    %v3154 = vpop.f32.mrb[0].mxu0
    %v3155 = vadd.f32 0.0, %v3154
    %v3156 = vpop.f32.mrb[0].mxu0
    %v3157 = vpop.f32.mrb[0].mxu0
    %v3158 = vadd.f32 0.0, %v3157
    %v3159 = vpop.f32.mrb[0].mxu0
    %3160 = vmatprep.mubr.bf16.mxu0 0
    %3161 = vmatmul.mubr.bf16.gmra.mrb[0].mxu0 %v2925
    %v3162 = vpop.f32.mrb[0].mxu0
    %v3163 = vadd.f32 0.0, %v3162
    %v3164 = vpop.f32.mrb[0].mxu0
    %v3165 = vpop.f32.mrb[0].mxu0
    %v3166 = vadd.f32 0.0, %v3165
    %v3167 = vpop.f32.mrb[0].mxu0
    %3168 = vmatprep.mubr.bf16.mxu0 0
    %3169 = vmatmul.mubr.bf16.gmra.mrb[0].mxu0 %v2926
    %v3170 = vpop.f32.mrb[0].mxu0
    %v3171 = vadd.f32 0.0, %v3170
    %v3172 = vpop.f32.mrb[0].mxu0
    %v3173 = vpop.f32.mrb[0].mxu0
    %v3174 = vadd.f32 0.0, %v3173
    %v3175 = vpop.f32.mrb[0].mxu0
    %3176 = vmatprep.mubr.bf16.mxu0 0
    %3177 = vmatmul.mubr.bf16.gmra.mrb[0].mxu0 %v2927
    %v3178 = vpop.f32.mrb[0].mxu0
    %v3179 = vadd.f32 0.0, %v3178
    %v3180 = vpop.f32.mrb[0].mxu0
    %v3181 = vpop.f32.mrb[0].mxu0
    %v3182 = vadd.f32 0.0, %v3181
    %v3183 = vpop.f32.mrb[0].mxu0
    %3184 = vmatprep.mubr.bf16.mxu0 0
    %3185 = vmatmul.mubr.bf16.gmra.mrb[0].mxu0 %v2928
    %v3186 = vpop.f32.mrb[0].mxu0
    %v3187 = vadd.f32 0.0, %v3186
    %v3188 = vpop.f32.mrb[0].mxu0
    %v3189 = vpop.f32.mrb[0].mxu0
    %v3190 = vadd.f32 0.0, %v3189
    %v3191 = vpop.f32.mrb[0].mxu0
    %3192 = vmatprep.mubr.bf16.mxu0 0
    %3193 = vmatmul.mubr.bf16.gmra.mrb[0].mxu0 %v2929
    %v3194 = vpop.f32.mrb[0].mxu0
    %v3195 = vadd.f32 0.0, %v3194
    %v3196 = vpop.f32.mrb[0].mxu0
    %v3197 = vpop.f32.mrb[0].mxu0
    %v3198 = vadd.f32 0.0, %v3197
    %v3199 = vpop.f32.mrb[0].mxu0
    %3200 = vmatprep.mubr.bf16.mxu0 0
    %3201 = vmatmul.mubr.bf16.gmra.mrb[0].mxu0 %v2930
    %v3202 = vpop.f32.mrb[0].mxu0
    %v3203 = vadd.f32 0.0, %v3202
    %v3204 = vpop.f32.mrb[0].mxu0
    %v3205 = vpop.f32.mrb[0].mxu0
    %v3206 = vadd.f32 0.0, %v3205
    %v3207 = vpop.f32.mrb[0].mxu0
    %3208 = vmatprep.mubr.bf16.mxu0 0
    %3209 = vmatmul.mubr.bf16.gmra.mrb[0].mxu0 %v2931
    %v3210 = vpop.f32.mrb[0].mxu0
    %v3211 = vadd.f32 0.0, %v3210
    %v3212 = vpop.f32.mrb[0].mxu0
    %v3213 = vpop.f32.mrb[0].mxu0
    %v3214 = vadd.f32 0.0, %v3213
    %v3215 = vpop.f32.mrb[0].mxu0
    %3216 = vmatprep.mubr.bf16.mxu0 0
    %3217 = vmatmul.mubr.bf16.gmra.mrb[0].mxu0 %v2932
    %v3218 = vpop.f32.mrb[0].mxu0
    %v3219 = vadd.f32 0.0, %v3218
    %v3220 = vpop.f32.mrb[0].mxu0
    %v3221 = vpop.f32.mrb[0].mxu0
    %v3222 = vadd.f32 0.0, %v3221
    %v3223 = vpop.f32.mrb[0].mxu0
    %3224 = vmatprep.mubr.bf16.mxu0 0
    %3225 = vmatmul.mubr.bf16.gmra.mrb[0].mxu0 %v2933
    %v3226 = vpop.f32.mrb[0].mxu0
    %v3227 = vadd.f32 0.0, %v3226
    %v3228 = vpop.f32.mrb[0].mxu0
    %v3229 = vpop.f32.mrb[0].mxu0
    %v3230 = vadd.f32 0.0, %v3229
    %v3231 = vpop.f32.mrb[0].mxu0
    %3232 = vmatprep.mubr.bf16.mxu0 0
    %3233 = vmatmul.mubr.bf16.gmra.mrb[0].mxu0 %v2934
    %v3234 = vpop.f32.mrb[0].mxu0
    %v3235 = vadd.f32 0.0, %v3234
    %v3236 = vpop.f32.mrb[0].mxu0
    %v3237 = vpop.f32.mrb[0].mxu0
    %v3238 = vadd.f32 0.0, %v3237
    %v3239 = vpop.f32.mrb[0].mxu0
    %3240 = vmatprep.mubr.bf16.mxu0 0
    %3241 = vmatmul.mubr.bf16.gmra.mrb[0].mxu0 %v2935
    %v3242 = vpop.f32.mrb[0].mxu0
    %v3243 = vadd.f32 0.0, %v3242
    %v3244 = vpop.f32.mrb[0].mxu0
    %v3245 = vpop.f32.mrb[0].mxu0
    %v3246 = vadd.f32 0.0, %v3245
    %v3247 = vpop.f32.mrb[0].mxu0
    %3248 = vmatprep.mubr.bf16.mxu0 0
    %3249 = vmatmul.mubr.bf16.gmra.mrb[0].mxu0 %v2936
    %v3250 = vpop.f32.mrb[0].mxu0
    %v3251 = vadd.f32 0.0, %v3250
    %v3252 = vpop.f32.mrb[0].mxu0
    %v3253 = vpop.f32.mrb[0].mxu0
    %v3254 = vadd.f32 0.0, %v3253
    %v3255 = vpop.f32.mrb[0].mxu0
    %3256 = vmatprep.mubr.bf16.mxu0 0
    %3257 = vmatmul.mubr.bf16.gmra.mrb[0].mxu0 %v2937
    %v3258 = vpop.f32.mrb[0].mxu0
    %v3259 = vadd.f32 0.0, %v3258
    %v3260 = vpop.f32.mrb[0].mxu0
    %v3261 = vpop.f32.mrb[0].mxu0
    %v3262 = vadd.f32 0.0, %v3261
    %v3263 = vpop.f32.mrb[0].mxu0
    %3264 = vmatprep.mubr.bf16.mxu0 0
    %3265 = vmatmul.mubr.bf16.gmra.mrb[0].mxu0 %v2938
    %v3266 = vpop.f32.mrb[0].mxu0
    %v3267 = vadd.f32 0.0, %v3266
    %v3268 = vpop.f32.mrb[0].mxu0
    %v3269 = vpop.f32.mrb[0].mxu0
    %v3270 = vadd.f32 0.0, %v3269
    %v3271 = vpop.f32.mrb[0].mxu0
    %3272 = vmatprep.mubr.bf16.mxu0 0
    %3273 = vmatmul.mubr.bf16.gmra.mrb[0].mxu0 %v2939
    %v3274 = vpop.f32.mrb[0].mxu0
    %v3275 = vadd.f32 0.0, %v3274
    %v3276 = vpop.f32.mrb[0].mxu0
    %v3277 = vpop.f32.mrb[0].mxu0
    %v3278 = vadd.f32 0.0, %v3277
    %v3279 = vpop.f32.mrb[0].mxu0
    %3280 = vmatprep.mubr.bf16.mxu0 0
    %3281 = vmatmul.mubr.bf16.gmra.mrb[0].mxu0 %v2940
    %v3282 = vpop.f32.mrb[0].mxu0
    %v3283 = vadd.f32 0.0, %v3282
    %v3284 = vpop.f32.mrb[0].mxu0
    %v3285 = vpop.f32.mrb[0].mxu0
    %v3286 = vadd.f32 0.0, %v3285
    %v3287 = vpop.f32.mrb[0].mxu0
    %3288 = vmatprep.mubr.bf16.mxu0 0
    %3289 = vmatmul.mubr.bf16.gmra.mrb[0].mxu0 %v2941
    %v3290 = vpop.f32.mrb[0].mxu0
    %v3291 = vadd.f32 0.0, %v3290
    %v3292 = vpop.f32.mrb[0].mxu0
    %v3293 = vpop.f32.mrb[0].mxu0
    %v3294 = vadd.f32 0.0, %v3293
    %v3295 = vpop.f32.mrb[0].mxu0
    %3296 = vmatprep.mubr.bf16.mxu0 0
    %3297 = vmatmul.mubr.bf16.gmra.mrb[0].mxu0 %v2942
    %v3298 = vpop.f32.mrb[0].mxu0
    %v3299 = vadd.f32 0.0, %v3298
    %v3300 = vpop.f32.mrb[0].mxu0
    %v3301 = vpop.f32.mrb[0].mxu0
    %v3302 = vadd.f32 0.0, %v3301
    %v3303 = vpop.f32.mrb[0].mxu0
    %3304 = vmatprep.mubr.bf16.mxu0 0
    %3305 = vmatmul.mubr.bf16.gmra.mrb[0].mxu0 %v2943
    %v3306 = vpop.f32.mrb[0].mxu0
    %v3307 = vadd.f32 0.0, %v3306
    %v3308 = vpop.f32.mrb[0].mxu0
    %v3309 = vpop.f32.mrb[0].mxu0
    %v3310 = vadd.f32 0.0, %v3309
    %v3311 = vpop.f32.mrb[0].mxu0
    %3312 = vdwg.mxu0
    %v3313 = vadd.f32 %v2638, %v3059
    %v3314 = vadd.f32 %v2639, %v3062
    %v3315 = vadd.f32 %v2640, %v3067
    %v3316 = vadd.f32 %v2641, %v3070
    %v3317 = vadd.f32 %v2642, %v3075
    %v3318 = vadd.f32 %v2643, %v3078
    %v3319 = vadd.f32 %v2644, %v3083
    %v3320 = vadd.f32 %v2645, %v3086
    %v3321 = vadd.f32 %v2646, %v3091
    %v3322 = vadd.f32 %v2647, %v3094
    %v3323 = vadd.f32 %v2648, %v3099
    %v3324 = vadd.f32 %v2649, %v3102
    %v3325 = vadd.f32 %v2650, %v3107
    %v3326 = vadd.f32 %v2651, %v3110
    %v3327 = vadd.f32 %v2652, %v3115
    %v3328 = vadd.f32 %v2653, %v3118
    %v3329 = vadd.f32 %v2654, %v3123
    %v3330 = vadd.f32 %v2655, %v3126
    %v3331 = vadd.f32 %v2656, %v3131
    %v3332 = vadd.f32 %v2657, %v3134
    %v3333 = vadd.f32 %v2658, %v3139
    %v3334 = vadd.f32 %v2659, %v3142
    %v3335 = vadd.f32 %v2660, %v3147
    %v3336 = vadd.f32 %v2661, %v3150
    %v3337 = vadd.f32 %v2662, %v3155
    %v3338 = vadd.f32 %v2663, %v3158
    %v3339 = vadd.f32 %v2664, %v3163
    %v3340 = vadd.f32 %v2665, %v3166
    %v3341 = vadd.f32 %v2666, %v3171
    %v3342 = vadd.f32 %v2667, %v3174
    %v3343 = vadd.f32 %v2668, %v3179
    %v3344 = vadd.f32 %v2669, %v3182
    %v3345 = vadd.f32 %v2670, %v3187
    %v3346 = vadd.f32 %v2671, %v3190
    %v3347 = vadd.f32 %v2672, %v3195
    %v3348 = vadd.f32 %v2673, %v3198
    %v3349 = vadd.f32 %v2674, %v3203
    %v3350 = vadd.f32 %v2675, %v3206
    %v3351 = vadd.f32 %v2676, %v3211
    %v3352 = vadd.f32 %v2677, %v3214
    %v3353 = vadd.f32 %v2678, %v3219
    %v3354 = vadd.f32 %v2679, %v3222
    %v3355 = vadd.f32 %v2680, %v3227
    %v3356 = vadd.f32 %v2681, %v3230
    %v3357 = vadd.f32 %v2682, %v3235
    %v3358 = vadd.f32 %v2683, %v3238
    %v3359 = vadd.f32 %v2684, %v3243
    %v3360 = vadd.f32 %v2685, %v3246
    %v3361 = vadd.f32 %v2686, %v3251
    %v3362 = vadd.f32 %v2687, %v3254
    %v3363 = vadd.f32 %v2688, %v3259
    %v3364 = vadd.f32 %v2689, %v3262
    %v3365 = vadd.f32 %v2690, %v3267
    %v3366 = vadd.f32 %v2691, %v3270
    %v3367 = vadd.f32 %v2692, %v3275
    %v3368 = vadd.f32 %v2693, %v3278
    %v3369 = vadd.f32 %v2694, %v3283
    %v3370 = vadd.f32 %v2695, %v3286
    %v3371 = vadd.f32 %v2696, %v3291
    %v3372 = vadd.f32 %v2697, %v3294
    %v3373 = vadd.f32 %v2698, %v3299
    %v3374 = vadd.f32 %v2699, %v3302
    %v3375 = vadd.f32 %v2700, %v3307
    %v3376 = vadd.f32 %v2701, %v3310
    %s3377 = scalar_lea.vmem [#allocation3], 1280
    %v3378 = vld [vmem:[%s3377] sm:$0xf]
    %v3379 = vld [vmem:[%s3377 + $0x4] sm:$0xf]
    %v3380 = vld [vmem:[%s3377 + $0x8] sm:$0xf]
    %v3381 = vld [vmem:[%s3377 + $0xc] sm:$0xf]
    %v3382 = vld [vmem:[%s3377 + $0x10] sm:$0xf]
    %v3383 = vld [vmem:[%s3377 + $0x14] sm:$0xf]
    %v3384 = vld [vmem:[%s3377 + $0x18] sm:$0xf]
    %v3385 = vld [vmem:[%s3377 + $0x1c] sm:$0xf]
    %v3386 = vld [vmem:[%s3377 + $0x20] sm:$0xf]
    %v3387 = vld [vmem:[%s3377 + $0x24] sm:$0xf]
    %v3388 = vld [vmem:[%s3377 + $0x28] sm:$0xf]
    %v3389 = vld [vmem:[%s3377 + $0x2c] sm:$0xf]
    %v3390 = vld [vmem:[%s3377 + $0x30] sm:$0xf]
    %v3391 = vld [vmem:[%s3377 + $0x34] sm:$0xf]
    %v3392 = vld [vmem:[%s3377 + $0x38] sm:$0xf]
    %v3393 = vld [vmem:[%s3377 + $0x3c] sm:$0xf]
    %v3394 = vld [vmem:[%s3377 + $0x40] sm:$0xf]
    %v3395 = vld [vmem:[%s3377 + $0x44] sm:$0xf]
    %v3396 = vld [vmem:[%s3377 + $0x48] sm:$0xf]
    %v3397 = vld [vmem:[%s3377 + $0x4c] sm:$0xf]
    %v3398 = vld [vmem:[%s3377 + $0x50] sm:$0xf]
    %v3399 = vld [vmem:[%s3377 + $0x54] sm:$0xf]
    %v3400 = vld [vmem:[%s3377 + $0x58] sm:$0xf]
    %v3401 = vld [vmem:[%s3377 + $0x5c] sm:$0xf]
    %v3402 = vld [vmem:[%s3377 + $0x60] sm:$0xf]
    %v3403 = vld [vmem:[%s3377 + $0x64] sm:$0xf]
    %v3404 = vld [vmem:[%s3377 + $0x68] sm:$0xf]
    %v3405 = vld [vmem:[%s3377 + $0x6c] sm:$0xf]
    %v3406 = vld [vmem:[%s3377 + $0x70] sm:$0xf]
    %v3407 = vld [vmem:[%s3377 + $0x74] sm:$0xf]
    %v3408 = vld [vmem:[%s3377 + $0x78] sm:$0xf]
    %v3409 = vld [vmem:[%s3377 + $0x7c] sm:$0xf]
    %v3410 = vld [vmem:[%s3377 + $0x80] sm:$0xf]
    %v3411 = vld [vmem:[%s3377 + $0x84] sm:$0xf]
    %v3412 = vld [vmem:[%s3377 + $0x88] sm:$0xf]
    %v3413 = vld [vmem:[%s3377 + $0x8c] sm:$0xf]
    %v3414 = vld [vmem:[%s3377 + $0x90] sm:$0xf]
    %v3415 = vld [vmem:[%s3377 + $0x94] sm:$0xf]
    %v3416 = vld [vmem:[%s3377 + $0x98] sm:$0xf]
    %v3417 = vld [vmem:[%s3377 + $0x9c] sm:$0xf]
    %v3418 = vld [vmem:[%s3377 + $0xa0] sm:$0xf]
    %v3419 = vld [vmem:[%s3377 + $0xa4] sm:$0xf]
    %v3420 = vld [vmem:[%s3377 + $0xa8] sm:$0xf]
    %v3421 = vld [vmem:[%s3377 + $0xac] sm:$0xf]
    %v3422 = vld [vmem:[%s3377 + $0xb0] sm:$0xf]
    %v3423 = vld [vmem:[%s3377 + $0xb4] sm:$0xf]
    %v3424 = vld [vmem:[%s3377 + $0xb8] sm:$0xf]
    %v3425 = vld [vmem:[%s3377 + $0xbc] sm:$0xf]
    %v3426 = vld [vmem:[%s3377 + $0xc0] sm:$0xf]
    %v3427 = vld [vmem:[%s3377 + $0xc4] sm:$0xf]
    %v3428 = vld [vmem:[%s3377 + $0xc8] sm:$0xf]
    %v3429 = vld [vmem:[%s3377 + $0xcc] sm:$0xf]
    %v3430 = vld [vmem:[%s3377 + $0xd0] sm:$0xf]
    %v3431 = vld [vmem:[%s3377 + $0xd4] sm:$0xf]
    %v3432 = vld [vmem:[%s3377 + $0xd8] sm:$0xf]
    %v3433 = vld [vmem:[%s3377 + $0xdc] sm:$0xf]
    %v3434 = vld [vmem:[%s3377 + $0xe0] sm:$0xf]
    %v3435 = vld [vmem:[%s3377 + $0xe4] sm:$0xf]
    %v3436 = vld [vmem:[%s3377 + $0xe8] sm:$0xf]
    %v3437 = vld [vmem:[%s3377 + $0xec] sm:$0xf]
    %v3438 = vld [vmem:[%s3377 + $0xf0] sm:$0xf]
    %v3439 = vld [vmem:[%s3377 + $0xf4] sm:$0xf]
    %v3440 = vld [vmem:[%s3377 + $0xf8] sm:$0xf]
    %v3441 = vld [vmem:[%s3377 + $0xfc] sm:$0xf]
    %s3442 = scalar_lea.vmem [#allocation6], 320
    %v3443 = vld [vmem:[%s3442] sm:$0xf]
    %v3444 = vld [vmem:[%s3442 + $0x4] sm:$0xf]
    %v3445 = vld [vmem:[%s3442 + $0x8] sm:$0xf]
    %v3446 = vld [vmem:[%s3442 + $0xc] sm:$0xf]
    %v3447 = vld [vmem:[%s3442 + $0x10] sm:$0xf]
    %v3448 = vld [vmem:[%s3442 + $0x14] sm:$0xf]
    %v3449 = vld [vmem:[%s3442 + $0x18] sm:$0xf]
    %v3450 = vld [vmem:[%s3442 + $0x1c] sm:$0xf]
    %v3451 = vld [vmem:[%s3442 + $0x20] sm:$0xf]
    %v3452 = vld [vmem:[%s3442 + $0x24] sm:$0xf]
    %v3453 = vld [vmem:[%s3442 + $0x28] sm:$0xf]
    %v3454 = vld [vmem:[%s3442 + $0x2c] sm:$0xf]
    %v3455 = vld [vmem:[%s3442 + $0x30] sm:$0xf]
    %v3456 = vld [vmem:[%s3442 + $0x34] sm:$0xf]
    %v3457 = vld [vmem:[%s3442 + $0x38] sm:$0xf]
    %v3458 = vld [vmem:[%s3442 + $0x3c] sm:$0xf]
    %v3523 = vunpack.c.l.b16 %v3378
    %v3524 = vunpack.c.l.b16 %v3379
    %v3525 = vunpack.c.l.b16 %v3380
    %v3526 = vunpack.c.l.b16 %v3381
    %v3527 = vunpack.c.l.b16 %v3382
    %v3528 = vunpack.c.l.b16 %v3383
    %v3529 = vunpack.c.l.b16 %v3384
    %v3530 = vunpack.c.l.b16 %v3385
    %v3531 = vunpack.c.l.b16 %v3386
    %v3532 = vunpack.c.l.b16 %v3387
    %v3533 = vunpack.c.l.b16 %v3388
    %v3534 = vunpack.c.l.b16 %v3389
    %v3535 = vunpack.c.l.b16 %v3390
    %v3536 = vunpack.c.l.b16 %v3391
    %v3537 = vunpack.c.l.b16 %v3392
    %v3538 = vunpack.c.l.b16 %v3393
    %v3539 = vunpack.c.l.b16 %v3394
    %v3540 = vunpack.c.l.b16 %v3395
    %v3541 = vunpack.c.l.b16 %v3396
    %v3542 = vunpack.c.l.b16 %v3397
    %v3543 = vunpack.c.l.b16 %v3398
    %v3544 = vunpack.c.l.b16 %v3399
    %v3545 = vunpack.c.l.b16 %v3400
    %v3546 = vunpack.c.l.b16 %v3401
    %v3547 = vunpack.c.l.b16 %v3402
    %v3548 = vunpack.c.l.b16 %v3403
    %v3549 = vunpack.c.l.b16 %v3404
    %v3550 = vunpack.c.l.b16 %v3405
    %v3551 = vunpack.c.l.b16 %v3406
    %v3552 = vunpack.c.l.b16 %v3407
    %v3553 = vunpack.c.l.b16 %v3408
    %v3554 = vunpack.c.l.b16 %v3409
    %v3555 = vunpack.c.l.b16 %v3410
    %v3556 = vunpack.c.l.b16 %v3411
    %v3557 = vunpack.c.l.b16 %v3412
    %v3558 = vunpack.c.l.b16 %v3413
    %v3559 = vunpack.c.l.b16 %v3414
    %v3560 = vunpack.c.l.b16 %v3415
    %v3561 = vunpack.c.l.b16 %v3416
    %v3562 = vunpack.c.l.b16 %v3417
    %v3563 = vunpack.c.l.b16 %v3418
    %v3564 = vunpack.c.l.b16 %v3419
    %v3565 = vunpack.c.l.b16 %v3420
    %v3566 = vunpack.c.l.b16 %v3421
    %v3567 = vunpack.c.l.b16 %v3422
    %v3568 = vunpack.c.l.b16 %v3423
    %v3569 = vunpack.c.l.b16 %v3424
    %v3570 = vunpack.c.l.b16 %v3425
    %v3571 = vunpack.c.l.b16 %v3426
    %v3572 = vunpack.c.l.b16 %v3427
    %v3573 = vunpack.c.l.b16 %v3428
    %v3574 = vunpack.c.l.b16 %v3429
    %v3575 = vunpack.c.l.b16 %v3430
    %v3576 = vunpack.c.l.b16 %v3431
    %v3577 = vunpack.c.l.b16 %v3432
    %v3578 = vunpack.c.l.b16 %v3433
    %v3579 = vunpack.c.l.b16 %v3434
    %v3580 = vunpack.c.l.b16 %v3435
    %v3581 = vunpack.c.l.b16 %v3436
    %v3582 = vunpack.c.l.b16 %v3437
    %v3583 = vunpack.c.l.b16 %v3438
    %v3584 = vunpack.c.l.b16 %v3439
    %v3585 = vunpack.c.l.b16 %v3440
    %v3586 = vunpack.c.l.b16 %v3441
    %v3587 = vpack.c.b16 %v3524, %v3523
    %v3588 = vpack.c.b16 %v3526, %v3525
    %v3589 = vpack.c.b16 %v3528, %v3527
    %v3590 = vpack.c.b16 %v3530, %v3529
    %v3591 = vpack.c.b16 %v3532, %v3531
    %v3592 = vpack.c.b16 %v3534, %v3533
    %v3593 = vpack.c.b16 %v3536, %v3535
    %v3594 = vpack.c.b16 %v3538, %v3537
    %v3595 = vpack.c.b16 %v3540, %v3539
    %v3596 = vpack.c.b16 %v3542, %v3541
    %v3597 = vpack.c.b16 %v3544, %v3543
    %v3598 = vpack.c.b16 %v3546, %v3545
    %v3599 = vpack.c.b16 %v3548, %v3547
    %v3600 = vpack.c.b16 %v3550, %v3549
    %v3601 = vpack.c.b16 %v3552, %v3551
    %v3602 = vpack.c.b16 %v3554, %v3553
    %v3603 = vpack.c.b16 %v3556, %v3555
    %v3604 = vpack.c.b16 %v3558, %v3557
    %v3605 = vpack.c.b16 %v3560, %v3559
    %v3606 = vpack.c.b16 %v3562, %v3561
    %v3607 = vpack.c.b16 %v3564, %v3563
    %v3608 = vpack.c.b16 %v3566, %v3565
    %v3609 = vpack.c.b16 %v3568, %v3567
    %v3610 = vpack.c.b16 %v3570, %v3569
    %v3611 = vpack.c.b16 %v3572, %v3571
    %v3612 = vpack.c.b16 %v3574, %v3573
    %v3613 = vpack.c.b16 %v3576, %v3575
    %v3614 = vpack.c.b16 %v3578, %v3577
    %v3615 = vpack.c.b16 %v3580, %v3579
    %v3616 = vpack.c.b16 %v3582, %v3581
    %v3617 = vpack.c.b16 %v3584, %v3583
    %v3618 = vpack.c.b16 %v3586, %v3585
    %v3667 = vunpack.c.l.b16 %v3443
    %v3668 = vunpack.c.l.b16 %v3444
    %v3669 = vunpack.c.l.b16 %v3445
    %v3670 = vunpack.c.l.b16 %v3446
    %v3671 = vunpack.c.l.b16 %v3447
    %v3672 = vunpack.c.l.b16 %v3448
    %v3673 = vunpack.c.l.b16 %v3449
    %v3674 = vunpack.c.l.b16 %v3450
    %v3675 = vunpack.c.l.b16 %v3451
    %v3676 = vunpack.c.l.b16 %v3452
    %v3677 = vunpack.c.l.b16 %v3453
    %v3678 = vunpack.c.l.b16 %v3454
    %v3679 = vunpack.c.l.b16 %v3455
    %v3680 = vunpack.c.l.b16 %v3456
    %v3681 = vunpack.c.l.b16 %v3457
    %v3682 = vunpack.c.l.b16 %v3458
    %v3683 = vpack.c.b16 %v3668, %v3667
    %v3684 = vpack.c.b16 %v3670, %v3669
    %v3685 = vpack.c.b16 %v3672, %v3671
    %v3686 = vpack.c.b16 %v3674, %v3673
    %v3687 = vpack.c.b16 %v3676, %v3675
    %v3688 = vpack.c.b16 %v3678, %v3677
    %v3689 = vpack.c.b16 %v3680, %v3679
    %v3690 = vpack.c.b16 %v3682, %v3681
    %3699 = vmatprep.subr.bf16.mxu0 0
    %3700 = vmatpush1.bf16.msra.mxu0 %v3683
    %3701 = vmatprep.subr.bf16.mxu0 0
    %3702 = vmatpush1.bf16.msra.mxu0 %v3684
    %3703 = vmatprep.subr.bf16.mxu0 0
    %3704 = vmatpush1.bf16.msra.mxu0 %v3685
    %3705 = vmatprep.subr.bf16.mxu0 0
    %3706 = vmatpush1.bf16.msra.mxu0 %v3686
    %3707 = vmatprep.subr.bf16.mxu0 0
    %3708 = vmatpush1.bf16.msra.mxu0 %v3687
    %3709 = vmatprep.subr.bf16.mxu0 0
    %3710 = vmatpush1.bf16.msra.mxu0 %v3688
    %3711 = vmatprep.subr.bf16.mxu0 0
    %3712 = vmatpush1.bf16.msra.mxu0 %v3689
    %3713 = vmatprep.subr.bf16.mxu0 0
    %3714 = vmatpush1.bf16.msra.mxu0 %v3690
    %3715 = vmatprep.subr.bf16.mxu0 0
    %3716 = vmatpush1.bf16.msra.mxu0 0
    %3717 = vmatprep.subr.bf16.mxu0 0
    %3718 = vmatpush1.bf16.msra.mxu0 0
    %3719 = vmatprep.subr.bf16.mxu0 0
    %3720 = vmatpush1.bf16.msra.mxu0 0
    %3721 = vmatprep.subr.bf16.mxu0 0
    %3722 = vmatpush1.bf16.msra.mxu0 0
    %3723 = vmatprep.subr.bf16.mxu0 0
    %3724 = vmatpush1.bf16.msra.mxu0 0
    %3725 = vmatprep.subr.bf16.mxu0 0
    %3726 = vmatpush1.bf16.msra.mxu0 0
    %3727 = vmatprep.subr.bf16.mxu0 0
    %3728 = vmatpush1.bf16.msra.mxu0 0
    %3729 = vmatprep.subr.bf16.mxu0 0
    %3730 = vmatpush1.bf16.msra.mxu0 0
    %3731 = vmatprep.mubr.bf16.mxu0 0
    %3732 = vmatmul.mubr.bf16.gmra.mrb[0].mxu0 %v3587
    %v3733 = vpop.f32.mrb[0].mxu0
    %v3734 = vadd.f32 0.0, %v3733
    %v3735 = vpop.f32.mrb[0].mxu0
    %v3736 = vpop.f32.mrb[0].mxu0
    %v3737 = vadd.f32 0.0, %v3736
    %v3738 = vpop.f32.mrb[0].mxu0
    %3739 = vmatprep.mubr.bf16.mxu0 0
    %3740 = vmatmul.mubr.bf16.gmra.mrb[0].mxu0 %v3588
    %v3741 = vpop.f32.mrb[0].mxu0
    %v3742 = vadd.f32 0.0, %v3741
    %v3743 = vpop.f32.mrb[0].mxu0
    %v3744 = vpop.f32.mrb[0].mxu0
    %v3745 = vadd.f32 0.0, %v3744
    %v3746 = vpop.f32.mrb[0].mxu0
    %3747 = vmatprep.mubr.bf16.mxu0 0
    %3748 = vmatmul.mubr.bf16.gmra.mrb[0].mxu0 %v3589
    %v3749 = vpop.f32.mrb[0].mxu0
    %v3750 = vadd.f32 0.0, %v3749
    %v3751 = vpop.f32.mrb[0].mxu0
    %v3752 = vpop.f32.mrb[0].mxu0
    %v3753 = vadd.f32 0.0, %v3752
    %v3754 = vpop.f32.mrb[0].mxu0
    %3755 = vmatprep.mubr.bf16.mxu0 0
    %3756 = vmatmul.mubr.bf16.gmra.mrb[0].mxu0 %v3590
    %v3757 = vpop.f32.mrb[0].mxu0
    %v3758 = vadd.f32 0.0, %v3757
    %v3759 = vpop.f32.mrb[0].mxu0
    %v3760 = vpop.f32.mrb[0].mxu0
    %v3761 = vadd.f32 0.0, %v3760
    %v3762 = vpop.f32.mrb[0].mxu0
    %3763 = vmatprep.mubr.bf16.mxu0 0
    %3764 = vmatmul.mubr.bf16.gmra.mrb[0].mxu0 %v3591
    %v3765 = vpop.f32.mrb[0].mxu0
    %v3766 = vadd.f32 0.0, %v3765
    %v3767 = vpop.f32.mrb[0].mxu0
    %v3768 = vpop.f32.mrb[0].mxu0
    %v3769 = vadd.f32 0.0, %v3768
    %v3770 = vpop.f32.mrb[0].mxu0
    %3771 = vmatprep.mubr.bf16.mxu0 0
    %3772 = vmatmul.mubr.bf16.gmra.mrb[0].mxu0 %v3592
    %v3773 = vpop.f32.mrb[0].mxu0
    %v3774 = vadd.f32 0.0, %v3773
    %v3775 = vpop.f32.mrb[0].mxu0
    %v3776 = vpop.f32.mrb[0].mxu0
    %v3777 = vadd.f32 0.0, %v3776
    %v3778 = vpop.f32.mrb[0].mxu0
    %3779 = vmatprep.mubr.bf16.mxu0 0
    %3780 = vmatmul.mubr.bf16.gmra.mrb[0].mxu0 %v3593
    %v3781 = vpop.f32.mrb[0].mxu0
    %v3782 = vadd.f32 0.0, %v3781
    %v3783 = vpop.f32.mrb[0].mxu0
    %v3784 = vpop.f32.mrb[0].mxu0
    %v3785 = vadd.f32 0.0, %v3784
    %v3786 = vpop.f32.mrb[0].mxu0
    %3787 = vmatprep.mubr.bf16.mxu0 0
    %3788 = vmatmul.mubr.bf16.gmra.mrb[0].mxu0 %v3594
    %v3789 = vpop.f32.mrb[0].mxu0
    %v3790 = vadd.f32 0.0, %v3789
    %v3791 = vpop.f32.mrb[0].mxu0
    %v3792 = vpop.f32.mrb[0].mxu0
    %v3793 = vadd.f32 0.0, %v3792
    %v3794 = vpop.f32.mrb[0].mxu0
    %3795 = vmatprep.mubr.bf16.mxu0 0
    %3796 = vmatmul.mubr.bf16.gmra.mrb[0].mxu0 %v3595
    %v3797 = vpop.f32.mrb[0].mxu0
    %v3798 = vadd.f32 0.0, %v3797
    %v3799 = vpop.f32.mrb[0].mxu0
    %v3800 = vpop.f32.mrb[0].mxu0
    %v3801 = vadd.f32 0.0, %v3800
    %v3802 = vpop.f32.mrb[0].mxu0
    %3803 = vmatprep.mubr.bf16.mxu0 0
    %3804 = vmatmul.mubr.bf16.gmra.mrb[0].mxu0 %v3596
    %v3805 = vpop.f32.mrb[0].mxu0
    %v3806 = vadd.f32 0.0, %v3805
    %v3807 = vpop.f32.mrb[0].mxu0
    %v3808 = vpop.f32.mrb[0].mxu0
    %v3809 = vadd.f32 0.0, %v3808
    %v3810 = vpop.f32.mrb[0].mxu0
    %3811 = vmatprep.mubr.bf16.mxu0 0
    %3812 = vmatmul.mubr.bf16.gmra.mrb[0].mxu0 %v3597
    %v3813 = vpop.f32.mrb[0].mxu0
    %v3814 = vadd.f32 0.0, %v3813
    %v3815 = vpop.f32.mrb[0].mxu0
    %v3816 = vpop.f32.mrb[0].mxu0
    %v3817 = vadd.f32 0.0, %v3816
    %v3818 = vpop.f32.mrb[0].mxu0
    %3819 = vmatprep.mubr.bf16.mxu0 0
    %3820 = vmatmul.mubr.bf16.gmra.mrb[0].mxu0 %v3598
    %v3821 = vpop.f32.mrb[0].mxu0
    %v3822 = vadd.f32 0.0, %v3821
    %v3823 = vpop.f32.mrb[0].mxu0
    %v3824 = vpop.f32.mrb[0].mxu0
    %v3825 = vadd.f32 0.0, %v3824
    %v3826 = vpop.f32.mrb[0].mxu0
    %3827 = vmatprep.mubr.bf16.mxu0 0
    %3828 = vmatmul.mubr.bf16.gmra.mrb[0].mxu0 %v3599
    %v3829 = vpop.f32.mrb[0].mxu0
    %v3830 = vadd.f32 0.0, %v3829
    %v3831 = vpop.f32.mrb[0].mxu0
    %v3832 = vpop.f32.mrb[0].mxu0
    %v3833 = vadd.f32 0.0, %v3832
    %v3834 = vpop.f32.mrb[0].mxu0
    %3835 = vmatprep.mubr.bf16.mxu0 0
    %3836 = vmatmul.mubr.bf16.gmra.mrb[0].mxu0 %v3600
    %v3837 = vpop.f32.mrb[0].mxu0
    %v3838 = vadd.f32 0.0, %v3837
    %v3839 = vpop.f32.mrb[0].mxu0
    %v3840 = vpop.f32.mrb[0].mxu0
    %v3841 = vadd.f32 0.0, %v3840
    %v3842 = vpop.f32.mrb[0].mxu0
    %3843 = vmatprep.mubr.bf16.mxu0 0
    %3844 = vmatmul.mubr.bf16.gmra.mrb[0].mxu0 %v3601
    %v3845 = vpop.f32.mrb[0].mxu0
    %v3846 = vadd.f32 0.0, %v3845
    %v3847 = vpop.f32.mrb[0].mxu0
    %v3848 = vpop.f32.mrb[0].mxu0
    %v3849 = vadd.f32 0.0, %v3848
    %v3850 = vpop.f32.mrb[0].mxu0
    %3851 = vmatprep.mubr.bf16.mxu0 0
    %3852 = vmatmul.mubr.bf16.gmra.mrb[0].mxu0 %v3602
    %v3853 = vpop.f32.mrb[0].mxu0
    %v3854 = vadd.f32 0.0, %v3853
    %v3855 = vpop.f32.mrb[0].mxu0
    %v3856 = vpop.f32.mrb[0].mxu0
    %v3857 = vadd.f32 0.0, %v3856
    %v3858 = vpop.f32.mrb[0].mxu0
    %3859 = vmatprep.mubr.bf16.mxu0 0
    %3860 = vmatmul.mubr.bf16.gmra.mrb[0].mxu0 %v3603
    %v3861 = vpop.f32.mrb[0].mxu0
    %v3862 = vadd.f32 0.0, %v3861
    %v3863 = vpop.f32.mrb[0].mxu0
    %v3864 = vpop.f32.mrb[0].mxu0
    %v3865 = vadd.f32 0.0, %v3864
    %v3866 = vpop.f32.mrb[0].mxu0
    %3867 = vmatprep.mubr.bf16.mxu0 0
    %3868 = vmatmul.mubr.bf16.gmra.mrb[0].mxu0 %v3604
    %v3869 = vpop.f32.mrb[0].mxu0
    %v3870 = vadd.f32 0.0, %v3869
    %v3871 = vpop.f32.mrb[0].mxu0
    %v3872 = vpop.f32.mrb[0].mxu0
    %v3873 = vadd.f32 0.0, %v3872
    %v3874 = vpop.f32.mrb[0].mxu0
    %3875 = vmatprep.mubr.bf16.mxu0 0
    %3876 = vmatmul.mubr.bf16.gmra.mrb[0].mxu0 %v3605
    %v3877 = vpop.f32.mrb[0].mxu0
    %v3878 = vadd.f32 0.0, %v3877
    %v3879 = vpop.f32.mrb[0].mxu0
    %v3880 = vpop.f32.mrb[0].mxu0
    %v3881 = vadd.f32 0.0, %v3880
    %v3882 = vpop.f32.mrb[0].mxu0
    %3883 = vmatprep.mubr.bf16.mxu0 0
    %3884 = vmatmul.mubr.bf16.gmra.mrb[0].mxu0 %v3606
    %v3885 = vpop.f32.mrb[0].mxu0
    %v3886 = vadd.f32 0.0, %v3885
    %v3887 = vpop.f32.mrb[0].mxu0
    %v3888 = vpop.f32.mrb[0].mxu0
    %v3889 = vadd.f32 0.0, %v3888
    %v3890 = vpop.f32.mrb[0].mxu0
    %3891 = vmatprep.mubr.bf16.mxu0 0
    %3892 = vmatmul.mubr.bf16.gmra.mrb[0].mxu0 %v3607
    %v3893 = vpop.f32.mrb[0].mxu0
    %v3894 = vadd.f32 0.0, %v3893
    %v3895 = vpop.f32.mrb[0].mxu0
    %v3896 = vpop.f32.mrb[0].mxu0
    %v3897 = vadd.f32 0.0, %v3896
    %v3898 = vpop.f32.mrb[0].mxu0
    %3899 = vmatprep.mubr.bf16.mxu0 0
    %3900 = vmatmul.mubr.bf16.gmra.mrb[0].mxu0 %v3608
    %v3901 = vpop.f32.mrb[0].mxu0
    %v3902 = vadd.f32 0.0, %v3901
    %v3903 = vpop.f32.mrb[0].mxu0
    %v3904 = vpop.f32.mrb[0].mxu0
    %v3905 = vadd.f32 0.0, %v3904
    %v3906 = vpop.f32.mrb[0].mxu0
    %3907 = vmatprep.mubr.bf16.mxu0 0
    %3908 = vmatmul.mubr.bf16.gmra.mrb[0].mxu0 %v3609
    %v3909 = vpop.f32.mrb[0].mxu0
    %v3910 = vadd.f32 0.0, %v3909
    %v3911 = vpop.f32.mrb[0].mxu0
    %v3912 = vpop.f32.mrb[0].mxu0
    %v3913 = vadd.f32 0.0, %v3912
    %v3914 = vpop.f32.mrb[0].mxu0
    %3915 = vmatprep.mubr.bf16.mxu0 0
    %3916 = vmatmul.mubr.bf16.gmra.mrb[0].mxu0 %v3610
    %v3917 = vpop.f32.mrb[0].mxu0
    %v3918 = vadd.f32 0.0, %v3917
    %v3919 = vpop.f32.mrb[0].mxu0
    %v3920 = vpop.f32.mrb[0].mxu0
    %v3921 = vadd.f32 0.0, %v3920
    %v3922 = vpop.f32.mrb[0].mxu0
    %3923 = vmatprep.mubr.bf16.mxu0 0
    %3924 = vmatmul.mubr.bf16.gmra.mrb[0].mxu0 %v3611
    %v3925 = vpop.f32.mrb[0].mxu0
    %v3926 = vadd.f32 0.0, %v3925
    %v3927 = vpop.f32.mrb[0].mxu0
    %v3928 = vpop.f32.mrb[0].mxu0
    %v3929 = vadd.f32 0.0, %v3928
    %v3930 = vpop.f32.mrb[0].mxu0
    %3931 = vmatprep.mubr.bf16.mxu0 0
    %3932 = vmatmul.mubr.bf16.gmra.mrb[0].mxu0 %v3612
    %v3933 = vpop.f32.mrb[0].mxu0
    %v3934 = vadd.f32 0.0, %v3933
    %v3935 = vpop.f32.mrb[0].mxu0
    %v3936 = vpop.f32.mrb[0].mxu0
    %v3937 = vadd.f32 0.0, %v3936
    %v3938 = vpop.f32.mrb[0].mxu0
    %3939 = vmatprep.mubr.bf16.mxu0 0
    %3940 = vmatmul.mubr.bf16.gmra.mrb[0].mxu0 %v3613
    %v3941 = vpop.f32.mrb[0].mxu0
    %v3942 = vadd.f32 0.0, %v3941
    %v3943 = vpop.f32.mrb[0].mxu0
    %v3944 = vpop.f32.mrb[0].mxu0
    %v3945 = vadd.f32 0.0, %v3944
    %v3946 = vpop.f32.mrb[0].mxu0
    %3947 = vmatprep.mubr.bf16.mxu0 0
    %3948 = vmatmul.mubr.bf16.gmra.mrb[0].mxu0 %v3614
    %v3949 = vpop.f32.mrb[0].mxu0
    %v3950 = vadd.f32 0.0, %v3949
    %v3951 = vpop.f32.mrb[0].mxu0
    %v3952 = vpop.f32.mrb[0].mxu0
    %v3953 = vadd.f32 0.0, %v3952
    %v3954 = vpop.f32.mrb[0].mxu0
    %3955 = vmatprep.mubr.bf16.mxu0 0
    %3956 = vmatmul.mubr.bf16.gmra.mrb[0].mxu0 %v3615
    %v3957 = vpop.f32.mrb[0].mxu0
    %v3958 = vadd.f32 0.0, %v3957
    %v3959 = vpop.f32.mrb[0].mxu0
    %v3960 = vpop.f32.mrb[0].mxu0
    %v3961 = vadd.f32 0.0, %v3960
    %v3962 = vpop.f32.mrb[0].mxu0
    %3963 = vmatprep.mubr.bf16.mxu0 0
    %3964 = vmatmul.mubr.bf16.gmra.mrb[0].mxu0 %v3616
    %v3965 = vpop.f32.mrb[0].mxu0
    %v3966 = vadd.f32 0.0, %v3965
    %v3967 = vpop.f32.mrb[0].mxu0
    %v3968 = vpop.f32.mrb[0].mxu0
    %v3969 = vadd.f32 0.0, %v3968
    %v3970 = vpop.f32.mrb[0].mxu0
    %3971 = vmatprep.mubr.bf16.mxu0 0
    %3972 = vmatmul.mubr.bf16.gmra.mrb[0].mxu0 %v3617
    %v3973 = vpop.f32.mrb[0].mxu0
    %v3974 = vadd.f32 0.0, %v3973
    %v3975 = vpop.f32.mrb[0].mxu0
    %v3976 = vpop.f32.mrb[0].mxu0
    %v3977 = vadd.f32 0.0, %v3976
    %v3978 = vpop.f32.mrb[0].mxu0
    %3979 = vmatprep.mubr.bf16.mxu0 0
    %3980 = vmatmul.mubr.bf16.gmra.mrb[0].mxu0 %v3618
    %v3981 = vpop.f32.mrb[0].mxu0
    %v3982 = vadd.f32 0.0, %v3981
    %v3983 = vpop.f32.mrb[0].mxu0
    %v3984 = vpop.f32.mrb[0].mxu0
    %v3985 = vadd.f32 0.0, %v3984
    %v3986 = vpop.f32.mrb[0].mxu0
    %3987 = vdwg.mxu0
    %v3988 = vadd.f32 %v3313, %v3734
    %v3989 = vadd.f32 %v3314, %v3737
    %v3990 = vadd.f32 %v3315, %v3742
    %v3991 = vadd.f32 %v3316, %v3745
    %v3992 = vadd.f32 %v3317, %v3750
    %v3993 = vadd.f32 %v3318, %v3753
    %v3994 = vadd.f32 %v3319, %v3758
    %v3995 = vadd.f32 %v3320, %v3761
    %v3996 = vadd.f32 %v3321, %v3766
    %v3997 = vadd.f32 %v3322, %v3769
    %v3998 = vadd.f32 %v3323, %v3774
    %v3999 = vadd.f32 %v3324, %v3777
    %v4000 = vadd.f32 %v3325, %v3782
    %v4001 = vadd.f32 %v3326, %v3785
    %v4002 = vadd.f32 %v3327, %v3790
    %v4003 = vadd.f32 %v3328, %v3793
    %v4004 = vadd.f32 %v3329, %v3798
    %v4005 = vadd.f32 %v3330, %v3801
    %v4006 = vadd.f32 %v3331, %v3806
    %v4007 = vadd.f32 %v3332, %v3809
    %v4008 = vadd.f32 %v3333, %v3814
    %v4009 = vadd.f32 %v3334, %v3817
    %v4010 = vadd.f32 %v3335, %v3822
    %v4011 = vadd.f32 %v3336, %v3825
    %v4012 = vadd.f32 %v3337, %v3830
    %v4013 = vadd.f32 %v3338, %v3833
    %v4014 = vadd.f32 %v3339, %v3838
    %v4015 = vadd.f32 %v3340, %v3841
    %v4016 = vadd.f32 %v3341, %v3846
    %v4017 = vadd.f32 %v3342, %v3849
    %v4018 = vadd.f32 %v3343, %v3854
    %v4019 = vadd.f32 %v3344, %v3857
    %v4020 = vadd.f32 %v3345, %v3862
    %v4021 = vadd.f32 %v3346, %v3865
    %v4022 = vadd.f32 %v3347, %v3870
    %v4023 = vadd.f32 %v3348, %v3873
    %v4024 = vadd.f32 %v3349, %v3878
    %v4025 = vadd.f32 %v3350, %v3881
    %v4026 = vadd.f32 %v3351, %v3886
    %v4027 = vadd.f32 %v3352, %v3889
    %v4028 = vadd.f32 %v3353, %v3894
    %v4029 = vadd.f32 %v3354, %v3897
    %v4030 = vadd.f32 %v3355, %v3902
    %v4031 = vadd.f32 %v3356, %v3905
    %v4032 = vadd.f32 %v3357, %v3910
    %v4033 = vadd.f32 %v3358, %v3913
    %v4034 = vadd.f32 %v3359, %v3918
    %v4035 = vadd.f32 %v3360, %v3921
    %v4036 = vadd.f32 %v3361, %v3926
    %v4037 = vadd.f32 %v3362, %v3929
    %v4038 = vadd.f32 %v3363, %v3934
    %v4039 = vadd.f32 %v3364, %v3937
    %v4040 = vadd.f32 %v3365, %v3942
    %v4041 = vadd.f32 %v3366, %v3945
    %v4042 = vadd.f32 %v3367, %v3950
    %v4043 = vadd.f32 %v3368, %v3953
    %v4044 = vadd.f32 %v3369, %v3958
    %v4045 = vadd.f32 %v3370, %v3961
    %v4046 = vadd.f32 %v3371, %v3966
    %v4047 = vadd.f32 %v3372, %v3969
    %v4048 = vadd.f32 %v3373, %v3974
    %v4049 = vadd.f32 %v3374, %v3977
    %v4050 = vadd.f32 %v3375, %v3982
    %v4051 = vadd.f32 %v3376, %v3985
    %s4052 = scalar_lea.vmem [#allocation3], 1536
    %v4053 = vld [vmem:[%s4052] sm:$0xf]
    %v4054 = vld [vmem:[%s4052 + $0x4] sm:$0xf]
    %v4055 = vld [vmem:[%s4052 + $0x8] sm:$0xf]
    %v4056 = vld [vmem:[%s4052 + $0xc] sm:$0xf]
    %v4057 = vld [vmem:[%s4052 + $0x10] sm:$0xf]
    %v4058 = vld [vmem:[%s4052 + $0x14] sm:$0xf]
    %v4059 = vld [vmem:[%s4052 + $0x18] sm:$0xf]
    %v4060 = vld [vmem:[%s4052 + $0x1c] sm:$0xf]
    %v4061 = vld [vmem:[%s4052 + $0x20] sm:$0xf]
    %v4062 = vld [vmem:[%s4052 + $0x24] sm:$0xf]
    %v4063 = vld [vmem:[%s4052 + $0x28] sm:$0xf]
    %v4064 = vld [vmem:[%s4052 + $0x2c] sm:$0xf]
    %v4065 = vld [vmem:[%s4052 + $0x30] sm:$0xf]
    %v4066 = vld [vmem:[%s4052 + $0x34] sm:$0xf]
    %v4067 = vld [vmem:[%s4052 + $0x38] sm:$0xf]
    %v4068 = vld [vmem:[%s4052 + $0x3c] sm:$0xf]
    %v4069 = vld [vmem:[%s4052 + $0x40] sm:$0xf]
    %v4070 = vld [vmem:[%s4052 + $0x44] sm:$0xf]
    %v4071 = vld [vmem:[%s4052 + $0x48] sm:$0xf]
    %v4072 = vld [vmem:[%s4052 + $0x4c] sm:$0xf]
    %v4073 = vld [vmem:[%s4052 + $0x50] sm:$0xf]
    %v4074 = vld [vmem:[%s4052 + $0x54] sm:$0xf]
    %v4075 = vld [vmem:[%s4052 + $0x58] sm:$0xf]
    %v4076 = vld [vmem:[%s4052 + $0x5c] sm:$0xf]
    %v4077 = vld [vmem:[%s4052 + $0x60] sm:$0xf]
    %v4078 = vld [vmem:[%s4052 + $0x64] sm:$0xf]
    %v4079 = vld [vmem:[%s4052 + $0x68] sm:$0xf]
    %v4080 = vld [vmem:[%s4052 + $0x6c] sm:$0xf]
    %v4081 = vld [vmem:[%s4052 + $0x70] sm:$0xf]
    %v4082 = vld [vmem:[%s4052 + $0x74] sm:$0xf]
    %v4083 = vld [vmem:[%s4052 + $0x78] sm:$0xf]
    %v4084 = vld [vmem:[%s4052 + $0x7c] sm:$0xf]
    %v4085 = vld [vmem:[%s4052 + $0x80] sm:$0xf]
    %v4086 = vld [vmem:[%s4052 + $0x84] sm:$0xf]
    %v4087 = vld [vmem:[%s4052 + $0x88] sm:$0xf]
    %v4088 = vld [vmem:[%s4052 + $0x8c] sm:$0xf]
    %v4089 = vld [vmem:[%s4052 + $0x90] sm:$0xf]
    %v4090 = vld [vmem:[%s4052 + $0x94] sm:$0xf]
    %v4091 = vld [vmem:[%s4052 + $0x98] sm:$0xf]
    %v4092 = vld [vmem:[%s4052 + $0x9c] sm:$0xf]
    %v4093 = vld [vmem:[%s4052 + $0xa0] sm:$0xf]
    %v4094 = vld [vmem:[%s4052 + $0xa4] sm:$0xf]
    %v4095 = vld [vmem:[%s4052 + $0xa8] sm:$0xf]
    %v4096 = vld [vmem:[%s4052 + $0xac] sm:$0xf]
    %v4097 = vld [vmem:[%s4052 + $0xb0] sm:$0xf]
    %v4098 = vld [vmem:[%s4052 + $0xb4] sm:$0xf]
    %v4099 = vld [vmem:[%s4052 + $0xb8] sm:$0xf]
    %v4100 = vld [vmem:[%s4052 + $0xbc] sm:$0xf]
    %v4101 = vld [vmem:[%s4052 + $0xc0] sm:$0xf]
    %v4102 = vld [vmem:[%s4052 + $0xc4] sm:$0xf]
    %v4103 = vld [vmem:[%s4052 + $0xc8] sm:$0xf]
    %v4104 = vld [vmem:[%s4052 + $0xcc] sm:$0xf]
    %v4105 = vld [vmem:[%s4052 + $0xd0] sm:$0xf]
    %v4106 = vld [vmem:[%s4052 + $0xd4] sm:$0xf]
    %v4107 = vld [vmem:[%s4052 + $0xd8] sm:$0xf]
    %v4108 = vld [vmem:[%s4052 + $0xdc] sm:$0xf]
    %v4109 = vld [vmem:[%s4052 + $0xe0] sm:$0xf]
    %v4110 = vld [vmem:[%s4052 + $0xe4] sm:$0xf]
    %v4111 = vld [vmem:[%s4052 + $0xe8] sm:$0xf]
    %v4112 = vld [vmem:[%s4052 + $0xec] sm:$0xf]
    %v4113 = vld [vmem:[%s4052 + $0xf0] sm:$0xf]
    %v4114 = vld [vmem:[%s4052 + $0xf4] sm:$0xf]
    %v4115 = vld [vmem:[%s4052 + $0xf8] sm:$0xf]
    %v4116 = vld [vmem:[%s4052 + $0xfc] sm:$0xf]
    %s4117 = scalar_lea.vmem [#allocation6], 384
    %v4118 = vld [vmem:[%s4117] sm:$0xf]
    %v4119 = vld [vmem:[%s4117 + $0x4] sm:$0xf]
    %v4120 = vld [vmem:[%s4117 + $0x8] sm:$0xf]
    %v4121 = vld [vmem:[%s4117 + $0xc] sm:$0xf]
    %v4122 = vld [vmem:[%s4117 + $0x10] sm:$0xf]
    %v4123 = vld [vmem:[%s4117 + $0x14] sm:$0xf]
    %v4124 = vld [vmem:[%s4117 + $0x18] sm:$0xf]
    %v4125 = vld [vmem:[%s4117 + $0x1c] sm:$0xf]
    %v4126 = vld [vmem:[%s4117 + $0x20] sm:$0xf]
    %v4127 = vld [vmem:[%s4117 + $0x24] sm:$0xf]
    %v4128 = vld [vmem:[%s4117 + $0x28] sm:$0xf]
    %v4129 = vld [vmem:[%s4117 + $0x2c] sm:$0xf]
    %v4130 = vld [vmem:[%s4117 + $0x30] sm:$0xf]
    %v4131 = vld [vmem:[%s4117 + $0x34] sm:$0xf]
    %v4132 = vld [vmem:[%s4117 + $0x38] sm:$0xf]
    %v4133 = vld [vmem:[%s4117 + $0x3c] sm:$0xf]
    %v4198 = vunpack.c.l.b16 %v4053
    %v4199 = vunpack.c.l.b16 %v4054
    %v4200 = vunpack.c.l.b16 %v4055
    %v4201 = vunpack.c.l.b16 %v4056
    %v4202 = vunpack.c.l.b16 %v4057
    %v4203 = vunpack.c.l.b16 %v4058
    %v4204 = vunpack.c.l.b16 %v4059
    %v4205 = vunpack.c.l.b16 %v4060
    %v4206 = vunpack.c.l.b16 %v4061
    %v4207 = vunpack.c.l.b16 %v4062
    %v4208 = vunpack.c.l.b16 %v4063
    %v4209 = vunpack.c.l.b16 %v4064
    %v4210 = vunpack.c.l.b16 %v4065
    %v4211 = vunpack.c.l.b16 %v4066
    %v4212 = vunpack.c.l.b16 %v4067
    %v4213 = vunpack.c.l.b16 %v4068
    %v4214 = vunpack.c.l.b16 %v4069
    %v4215 = vunpack.c.l.b16 %v4070
    %v4216 = vunpack.c.l.b16 %v4071
    %v4217 = vunpack.c.l.b16 %v4072
    %v4218 = vunpack.c.l.b16 %v4073
    %v4219 = vunpack.c.l.b16 %v4074
    %v4220 = vunpack.c.l.b16 %v4075
    %v4221 = vunpack.c.l.b16 %v4076
    %v4222 = vunpack.c.l.b16 %v4077
    %v4223 = vunpack.c.l.b16 %v4078
    %v4224 = vunpack.c.l.b16 %v4079
    %v4225 = vunpack.c.l.b16 %v4080
    %v4226 = vunpack.c.l.b16 %v4081
    %v4227 = vunpack.c.l.b16 %v4082
    %v4228 = vunpack.c.l.b16 %v4083
    %v4229 = vunpack.c.l.b16 %v4084
    %v4230 = vunpack.c.l.b16 %v4085
    %v4231 = vunpack.c.l.b16 %v4086
    %v4232 = vunpack.c.l.b16 %v4087
    %v4233 = vunpack.c.l.b16 %v4088
    %v4234 = vunpack.c.l.b16 %v4089
    %v4235 = vunpack.c.l.b16 %v4090
    %v4236 = vunpack.c.l.b16 %v4091
    %v4237 = vunpack.c.l.b16 %v4092
    %v4238 = vunpack.c.l.b16 %v4093
    %v4239 = vunpack.c.l.b16 %v4094
    %v4240 = vunpack.c.l.b16 %v4095
    %v4241 = vunpack.c.l.b16 %v4096
    %v4242 = vunpack.c.l.b16 %v4097
    %v4243 = vunpack.c.l.b16 %v4098
    %v4244 = vunpack.c.l.b16 %v4099
    %v4245 = vunpack.c.l.b16 %v4100
    %v4246 = vunpack.c.l.b16 %v4101
    %v4247 = vunpack.c.l.b16 %v4102
    %v4248 = vunpack.c.l.b16 %v4103
    %v4249 = vunpack.c.l.b16 %v4104
    %v4250 = vunpack.c.l.b16 %v4105
    %v4251 = vunpack.c.l.b16 %v4106
    %v4252 = vunpack.c.l.b16 %v4107
    %v4253 = vunpack.c.l.b16 %v4108
    %v4254 = vunpack.c.l.b16 %v4109
    %v4255 = vunpack.c.l.b16 %v4110
    %v4256 = vunpack.c.l.b16 %v4111
    %v4257 = vunpack.c.l.b16 %v4112
    %v4258 = vunpack.c.l.b16 %v4113
    %v4259 = vunpack.c.l.b16 %v4114
    %v4260 = vunpack.c.l.b16 %v4115
    %v4261 = vunpack.c.l.b16 %v4116
    %v4262 = vpack.c.b16 %v4199, %v4198
    %v4263 = vpack.c.b16 %v4201, %v4200
    %v4264 = vpack.c.b16 %v4203, %v4202
    %v4265 = vpack.c.b16 %v4205, %v4204
    %v4266 = vpack.c.b16 %v4207, %v4206
    %v4267 = vpack.c.b16 %v4209, %v4208
    %v4268 = vpack.c.b16 %v4211, %v4210
    %v4269 = vpack.c.b16 %v4213, %v4212
    %v4270 = vpack.c.b16 %v4215, %v4214
    %v4271 = vpack.c.b16 %v4217, %v4216
    %v4272 = vpack.c.b16 %v4219, %v4218
    %v4273 = vpack.c.b16 %v4221, %v4220
    %v4274 = vpack.c.b16 %v4223, %v4222
    %v4275 = vpack.c.b16 %v4225, %v4224
    %v4276 = vpack.c.b16 %v4227, %v4226
    %v4277 = vpack.c.b16 %v4229, %v4228
    %v4278 = vpack.c.b16 %v4231, %v4230
    %v4279 = vpack.c.b16 %v4233, %v4232
    %v4280 = vpack.c.b16 %v4235, %v4234
    %v4281 = vpack.c.b16 %v4237, %v4236
    %v4282 = vpack.c.b16 %v4239, %v4238
    %v4283 = vpack.c.b16 %v4241, %v4240
    %v4284 = vpack.c.b16 %v4243, %v4242
    %v4285 = vpack.c.b16 %v4245, %v4244
    %v4286 = vpack.c.b16 %v4247, %v4246
    %v4287 = vpack.c.b16 %v4249, %v4248
    %v4288 = vpack.c.b16 %v4251, %v4250
    %v4289 = vpack.c.b16 %v4253, %v4252
    %v4290 = vpack.c.b16 %v4255, %v4254
    %v4291 = vpack.c.b16 %v4257, %v4256
    %v4292 = vpack.c.b16 %v4259, %v4258
    %v4293 = vpack.c.b16 %v4261, %v4260
    %v4342 = vunpack.c.l.b16 %v4118
    %v4343 = vunpack.c.l.b16 %v4119
    %v4344 = vunpack.c.l.b16 %v4120
    %v4345 = vunpack.c.l.b16 %v4121
    %v4346 = vunpack.c.l.b16 %v4122
    %v4347 = vunpack.c.l.b16 %v4123
    %v4348 = vunpack.c.l.b16 %v4124
    %v4349 = vunpack.c.l.b16 %v4125
    %v4350 = vunpack.c.l.b16 %v4126
    %v4351 = vunpack.c.l.b16 %v4127
    %v4352 = vunpack.c.l.b16 %v4128
    %v4353 = vunpack.c.l.b16 %v4129
    %v4354 = vunpack.c.l.b16 %v4130
    %v4355 = vunpack.c.l.b16 %v4131
    %v4356 = vunpack.c.l.b16 %v4132
    %v4357 = vunpack.c.l.b16 %v4133
    %v4358 = vpack.c.b16 %v4343, %v4342
    %v4359 = vpack.c.b16 %v4345, %v4344
    %v4360 = vpack.c.b16 %v4347, %v4346
    %v4361 = vpack.c.b16 %v4349, %v4348
    %v4362 = vpack.c.b16 %v4351, %v4350
    %v4363 = vpack.c.b16 %v4353, %v4352
    %v4364 = vpack.c.b16 %v4355, %v4354
    %v4365 = vpack.c.b16 %v4357, %v4356
    %4374 = vmatprep.subr.bf16.mxu0 0
    %4375 = vmatpush1.bf16.msra.mxu0 %v4358
    %4376 = vmatprep.subr.bf16.mxu0 0
    %4377 = vmatpush1.bf16.msra.mxu0 %v4359
    %4378 = vmatprep.subr.bf16.mxu0 0
    %4379 = vmatpush1.bf16.msra.mxu0 %v4360
    %4380 = vmatprep.subr.bf16.mxu0 0
    %4381 = vmatpush1.bf16.msra.mxu0 %v4361
    %4382 = vmatprep.subr.bf16.mxu0 0
    %4383 = vmatpush1.bf16.msra.mxu0 %v4362
    %4384 = vmatprep.subr.bf16.mxu0 0
    %4385 = vmatpush1.bf16.msra.mxu0 %v4363
    %4386 = vmatprep.subr.bf16.mxu0 0
    %4387 = vmatpush1.bf16.msra.mxu0 %v4364
    %4388 = vmatprep.subr.bf16.mxu0 0
    %4389 = vmatpush1.bf16.msra.mxu0 %v4365
    %4390 = vmatprep.subr.bf16.mxu0 0
    %4391 = vmatpush1.bf16.msra.mxu0 0
    %4392 = vmatprep.subr.bf16.mxu0 0
    %4393 = vmatpush1.bf16.msra.mxu0 0
    %4394 = vmatprep.subr.bf16.mxu0 0
    %4395 = vmatpush1.bf16.msra.mxu0 0
    %4396 = vmatprep.subr.bf16.mxu0 0
    %4397 = vmatpush1.bf16.msra.mxu0 0
    %4398 = vmatprep.subr.bf16.mxu0 0
    %4399 = vmatpush1.bf16.msra.mxu0 0
    %4400 = vmatprep.subr.bf16.mxu0 0
    %4401 = vmatpush1.bf16.msra.mxu0 0
    %4402 = vmatprep.subr.bf16.mxu0 0
    %4403 = vmatpush1.bf16.msra.mxu0 0
    %4404 = vmatprep.subr.bf16.mxu0 0
    %4405 = vmatpush1.bf16.msra.mxu0 0
    %4406 = vmatprep.mubr.bf16.mxu0 0
    %4407 = vmatmul.mubr.bf16.gmra.mrb[0].mxu0 %v4262
    %v4408 = vpop.f32.mrb[0].mxu0
    %v4409 = vadd.f32 0.0, %v4408
    %v4410 = vpop.f32.mrb[0].mxu0
    %v4411 = vpop.f32.mrb[0].mxu0
    %v4412 = vadd.f32 0.0, %v4411
    %v4413 = vpop.f32.mrb[0].mxu0
    %4414 = vmatprep.mubr.bf16.mxu0 0
    %4415 = vmatmul.mubr.bf16.gmra.mrb[0].mxu0 %v4263
    %v4416 = vpop.f32.mrb[0].mxu0
    %v4417 = vadd.f32 0.0, %v4416
    %v4418 = vpop.f32.mrb[0].mxu0
    %v4419 = vpop.f32.mrb[0].mxu0
    %v4420 = vadd.f32 0.0, %v4419
    %v4421 = vpop.f32.mrb[0].mxu0
    %4422 = vmatprep.mubr.bf16.mxu0 0
    %4423 = vmatmul.mubr.bf16.gmra.mrb[0].mxu0 %v4264
    %v4424 = vpop.f32.mrb[0].mxu0
    %v4425 = vadd.f32 0.0, %v4424
    %v4426 = vpop.f32.mrb[0].mxu0
    %v4427 = vpop.f32.mrb[0].mxu0
    %v4428 = vadd.f32 0.0, %v4427
    %v4429 = vpop.f32.mrb[0].mxu0
    %4430 = vmatprep.mubr.bf16.mxu0 0
    %4431 = vmatmul.mubr.bf16.gmra.mrb[0].mxu0 %v4265
    %v4432 = vpop.f32.mrb[0].mxu0
    %v4433 = vadd.f32 0.0, %v4432
    %v4434 = vpop.f32.mrb[0].mxu0
    %v4435 = vpop.f32.mrb[0].mxu0
    %v4436 = vadd.f32 0.0, %v4435
    %v4437 = vpop.f32.mrb[0].mxu0
    %4438 = vmatprep.mubr.bf16.mxu0 0
    %4439 = vmatmul.mubr.bf16.gmra.mrb[0].mxu0 %v4266
    %v4440 = vpop.f32.mrb[0].mxu0
    %v4441 = vadd.f32 0.0, %v4440
    %v4442 = vpop.f32.mrb[0].mxu0
    %v4443 = vpop.f32.mrb[0].mxu0
    %v4444 = vadd.f32 0.0, %v4443
    %v4445 = vpop.f32.mrb[0].mxu0
    %4446 = vmatprep.mubr.bf16.mxu0 0
    %4447 = vmatmul.mubr.bf16.gmra.mrb[0].mxu0 %v4267
    %v4448 = vpop.f32.mrb[0].mxu0
    %v4449 = vadd.f32 0.0, %v4448
    %v4450 = vpop.f32.mrb[0].mxu0
    %v4451 = vpop.f32.mrb[0].mxu0
    %v4452 = vadd.f32 0.0, %v4451
    %v4453 = vpop.f32.mrb[0].mxu0
    %4454 = vmatprep.mubr.bf16.mxu0 0
    %4455 = vmatmul.mubr.bf16.gmra.mrb[0].mxu0 %v4268
    %v4456 = vpop.f32.mrb[0].mxu0
    %v4457 = vadd.f32 0.0, %v4456
    %v4458 = vpop.f32.mrb[0].mxu0
    %v4459 = vpop.f32.mrb[0].mxu0
    %v4460 = vadd.f32 0.0, %v4459
    %v4461 = vpop.f32.mrb[0].mxu0
    %4462 = vmatprep.mubr.bf16.mxu0 0
    %4463 = vmatmul.mubr.bf16.gmra.mrb[0].mxu0 %v4269
    %v4464 = vpop.f32.mrb[0].mxu0
    %v4465 = vadd.f32 0.0, %v4464
    %v4466 = vpop.f32.mrb[0].mxu0
    %v4467 = vpop.f32.mrb[0].mxu0
    %v4468 = vadd.f32 0.0, %v4467
    %v4469 = vpop.f32.mrb[0].mxu0
    %4470 = vmatprep.mubr.bf16.mxu0 0
    %4471 = vmatmul.mubr.bf16.gmra.mrb[0].mxu0 %v4270
    %v4472 = vpop.f32.mrb[0].mxu0
    %v4473 = vadd.f32 0.0, %v4472
    %v4474 = vpop.f32.mrb[0].mxu0
    %v4475 = vpop.f32.mrb[0].mxu0
    %v4476 = vadd.f32 0.0, %v4475
    %v4477 = vpop.f32.mrb[0].mxu0
    %4478 = vmatprep.mubr.bf16.mxu0 0
    %4479 = vmatmul.mubr.bf16.gmra.mrb[0].mxu0 %v4271
    %v4480 = vpop.f32.mrb[0].mxu0
    %v4481 = vadd.f32 0.0, %v4480
    %v4482 = vpop.f32.mrb[0].mxu0
    %v4483 = vpop.f32.mrb[0].mxu0
    %v4484 = vadd.f32 0.0, %v4483
    %v4485 = vpop.f32.mrb[0].mxu0
    %4486 = vmatprep.mubr.bf16.mxu0 0
    %4487 = vmatmul.mubr.bf16.gmra.mrb[0].mxu0 %v4272
    %v4488 = vpop.f32.mrb[0].mxu0
    %v4489 = vadd.f32 0.0, %v4488
    %v4490 = vpop.f32.mrb[0].mxu0
    %v4491 = vpop.f32.mrb[0].mxu0
    %v4492 = vadd.f32 0.0, %v4491
    %v4493 = vpop.f32.mrb[0].mxu0
    %4494 = vmatprep.mubr.bf16.mxu0 0
    %4495 = vmatmul.mubr.bf16.gmra.mrb[0].mxu0 %v4273
    %v4496 = vpop.f32.mrb[0].mxu0
    %v4497 = vadd.f32 0.0, %v4496
    %v4498 = vpop.f32.mrb[0].mxu0
    %v4499 = vpop.f32.mrb[0].mxu0
    %v4500 = vadd.f32 0.0, %v4499
    %v4501 = vpop.f32.mrb[0].mxu0
    %4502 = vmatprep.mubr.bf16.mxu0 0
    %4503 = vmatmul.mubr.bf16.gmra.mrb[0].mxu0 %v4274
    %v4504 = vpop.f32.mrb[0].mxu0
    %v4505 = vadd.f32 0.0, %v4504
    %v4506 = vpop.f32.mrb[0].mxu0
    %v4507 = vpop.f32.mrb[0].mxu0
    %v4508 = vadd.f32 0.0, %v4507
    %v4509 = vpop.f32.mrb[0].mxu0
    %4510 = vmatprep.mubr.bf16.mxu0 0
    %4511 = vmatmul.mubr.bf16.gmra.mrb[0].mxu0 %v4275
    %v4512 = vpop.f32.mrb[0].mxu0
    %v4513 = vadd.f32 0.0, %v4512
    %v4514 = vpop.f32.mrb[0].mxu0
    %v4515 = vpop.f32.mrb[0].mxu0
    %v4516 = vadd.f32 0.0, %v4515
    %v4517 = vpop.f32.mrb[0].mxu0
    %4518 = vmatprep.mubr.bf16.mxu0 0
    %4519 = vmatmul.mubr.bf16.gmra.mrb[0].mxu0 %v4276
    %v4520 = vpop.f32.mrb[0].mxu0
    %v4521 = vadd.f32 0.0, %v4520
    %v4522 = vpop.f32.mrb[0].mxu0
    %v4523 = vpop.f32.mrb[0].mxu0
    %v4524 = vadd.f32 0.0, %v4523
    %v4525 = vpop.f32.mrb[0].mxu0
    %4526 = vmatprep.mubr.bf16.mxu0 0
    %4527 = vmatmul.mubr.bf16.gmra.mrb[0].mxu0 %v4277
    %v4528 = vpop.f32.mrb[0].mxu0
    %v4529 = vadd.f32 0.0, %v4528
    %v4530 = vpop.f32.mrb[0].mxu0
    %v4531 = vpop.f32.mrb[0].mxu0
    %v4532 = vadd.f32 0.0, %v4531
    %v4533 = vpop.f32.mrb[0].mxu0
    %4534 = vmatprep.mubr.bf16.mxu0 0
    %4535 = vmatmul.mubr.bf16.gmra.mrb[0].mxu0 %v4278
    %v4536 = vpop.f32.mrb[0].mxu0
    %v4537 = vadd.f32 0.0, %v4536
    %v4538 = vpop.f32.mrb[0].mxu0
    %v4539 = vpop.f32.mrb[0].mxu0
    %v4540 = vadd.f32 0.0, %v4539
    %v4541 = vpop.f32.mrb[0].mxu0
    %4542 = vmatprep.mubr.bf16.mxu0 0
    %4543 = vmatmul.mubr.bf16.gmra.mrb[0].mxu0 %v4279
    %v4544 = vpop.f32.mrb[0].mxu0
    %v4545 = vadd.f32 0.0, %v4544
    %v4546 = vpop.f32.mrb[0].mxu0
    %v4547 = vpop.f32.mrb[0].mxu0
    %v4548 = vadd.f32 0.0, %v4547
    %v4549 = vpop.f32.mrb[0].mxu0
    %4550 = vmatprep.mubr.bf16.mxu0 0
    %4551 = vmatmul.mubr.bf16.gmra.mrb[0].mxu0 %v4280
    %v4552 = vpop.f32.mrb[0].mxu0
    %v4553 = vadd.f32 0.0, %v4552
    %v4554 = vpop.f32.mrb[0].mxu0
    %v4555 = vpop.f32.mrb[0].mxu0
    %v4556 = vadd.f32 0.0, %v4555
    %v4557 = vpop.f32.mrb[0].mxu0
    %4558 = vmatprep.mubr.bf16.mxu0 0
    %4559 = vmatmul.mubr.bf16.gmra.mrb[0].mxu0 %v4281
    %v4560 = vpop.f32.mrb[0].mxu0
    %v4561 = vadd.f32 0.0, %v4560
    %v4562 = vpop.f32.mrb[0].mxu0
    %v4563 = vpop.f32.mrb[0].mxu0
    %v4564 = vadd.f32 0.0, %v4563
    %v4565 = vpop.f32.mrb[0].mxu0
    %4566 = vmatprep.mubr.bf16.mxu0 0
    %4567 = vmatmul.mubr.bf16.gmra.mrb[0].mxu0 %v4282
    %v4568 = vpop.f32.mrb[0].mxu0
    %v4569 = vadd.f32 0.0, %v4568
    %v4570 = vpop.f32.mrb[0].mxu0
    %v4571 = vpop.f32.mrb[0].mxu0
    %v4572 = vadd.f32 0.0, %v4571
    %v4573 = vpop.f32.mrb[0].mxu0
    %4574 = vmatprep.mubr.bf16.mxu0 0
    %4575 = vmatmul.mubr.bf16.gmra.mrb[0].mxu0 %v4283
    %v4576 = vpop.f32.mrb[0].mxu0
    %v4577 = vadd.f32 0.0, %v4576
    %v4578 = vpop.f32.mrb[0].mxu0
    %v4579 = vpop.f32.mrb[0].mxu0
    %v4580 = vadd.f32 0.0, %v4579
    %v4581 = vpop.f32.mrb[0].mxu0
    %4582 = vmatprep.mubr.bf16.mxu0 0
    %4583 = vmatmul.mubr.bf16.gmra.mrb[0].mxu0 %v4284
    %v4584 = vpop.f32.mrb[0].mxu0
    %v4585 = vadd.f32 0.0, %v4584
    %v4586 = vpop.f32.mrb[0].mxu0
    %v4587 = vpop.f32.mrb[0].mxu0
    %v4588 = vadd.f32 0.0, %v4587
    %v4589 = vpop.f32.mrb[0].mxu0
    %4590 = vmatprep.mubr.bf16.mxu0 0
    %4591 = vmatmul.mubr.bf16.gmra.mrb[0].mxu0 %v4285
    %v4592 = vpop.f32.mrb[0].mxu0
    %v4593 = vadd.f32 0.0, %v4592
    %v4594 = vpop.f32.mrb[0].mxu0
    %v4595 = vpop.f32.mrb[0].mxu0
    %v4596 = vadd.f32 0.0, %v4595
    %v4597 = vpop.f32.mrb[0].mxu0
    %4598 = vmatprep.mubr.bf16.mxu0 0
    %4599 = vmatmul.mubr.bf16.gmra.mrb[0].mxu0 %v4286
    %v4600 = vpop.f32.mrb[0].mxu0
    %v4601 = vadd.f32 0.0, %v4600
    %v4602 = vpop.f32.mrb[0].mxu0
    %v4603 = vpop.f32.mrb[0].mxu0
    %v4604 = vadd.f32 0.0, %v4603
    %v4605 = vpop.f32.mrb[0].mxu0
    %4606 = vmatprep.mubr.bf16.mxu0 0
    %4607 = vmatmul.mubr.bf16.gmra.mrb[0].mxu0 %v4287
    %v4608 = vpop.f32.mrb[0].mxu0
    %v4609 = vadd.f32 0.0, %v4608
    %v4610 = vpop.f32.mrb[0].mxu0
    %v4611 = vpop.f32.mrb[0].mxu0
    %v4612 = vadd.f32 0.0, %v4611
    %v4613 = vpop.f32.mrb[0].mxu0
    %4614 = vmatprep.mubr.bf16.mxu0 0
    %4615 = vmatmul.mubr.bf16.gmra.mrb[0].mxu0 %v4288
    %v4616 = vpop.f32.mrb[0].mxu0
    %v4617 = vadd.f32 0.0, %v4616
    %v4618 = vpop.f32.mrb[0].mxu0
    %v4619 = vpop.f32.mrb[0].mxu0
    %v4620 = vadd.f32 0.0, %v4619
    %v4621 = vpop.f32.mrb[0].mxu0
    %4622 = vmatprep.mubr.bf16.mxu0 0
    %4623 = vmatmul.mubr.bf16.gmra.mrb[0].mxu0 %v4289
    %v4624 = vpop.f32.mrb[0].mxu0
    %v4625 = vadd.f32 0.0, %v4624
    %v4626 = vpop.f32.mrb[0].mxu0
    %v4627 = vpop.f32.mrb[0].mxu0
    %v4628 = vadd.f32 0.0, %v4627
    %v4629 = vpop.f32.mrb[0].mxu0
    %4630 = vmatprep.mubr.bf16.mxu0 0
    %4631 = vmatmul.mubr.bf16.gmra.mrb[0].mxu0 %v4290
    %v4632 = vpop.f32.mrb[0].mxu0
    %v4633 = vadd.f32 0.0, %v4632
    %v4634 = vpop.f32.mrb[0].mxu0
    %v4635 = vpop.f32.mrb[0].mxu0
    %v4636 = vadd.f32 0.0, %v4635
    %v4637 = vpop.f32.mrb[0].mxu0
    %4638 = vmatprep.mubr.bf16.mxu0 0
    %4639 = vmatmul.mubr.bf16.gmra.mrb[0].mxu0 %v4291
    %v4640 = vpop.f32.mrb[0].mxu0
    %v4641 = vadd.f32 0.0, %v4640
    %v4642 = vpop.f32.mrb[0].mxu0
    %v4643 = vpop.f32.mrb[0].mxu0
    %v4644 = vadd.f32 0.0, %v4643
    %v4645 = vpop.f32.mrb[0].mxu0
    %4646 = vmatprep.mubr.bf16.mxu0 0
    %4647 = vmatmul.mubr.bf16.gmra.mrb[0].mxu0 %v4292
    %v4648 = vpop.f32.mrb[0].mxu0
    %v4649 = vadd.f32 0.0, %v4648
    %v4650 = vpop.f32.mrb[0].mxu0
    %v4651 = vpop.f32.mrb[0].mxu0
    %v4652 = vadd.f32 0.0, %v4651
    %v4653 = vpop.f32.mrb[0].mxu0
    %4654 = vmatprep.mubr.bf16.mxu0 0
    %4655 = vmatmul.mubr.bf16.gmra.mrb[0].mxu0 %v4293
    %v4656 = vpop.f32.mrb[0].mxu0
    %v4657 = vadd.f32 0.0, %v4656
    %v4658 = vpop.f32.mrb[0].mxu0
    %v4659 = vpop.f32.mrb[0].mxu0
    %v4660 = vadd.f32 0.0, %v4659
    %v4661 = vpop.f32.mrb[0].mxu0
    %4662 = vdwg.mxu0
    %v4663 = vadd.f32 %v3988, %v4409
    %v4664 = vadd.f32 %v3989, %v4412
    %v4665 = vadd.f32 %v3990, %v4417
    %v4666 = vadd.f32 %v3991, %v4420
    %v4667 = vadd.f32 %v3992, %v4425
    %v4668 = vadd.f32 %v3993, %v4428
    %v4669 = vadd.f32 %v3994, %v4433
    %v4670 = vadd.f32 %v3995, %v4436
    %v4671 = vadd.f32 %v3996, %v4441
    %v4672 = vadd.f32 %v3997, %v4444
    %v4673 = vadd.f32 %v3998, %v4449
    %v4674 = vadd.f32 %v3999, %v4452
    %v4675 = vadd.f32 %v4000, %v4457
    %v4676 = vadd.f32 %v4001, %v4460
    %v4677 = vadd.f32 %v4002, %v4465
    %v4678 = vadd.f32 %v4003, %v4468
    %v4679 = vadd.f32 %v4004, %v4473
    %v4680 = vadd.f32 %v4005, %v4476
    %v4681 = vadd.f32 %v4006, %v4481
    %v4682 = vadd.f32 %v4007, %v4484
    %v4683 = vadd.f32 %v4008, %v4489
    %v4684 = vadd.f32 %v4009, %v4492
    %v4685 = vadd.f32 %v4010, %v4497
    %v4686 = vadd.f32 %v4011, %v4500
    %v4687 = vadd.f32 %v4012, %v4505
    %v4688 = vadd.f32 %v4013, %v4508
    %v4689 = vadd.f32 %v4014, %v4513
    %v4690 = vadd.f32 %v4015, %v4516
    %v4691 = vadd.f32 %v4016, %v4521
    %v4692 = vadd.f32 %v4017, %v4524
    %v4693 = vadd.f32 %v4018, %v4529
    %v4694 = vadd.f32 %v4019, %v4532
    %v4695 = vadd.f32 %v4020, %v4537
    %v4696 = vadd.f32 %v4021, %v4540
    %v4697 = vadd.f32 %v4022, %v4545
    %v4698 = vadd.f32 %v4023, %v4548
    %v4699 = vadd.f32 %v4024, %v4553
    %v4700 = vadd.f32 %v4025, %v4556
    %v4701 = vadd.f32 %v4026, %v4561
    %v4702 = vadd.f32 %v4027, %v4564
    %v4703 = vadd.f32 %v4028, %v4569
    %v4704 = vadd.f32 %v4029, %v4572
    %v4705 = vadd.f32 %v4030, %v4577
    %v4706 = vadd.f32 %v4031, %v4580
    %v4707 = vadd.f32 %v4032, %v4585
    %v4708 = vadd.f32 %v4033, %v4588
    %v4709 = vadd.f32 %v4034, %v4593
    %v4710 = vadd.f32 %v4035, %v4596
    %v4711 = vadd.f32 %v4036, %v4601
    %v4712 = vadd.f32 %v4037, %v4604
    %v4713 = vadd.f32 %v4038, %v4609
    %v4714 = vadd.f32 %v4039, %v4612
    %v4715 = vadd.f32 %v4040, %v4617
    %v4716 = vadd.f32 %v4041, %v4620
    %v4717 = vadd.f32 %v4042, %v4625
    %v4718 = vadd.f32 %v4043, %v4628
    %v4719 = vadd.f32 %v4044, %v4633
    %v4720 = vadd.f32 %v4045, %v4636
    %v4721 = vadd.f32 %v4046, %v4641
    %v4722 = vadd.f32 %v4047, %v4644
    %v4723 = vadd.f32 %v4048, %v4649
    %v4724 = vadd.f32 %v4049, %v4652
    %v4725 = vadd.f32 %v4050, %v4657
    %v4726 = vadd.f32 %v4051, %v4660
    %s4727 = scalar_lea.vmem [#allocation3], 1792
    %v4728 = vld [vmem:[%s4727] sm:$0xf]
    %v4729 = vld [vmem:[%s4727 + $0x4] sm:$0xf]
    %v4730 = vld [vmem:[%s4727 + $0x8] sm:$0xf]
    %v4731 = vld [vmem:[%s4727 + $0xc] sm:$0xf]
    %v4732 = vld [vmem:[%s4727 + $0x10] sm:$0xf]
    %v4733 = vld [vmem:[%s4727 + $0x14] sm:$0xf]
    %v4734 = vld [vmem:[%s4727 + $0x18] sm:$0xf]
    %v4735 = vld [vmem:[%s4727 + $0x1c] sm:$0xf]
    %v4736 = vld [vmem:[%s4727 + $0x20] sm:$0xf]
    %v4737 = vld [vmem:[%s4727 + $0x24] sm:$0xf]
    %v4738 = vld [vmem:[%s4727 + $0x28] sm:$0xf]
    %v4739 = vld [vmem:[%s4727 + $0x2c] sm:$0xf]
    %v4740 = vld [vmem:[%s4727 + $0x30] sm:$0xf]
    %v4741 = vld [vmem:[%s4727 + $0x34] sm:$0xf]
    %v4742 = vld [vmem:[%s4727 + $0x38] sm:$0xf]
    %v4743 = vld [vmem:[%s4727 + $0x3c] sm:$0xf]
    %v4744 = vld [vmem:[%s4727 + $0x40] sm:$0xf]
    %v4745 = vld [vmem:[%s4727 + $0x44] sm:$0xf]
    %v4746 = vld [vmem:[%s4727 + $0x48] sm:$0xf]
    %v4747 = vld [vmem:[%s4727 + $0x4c] sm:$0xf]
    %v4748 = vld [vmem:[%s4727 + $0x50] sm:$0xf]
    %v4749 = vld [vmem:[%s4727 + $0x54] sm:$0xf]
    %v4750 = vld [vmem:[%s4727 + $0x58] sm:$0xf]
    %v4751 = vld [vmem:[%s4727 + $0x5c] sm:$0xf]
    %v4752 = vld [vmem:[%s4727 + $0x60] sm:$0xf]
    %v4753 = vld [vmem:[%s4727 + $0x64] sm:$0xf]
    %v4754 = vld [vmem:[%s4727 + $0x68] sm:$0xf]
    %v4755 = vld [vmem:[%s4727 + $0x6c] sm:$0xf]
    %v4756 = vld [vmem:[%s4727 + $0x70] sm:$0xf]
    %v4757 = vld [vmem:[%s4727 + $0x74] sm:$0xf]
    %v4758 = vld [vmem:[%s4727 + $0x78] sm:$0xf]
    %v4759 = vld [vmem:[%s4727 + $0x7c] sm:$0xf]
    %v4760 = vld [vmem:[%s4727 + $0x80] sm:$0xf]
    %v4761 = vld [vmem:[%s4727 + $0x84] sm:$0xf]
    %v4762 = vld [vmem:[%s4727 + $0x88] sm:$0xf]
    %v4763 = vld [vmem:[%s4727 + $0x8c] sm:$0xf]
    %v4764 = vld [vmem:[%s4727 + $0x90] sm:$0xf]
    %v4765 = vld [vmem:[%s4727 + $0x94] sm:$0xf]
    %v4766 = vld [vmem:[%s4727 + $0x98] sm:$0xf]
    %v4767 = vld [vmem:[%s4727 + $0x9c] sm:$0xf]
    %v4768 = vld [vmem:[%s4727 + $0xa0] sm:$0xf]
    %v4769 = vld [vmem:[%s4727 + $0xa4] sm:$0xf]
    %v4770 = vld [vmem:[%s4727 + $0xa8] sm:$0xf]
    %v4771 = vld [vmem:[%s4727 + $0xac] sm:$0xf]
    %v4772 = vld [vmem:[%s4727 + $0xb0] sm:$0xf]
    %v4773 = vld [vmem:[%s4727 + $0xb4] sm:$0xf]
    %v4774 = vld [vmem:[%s4727 + $0xb8] sm:$0xf]
    %v4775 = vld [vmem:[%s4727 + $0xbc] sm:$0xf]
    %v4776 = vld [vmem:[%s4727 + $0xc0] sm:$0xf]
    %v4777 = vld [vmem:[%s4727 + $0xc4] sm:$0xf]
    %v4778 = vld [vmem:[%s4727 + $0xc8] sm:$0xf]
    %v4779 = vld [vmem:[%s4727 + $0xcc] sm:$0xf]
    %v4780 = vld [vmem:[%s4727 + $0xd0] sm:$0xf]
    %v4781 = vld [vmem:[%s4727 + $0xd4] sm:$0xf]
    %v4782 = vld [vmem:[%s4727 + $0xd8] sm:$0xf]
    %v4783 = vld [vmem:[%s4727 + $0xdc] sm:$0xf]
    %v4784 = vld [vmem:[%s4727 + $0xe0] sm:$0xf]
    %v4785 = vld [vmem:[%s4727 + $0xe4] sm:$0xf]
    %v4786 = vld [vmem:[%s4727 + $0xe8] sm:$0xf]
    %v4787 = vld [vmem:[%s4727 + $0xec] sm:$0xf]
    %v4788 = vld [vmem:[%s4727 + $0xf0] sm:$0xf]
    %v4789 = vld [vmem:[%s4727 + $0xf4] sm:$0xf]
    %v4790 = vld [vmem:[%s4727 + $0xf8] sm:$0xf]
    %v4791 = vld [vmem:[%s4727 + $0xfc] sm:$0xf]
    %s4792 = scalar_lea.vmem [#allocation6], 448
    %v4793 = vld [vmem:[%s4792] sm:$0xf]
    %v4794 = vld [vmem:[%s4792 + $0x4] sm:$0xf]
    %v4795 = vld [vmem:[%s4792 + $0x8] sm:$0xf]
    %v4796 = vld [vmem:[%s4792 + $0xc] sm:$0xf]
    %v4797 = vld [vmem:[%s4792 + $0x10] sm:$0xf]
    %v4798 = vld [vmem:[%s4792 + $0x14] sm:$0xf]
    %v4799 = vld [vmem:[%s4792 + $0x18] sm:$0xf]
    %v4800 = vld [vmem:[%s4792 + $0x1c] sm:$0xf]
    %v4801 = vld [vmem:[%s4792 + $0x20] sm:$0xf]
    %v4802 = vld [vmem:[%s4792 + $0x24] sm:$0xf]
    %v4803 = vld [vmem:[%s4792 + $0x28] sm:$0xf]
    %v4804 = vld [vmem:[%s4792 + $0x2c] sm:$0xf]
    %v4805 = vld [vmem:[%s4792 + $0x30] sm:$0xf]
    %v4806 = vld [vmem:[%s4792 + $0x34] sm:$0xf]
    %v4807 = vld [vmem:[%s4792 + $0x38] sm:$0xf]
    %v4808 = vld [vmem:[%s4792 + $0x3c] sm:$0xf]
    %v4873 = vunpack.c.l.b16 %v4728
    %v4874 = vunpack.c.l.b16 %v4729
    %v4875 = vunpack.c.l.b16 %v4730
    %v4876 = vunpack.c.l.b16 %v4731
    %v4877 = vunpack.c.l.b16 %v4732
    %v4878 = vunpack.c.l.b16 %v4733
    %v4879 = vunpack.c.l.b16 %v4734
    %v4880 = vunpack.c.l.b16 %v4735
    %v4881 = vunpack.c.l.b16 %v4736
    %v4882 = vunpack.c.l.b16 %v4737
    %v4883 = vunpack.c.l.b16 %v4738
    %v4884 = vunpack.c.l.b16 %v4739
    %v4885 = vunpack.c.l.b16 %v4740
    %v4886 = vunpack.c.l.b16 %v4741
    %v4887 = vunpack.c.l.b16 %v4742
    %v4888 = vunpack.c.l.b16 %v4743
    %v4889 = vunpack.c.l.b16 %v4744
    %v4890 = vunpack.c.l.b16 %v4745
    %v4891 = vunpack.c.l.b16 %v4746
    %v4892 = vunpack.c.l.b16 %v4747
    %v4893 = vunpack.c.l.b16 %v4748
    %v4894 = vunpack.c.l.b16 %v4749
    %v4895 = vunpack.c.l.b16 %v4750
    %v4896 = vunpack.c.l.b16 %v4751
    %v4897 = vunpack.c.l.b16 %v4752
    %v4898 = vunpack.c.l.b16 %v4753
    %v4899 = vunpack.c.l.b16 %v4754
    %v4900 = vunpack.c.l.b16 %v4755
    %v4901 = vunpack.c.l.b16 %v4756
    %v4902 = vunpack.c.l.b16 %v4757
    %v4903 = vunpack.c.l.b16 %v4758
    %v4904 = vunpack.c.l.b16 %v4759
    %v4905 = vunpack.c.l.b16 %v4760
    %v4906 = vunpack.c.l.b16 %v4761
    %v4907 = vunpack.c.l.b16 %v4762
    %v4908 = vunpack.c.l.b16 %v4763
    %v4909 = vunpack.c.l.b16 %v4764
    %v4910 = vunpack.c.l.b16 %v4765
    %v4911 = vunpack.c.l.b16 %v4766
    %v4912 = vunpack.c.l.b16 %v4767
    %v4913 = vunpack.c.l.b16 %v4768
    %v4914 = vunpack.c.l.b16 %v4769
    %v4915 = vunpack.c.l.b16 %v4770
    %v4916 = vunpack.c.l.b16 %v4771
    %v4917 = vunpack.c.l.b16 %v4772
    %v4918 = vunpack.c.l.b16 %v4773
    %v4919 = vunpack.c.l.b16 %v4774
    %v4920 = vunpack.c.l.b16 %v4775
    %v4921 = vunpack.c.l.b16 %v4776
    %v4922 = vunpack.c.l.b16 %v4777
    %v4923 = vunpack.c.l.b16 %v4778
    %v4924 = vunpack.c.l.b16 %v4779
    %v4925 = vunpack.c.l.b16 %v4780
    %v4926 = vunpack.c.l.b16 %v4781
    %v4927 = vunpack.c.l.b16 %v4782
    %v4928 = vunpack.c.l.b16 %v4783
    %v4929 = vunpack.c.l.b16 %v4784
    %v4930 = vunpack.c.l.b16 %v4785
    %v4931 = vunpack.c.l.b16 %v4786
    %v4932 = vunpack.c.l.b16 %v4787
    %v4933 = vunpack.c.l.b16 %v4788
    %v4934 = vunpack.c.l.b16 %v4789
    %v4935 = vunpack.c.l.b16 %v4790
    %v4936 = vunpack.c.l.b16 %v4791
    %v4937 = vpack.c.b16 %v4874, %v4873
    %v4938 = vpack.c.b16 %v4876, %v4875
    %v4939 = vpack.c.b16 %v4878, %v4877
    %v4940 = vpack.c.b16 %v4880, %v4879
    %v4941 = vpack.c.b16 %v4882, %v4881
    %v4942 = vpack.c.b16 %v4884, %v4883
    %v4943 = vpack.c.b16 %v4886, %v4885
    %v4944 = vpack.c.b16 %v4888, %v4887
    %v4945 = vpack.c.b16 %v4890, %v4889
    %v4946 = vpack.c.b16 %v4892, %v4891
    %v4947 = vpack.c.b16 %v4894, %v4893
    %v4948 = vpack.c.b16 %v4896, %v4895
    %v4949 = vpack.c.b16 %v4898, %v4897
    %v4950 = vpack.c.b16 %v4900, %v4899
    %v4951 = vpack.c.b16 %v4902, %v4901
    %v4952 = vpack.c.b16 %v4904, %v4903
    %v4953 = vpack.c.b16 %v4906, %v4905
    %v4954 = vpack.c.b16 %v4908, %v4907
    %v4955 = vpack.c.b16 %v4910, %v4909
    %v4956 = vpack.c.b16 %v4912, %v4911
    %v4957 = vpack.c.b16 %v4914, %v4913
    %v4958 = vpack.c.b16 %v4916, %v4915
    %v4959 = vpack.c.b16 %v4918, %v4917
    %v4960 = vpack.c.b16 %v4920, %v4919
    %v4961 = vpack.c.b16 %v4922, %v4921
    %v4962 = vpack.c.b16 %v4924, %v4923
    %v4963 = vpack.c.b16 %v4926, %v4925
    %v4964 = vpack.c.b16 %v4928, %v4927
    %v4965 = vpack.c.b16 %v4930, %v4929
    %v4966 = vpack.c.b16 %v4932, %v4931
    %v4967 = vpack.c.b16 %v4934, %v4933
    %v4968 = vpack.c.b16 %v4936, %v4935
    %v5017 = vunpack.c.l.b16 %v4793
    %v5018 = vunpack.c.l.b16 %v4794
    %v5019 = vunpack.c.l.b16 %v4795
    %v5020 = vunpack.c.l.b16 %v4796
    %v5021 = vunpack.c.l.b16 %v4797
    %v5022 = vunpack.c.l.b16 %v4798
    %v5023 = vunpack.c.l.b16 %v4799
    %v5024 = vunpack.c.l.b16 %v4800
    %v5025 = vunpack.c.l.b16 %v4801
    %v5026 = vunpack.c.l.b16 %v4802
    %v5027 = vunpack.c.l.b16 %v4803
    %v5028 = vunpack.c.l.b16 %v4804
    %v5029 = vunpack.c.l.b16 %v4805
    %v5030 = vunpack.c.l.b16 %v4806
    %v5031 = vunpack.c.l.b16 %v4807
    %v5032 = vunpack.c.l.b16 %v4808
    %v5033 = vpack.c.b16 %v5018, %v5017
    %v5034 = vpack.c.b16 %v5020, %v5019
    %v5035 = vpack.c.b16 %v5022, %v5021
    %v5036 = vpack.c.b16 %v5024, %v5023
    %v5037 = vpack.c.b16 %v5026, %v5025
    %v5038 = vpack.c.b16 %v5028, %v5027
    %v5039 = vpack.c.b16 %v5030, %v5029
    %v5040 = vpack.c.b16 %v5032, %v5031
    %5049 = vmatprep.subr.bf16.mxu0 0
    %5050 = vmatpush1.bf16.msra.mxu0 %v5033
    %5051 = vmatprep.subr.bf16.mxu0 0
    %5052 = vmatpush1.bf16.msra.mxu0 %v5034
    %5053 = vmatprep.subr.bf16.mxu0 0
    %5054 = vmatpush1.bf16.msra.mxu0 %v5035
    %5055 = vmatprep.subr.bf16.mxu0 0
    %5056 = vmatpush1.bf16.msra.mxu0 %v5036
    %5057 = vmatprep.subr.bf16.mxu0 0
    %5058 = vmatpush1.bf16.msra.mxu0 %v5037
    %5059 = vmatprep.subr.bf16.mxu0 0
    %5060 = vmatpush1.bf16.msra.mxu0 %v5038
    %5061 = vmatprep.subr.bf16.mxu0 0
    %5062 = vmatpush1.bf16.msra.mxu0 %v5039
    %5063 = vmatprep.subr.bf16.mxu0 0
    %5064 = vmatpush1.bf16.msra.mxu0 %v5040
    %5065 = vmatprep.subr.bf16.mxu0 0
    %5066 = vmatpush1.bf16.msra.mxu0 0
    %5067 = vmatprep.subr.bf16.mxu0 0
    %5068 = vmatpush1.bf16.msra.mxu0 0
    %5069 = vmatprep.subr.bf16.mxu0 0
    %5070 = vmatpush1.bf16.msra.mxu0 0
    %5071 = vmatprep.subr.bf16.mxu0 0
    %5072 = vmatpush1.bf16.msra.mxu0 0
    %5073 = vmatprep.subr.bf16.mxu0 0
    %5074 = vmatpush1.bf16.msra.mxu0 0
    %5075 = vmatprep.subr.bf16.mxu0 0
    %5076 = vmatpush1.bf16.msra.mxu0 0
    %5077 = vmatprep.subr.bf16.mxu0 0
    %5078 = vmatpush1.bf16.msra.mxu0 0
    %5079 = vmatprep.subr.bf16.mxu0 0
    %5080 = vmatpush1.bf16.msra.mxu0 0
    %5081 = vmatprep.mubr.bf16.mxu0 0
    %5082 = vmatmul.mubr.bf16.gmra.mrb[0].mxu0 %v4937
    %v5083 = vpop.f32.mrb[0].mxu0
    %v5084 = vadd.f32 0.0, %v5083
    %v5085 = vpop.f32.mrb[0].mxu0
    %v5086 = vpop.f32.mrb[0].mxu0
    %v5087 = vadd.f32 0.0, %v5086
    %v5088 = vpop.f32.mrb[0].mxu0
    %5089 = vmatprep.mubr.bf16.mxu0 0
    %5090 = vmatmul.mubr.bf16.gmra.mrb[0].mxu0 %v4938
    %v5091 = vpop.f32.mrb[0].mxu0
    %v5092 = vadd.f32 0.0, %v5091
    %v5093 = vpop.f32.mrb[0].mxu0
    %v5094 = vpop.f32.mrb[0].mxu0
    %v5095 = vadd.f32 0.0, %v5094
    %v5096 = vpop.f32.mrb[0].mxu0
    %5097 = vmatprep.mubr.bf16.mxu0 0
    %5098 = vmatmul.mubr.bf16.gmra.mrb[0].mxu0 %v4939
    %v5099 = vpop.f32.mrb[0].mxu0
    %v5100 = vadd.f32 0.0, %v5099
    %v5101 = vpop.f32.mrb[0].mxu0
    %v5102 = vpop.f32.mrb[0].mxu0
    %v5103 = vadd.f32 0.0, %v5102
    %v5104 = vpop.f32.mrb[0].mxu0
    %5105 = vmatprep.mubr.bf16.mxu0 0
    %5106 = vmatmul.mubr.bf16.gmra.mrb[0].mxu0 %v4940
    %v5107 = vpop.f32.mrb[0].mxu0
    %v5108 = vadd.f32 0.0, %v5107
    %v5109 = vpop.f32.mrb[0].mxu0
    %v5110 = vpop.f32.mrb[0].mxu0
    %v5111 = vadd.f32 0.0, %v5110
    %v5112 = vpop.f32.mrb[0].mxu0
    %5113 = vmatprep.mubr.bf16.mxu0 0
    %5114 = vmatmul.mubr.bf16.gmra.mrb[0].mxu0 %v4941
    %v5115 = vpop.f32.mrb[0].mxu0
    %v5116 = vadd.f32 0.0, %v5115
    %v5117 = vpop.f32.mrb[0].mxu0
    %v5118 = vpop.f32.mrb[0].mxu0
    %v5119 = vadd.f32 0.0, %v5118
    %v5120 = vpop.f32.mrb[0].mxu0
    %5121 = vmatprep.mubr.bf16.mxu0 0
    %5122 = vmatmul.mubr.bf16.gmra.mrb[0].mxu0 %v4942
    %v5123 = vpop.f32.mrb[0].mxu0
    %v5124 = vadd.f32 0.0, %v5123
    %v5125 = vpop.f32.mrb[0].mxu0
    %v5126 = vpop.f32.mrb[0].mxu0
    %v5127 = vadd.f32 0.0, %v5126
    %v5128 = vpop.f32.mrb[0].mxu0
    %5129 = vmatprep.mubr.bf16.mxu0 0
    %5130 = vmatmul.mubr.bf16.gmra.mrb[0].mxu0 %v4943
    %v5131 = vpop.f32.mrb[0].mxu0
    %v5132 = vadd.f32 0.0, %v5131
    %v5133 = vpop.f32.mrb[0].mxu0
    %v5134 = vpop.f32.mrb[0].mxu0
    %v5135 = vadd.f32 0.0, %v5134
    %v5136 = vpop.f32.mrb[0].mxu0
    %5137 = vmatprep.mubr.bf16.mxu0 0
    %5138 = vmatmul.mubr.bf16.gmra.mrb[0].mxu0 %v4944
    %v5139 = vpop.f32.mrb[0].mxu0
    %v5140 = vadd.f32 0.0, %v5139
    %v5141 = vpop.f32.mrb[0].mxu0
    %v5142 = vpop.f32.mrb[0].mxu0
    %v5143 = vadd.f32 0.0, %v5142
    %v5144 = vpop.f32.mrb[0].mxu0
    %5145 = vmatprep.mubr.bf16.mxu0 0
    %5146 = vmatmul.mubr.bf16.gmra.mrb[0].mxu0 %v4945
    %v5147 = vpop.f32.mrb[0].mxu0
    %v5148 = vadd.f32 0.0, %v5147
    %v5149 = vpop.f32.mrb[0].mxu0
    %v5150 = vpop.f32.mrb[0].mxu0
    %v5151 = vadd.f32 0.0, %v5150
    %v5152 = vpop.f32.mrb[0].mxu0
    %5153 = vmatprep.mubr.bf16.mxu0 0
    %5154 = vmatmul.mubr.bf16.gmra.mrb[0].mxu0 %v4946
    %v5155 = vpop.f32.mrb[0].mxu0
    %v5156 = vadd.f32 0.0, %v5155
    %v5157 = vpop.f32.mrb[0].mxu0
    %v5158 = vpop.f32.mrb[0].mxu0
    %v5159 = vadd.f32 0.0, %v5158
    %v5160 = vpop.f32.mrb[0].mxu0
    %5161 = vmatprep.mubr.bf16.mxu0 0
    %5162 = vmatmul.mubr.bf16.gmra.mrb[0].mxu0 %v4947
    %v5163 = vpop.f32.mrb[0].mxu0
    %v5164 = vadd.f32 0.0, %v5163
    %v5165 = vpop.f32.mrb[0].mxu0
    %v5166 = vpop.f32.mrb[0].mxu0
    %v5167 = vadd.f32 0.0, %v5166
    %v5168 = vpop.f32.mrb[0].mxu0
    %5169 = vmatprep.mubr.bf16.mxu0 0
    %5170 = vmatmul.mubr.bf16.gmra.mrb[0].mxu0 %v4948
    %v5171 = vpop.f32.mrb[0].mxu0
    %v5172 = vadd.f32 0.0, %v5171
    %v5173 = vpop.f32.mrb[0].mxu0
    %v5174 = vpop.f32.mrb[0].mxu0
    %v5175 = vadd.f32 0.0, %v5174
    %v5176 = vpop.f32.mrb[0].mxu0
    %5177 = vmatprep.mubr.bf16.mxu0 0
    %5178 = vmatmul.mubr.bf16.gmra.mrb[0].mxu0 %v4949
    %v5179 = vpop.f32.mrb[0].mxu0
    %v5180 = vadd.f32 0.0, %v5179
    %v5181 = vpop.f32.mrb[0].mxu0
    %v5182 = vpop.f32.mrb[0].mxu0
    %v5183 = vadd.f32 0.0, %v5182
    %v5184 = vpop.f32.mrb[0].mxu0
    %5185 = vmatprep.mubr.bf16.mxu0 0
    %5186 = vmatmul.mubr.bf16.gmra.mrb[0].mxu0 %v4950
    %v5187 = vpop.f32.mrb[0].mxu0
    %v5188 = vadd.f32 0.0, %v5187
    %v5189 = vpop.f32.mrb[0].mxu0
    %v5190 = vpop.f32.mrb[0].mxu0
    %v5191 = vadd.f32 0.0, %v5190
    %v5192 = vpop.f32.mrb[0].mxu0
    %5193 = vmatprep.mubr.bf16.mxu0 0
    %5194 = vmatmul.mubr.bf16.gmra.mrb[0].mxu0 %v4951
    %v5195 = vpop.f32.mrb[0].mxu0
    %v5196 = vadd.f32 0.0, %v5195
    %v5197 = vpop.f32.mrb[0].mxu0
    %v5198 = vpop.f32.mrb[0].mxu0
    %v5199 = vadd.f32 0.0, %v5198
    %v5200 = vpop.f32.mrb[0].mxu0
    %5201 = vmatprep.mubr.bf16.mxu0 0
    %5202 = vmatmul.mubr.bf16.gmra.mrb[0].mxu0 %v4952
    %v5203 = vpop.f32.mrb[0].mxu0
    %v5204 = vadd.f32 0.0, %v5203
    %v5205 = vpop.f32.mrb[0].mxu0
    %v5206 = vpop.f32.mrb[0].mxu0
    %v5207 = vadd.f32 0.0, %v5206
    %v5208 = vpop.f32.mrb[0].mxu0
    %5209 = vmatprep.mubr.bf16.mxu0 0
    %5210 = vmatmul.mubr.bf16.gmra.mrb[0].mxu0 %v4953
    %v5211 = vpop.f32.mrb[0].mxu0
    %v5212 = vadd.f32 0.0, %v5211
    %v5213 = vpop.f32.mrb[0].mxu0
    %v5214 = vpop.f32.mrb[0].mxu0
    %v5215 = vadd.f32 0.0, %v5214
    %v5216 = vpop.f32.mrb[0].mxu0
    %5217 = vmatprep.mubr.bf16.mxu0 0
    %5218 = vmatmul.mubr.bf16.gmra.mrb[0].mxu0 %v4954
    %v5219 = vpop.f32.mrb[0].mxu0
    %v5220 = vadd.f32 0.0, %v5219
    %v5221 = vpop.f32.mrb[0].mxu0
    %v5222 = vpop.f32.mrb[0].mxu0
    %v5223 = vadd.f32 0.0, %v5222
    %v5224 = vpop.f32.mrb[0].mxu0
    %5225 = vmatprep.mubr.bf16.mxu0 0
    %5226 = vmatmul.mubr.bf16.gmra.mrb[0].mxu0 %v4955
    %v5227 = vpop.f32.mrb[0].mxu0
    %v5228 = vadd.f32 0.0, %v5227
    %v5229 = vpop.f32.mrb[0].mxu0
    %v5230 = vpop.f32.mrb[0].mxu0
    %v5231 = vadd.f32 0.0, %v5230
    %v5232 = vpop.f32.mrb[0].mxu0
    %5233 = vmatprep.mubr.bf16.mxu0 0
    %5234 = vmatmul.mubr.bf16.gmra.mrb[0].mxu0 %v4956
    %v5235 = vpop.f32.mrb[0].mxu0
    %v5236 = vadd.f32 0.0, %v5235
    %v5237 = vpop.f32.mrb[0].mxu0
    %v5238 = vpop.f32.mrb[0].mxu0
    %v5239 = vadd.f32 0.0, %v5238
    %v5240 = vpop.f32.mrb[0].mxu0
    %5241 = vmatprep.mubr.bf16.mxu0 0
    %5242 = vmatmul.mubr.bf16.gmra.mrb[0].mxu0 %v4957
    %v5243 = vpop.f32.mrb[0].mxu0
    %v5244 = vadd.f32 0.0, %v5243
    %v5245 = vpop.f32.mrb[0].mxu0
    %v5246 = vpop.f32.mrb[0].mxu0
    %v5247 = vadd.f32 0.0, %v5246
    %v5248 = vpop.f32.mrb[0].mxu0
    %5249 = vmatprep.mubr.bf16.mxu0 0
    %5250 = vmatmul.mubr.bf16.gmra.mrb[0].mxu0 %v4958
    %v5251 = vpop.f32.mrb[0].mxu0
    %v5252 = vadd.f32 0.0, %v5251
    %v5253 = vpop.f32.mrb[0].mxu0
    %v5254 = vpop.f32.mrb[0].mxu0
    %v5255 = vadd.f32 0.0, %v5254
    %v5256 = vpop.f32.mrb[0].mxu0
    %5257 = vmatprep.mubr.bf16.mxu0 0
    %5258 = vmatmul.mubr.bf16.gmra.mrb[0].mxu0 %v4959
    %v5259 = vpop.f32.mrb[0].mxu0
    %v5260 = vadd.f32 0.0, %v5259
    %v5261 = vpop.f32.mrb[0].mxu0
    %v5262 = vpop.f32.mrb[0].mxu0
    %v5263 = vadd.f32 0.0, %v5262
    %v5264 = vpop.f32.mrb[0].mxu0
    %5265 = vmatprep.mubr.bf16.mxu0 0
    %5266 = vmatmul.mubr.bf16.gmra.mrb[0].mxu0 %v4960
    %v5267 = vpop.f32.mrb[0].mxu0
    %v5268 = vadd.f32 0.0, %v5267
    %v5269 = vpop.f32.mrb[0].mxu0
    %v5270 = vpop.f32.mrb[0].mxu0
    %v5271 = vadd.f32 0.0, %v5270
    %v5272 = vpop.f32.mrb[0].mxu0
    %5273 = vmatprep.mubr.bf16.mxu0 0
    %5274 = vmatmul.mubr.bf16.gmra.mrb[0].mxu0 %v4961
    %v5275 = vpop.f32.mrb[0].mxu0
    %v5276 = vadd.f32 0.0, %v5275
    %v5277 = vpop.f32.mrb[0].mxu0
    %v5278 = vpop.f32.mrb[0].mxu0
    %v5279 = vadd.f32 0.0, %v5278
    %v5280 = vpop.f32.mrb[0].mxu0
    %5281 = vmatprep.mubr.bf16.mxu0 0
    %5282 = vmatmul.mubr.bf16.gmra.mrb[0].mxu0 %v4962
    %v5283 = vpop.f32.mrb[0].mxu0
    %v5284 = vadd.f32 0.0, %v5283
    %v5285 = vpop.f32.mrb[0].mxu0
    %v5286 = vpop.f32.mrb[0].mxu0
    %v5287 = vadd.f32 0.0, %v5286
    %v5288 = vpop.f32.mrb[0].mxu0
    %5289 = vmatprep.mubr.bf16.mxu0 0
    %5290 = vmatmul.mubr.bf16.gmra.mrb[0].mxu0 %v4963
    %v5291 = vpop.f32.mrb[0].mxu0
    %v5292 = vadd.f32 0.0, %v5291
    %v5293 = vpop.f32.mrb[0].mxu0
    %v5294 = vpop.f32.mrb[0].mxu0
    %v5295 = vadd.f32 0.0, %v5294
    %v5296 = vpop.f32.mrb[0].mxu0
    %5297 = vmatprep.mubr.bf16.mxu0 0
    %5298 = vmatmul.mubr.bf16.gmra.mrb[0].mxu0 %v4964
    %v5299 = vpop.f32.mrb[0].mxu0
    %v5300 = vadd.f32 0.0, %v5299
    %v5301 = vpop.f32.mrb[0].mxu0
    %v5302 = vpop.f32.mrb[0].mxu0
    %v5303 = vadd.f32 0.0, %v5302
    %v5304 = vpop.f32.mrb[0].mxu0
    %5305 = vmatprep.mubr.bf16.mxu0 0
    %5306 = vmatmul.mubr.bf16.gmra.mrb[0].mxu0 %v4965
    %v5307 = vpop.f32.mrb[0].mxu0
    %v5308 = vadd.f32 0.0, %v5307
    %v5309 = vpop.f32.mrb[0].mxu0
    %v5310 = vpop.f32.mrb[0].mxu0
    %v5311 = vadd.f32 0.0, %v5310
    %v5312 = vpop.f32.mrb[0].mxu0
    %5313 = vmatprep.mubr.bf16.mxu0 0
    %5314 = vmatmul.mubr.bf16.gmra.mrb[0].mxu0 %v4966
    %v5315 = vpop.f32.mrb[0].mxu0
    %v5316 = vadd.f32 0.0, %v5315
    %v5317 = vpop.f32.mrb[0].mxu0
    %v5318 = vpop.f32.mrb[0].mxu0
    %v5319 = vadd.f32 0.0, %v5318
    %v5320 = vpop.f32.mrb[0].mxu0
    %5321 = vmatprep.mubr.bf16.mxu0 0
    %5322 = vmatmul.mubr.bf16.gmra.mrb[0].mxu0 %v4967
    %v5323 = vpop.f32.mrb[0].mxu0
    %v5324 = vadd.f32 0.0, %v5323
    %v5325 = vpop.f32.mrb[0].mxu0
    %v5326 = vpop.f32.mrb[0].mxu0
    %v5327 = vadd.f32 0.0, %v5326
    %v5328 = vpop.f32.mrb[0].mxu0
    %5329 = vmatprep.mubr.bf16.mxu0 0
    %5330 = vmatmul.mubr.bf16.gmra.mrb[0].mxu0 %v4968
    %v5331 = vpop.f32.mrb[0].mxu0
    %v5332 = vadd.f32 0.0, %v5331
    %v5333 = vpop.f32.mrb[0].mxu0
    %v5334 = vpop.f32.mrb[0].mxu0
    %v5335 = vadd.f32 0.0, %v5334
    %v5336 = vpop.f32.mrb[0].mxu0
    %5337 = vdwg.mxu0
    %v5338 = vadd.f32 %v4663, %v5084
    %v5339 = vadd.f32 %v4664, %v5087
    %v5340 = vadd.f32 %v4665, %v5092
    %v5341 = vadd.f32 %v4666, %v5095
    %v5342 = vadd.f32 %v4667, %v5100
    %v5343 = vadd.f32 %v4668, %v5103
    %v5344 = vadd.f32 %v4669, %v5108
    %v5345 = vadd.f32 %v4670, %v5111
    %v5346 = vadd.f32 %v4671, %v5116
    %v5347 = vadd.f32 %v4672, %v5119
    %v5348 = vadd.f32 %v4673, %v5124
    %v5349 = vadd.f32 %v4674, %v5127
    %v5350 = vadd.f32 %v4675, %v5132
    %v5351 = vadd.f32 %v4676, %v5135
    %v5352 = vadd.f32 %v4677, %v5140
    %v5353 = vadd.f32 %v4678, %v5143
    %v5354 = vadd.f32 %v4679, %v5148
    %v5355 = vadd.f32 %v4680, %v5151
    %v5356 = vadd.f32 %v4681, %v5156
    %v5357 = vadd.f32 %v4682, %v5159
    %v5358 = vadd.f32 %v4683, %v5164
    %v5359 = vadd.f32 %v4684, %v5167
    %v5360 = vadd.f32 %v4685, %v5172
    %v5361 = vadd.f32 %v4686, %v5175
    %v5362 = vadd.f32 %v4687, %v5180
    %v5363 = vadd.f32 %v4688, %v5183
    %v5364 = vadd.f32 %v4689, %v5188
    %v5365 = vadd.f32 %v4690, %v5191
    %v5366 = vadd.f32 %v4691, %v5196
    %v5367 = vadd.f32 %v4692, %v5199
    %v5368 = vadd.f32 %v4693, %v5204
    %v5369 = vadd.f32 %v4694, %v5207
    %v5370 = vadd.f32 %v4695, %v5212
    %v5371 = vadd.f32 %v4696, %v5215
    %v5372 = vadd.f32 %v4697, %v5220
    %v5373 = vadd.f32 %v4698, %v5223
    %v5374 = vadd.f32 %v4699, %v5228
    %v5375 = vadd.f32 %v4700, %v5231
    %v5376 = vadd.f32 %v4701, %v5236
    %v5377 = vadd.f32 %v4702, %v5239
    %v5378 = vadd.f32 %v4703, %v5244
    %v5379 = vadd.f32 %v4704, %v5247
    %v5380 = vadd.f32 %v4705, %v5252
    %v5381 = vadd.f32 %v4706, %v5255
    %v5382 = vadd.f32 %v4707, %v5260
    %v5383 = vadd.f32 %v4708, %v5263
    %v5384 = vadd.f32 %v4709, %v5268
    %v5385 = vadd.f32 %v4710, %v5271
    %v5386 = vadd.f32 %v4711, %v5276
    %v5387 = vadd.f32 %v4712, %v5279
    %v5388 = vadd.f32 %v4713, %v5284
    %v5389 = vadd.f32 %v4714, %v5287
    %v5390 = vadd.f32 %v4715, %v5292
    %v5391 = vadd.f32 %v4716, %v5295
    %v5392 = vadd.f32 %v4717, %v5300
    %v5393 = vadd.f32 %v4718, %v5303
    %v5394 = vadd.f32 %v4719, %v5308
    %v5395 = vadd.f32 %v4720, %v5311
    %v5396 = vadd.f32 %v4721, %v5316
    %v5397 = vadd.f32 %v4722, %v5319
    %v5398 = vadd.f32 %v4723, %v5324
    %v5399 = vadd.f32 %v4724, %v5327
    %v5400 = vadd.f32 %v4725, %v5332
    %v5401 = vadd.f32 %v4726, %v5335
    %s5402 = scalar_lea.vmem [#allocation3], 2048
    %v5403 = vld [vmem:[%s5402] sm:$0xf]
    %v5404 = vld [vmem:[%s5402 + $0x4] sm:$0xf]
    %v5405 = vld [vmem:[%s5402 + $0x8] sm:$0xf]
    %v5406 = vld [vmem:[%s5402 + $0xc] sm:$0xf]
    %v5407 = vld [vmem:[%s5402 + $0x10] sm:$0xf]
    %v5408 = vld [vmem:[%s5402 + $0x14] sm:$0xf]
    %v5409 = vld [vmem:[%s5402 + $0x18] sm:$0xf]
    %v5410 = vld [vmem:[%s5402 + $0x1c] sm:$0xf]
    %v5411 = vld [vmem:[%s5402 + $0x20] sm:$0xf]
    %v5412 = vld [vmem:[%s5402 + $0x24] sm:$0xf]
    %v5413 = vld [vmem:[%s5402 + $0x28] sm:$0xf]
    %v5414 = vld [vmem:[%s5402 + $0x2c] sm:$0xf]
    %v5415 = vld [vmem:[%s5402 + $0x30] sm:$0xf]
    %v5416 = vld [vmem:[%s5402 + $0x34] sm:$0xf]
    %v5417 = vld [vmem:[%s5402 + $0x38] sm:$0xf]
    %v5418 = vld [vmem:[%s5402 + $0x3c] sm:$0xf]
    %v5419 = vld [vmem:[%s5402 + $0x40] sm:$0xf]
    %v5420 = vld [vmem:[%s5402 + $0x44] sm:$0xf]
    %v5421 = vld [vmem:[%s5402 + $0x48] sm:$0xf]
    %v5422 = vld [vmem:[%s5402 + $0x4c] sm:$0xf]
    %v5423 = vld [vmem:[%s5402 + $0x50] sm:$0xf]
    %v5424 = vld [vmem:[%s5402 + $0x54] sm:$0xf]
    %v5425 = vld [vmem:[%s5402 + $0x58] sm:$0xf]
    %v5426 = vld [vmem:[%s5402 + $0x5c] sm:$0xf]
    %v5427 = vld [vmem:[%s5402 + $0x60] sm:$0xf]
    %v5428 = vld [vmem:[%s5402 + $0x64] sm:$0xf]
    %v5429 = vld [vmem:[%s5402 + $0x68] sm:$0xf]
    %v5430 = vld [vmem:[%s5402 + $0x6c] sm:$0xf]
    %v5431 = vld [vmem:[%s5402 + $0x70] sm:$0xf]
    %v5432 = vld [vmem:[%s5402 + $0x74] sm:$0xf]
    %v5433 = vld [vmem:[%s5402 + $0x78] sm:$0xf]
    %v5434 = vld [vmem:[%s5402 + $0x7c] sm:$0xf]
    %v5435 = vld [vmem:[%s5402 + $0x80] sm:$0xf]
    %v5436 = vld [vmem:[%s5402 + $0x84] sm:$0xf]
    %v5437 = vld [vmem:[%s5402 + $0x88] sm:$0xf]
    %v5438 = vld [vmem:[%s5402 + $0x8c] sm:$0xf]
    %v5439 = vld [vmem:[%s5402 + $0x90] sm:$0xf]
    %v5440 = vld [vmem:[%s5402 + $0x94] sm:$0xf]
    %v5441 = vld [vmem:[%s5402 + $0x98] sm:$0xf]
    %v5442 = vld [vmem:[%s5402 + $0x9c] sm:$0xf]
    %v5443 = vld [vmem:[%s5402 + $0xa0] sm:$0xf]
    %v5444 = vld [vmem:[%s5402 + $0xa4] sm:$0xf]
    %v5445 = vld [vmem:[%s5402 + $0xa8] sm:$0xf]
    %v5446 = vld [vmem:[%s5402 + $0xac] sm:$0xf]
    %v5447 = vld [vmem:[%s5402 + $0xb0] sm:$0xf]
    %v5448 = vld [vmem:[%s5402 + $0xb4] sm:$0xf]
    %v5449 = vld [vmem:[%s5402 + $0xb8] sm:$0xf]
    %v5450 = vld [vmem:[%s5402 + $0xbc] sm:$0xf]
    %v5451 = vld [vmem:[%s5402 + $0xc0] sm:$0xf]
    %v5452 = vld [vmem:[%s5402 + $0xc4] sm:$0xf]
    %v5453 = vld [vmem:[%s5402 + $0xc8] sm:$0xf]
    %v5454 = vld [vmem:[%s5402 + $0xcc] sm:$0xf]
    %v5455 = vld [vmem:[%s5402 + $0xd0] sm:$0xf]
    %v5456 = vld [vmem:[%s5402 + $0xd4] sm:$0xf]
    %v5457 = vld [vmem:[%s5402 + $0xd8] sm:$0xf]
    %v5458 = vld [vmem:[%s5402 + $0xdc] sm:$0xf]
    %v5459 = vld [vmem:[%s5402 + $0xe0] sm:$0xf]
    %v5460 = vld [vmem:[%s5402 + $0xe4] sm:$0xf]
    %v5461 = vld [vmem:[%s5402 + $0xe8] sm:$0xf]
    %v5462 = vld [vmem:[%s5402 + $0xec] sm:$0xf]
    %v5463 = vld [vmem:[%s5402 + $0xf0] sm:$0xf]
    %v5464 = vld [vmem:[%s5402 + $0xf4] sm:$0xf]
    %v5465 = vld [vmem:[%s5402 + $0xf8] sm:$0xf]
    %v5466 = vld [vmem:[%s5402 + $0xfc] sm:$0xf]
    %s5467 = scalar_lea.vmem [#allocation6], 512
    %v5468 = vld [vmem:[%s5467] sm:$0xf]
    %v5469 = vld [vmem:[%s5467 + $0x4] sm:$0xf]
    %v5470 = vld [vmem:[%s5467 + $0x8] sm:$0xf]
    %v5471 = vld [vmem:[%s5467 + $0xc] sm:$0xf]
    %v5472 = vld [vmem:[%s5467 + $0x10] sm:$0xf]
    %v5473 = vld [vmem:[%s5467 + $0x14] sm:$0xf]
    %v5474 = vld [vmem:[%s5467 + $0x18] sm:$0xf]
    %v5475 = vld [vmem:[%s5467 + $0x1c] sm:$0xf]
    %v5476 = vld [vmem:[%s5467 + $0x20] sm:$0xf]
    %v5477 = vld [vmem:[%s5467 + $0x24] sm:$0xf]
    %v5478 = vld [vmem:[%s5467 + $0x28] sm:$0xf]
    %v5479 = vld [vmem:[%s5467 + $0x2c] sm:$0xf]
    %v5480 = vld [vmem:[%s5467 + $0x30] sm:$0xf]
    %v5481 = vld [vmem:[%s5467 + $0x34] sm:$0xf]
    %v5482 = vld [vmem:[%s5467 + $0x38] sm:$0xf]
    %v5483 = vld [vmem:[%s5467 + $0x3c] sm:$0xf]
    %v5548 = vunpack.c.l.b16 %v5403
    %v5549 = vunpack.c.l.b16 %v5404
    %v5550 = vunpack.c.l.b16 %v5405
    %v5551 = vunpack.c.l.b16 %v5406
    %v5552 = vunpack.c.l.b16 %v5407
    %v5553 = vunpack.c.l.b16 %v5408
    %v5554 = vunpack.c.l.b16 %v5409
    %v5555 = vunpack.c.l.b16 %v5410
    %v5556 = vunpack.c.l.b16 %v5411
    %v5557 = vunpack.c.l.b16 %v5412
    %v5558 = vunpack.c.l.b16 %v5413
    %v5559 = vunpack.c.l.b16 %v5414
    %v5560 = vunpack.c.l.b16 %v5415
    %v5561 = vunpack.c.l.b16 %v5416
    %v5562 = vunpack.c.l.b16 %v5417
    %v5563 = vunpack.c.l.b16 %v5418
    %v5564 = vunpack.c.l.b16 %v5419
    %v5565 = vunpack.c.l.b16 %v5420
    %v5566 = vunpack.c.l.b16 %v5421
    %v5567 = vunpack.c.l.b16 %v5422
    %v5568 = vunpack.c.l.b16 %v5423
    %v5569 = vunpack.c.l.b16 %v5424
    %v5570 = vunpack.c.l.b16 %v5425
    %v5571 = vunpack.c.l.b16 %v5426
    %v5572 = vunpack.c.l.b16 %v5427
    %v5573 = vunpack.c.l.b16 %v5428
    %v5574 = vunpack.c.l.b16 %v5429
    %v5575 = vunpack.c.l.b16 %v5430
    %v5576 = vunpack.c.l.b16 %v5431
    %v5577 = vunpack.c.l.b16 %v5432
    %v5578 = vunpack.c.l.b16 %v5433
    %v5579 = vunpack.c.l.b16 %v5434
    %v5580 = vunpack.c.l.b16 %v5435
    %v5581 = vunpack.c.l.b16 %v5436
    %v5582 = vunpack.c.l.b16 %v5437
    %v5583 = vunpack.c.l.b16 %v5438
    %v5584 = vunpack.c.l.b16 %v5439
    %v5585 = vunpack.c.l.b16 %v5440
    %v5586 = vunpack.c.l.b16 %v5441
    %v5587 = vunpack.c.l.b16 %v5442
    %v5588 = vunpack.c.l.b16 %v5443
    %v5589 = vunpack.c.l.b16 %v5444
    %v5590 = vunpack.c.l.b16 %v5445
    %v5591 = vunpack.c.l.b16 %v5446
    %v5592 = vunpack.c.l.b16 %v5447
    %v5593 = vunpack.c.l.b16 %v5448
    %v5594 = vunpack.c.l.b16 %v5449
    %v5595 = vunpack.c.l.b16 %v5450
    %v5596 = vunpack.c.l.b16 %v5451
    %v5597 = vunpack.c.l.b16 %v5452
    %v5598 = vunpack.c.l.b16 %v5453
    %v5599 = vunpack.c.l.b16 %v5454
    %v5600 = vunpack.c.l.b16 %v5455
    %v5601 = vunpack.c.l.b16 %v5456
    %v5602 = vunpack.c.l.b16 %v5457
    %v5603 = vunpack.c.l.b16 %v5458
    %v5604 = vunpack.c.l.b16 %v5459
    %v5605 = vunpack.c.l.b16 %v5460
    %v5606 = vunpack.c.l.b16 %v5461
    %v5607 = vunpack.c.l.b16 %v5462
    %v5608 = vunpack.c.l.b16 %v5463
    %v5609 = vunpack.c.l.b16 %v5464
    %v5610 = vunpack.c.l.b16 %v5465
    %v5611 = vunpack.c.l.b16 %v5466
    %v5612 = vpack.c.b16 %v5549, %v5548
    %v5613 = vpack.c.b16 %v5551, %v5550
    %v5614 = vpack.c.b16 %v5553, %v5552
    %v5615 = vpack.c.b16 %v5555, %v5554
    %v5616 = vpack.c.b16 %v5557, %v5556
    %v5617 = vpack.c.b16 %v5559, %v5558
    %v5618 = vpack.c.b16 %v5561, %v5560
    %v5619 = vpack.c.b16 %v5563, %v5562
    %v5620 = vpack.c.b16 %v5565, %v5564
    %v5621 = vpack.c.b16 %v5567, %v5566
    %v5622 = vpack.c.b16 %v5569, %v5568
    %v5623 = vpack.c.b16 %v5571, %v5570
    %v5624 = vpack.c.b16 %v5573, %v5572
    %v5625 = vpack.c.b16 %v5575, %v5574
    %v5626 = vpack.c.b16 %v5577, %v5576
    %v5627 = vpack.c.b16 %v5579, %v5578
    %v5628 = vpack.c.b16 %v5581, %v5580
    %v5629 = vpack.c.b16 %v5583, %v5582
    %v5630 = vpack.c.b16 %v5585, %v5584
    %v5631 = vpack.c.b16 %v5587, %v5586
    %v5632 = vpack.c.b16 %v5589, %v5588
    %v5633 = vpack.c.b16 %v5591, %v5590
    %v5634 = vpack.c.b16 %v5593, %v5592
    %v5635 = vpack.c.b16 %v5595, %v5594
    %v5636 = vpack.c.b16 %v5597, %v5596
    %v5637 = vpack.c.b16 %v5599, %v5598
    %v5638 = vpack.c.b16 %v5601, %v5600
    %v5639 = vpack.c.b16 %v5603, %v5602
    %v5640 = vpack.c.b16 %v5605, %v5604
    %v5641 = vpack.c.b16 %v5607, %v5606
    %v5642 = vpack.c.b16 %v5609, %v5608
    %v5643 = vpack.c.b16 %v5611, %v5610
    %v5692 = vunpack.c.l.b16 %v5468
    %v5693 = vunpack.c.l.b16 %v5469
    %v5694 = vunpack.c.l.b16 %v5470
    %v5695 = vunpack.c.l.b16 %v5471
    %v5696 = vunpack.c.l.b16 %v5472
    %v5697 = vunpack.c.l.b16 %v5473
    %v5698 = vunpack.c.l.b16 %v5474
    %v5699 = vunpack.c.l.b16 %v5475
    %v5700 = vunpack.c.l.b16 %v5476
    %v5701 = vunpack.c.l.b16 %v5477
    %v5702 = vunpack.c.l.b16 %v5478
    %v5703 = vunpack.c.l.b16 %v5479
    %v5704 = vunpack.c.l.b16 %v5480
    %v5705 = vunpack.c.l.b16 %v5481
    %v5706 = vunpack.c.l.b16 %v5482
    %v5707 = vunpack.c.l.b16 %v5483
    %v5708 = vpack.c.b16 %v5693, %v5692
    %v5709 = vpack.c.b16 %v5695, %v5694
    %v5710 = vpack.c.b16 %v5697, %v5696
    %v5711 = vpack.c.b16 %v5699, %v5698
    %v5712 = vpack.c.b16 %v5701, %v5700
    %v5713 = vpack.c.b16 %v5703, %v5702
    %v5714 = vpack.c.b16 %v5705, %v5704
    %v5715 = vpack.c.b16 %v5707, %v5706
    %5724 = vmatprep.subr.bf16.mxu0 0
    %5725 = vmatpush1.bf16.msra.mxu0 %v5708
    %5726 = vmatprep.subr.bf16.mxu0 0
    %5727 = vmatpush1.bf16.msra.mxu0 %v5709
    %5728 = vmatprep.subr.bf16.mxu0 0
    %5729 = vmatpush1.bf16.msra.mxu0 %v5710
    %5730 = vmatprep.subr.bf16.mxu0 0
    %5731 = vmatpush1.bf16.msra.mxu0 %v5711
    %5732 = vmatprep.subr.bf16.mxu0 0
    %5733 = vmatpush1.bf16.msra.mxu0 %v5712
    %5734 = vmatprep.subr.bf16.mxu0 0
    %5735 = vmatpush1.bf16.msra.mxu0 %v5713
    %5736 = vmatprep.subr.bf16.mxu0 0
    %5737 = vmatpush1.bf16.msra.mxu0 %v5714
    %5738 = vmatprep.subr.bf16.mxu0 0
    %5739 = vmatpush1.bf16.msra.mxu0 %v5715
    %5740 = vmatprep.subr.bf16.mxu0 0
    %5741 = vmatpush1.bf16.msra.mxu0 0
    %5742 = vmatprep.subr.bf16.mxu0 0
    %5743 = vmatpush1.bf16.msra.mxu0 0
    %5744 = vmatprep.subr.bf16.mxu0 0
    %5745 = vmatpush1.bf16.msra.mxu0 0
    %5746 = vmatprep.subr.bf16.mxu0 0
    %5747 = vmatpush1.bf16.msra.mxu0 0
    %5748 = vmatprep.subr.bf16.mxu0 0
    %5749 = vmatpush1.bf16.msra.mxu0 0
    %5750 = vmatprep.subr.bf16.mxu0 0
    %5751 = vmatpush1.bf16.msra.mxu0 0
    %5752 = vmatprep.subr.bf16.mxu0 0
    %5753 = vmatpush1.bf16.msra.mxu0 0
    %5754 = vmatprep.subr.bf16.mxu0 0
    %5755 = vmatpush1.bf16.msra.mxu0 0
    %5756 = vmatprep.mubr.bf16.mxu0 0
    %5757 = vmatmul.mubr.bf16.gmra.mrb[0].mxu0 %v5612
    %v5758 = vpop.f32.mrb[0].mxu0
    %v5759 = vadd.f32 0.0, %v5758
    %v5760 = vpop.f32.mrb[0].mxu0
    %v5761 = vpop.f32.mrb[0].mxu0
    %v5762 = vadd.f32 0.0, %v5761
    %v5763 = vpop.f32.mrb[0].mxu0
    %5764 = vmatprep.mubr.bf16.mxu0 0
    %5765 = vmatmul.mubr.bf16.gmra.mrb[0].mxu0 %v5613
    %v5766 = vpop.f32.mrb[0].mxu0
    %v5767 = vadd.f32 0.0, %v5766
    %v5768 = vpop.f32.mrb[0].mxu0
    %v5769 = vpop.f32.mrb[0].mxu0
    %v5770 = vadd.f32 0.0, %v5769
    %v5771 = vpop.f32.mrb[0].mxu0
    %5772 = vmatprep.mubr.bf16.mxu0 0
    %5773 = vmatmul.mubr.bf16.gmra.mrb[0].mxu0 %v5614
    %v5774 = vpop.f32.mrb[0].mxu0
    %v5775 = vadd.f32 0.0, %v5774
    %v5776 = vpop.f32.mrb[0].mxu0
    %v5777 = vpop.f32.mrb[0].mxu0
    %v5778 = vadd.f32 0.0, %v5777
    %v5779 = vpop.f32.mrb[0].mxu0
    %5780 = vmatprep.mubr.bf16.mxu0 0
    %5781 = vmatmul.mubr.bf16.gmra.mrb[0].mxu0 %v5615
    %v5782 = vpop.f32.mrb[0].mxu0
    %v5783 = vadd.f32 0.0, %v5782
    %v5784 = vpop.f32.mrb[0].mxu0
    %v5785 = vpop.f32.mrb[0].mxu0
    %v5786 = vadd.f32 0.0, %v5785
    %v5787 = vpop.f32.mrb[0].mxu0
    %5788 = vmatprep.mubr.bf16.mxu0 0
    %5789 = vmatmul.mubr.bf16.gmra.mrb[0].mxu0 %v5616
    %v5790 = vpop.f32.mrb[0].mxu0
    %v5791 = vadd.f32 0.0, %v5790
    %v5792 = vpop.f32.mrb[0].mxu0
    %v5793 = vpop.f32.mrb[0].mxu0
    %v5794 = vadd.f32 0.0, %v5793
    %v5795 = vpop.f32.mrb[0].mxu0
    %5796 = vmatprep.mubr.bf16.mxu0 0
    %5797 = vmatmul.mubr.bf16.gmra.mrb[0].mxu0 %v5617
    %v5798 = vpop.f32.mrb[0].mxu0
    %v5799 = vadd.f32 0.0, %v5798
    %v5800 = vpop.f32.mrb[0].mxu0
    %v5801 = vpop.f32.mrb[0].mxu0
    %v5802 = vadd.f32 0.0, %v5801
    %v5803 = vpop.f32.mrb[0].mxu0
    %5804 = vmatprep.mubr.bf16.mxu0 0
    %5805 = vmatmul.mubr.bf16.gmra.mrb[0].mxu0 %v5618
    %v5806 = vpop.f32.mrb[0].mxu0
    %v5807 = vadd.f32 0.0, %v5806
    %v5808 = vpop.f32.mrb[0].mxu0
    %v5809 = vpop.f32.mrb[0].mxu0
    %v5810 = vadd.f32 0.0, %v5809
    %v5811 = vpop.f32.mrb[0].mxu0
    %5812 = vmatprep.mubr.bf16.mxu0 0
    %5813 = vmatmul.mubr.bf16.gmra.mrb[0].mxu0 %v5619
    %v5814 = vpop.f32.mrb[0].mxu0
    %v5815 = vadd.f32 0.0, %v5814
    %v5816 = vpop.f32.mrb[0].mxu0
    %v5817 = vpop.f32.mrb[0].mxu0
    %v5818 = vadd.f32 0.0, %v5817
    %v5819 = vpop.f32.mrb[0].mxu0
    %5820 = vmatprep.mubr.bf16.mxu0 0
    %5821 = vmatmul.mubr.bf16.gmra.mrb[0].mxu0 %v5620
    %v5822 = vpop.f32.mrb[0].mxu0
    %v5823 = vadd.f32 0.0, %v5822
    %v5824 = vpop.f32.mrb[0].mxu0
    %v5825 = vpop.f32.mrb[0].mxu0
    %v5826 = vadd.f32 0.0, %v5825
    %v5827 = vpop.f32.mrb[0].mxu0
    %5828 = vmatprep.mubr.bf16.mxu0 0
    %5829 = vmatmul.mubr.bf16.gmra.mrb[0].mxu0 %v5621
    %v5830 = vpop.f32.mrb[0].mxu0
    %v5831 = vadd.f32 0.0, %v5830
    %v5832 = vpop.f32.mrb[0].mxu0
    %v5833 = vpop.f32.mrb[0].mxu0
    %v5834 = vadd.f32 0.0, %v5833
    %v5835 = vpop.f32.mrb[0].mxu0
    %5836 = vmatprep.mubr.bf16.mxu0 0
    %5837 = vmatmul.mubr.bf16.gmra.mrb[0].mxu0 %v5622
    %v5838 = vpop.f32.mrb[0].mxu0
    %v5839 = vadd.f32 0.0, %v5838
    %v5840 = vpop.f32.mrb[0].mxu0
    %v5841 = vpop.f32.mrb[0].mxu0
    %v5842 = vadd.f32 0.0, %v5841
    %v5843 = vpop.f32.mrb[0].mxu0
    %5844 = vmatprep.mubr.bf16.mxu0 0
    %5845 = vmatmul.mubr.bf16.gmra.mrb[0].mxu0 %v5623
    %v5846 = vpop.f32.mrb[0].mxu0
    %v5847 = vadd.f32 0.0, %v5846
    %v5848 = vpop.f32.mrb[0].mxu0
    %v5849 = vpop.f32.mrb[0].mxu0
    %v5850 = vadd.f32 0.0, %v5849
    %v5851 = vpop.f32.mrb[0].mxu0
    %5852 = vmatprep.mubr.bf16.mxu0 0
    %5853 = vmatmul.mubr.bf16.gmra.mrb[0].mxu0 %v5624
    %v5854 = vpop.f32.mrb[0].mxu0
    %v5855 = vadd.f32 0.0, %v5854
    %v5856 = vpop.f32.mrb[0].mxu0
    %v5857 = vpop.f32.mrb[0].mxu0
    %v5858 = vadd.f32 0.0, %v5857
    %v5859 = vpop.f32.mrb[0].mxu0
    %5860 = vmatprep.mubr.bf16.mxu0 0
    %5861 = vmatmul.mubr.bf16.gmra.mrb[0].mxu0 %v5625
    %v5862 = vpop.f32.mrb[0].mxu0
    %v5863 = vadd.f32 0.0, %v5862
    %v5864 = vpop.f32.mrb[0].mxu0
    %v5865 = vpop.f32.mrb[0].mxu0
    %v5866 = vadd.f32 0.0, %v5865
    %v5867 = vpop.f32.mrb[0].mxu0
    %5868 = vmatprep.mubr.bf16.mxu0 0
    %5869 = vmatmul.mubr.bf16.gmra.mrb[0].mxu0 %v5626
    %v5870 = vpop.f32.mrb[0].mxu0
    %v5871 = vadd.f32 0.0, %v5870
    %v5872 = vpop.f32.mrb[0].mxu0
    %v5873 = vpop.f32.mrb[0].mxu0
    %v5874 = vadd.f32 0.0, %v5873
    %v5875 = vpop.f32.mrb[0].mxu0
    %5876 = vmatprep.mubr.bf16.mxu0 0
    %5877 = vmatmul.mubr.bf16.gmra.mrb[0].mxu0 %v5627
    %v5878 = vpop.f32.mrb[0].mxu0
    %v5879 = vadd.f32 0.0, %v5878
    %v5880 = vpop.f32.mrb[0].mxu0
    %v5881 = vpop.f32.mrb[0].mxu0
    %v5882 = vadd.f32 0.0, %v5881
    %v5883 = vpop.f32.mrb[0].mxu0
    %5884 = vmatprep.mubr.bf16.mxu0 0
    %5885 = vmatmul.mubr.bf16.gmra.mrb[0].mxu0 %v5628
    %v5886 = vpop.f32.mrb[0].mxu0
    %v5887 = vadd.f32 0.0, %v5886
    %v5888 = vpop.f32.mrb[0].mxu0
    %v5889 = vpop.f32.mrb[0].mxu0
    %v5890 = vadd.f32 0.0, %v5889
    %v5891 = vpop.f32.mrb[0].mxu0
    %5892 = vmatprep.mubr.bf16.mxu0 0
    %5893 = vmatmul.mubr.bf16.gmra.mrb[0].mxu0 %v5629
    %v5894 = vpop.f32.mrb[0].mxu0
    %v5895 = vadd.f32 0.0, %v5894
    %v5896 = vpop.f32.mrb[0].mxu0
    %v5897 = vpop.f32.mrb[0].mxu0
    %v5898 = vadd.f32 0.0, %v5897
    %v5899 = vpop.f32.mrb[0].mxu0
    %5900 = vmatprep.mubr.bf16.mxu0 0
    %5901 = vmatmul.mubr.bf16.gmra.mrb[0].mxu0 %v5630
    %v5902 = vpop.f32.mrb[0].mxu0
    %v5903 = vadd.f32 0.0, %v5902
    %v5904 = vpop.f32.mrb[0].mxu0
    %v5905 = vpop.f32.mrb[0].mxu0
    %v5906 = vadd.f32 0.0, %v5905
    %v5907 = vpop.f32.mrb[0].mxu0
    %5908 = vmatprep.mubr.bf16.mxu0 0
    %5909 = vmatmul.mubr.bf16.gmra.mrb[0].mxu0 %v5631
    %v5910 = vpop.f32.mrb[0].mxu0
    %v5911 = vadd.f32 0.0, %v5910
    %v5912 = vpop.f32.mrb[0].mxu0
    %v5913 = vpop.f32.mrb[0].mxu0
    %v5914 = vadd.f32 0.0, %v5913
    %v5915 = vpop.f32.mrb[0].mxu0
    %5916 = vmatprep.mubr.bf16.mxu0 0
    %5917 = vmatmul.mubr.bf16.gmra.mrb[0].mxu0 %v5632
    %v5918 = vpop.f32.mrb[0].mxu0
    %v5919 = vadd.f32 0.0, %v5918
    %v5920 = vpop.f32.mrb[0].mxu0
    %v5921 = vpop.f32.mrb[0].mxu0
    %v5922 = vadd.f32 0.0, %v5921
    %v5923 = vpop.f32.mrb[0].mxu0
    %5924 = vmatprep.mubr.bf16.mxu0 0
    %5925 = vmatmul.mubr.bf16.gmra.mrb[0].mxu0 %v5633
    %v5926 = vpop.f32.mrb[0].mxu0
    %v5927 = vadd.f32 0.0, %v5926
    %v5928 = vpop.f32.mrb[0].mxu0
    %v5929 = vpop.f32.mrb[0].mxu0
    %v5930 = vadd.f32 0.0, %v5929
    %v5931 = vpop.f32.mrb[0].mxu0
    %5932 = vmatprep.mubr.bf16.mxu0 0
    %5933 = vmatmul.mubr.bf16.gmra.mrb[0].mxu0 %v5634
    %v5934 = vpop.f32.mrb[0].mxu0
    %v5935 = vadd.f32 0.0, %v5934
    %v5936 = vpop.f32.mrb[0].mxu0
    %v5937 = vpop.f32.mrb[0].mxu0
    %v5938 = vadd.f32 0.0, %v5937
    %v5939 = vpop.f32.mrb[0].mxu0
    %5940 = vmatprep.mubr.bf16.mxu0 0
    %5941 = vmatmul.mubr.bf16.gmra.mrb[0].mxu0 %v5635
    %v5942 = vpop.f32.mrb[0].mxu0
    %v5943 = vadd.f32 0.0, %v5942
    %v5944 = vpop.f32.mrb[0].mxu0
    %v5945 = vpop.f32.mrb[0].mxu0
    %v5946 = vadd.f32 0.0, %v5945
    %v5947 = vpop.f32.mrb[0].mxu0
    %5948 = vmatprep.mubr.bf16.mxu0 0
    %5949 = vmatmul.mubr.bf16.gmra.mrb[0].mxu0 %v5636
    %v5950 = vpop.f32.mrb[0].mxu0
    %v5951 = vadd.f32 0.0, %v5950
    %v5952 = vpop.f32.mrb[0].mxu0
    %v5953 = vpop.f32.mrb[0].mxu0
    %v5954 = vadd.f32 0.0, %v5953
    %v5955 = vpop.f32.mrb[0].mxu0
    %5956 = vmatprep.mubr.bf16.mxu0 0
    %5957 = vmatmul.mubr.bf16.gmra.mrb[0].mxu0 %v5637
    %v5958 = vpop.f32.mrb[0].mxu0
    %v5959 = vadd.f32 0.0, %v5958
    %v5960 = vpop.f32.mrb[0].mxu0
    %v5961 = vpop.f32.mrb[0].mxu0
    %v5962 = vadd.f32 0.0, %v5961
    %v5963 = vpop.f32.mrb[0].mxu0
    %5964 = vmatprep.mubr.bf16.mxu0 0
    %5965 = vmatmul.mubr.bf16.gmra.mrb[0].mxu0 %v5638
    %v5966 = vpop.f32.mrb[0].mxu0
    %v5967 = vadd.f32 0.0, %v5966
    %v5968 = vpop.f32.mrb[0].mxu0
    %v5969 = vpop.f32.mrb[0].mxu0
    %v5970 = vadd.f32 0.0, %v5969
    %v5971 = vpop.f32.mrb[0].mxu0
    %5972 = vmatprep.mubr.bf16.mxu0 0
    %5973 = vmatmul.mubr.bf16.gmra.mrb[0].mxu0 %v5639
    %v5974 = vpop.f32.mrb[0].mxu0
    %v5975 = vadd.f32 0.0, %v5974
    %v5976 = vpop.f32.mrb[0].mxu0
    %v5977 = vpop.f32.mrb[0].mxu0
    %v5978 = vadd.f32 0.0, %v5977
    %v5979 = vpop.f32.mrb[0].mxu0
    %5980 = vmatprep.mubr.bf16.mxu0 0
    %5981 = vmatmul.mubr.bf16.gmra.mrb[0].mxu0 %v5640
    %v5982 = vpop.f32.mrb[0].mxu0
    %v5983 = vadd.f32 0.0, %v5982
    %v5984 = vpop.f32.mrb[0].mxu0
    %v5985 = vpop.f32.mrb[0].mxu0
    %v5986 = vadd.f32 0.0, %v5985
    %v5987 = vpop.f32.mrb[0].mxu0
    %5988 = vmatprep.mubr.bf16.mxu0 0
    %5989 = vmatmul.mubr.bf16.gmra.mrb[0].mxu0 %v5641
    %v5990 = vpop.f32.mrb[0].mxu0
    %v5991 = vadd.f32 0.0, %v5990
    %v5992 = vpop.f32.mrb[0].mxu0
    %v5993 = vpop.f32.mrb[0].mxu0
    %v5994 = vadd.f32 0.0, %v5993
    %v5995 = vpop.f32.mrb[0].mxu0
    %5996 = vmatprep.mubr.bf16.mxu0 0
    %5997 = vmatmul.mubr.bf16.gmra.mrb[0].mxu0 %v5642
    %v5998 = vpop.f32.mrb[0].mxu0
    %v5999 = vadd.f32 0.0, %v5998
    %v6000 = vpop.f32.mrb[0].mxu0
    %v6001 = vpop.f32.mrb[0].mxu0
    %v6002 = vadd.f32 0.0, %v6001
    %v6003 = vpop.f32.mrb[0].mxu0
    %6004 = vmatprep.mubr.bf16.mxu0 0
    %6005 = vmatmul.mubr.bf16.gmra.mrb[0].mxu0 %v5643
    %v6006 = vpop.f32.mrb[0].mxu0
    %v6007 = vadd.f32 0.0, %v6006
    %v6008 = vpop.f32.mrb[0].mxu0
    %v6009 = vpop.f32.mrb[0].mxu0
    %v6010 = vadd.f32 0.0, %v6009
    %v6011 = vpop.f32.mrb[0].mxu0
    %6012 = vdwg.mxu0
    %v6013 = vadd.f32 %v5338, %v5759
    %v6014 = vadd.f32 %v5339, %v5762
    %v6015 = vadd.f32 %v5340, %v5767
    %v6016 = vadd.f32 %v5341, %v5770
    %v6017 = vadd.f32 %v5342, %v5775
    %v6018 = vadd.f32 %v5343, %v5778
    %v6019 = vadd.f32 %v5344, %v5783
    %v6020 = vadd.f32 %v5345, %v5786
    %v6021 = vadd.f32 %v5346, %v5791
    %v6022 = vadd.f32 %v5347, %v5794
    %v6023 = vadd.f32 %v5348, %v5799
    %v6024 = vadd.f32 %v5349, %v5802
    %v6025 = vadd.f32 %v5350, %v5807
    %v6026 = vadd.f32 %v5351, %v5810
    %v6027 = vadd.f32 %v5352, %v5815
    %v6028 = vadd.f32 %v5353, %v5818
    %v6029 = vadd.f32 %v5354, %v5823
    %v6030 = vadd.f32 %v5355, %v5826
    %v6031 = vadd.f32 %v5356, %v5831
    %v6032 = vadd.f32 %v5357, %v5834
    %v6033 = vadd.f32 %v5358, %v5839
    %v6034 = vadd.f32 %v5359, %v5842
    %v6035 = vadd.f32 %v5360, %v5847
    %v6036 = vadd.f32 %v5361, %v5850
    %v6037 = vadd.f32 %v5362, %v5855
    %v6038 = vadd.f32 %v5363, %v5858
    %v6039 = vadd.f32 %v5364, %v5863
    %v6040 = vadd.f32 %v5365, %v5866
    %v6041 = vadd.f32 %v5366, %v5871
    %v6042 = vadd.f32 %v5367, %v5874
    %v6043 = vadd.f32 %v5368, %v5879
    %v6044 = vadd.f32 %v5369, %v5882
    %v6045 = vadd.f32 %v5370, %v5887
    %v6046 = vadd.f32 %v5371, %v5890
    %v6047 = vadd.f32 %v5372, %v5895
    %v6048 = vadd.f32 %v5373, %v5898
    %v6049 = vadd.f32 %v5374, %v5903
    %v6050 = vadd.f32 %v5375, %v5906
    %v6051 = vadd.f32 %v5376, %v5911
    %v6052 = vadd.f32 %v5377, %v5914
    %v6053 = vadd.f32 %v5378, %v5919
    %v6054 = vadd.f32 %v5379, %v5922
    %v6055 = vadd.f32 %v5380, %v5927
    %v6056 = vadd.f32 %v5381, %v5930
    %v6057 = vadd.f32 %v5382, %v5935
    %v6058 = vadd.f32 %v5383, %v5938
    %v6059 = vadd.f32 %v5384, %v5943
    %v6060 = vadd.f32 %v5385, %v5946
    %v6061 = vadd.f32 %v5386, %v5951
    %v6062 = vadd.f32 %v5387, %v5954
    %v6063 = vadd.f32 %v5388, %v5959
    %v6064 = vadd.f32 %v5389, %v5962
    %v6065 = vadd.f32 %v5390, %v5967
    %v6066 = vadd.f32 %v5391, %v5970
    %v6067 = vadd.f32 %v5392, %v5975
    %v6068 = vadd.f32 %v5393, %v5978
    %v6069 = vadd.f32 %v5394, %v5983
    %v6070 = vadd.f32 %v5395, %v5986
    %v6071 = vadd.f32 %v5396, %v5991
    %v6072 = vadd.f32 %v5397, %v5994
    %v6073 = vadd.f32 %v5398, %v5999
    %v6074 = vadd.f32 %v5399, %v6002
    %v6075 = vadd.f32 %v5400, %v6007
    %v6076 = vadd.f32 %v5401, %v6010
    %v6077 = vld [vmem:[#allocation8] sm:$0x1]
    %v6079 = vlaneseq
    %v6080 = vshrl.u32 %v6079, 7
    %v6081 = vsub.s32 0, %v6080
    %v6082 = vrot.slane %v6077, %v6081
    %v6084 = vmul.f32 %v6013, %v6082
    %v6085 = vmul.f32 %v6014, %v6082
    %v6086 = vmul.f32 %v6015, %v6082
    %v6087 = vmul.f32 %v6016, %v6082
    %v6088 = vmul.f32 %v6017, %v6082
    %v6089 = vmul.f32 %v6018, %v6082
    %v6090 = vmul.f32 %v6019, %v6082
    %v6091 = vmul.f32 %v6020, %v6082
    %v6092 = vmul.f32 %v6021, %v6082
    %v6093 = vmul.f32 %v6022, %v6082
    %v6094 = vmul.f32 %v6023, %v6082
    %v6095 = vmul.f32 %v6024, %v6082
    %v6096 = vmul.f32 %v6025, %v6082
    %v6097 = vmul.f32 %v6026, %v6082
    %v6098 = vmul.f32 %v6027, %v6082
    %v6099 = vmul.f32 %v6028, %v6082
    %v6100 = vmul.f32 %v6029, %v6082
    %v6101 = vmul.f32 %v6030, %v6082
    %v6102 = vmul.f32 %v6031, %v6082
    %v6103 = vmul.f32 %v6032, %v6082
    %v6104 = vmul.f32 %v6033, %v6082
    %v6105 = vmul.f32 %v6034, %v6082
    %v6106 = vmul.f32 %v6035, %v6082
    %v6107 = vmul.f32 %v6036, %v6082
    %v6108 = vmul.f32 %v6037, %v6082
    %v6109 = vmul.f32 %v6038, %v6082
    %v6110 = vmul.f32 %v6039, %v6082
    %v6111 = vmul.f32 %v6040, %v6082
    %v6112 = vmul.f32 %v6041, %v6082
    %v6113 = vmul.f32 %v6042, %v6082
    %v6114 = vmul.f32 %v6043, %v6082
    %v6115 = vmul.f32 %v6044, %v6082
    %v6116 = vmul.f32 %v6045, %v6082
    %v6117 = vmul.f32 %v6046, %v6082
    %v6118 = vmul.f32 %v6047, %v6082
    %v6119 = vmul.f32 %v6048, %v6082
    %v6120 = vmul.f32 %v6049, %v6082
    %v6121 = vmul.f32 %v6050, %v6082
    %v6122 = vmul.f32 %v6051, %v6082
    %v6123 = vmul.f32 %v6052, %v6082
    %v6124 = vmul.f32 %v6053, %v6082
    %v6125 = vmul.f32 %v6054, %v6082
    %v6126 = vmul.f32 %v6055, %v6082
    %v6127 = vmul.f32 %v6056, %v6082
    %v6128 = vmul.f32 %v6057, %v6082
    %v6129 = vmul.f32 %v6058, %v6082
    %v6130 = vmul.f32 %v6059, %v6082
    %v6131 = vmul.f32 %v6060, %v6082
    %v6132 = vmul.f32 %v6061, %v6082
    %v6133 = vmul.f32 %v6062, %v6082
    %v6134 = vmul.f32 %v6063, %v6082
    %v6135 = vmul.f32 %v6064, %v6082
    %v6136 = vmul.f32 %v6065, %v6082
    %v6137 = vmul.f32 %v6066, %v6082
    %v6138 = vmul.f32 %v6067, %v6082
    %v6139 = vmul.f32 %v6068, %v6082
    %v6140 = vmul.f32 %v6069, %v6082
    %v6141 = vmul.f32 %v6070, %v6082
    %v6142 = vmul.f32 %v6071, %v6082
    %v6143 = vmul.f32 %v6072, %v6082
    %v6144 = vmul.f32 %v6073, %v6082
    %v6145 = vmul.f32 %v6074, %v6082
    %v6146 = vmul.f32 %v6075, %v6082
    %v6147 = vmul.f32 %v6076, %v6082
    %v6148 = vld [vmem:[#allocation9] sm:$0x1]
    %v6150 = vlaneseq
    %v6151 = vshrl.u32 %v6150, 7
    %v6152 = vsub.s32 0, %v6151
    %v6153 = vrot.slane %v6148, %v6152
    %v6155 = vadd.f32 %v6084, %v6153
    %v6156 = vadd.f32 %v6085, %v6153
    %v6157 = vadd.f32 %v6086, %v6153
    %v6158 = vadd.f32 %v6087, %v6153
    %v6159 = vadd.f32 %v6088, %v6153
    %v6160 = vadd.f32 %v6089, %v6153
    %v6161 = vadd.f32 %v6090, %v6153
    %v6162 = vadd.f32 %v6091, %v6153
    %v6163 = vadd.f32 %v6092, %v6153
    %v6164 = vadd.f32 %v6093, %v6153
    %v6165 = vadd.f32 %v6094, %v6153
    %v6166 = vadd.f32 %v6095, %v6153
    %v6167 = vadd.f32 %v6096, %v6153
    %v6168 = vadd.f32 %v6097, %v6153
    %v6169 = vadd.f32 %v6098, %v6153
    %v6170 = vadd.f32 %v6099, %v6153
    %v6171 = vadd.f32 %v6100, %v6153
    %v6172 = vadd.f32 %v6101, %v6153
    %v6173 = vadd.f32 %v6102, %v6153
    %v6174 = vadd.f32 %v6103, %v6153
    %v6175 = vadd.f32 %v6104, %v6153
    %v6176 = vadd.f32 %v6105, %v6153
    %v6177 = vadd.f32 %v6106, %v6153
    %v6178 = vadd.f32 %v6107, %v6153
    %v6179 = vadd.f32 %v6108, %v6153
    %v6180 = vadd.f32 %v6109, %v6153
    %v6181 = vadd.f32 %v6110, %v6153
    %v6182 = vadd.f32 %v6111, %v6153
    %v6183 = vadd.f32 %v6112, %v6153
    %v6184 = vadd.f32 %v6113, %v6153
    %v6185 = vadd.f32 %v6114, %v6153
    %v6186 = vadd.f32 %v6115, %v6153
    %v6187 = vadd.f32 %v6116, %v6153
    %v6188 = vadd.f32 %v6117, %v6153
    %v6189 = vadd.f32 %v6118, %v6153
    %v6190 = vadd.f32 %v6119, %v6153
    %v6191 = vadd.f32 %v6120, %v6153
    %v6192 = vadd.f32 %v6121, %v6153
    %v6193 = vadd.f32 %v6122, %v6153
    %v6194 = vadd.f32 %v6123, %v6153
    %v6195 = vadd.f32 %v6124, %v6153
    %v6196 = vadd.f32 %v6125, %v6153
    %v6197 = vadd.f32 %v6126, %v6153
    %v6198 = vadd.f32 %v6127, %v6153
    %v6199 = vadd.f32 %v6128, %v6153
    %v6200 = vadd.f32 %v6129, %v6153
    %v6201 = vadd.f32 %v6130, %v6153
    %v6202 = vadd.f32 %v6131, %v6153
    %v6203 = vadd.f32 %v6132, %v6153
    %v6204 = vadd.f32 %v6133, %v6153
    %v6205 = vadd.f32 %v6134, %v6153
    %v6206 = vadd.f32 %v6135, %v6153
    %v6207 = vadd.f32 %v6136, %v6153
    %v6208 = vadd.f32 %v6137, %v6153
    %v6209 = vadd.f32 %v6138, %v6153
    %v6210 = vadd.f32 %v6139, %v6153
    %v6211 = vadd.f32 %v6140, %v6153
    %v6212 = vadd.f32 %v6141, %v6153
    %v6213 = vadd.f32 %v6142, %v6153
    %v6214 = vadd.f32 %v6143, %v6153
    %v6215 = vadd.f32 %v6144, %v6153
    %v6216 = vadd.f32 %v6145, %v6153
    %v6217 = vadd.f32 %v6146, %v6153
    %v6218 = vadd.f32 %v6147, %v6153
    %v6219 = vmax.f32 %v6155, 0.0
    %v6220 = vmax.f32 %v6156, 0.0
    %v6221 = vmax.f32 %v6157, 0.0
    %v6222 = vmax.f32 %v6158, 0.0
    %v6223 = vmax.f32 %v6159, 0.0
    %v6224 = vmax.f32 %v6160, 0.0
    %v6225 = vmax.f32 %v6161, 0.0
    %v6226 = vmax.f32 %v6162, 0.0
    %v6227 = vmax.f32 %v6163, 0.0
    %v6228 = vmax.f32 %v6164, 0.0
    %v6229 = vmax.f32 %v6165, 0.0
    %v6230 = vmax.f32 %v6166, 0.0
    %v6231 = vmax.f32 %v6167, 0.0
    %v6232 = vmax.f32 %v6168, 0.0
    %v6233 = vmax.f32 %v6169, 0.0
    %v6234 = vmax.f32 %v6170, 0.0
    %v6235 = vmax.f32 %v6171, 0.0
    %v6236 = vmax.f32 %v6172, 0.0
    %v6237 = vmax.f32 %v6173, 0.0
    %v6238 = vmax.f32 %v6174, 0.0
    %v6239 = vmax.f32 %v6175, 0.0
    %v6240 = vmax.f32 %v6176, 0.0
    %v6241 = vmax.f32 %v6177, 0.0
    %v6242 = vmax.f32 %v6178, 0.0
    %v6243 = vmax.f32 %v6179, 0.0
    %v6244 = vmax.f32 %v6180, 0.0
    %v6245 = vmax.f32 %v6181, 0.0
    %v6246 = vmax.f32 %v6182, 0.0
    %v6247 = vmax.f32 %v6183, 0.0
    %v6248 = vmax.f32 %v6184, 0.0
    %v6249 = vmax.f32 %v6185, 0.0
    %v6250 = vmax.f32 %v6186, 0.0
    %v6251 = vmax.f32 %v6187, 0.0
    %v6252 = vmax.f32 %v6188, 0.0
    %v6253 = vmax.f32 %v6189, 0.0
    %v6254 = vmax.f32 %v6190, 0.0
    %v6255 = vmax.f32 %v6191, 0.0
    %v6256 = vmax.f32 %v6192, 0.0
    %v6257 = vmax.f32 %v6193, 0.0
    %v6258 = vmax.f32 %v6194, 0.0
    %v6259 = vmax.f32 %v6195, 0.0
    %v6260 = vmax.f32 %v6196, 0.0
    %v6261 = vmax.f32 %v6197, 0.0
    %v6262 = vmax.f32 %v6198, 0.0
    %v6263 = vmax.f32 %v6199, 0.0
    %v6264 = vmax.f32 %v6200, 0.0
    %v6265 = vmax.f32 %v6201, 0.0
    %v6266 = vmax.f32 %v6202, 0.0
    %v6267 = vmax.f32 %v6203, 0.0
    %v6268 = vmax.f32 %v6204, 0.0
    %v6269 = vmax.f32 %v6205, 0.0
    %v6270 = vmax.f32 %v6206, 0.0
    %v6271 = vmax.f32 %v6207, 0.0
    %v6272 = vmax.f32 %v6208, 0.0
    %v6273 = vmax.f32 %v6209, 0.0
    %v6274 = vmax.f32 %v6210, 0.0
    %v6275 = vmax.f32 %v6211, 0.0
    %v6276 = vmax.f32 %v6212, 0.0
    %v6277 = vmax.f32 %v6213, 0.0
    %v6278 = vmax.f32 %v6214, 0.0
    %v6279 = vmax.f32 %v6215, 0.0
    %v6280 = vmax.f32 %v6216, 0.0
    %v6281 = vmax.f32 %v6217, 0.0
    %v6282 = vmax.f32 %v6218, 0.0
    %6283 = vst [vmem:[#allocation2] sm:$0xff] 0.0
    %6284 = vst [vmem:[#allocation2 + $0x8] sm:$0xff] 0.0
    %6285 = vst [vmem:[#allocation2 + $0x10] sm:$0x3] 0.0
    %6286 = vst [vmem:[#allocation2 + $0x18] sm:$0xff] 0.0
    %6287 = vst [vmem:[#allocation2 + $0x20] sm:$0xff] 0.0
    %6288 = vst [vmem:[#allocation2 + $0x28] sm:$0x3] 0.0
    %6289 = vst [vmem:[#allocation2 + $0x30] sm:$0xff] 0.0
    %6290 = vst [vmem:[#allocation2 + $0x38] sm:$0xff] 0.0
    %6291 = vst [vmem:[#allocation2 + $0x40] sm:$0x3] 0.0
    %6292 = vst [vmem:[#allocation2 + $0x48] sm:$0xff] 0.0
    %6293 = vst [vmem:[#allocation2 + $0x50] sm:$0xff] 0.0
    %6294 = vst [vmem:[#allocation2 + $0x58] sm:$0x3] 0.0
    %6295 = vst [vmem:[#allocation2 + $0x60] sm:$0xff] 0.0
    %6296 = vst [vmem:[#allocation2 + $0x68] sm:$0xff] 0.0
    %6297 = vst [vmem:[#allocation2 + $0x70] sm:$0x3] 0.0
    %6298 = vst [vmem:[#allocation2 + $0x78] sm:$0xff] 0.0
    %6299 = vst [vmem:[#allocation2 + $0x80] sm:$0xff] 0.0
    %6300 = vst [vmem:[#allocation2 + $0x88] sm:$0x3] 0.0
    %6301 = vst [vmem:[#allocation2 + $0x90] sm:$0xff] 0.0
    %6302 = vst [vmem:[#allocation2 + $0x98] sm:$0xff] 0.0
    %6303 = vst [vmem:[#allocation2 + $0xa0] sm:$0x3] 0.0
    %6304 = vst [vmem:[#allocation2 + $0xa8] sm:$0xff] 0.0
    %6305 = vst [vmem:[#allocation2 + $0xb0] sm:$0xff] 0.0
    %6306 = vst [vmem:[#allocation2 + $0xb8] sm:$0x3] 0.0
    %6307 = vst [vmem:[#allocation2 + $0xc0] sm:$0xff] 0.0
    %6308 = vst [vmem:[#allocation2 + $0xc8] sm:$0xff] 0.0
    %6309 = vst [vmem:[#allocation2 + $0xd0] sm:$0x3] 0.0
    %6310 = vst [vmem:[#allocation2 + $0xd8] sm:$0xff] 0.0
    %6311 = vst [vmem:[#allocation2 + $0xe0] sm:$0xff] 0.0
    %6312 = vst [vmem:[#allocation2 + $0xe8] sm:$0x3] 0.0
    %6313 = vst [vmem:[#allocation2 + $0xf0] sm:$0xff] 0.0
    %6314 = vst [vmem:[#allocation2 + $0xf8] sm:$0xff] 0.0
    %6315 = vst [vmem:[#allocation2 + $0x100] sm:$0x3] 0.0
    %6316 = vst [vmem:[#allocation2 + $0x108] sm:$0xff] 0.0
    %6317 = vst [vmem:[#allocation2 + $0x110] sm:$0xff] 0.0
    %6318 = vst [vmem:[#allocation2 + $0x118] sm:$0x3] 0.0
    %6319 = vst [vmem:[#allocation2 + $0x120] sm:$0xff] 0.0
    %6320 = vst [vmem:[#allocation2 + $0x128] sm:$0xff] 0.0
    %6321 = vst [vmem:[#allocation2 + $0x130] sm:$0x3] 0.0
    %6322 = vst [vmem:[#allocation2 + $0x138] sm:$0xff] 0.0
    %6323 = vst [vmem:[#allocation2 + $0x140] sm:$0xff] 0.0
    %6324 = vst [vmem:[#allocation2 + $0x148] sm:$0x3] 0.0
    %6325 = vst [vmem:[#allocation2 + $0x150] sm:$0xff] 0.0
    %6326 = vst [vmem:[#allocation2 + $0x158] sm:$0xff] 0.0
    %6327 = vst [vmem:[#allocation2 + $0x160] sm:$0x3] 0.0
    %6328 = vst [vmem:[#allocation2 + $0x168] sm:$0xff] 0.0
    %6329 = vst [vmem:[#allocation2 + $0x170] sm:$0xff] 0.0
    %6330 = vst [vmem:[#allocation2 + $0x178] sm:$0x3] 0.0
    %6331 = vst [vmem:[#allocation2 + $0x180] sm:$0xff] 0.0
    %6332 = vst [vmem:[#allocation2 + $0x188] sm:$0xff] 0.0
    %6333 = vst [vmem:[#allocation2 + $0x190] sm:$0x3] 0.0
    %6334 = vst [vmem:[#allocation2 + $0x198] sm:$0xff] 0.0
    %6335 = vst [vmem:[#allocation2 + $0x1a0] sm:$0xff] 0.0
    %6336 = vst [vmem:[#allocation2 + $0x1a8] sm:$0x3] 0.0
    %6337 = vst [vmem:[#allocation2 + $0x1b0] sm:$0xff] 0.0
    %6338 = vst [vmem:[#allocation2 + $0x1b8] sm:$0xff] 0.0
    %6339 = vst [vmem:[#allocation2 + $0x1c0] sm:$0x3] 0.0
    %6340 = vst [vmem:[#allocation2 + $0x1c8] sm:$0xff] 0.0
    %6341 = vst [vmem:[#allocation2 + $0x1d0] sm:$0xff] 0.0
    %6342 = vst [vmem:[#allocation2 + $0x1d8] sm:$0x3] 0.0
    %6343 = vst [vmem:[#allocation2 + $0x1e0] sm:$0xff] 0.0
    %6344 = vst [vmem:[#allocation2 + $0x1e8] sm:$0xff] 0.0
    %6345 = vst [vmem:[#allocation2 + $0x1f0] sm:$0x3] 0.0
    %6346 = vst [vmem:[#allocation2 + $0x1f8] sm:$0xff] 0.0
    %6347 = vst [vmem:[#allocation2 + $0x200] sm:$0xff] 0.0
    %6348 = vst [vmem:[#allocation2 + $0x208] sm:$0x3] 0.0
    %6349 = vst [vmem:[#allocation2 + $0x210] sm:$0xff] 0.0
    %6350 = vst [vmem:[#allocation2 + $0x218] sm:$0xff] 0.0
    %6351 = vst [vmem:[#allocation2 + $0x220] sm:$0x3] 0.0
    %6352 = vst [vmem:[#allocation2 + $0x228] sm:$0xff] 0.0
    %6353 = vst [vmem:[#allocation2 + $0x230] sm:$0xff] 0.0
    %6354 = vst [vmem:[#allocation2 + $0x238] sm:$0x3] 0.0
    %6355 = vst [vmem:[#allocation2 + $0x240] sm:$0xff] 0.0
    %6356 = vst [vmem:[#allocation2 + $0x248] sm:$0xff] 0.0
    %6357 = vst [vmem:[#allocation2 + $0x250] sm:$0x3] 0.0
    %6358 = vst [vmem:[#allocation2 + $0x258] sm:$0xff] 0.0
    %6359 = vst [vmem:[#allocation2 + $0x260] sm:$0xff] 0.0
    %6360 = vst [vmem:[#allocation2 + $0x268] sm:$0x3] 0.0
    %6361 = vst [vmem:[#allocation2 + $0x270] sm:$0xff] 0.0
    %6362 = vst [vmem:[#allocation2 + $0x278] sm:$0xff] 0.0
    %6363 = vst [vmem:[#allocation2 + $0x280] sm:$0x3] 0.0
    %6364 = vst [vmem:[#allocation2 + $0x288] sm:$0xff] 0.0
    %6365 = vst [vmem:[#allocation2 + $0x290] sm:$0xff] 0.0
    %6366 = vst [vmem:[#allocation2 + $0x298] sm:$0x3] 0.0
    %6367 = vst [vmem:[#allocation2 + $0x2a0] sm:$0xff] 0.0
    %6368 = vst [vmem:[#allocation2 + $0x2a8] sm:$0xff] 0.0
    %6369 = vst [vmem:[#allocation2 + $0x2b0] sm:$0x3] 0.0
    %6370 = vst [vmem:[#allocation2 + $0x2b8] sm:$0xff] 0.0
    %6371 = vst [vmem:[#allocation2 + $0x2c0] sm:$0xff] 0.0
    %6372 = vst [vmem:[#allocation2 + $0x2c8] sm:$0x3] 0.0
    %6373 = vst [vmem:[#allocation2 + $0x2d0] sm:$0xff] 0.0
    %6374 = vst [vmem:[#allocation2 + $0x2d8] sm:$0xff] 0.0
    %6375 = vst [vmem:[#allocation2 + $0x2e0] sm:$0x3] 0.0
    %6376 = vst [vmem:[#allocation2 + $0x2e8] sm:$0xff] 0.0
    %6377 = vst [vmem:[#allocation2 + $0x2f0] sm:$0xff] 0.0
    %6378 = vst [vmem:[#allocation2 + $0x2f8] sm:$0x3] 0.0
    %6379 = vst [vmem:[#allocation2 + $0x300] sm:$0xff] 0.0
    %6380 = vst [vmem:[#allocation2 + $0x308] sm:$0xff] 0.0
    %6381 = vst [vmem:[#allocation2 + $0x310] sm:$0x3] 0.0
    %6382 = vst [vmem:[#allocation2 + $0x318] sm:$0xff] 0.0
    %6383 = vst [vmem:[#allocation2 + $0x320] sm:$0xff] 0.0
    %6384 = vst [vmem:[#allocation2 + $0x328] sm:$0x3] 0.0
    %6385 = vst [vmem:[#allocation2 + $0x330] sm:$0xff] 0.0
    %6386 = vst [vmem:[#allocation2 + $0x338] sm:$0xff] 0.0
    %6387 = vst [vmem:[#allocation2 + $0x340] sm:$0x3] 0.0
    %6388 = vst [vmem:[#allocation2 + $0x348] sm:$0xff] 0.0
    %6389 = vst [vmem:[#allocation2 + $0x350] sm:$0xff] 0.0
    %6390 = vst [vmem:[#allocation2 + $0x358] sm:$0x3] 0.0
    %s6391 = scalar_lea.vmem [#allocation2], 24
    %6392 = vst [vmem:[%s6391 + $0x1] sm:$0xff] %v6219
    %6393 = vst [vmem:[%s6391 + $0x9] sm:$0xff] %v6220
    %6394 = vst [vmem:[%s6391 + $0x19] sm:$0xff] %v6221
    %6395 = vst [vmem:[%s6391 + $0x21] sm:$0xff] %v6222
    %6396 = vst [vmem:[%s6391 + $0x31] sm:$0xff] %v6223
    %6397 = vst [vmem:[%s6391 + $0x39] sm:$0xff] %v6224
    %6398 = vst [vmem:[%s6391 + $0x49] sm:$0xff] %v6225
    %6399 = vst [vmem:[%s6391 + $0x51] sm:$0xff] %v6226
    %6400 = vst [vmem:[%s6391 + $0x61] sm:$0xff] %v6227
    %6401 = vst [vmem:[%s6391 + $0x69] sm:$0xff] %v6228
    %6402 = vst [vmem:[%s6391 + $0x79] sm:$0xff] %v6229
    %6403 = vst [vmem:[%s6391 + $0x81] sm:$0xff] %v6230
    %6404 = vst [vmem:[%s6391 + $0x91] sm:$0xff] %v6231
    %6405 = vst [vmem:[%s6391 + $0x99] sm:$0xff] %v6232
    %6406 = vst [vmem:[%s6391 + $0xa9] sm:$0xff] %v6233
    %6407 = vst [vmem:[%s6391 + $0xb1] sm:$0xff] %v6234
    %6408 = vst [vmem:[%s6391 + $0xc1] sm:$0xff] %v6235
    %6409 = vst [vmem:[%s6391 + $0xc9] sm:$0xff] %v6236
    %6410 = vst [vmem:[%s6391 + $0xd9] sm:$0xff] %v6237
    %6411 = vst [vmem:[%s6391 + $0xe1] sm:$0xff] %v6238
    %6412 = vst [vmem:[%s6391 + $0xf1] sm:$0xff] %v6239
    %6413 = vst [vmem:[%s6391 + $0xf9] sm:$0xff] %v6240
    %6414 = vst [vmem:[%s6391 + $0x109] sm:$0xff] %v6241
    %6415 = vst [vmem:[%s6391 + $0x111] sm:$0xff] %v6242
    %6416 = vst [vmem:[%s6391 + $0x121] sm:$0xff] %v6243
    %6417 = vst [vmem:[%s6391 + $0x129] sm:$0xff] %v6244
    %6418 = vst [vmem:[%s6391 + $0x139] sm:$0xff] %v6245
    %6419 = vst [vmem:[%s6391 + $0x141] sm:$0xff] %v6246
    %6420 = vst [vmem:[%s6391 + $0x151] sm:$0xff] %v6247
    %6421 = vst [vmem:[%s6391 + $0x159] sm:$0xff] %v6248
    %6422 = vst [vmem:[%s6391 + $0x169] sm:$0xff] %v6249
    %6423 = vst [vmem:[%s6391 + $0x171] sm:$0xff] %v6250
    %6424 = vst [vmem:[%s6391 + $0x1b1] sm:$0xff] %v6251
    %6425 = vst [vmem:[%s6391 + $0x1b9] sm:$0xff] %v6252
    %6426 = vst [vmem:[%s6391 + $0x1c9] sm:$0xff] %v6253
    %6427 = vst [vmem:[%s6391 + $0x1d1] sm:$0xff] %v6254
    %6428 = vst [vmem:[%s6391 + $0x1e1] sm:$0xff] %v6255
    %6429 = vst [vmem:[%s6391 + $0x1e9] sm:$0xff] %v6256
    %6430 = vst [vmem:[%s6391 + $0x1f9] sm:$0xff] %v6257
    %6431 = vst [vmem:[%s6391 + $0x201] sm:$0xff] %v6258
    %6432 = vst [vmem:[%s6391 + $0x211] sm:$0xff] %v6259
    %6433 = vst [vmem:[%s6391 + $0x219] sm:$0xff] %v6260
    %6434 = vst [vmem:[%s6391 + $0x229] sm:$0xff] %v6261
    %6435 = vst [vmem:[%s6391 + $0x231] sm:$0xff] %v6262
    %6436 = vst [vmem:[%s6391 + $0x241] sm:$0xff] %v6263
    %6437 = vst [vmem:[%s6391 + $0x249] sm:$0xff] %v6264
    %6438 = vst [vmem:[%s6391 + $0x259] sm:$0xff] %v6265
    %6439 = vst [vmem:[%s6391 + $0x261] sm:$0xff] %v6266
    %6440 = vst [vmem:[%s6391 + $0x271] sm:$0xff] %v6267
    %6441 = vst [vmem:[%s6391 + $0x279] sm:$0xff] %v6268
    %6442 = vst [vmem:[%s6391 + $0x289] sm:$0xff] %v6269
    %6443 = vst [vmem:[%s6391 + $0x291] sm:$0xff] %v6270
    %6444 = vst [vmem:[%s6391 + $0x2a1] sm:$0xff] %v6271
    %6445 = vst [vmem:[%s6391 + $0x2a9] sm:$0xff] %v6272
    %6446 = vst [vmem:[%s6391 + $0x2b9] sm:$0xff] %v6273
    %6447 = vst [vmem:[%s6391 + $0x2c1] sm:$0xff] %v6274
    %6448 = vst [vmem:[%s6391 + $0x2d1] sm:$0xff] %v6275
    %6449 = vst [vmem:[%s6391 + $0x2d9] sm:$0xff] %v6276
    %6450 = vst [vmem:[%s6391 + $0x2e9] sm:$0xff] %v6277
    %6451 = vst [vmem:[%s6391 + $0x2f1] sm:$0xff] %v6278
    %6452 = vst [vmem:[%s6391 + $0x301] sm:$0xff] %v6279
    %6453 = vst [vmem:[%s6391 + $0x309] sm:$0xff] %v6280
    %6454 = vst [vmem:[%s6391 + $0x319] sm:$0xff] %v6281
    %6455 = vst [vmem:[%s6391 + $0x321] sm:$0xff] %v6282
    %v6456 = vld [vmem:[#allocation2] sm:$0xff]
    %v6457 = vld [vmem:[#allocation2 + $0x8] sm:$0xff]
    %v6458 = vld [vmem:[#allocation2 + $0x18] sm:$0xff]
    %v6459 = vld [vmem:[#allocation2 + $0x20] sm:$0xff]
    %v6460 = vld [vmem:[#allocation2 + $0x30] sm:$0xff]
    %v6461 = vld [vmem:[#allocation2 + $0x38] sm:$0xff]
    %v6462 = vld [vmem:[#allocation2 + $0x48] sm:$0xff]
    %v6463 = vld [vmem:[#allocation2 + $0x50] sm:$0xff]
    %v6464 = vld [vmem:[#allocation2 + $0x60] sm:$0xff]
    %v6465 = vld [vmem:[#allocation2 + $0x68] sm:$0xff]
    %v6466 = vld [vmem:[#allocation2 + $0x78] sm:$0xff]
    %v6467 = vld [vmem:[#allocation2 + $0x80] sm:$0xff]
    %v6468 = vld [vmem:[#allocation2 + $0x90] sm:$0xff]
    %v6469 = vld [vmem:[#allocation2 + $0x98] sm:$0xff]
    %v6470 = vld [vmem:[#allocation2 + $0xa8] sm:$0xff]
    %v6471 = vld [vmem:[#allocation2 + $0xb0] sm:$0xff]
    %v6472 = vld [vmem:[#allocation2 + $0xc0] sm:$0xff]
    %v6473 = vld [vmem:[#allocation2 + $0xc8] sm:$0xff]
    %v6474 = vld [vmem:[#allocation2 + $0xd8] sm:$0xff]
    %v6475 = vld [vmem:[#allocation2 + $0xe0] sm:$0xff]
    %v6476 = vld [vmem:[#allocation2 + $0xf0] sm:$0xff]
    %v6477 = vld [vmem:[#allocation2 + $0xf8] sm:$0xff]
    %v6478 = vld [vmem:[#allocation2 + $0x108] sm:$0xff]
    %v6479 = vld [vmem:[#allocation2 + $0x110] sm:$0xff]
    %v6480 = vld [vmem:[#allocation2 + $0x120] sm:$0xff]
    %v6481 = vld [vmem:[#allocation2 + $0x128] sm:$0xff]
    %v6482 = vld [vmem:[#allocation2 + $0x138] sm:$0xff]
    %v6483 = vld [vmem:[#allocation2 + $0x140] sm:$0xff]
    %v6484 = vld [vmem:[#allocation2 + $0x150] sm:$0xff]
    %v6485 = vld [vmem:[#allocation2 + $0x158] sm:$0xff]
    %v6486 = vld [vmem:[#allocation2 + $0x168] sm:$0xff]
    %v6487 = vld [vmem:[#allocation2 + $0x170] sm:$0xff]
    %v6488 = vld [vmem:[#allocation2 + $0x1b0] sm:$0xff]
    %v6489 = vld [vmem:[#allocation2 + $0x1b8] sm:$0xff]
    %v6490 = vld [vmem:[#allocation2 + $0x1c8] sm:$0xff]
    %v6491 = vld [vmem:[#allocation2 + $0x1d0] sm:$0xff]
    %v6492 = vld [vmem:[#allocation2 + $0x1e0] sm:$0xff]
    %v6493 = vld [vmem:[#allocation2 + $0x1e8] sm:$0xff]
    %v6494 = vld [vmem:[#allocation2 + $0x1f8] sm:$0xff]
    %v6495 = vld [vmem:[#allocation2 + $0x200] sm:$0xff]
    %v6496 = vld [vmem:[#allocation2 + $0x210] sm:$0xff]
    %v6497 = vld [vmem:[#allocation2 + $0x218] sm:$0xff]
    %v6498 = vld [vmem:[#allocation2 + $0x228] sm:$0xff]
    %v6499 = vld [vmem:[#allocation2 + $0x230] sm:$0xff]
    %v6500 = vld [vmem:[#allocation2 + $0x240] sm:$0xff]
    %v6501 = vld [vmem:[#allocation2 + $0x248] sm:$0xff]
    %v6502 = vld [vmem:[#allocation2 + $0x258] sm:$0xff]
    %v6503 = vld [vmem:[#allocation2 + $0x260] sm:$0xff]
    %v6504 = vld [vmem:[#allocation2 + $0x270] sm:$0xff]
    %v6505 = vld [vmem:[#allocation2 + $0x278] sm:$0xff]
    %v6506 = vld [vmem:[#allocation2 + $0x288] sm:$0xff]
    %v6507 = vld [vmem:[#allocation2 + $0x290] sm:$0xff]
    %v6508 = vld [vmem:[#allocation2 + $0x2a0] sm:$0xff]
    %v6509 = vld [vmem:[#allocation2 + $0x2a8] sm:$0xff]
    %v6510 = vld [vmem:[#allocation2 + $0x2b8] sm:$0xff]
    %v6511 = vld [vmem:[#allocation2 + $0x2c0] sm:$0xff]
    %v6512 = vld [vmem:[#allocation2 + $0x2d0] sm:$0xff]
    %v6513 = vld [vmem:[#allocation2 + $0x2d8] sm:$0xff]
    %v6514 = vld [vmem:[#allocation2 + $0x2e8] sm:$0xff]
    %v6515 = vld [vmem:[#allocation2 + $0x2f0] sm:$0xff]
    %v6516 = vld [vmem:[#allocation2 + $0x300] sm:$0xff]
    %v6517 = vld [vmem:[#allocation2 + $0x308] sm:$0xff]
    %v6518 = vld [vmem:[#allocation2 + $0x318] sm:$0xff]
    %v6519 = vld [vmem:[#allocation2 + $0x320] sm:$0xff]
    %v6520 = vpack.c.bf16 %v6457, %v6456
    %v6521 = vpack.c.bf16 %v6459, %v6458
    %v6522 = vpack.c.bf16 %v6461, %v6460
    %v6523 = vpack.c.bf16 %v6463, %v6462
    %v6524 = vpack.c.bf16 %v6465, %v6464
    %v6525 = vpack.c.bf16 %v6467, %v6466
    %v6526 = vpack.c.bf16 %v6469, %v6468
    %v6527 = vpack.c.bf16 %v6471, %v6470
    %v6528 = vpack.c.bf16 %v6473, %v6472
    %v6529 = vpack.c.bf16 %v6475, %v6474
    %v6530 = vpack.c.bf16 %v6477, %v6476
    %v6531 = vpack.c.bf16 %v6479, %v6478
    %v6532 = vpack.c.bf16 %v6481, %v6480
    %v6533 = vpack.c.bf16 %v6483, %v6482
    %v6534 = vpack.c.bf16 %v6485, %v6484
    %v6535 = vpack.c.bf16 %v6487, %v6486
    %v6536 = vpack.c.bf16 %v6489, %v6488
    %v6537 = vpack.c.bf16 %v6491, %v6490
    %v6538 = vpack.c.bf16 %v6493, %v6492
    %v6539 = vpack.c.bf16 %v6495, %v6494
    %v6540 = vpack.c.bf16 %v6497, %v6496
    %v6541 = vpack.c.bf16 %v6499, %v6498
    %v6542 = vpack.c.bf16 %v6501, %v6500
    %v6543 = vpack.c.bf16 %v6503, %v6502
    %v6544 = vpack.c.bf16 %v6505, %v6504
    %v6545 = vpack.c.bf16 %v6507, %v6506
    %v6546 = vpack.c.bf16 %v6509, %v6508
    %v6547 = vpack.c.bf16 %v6511, %v6510
    %v6548 = vpack.c.bf16 %v6513, %v6512
    %v6549 = vpack.c.bf16 %v6515, %v6514
    %v6550 = vpack.c.bf16 %v6517, %v6516
    %v6551 = vpack.c.bf16 %v6519, %v6518
    %v6552 = vld [vmem:[#allocation11] sm:$0xf]
    %v6553 = vld [vmem:[#allocation11 + $0x4] sm:$0xf]
    %v6554 = vld [vmem:[#allocation11 + $0x8] sm:$0xf]
    %v6555 = vld [vmem:[#allocation11 + $0xc] sm:$0xf]
    %v6556 = vld [vmem:[#allocation11 + $0x10] sm:$0xf]
    %v6557 = vld [vmem:[#allocation11 + $0x14] sm:$0xf]
    %v6558 = vld [vmem:[#allocation11 + $0x18] sm:$0xf]
    %v6559 = vld [vmem:[#allocation11 + $0x1c] sm:$0xf]
    %v6560 = vld [vmem:[#allocation11 + $0x20] sm:$0xf]
    %v6561 = vld [vmem:[#allocation11 + $0x24] sm:$0xf]
    %v6562 = vld [vmem:[#allocation11 + $0x28] sm:$0xf]
    %v6563 = vld [vmem:[#allocation11 + $0x2c] sm:$0xf]
    %v6564 = vld [vmem:[#allocation11 + $0x30] sm:$0xf]
    %v6565 = vld [vmem:[#allocation11 + $0x34] sm:$0xf]
    %v6566 = vld [vmem:[#allocation11 + $0x38] sm:$0xf]
    %v6567 = vld [vmem:[#allocation11 + $0x3c] sm:$0xf]
    %v6568 = vld [vmem:[#allocation2 + $0x1] sm:$0xff]
    %v6569 = vld [vmem:[#allocation2 + $0x9] sm:$0xff]
    %v6570 = vld [vmem:[#allocation2 + $0x19] sm:$0xff]
    %v6571 = vld [vmem:[#allocation2 + $0x21] sm:$0xff]
    %v6572 = vld [vmem:[#allocation2 + $0x31] sm:$0xff]
    %v6573 = vld [vmem:[#allocation2 + $0x39] sm:$0xff]
    %v6574 = vld [vmem:[#allocation2 + $0x49] sm:$0xff]
    %v6575 = vld [vmem:[#allocation2 + $0x51] sm:$0xff]
    %v6576 = vld [vmem:[#allocation2 + $0x61] sm:$0xff]
    %v6577 = vld [vmem:[#allocation2 + $0x69] sm:$0xff]
    %v6578 = vld [vmem:[#allocation2 + $0x79] sm:$0xff]
    %v6579 = vld [vmem:[#allocation2 + $0x81] sm:$0xff]
    %v6580 = vld [vmem:[#allocation2 + $0x91] sm:$0xff]
    %v6581 = vld [vmem:[#allocation2 + $0x99] sm:$0xff]
    %v6582 = vld [vmem:[#allocation2 + $0xa9] sm:$0xff]
    %v6583 = vld [vmem:[#allocation2 + $0xb1] sm:$0xff]
    %v6584 = vld [vmem:[#allocation2 + $0xc1] sm:$0xff]
    %v6585 = vld [vmem:[#allocation2 + $0xc9] sm:$0xff]
    %v6586 = vld [vmem:[#allocation2 + $0xd9] sm:$0xff]
    %v6587 = vld [vmem:[#allocation2 + $0xe1] sm:$0xff]
    %v6588 = vld [vmem:[#allocation2 + $0xf1] sm:$0xff]
    %v6589 = vld [vmem:[#allocation2 + $0xf9] sm:$0xff]
    %v6590 = vld [vmem:[#allocation2 + $0x109] sm:$0xff]
    %v6591 = vld [vmem:[#allocation2 + $0x111] sm:$0xff]
    %v6592 = vld [vmem:[#allocation2 + $0x121] sm:$0xff]
    %v6593 = vld [vmem:[#allocation2 + $0x129] sm:$0xff]
    %v6594 = vld [vmem:[#allocation2 + $0x139] sm:$0xff]
    %v6595 = vld [vmem:[#allocation2 + $0x141] sm:$0xff]
    %v6596 = vld [vmem:[#allocation2 + $0x151] sm:$0xff]
    %v6597 = vld [vmem:[#allocation2 + $0x159] sm:$0xff]
    %v6598 = vld [vmem:[#allocation2 + $0x169] sm:$0xff]
    %v6599 = vld [vmem:[#allocation2 + $0x171] sm:$0xff]
    %v6600 = vld [vmem:[#allocation2 + $0x1b1] sm:$0xff]
    %v6601 = vld [vmem:[#allocation2 + $0x1b9] sm:$0xff]
    %v6602 = vld [vmem:[#allocation2 + $0x1c9] sm:$0xff]
    %v6603 = vld [vmem:[#allocation2 + $0x1d1] sm:$0xff]
    %v6604 = vld [vmem:[#allocation2 + $0x1e1] sm:$0xff]
    %v6605 = vld [vmem:[#allocation2 + $0x1e9] sm:$0xff]
    %v6606 = vld [vmem:[#allocation2 + $0x1f9] sm:$0xff]
    %v6607 = vld [vmem:[#allocation2 + $0x201] sm:$0xff]
    %v6608 = vld [vmem:[#allocation2 + $0x211] sm:$0xff]
    %v6609 = vld [vmem:[#allocation2 + $0x219] sm:$0xff]
    %v6610 = vld [vmem:[#allocation2 + $0x229] sm:$0xff]
    %v6611 = vld [vmem:[#allocation2 + $0x231] sm:$0xff]
    %v6612 = vld [vmem:[#allocation2 + $0x241] sm:$0xff]
    %v6613 = vld [vmem:[#allocation2 + $0x249] sm:$0xff]
    %v6614 = vld [vmem:[#allocation2 + $0x259] sm:$0xff]
    %v6615 = vld [vmem:[#allocation2 + $0x261] sm:$0xff]
    %v6616 = vld [vmem:[#allocation2 + $0x271] sm:$0xff]
    %v6617 = vld [vmem:[#allocation2 + $0x279] sm:$0xff]
    %v6618 = vld [vmem:[#allocation2 + $0x289] sm:$0xff]
    %v6619 = vld [vmem:[#allocation2 + $0x291] sm:$0xff]
    %v6620 = vld [vmem:[#allocation2 + $0x2a1] sm:$0xff]
    %v6621 = vld [vmem:[#allocation2 + $0x2a9] sm:$0xff]
    %v6622 = vld [vmem:[#allocation2 + $0x2b9] sm:$0xff]
    %v6623 = vld [vmem:[#allocation2 + $0x2c1] sm:$0xff]
    %v6624 = vld [vmem:[#allocation2 + $0x2d1] sm:$0xff]
    %v6625 = vld [vmem:[#allocation2 + $0x2d9] sm:$0xff]
    %v6626 = vld [vmem:[#allocation2 + $0x2e9] sm:$0xff]
    %v6627 = vld [vmem:[#allocation2 + $0x2f1] sm:$0xff]
    %v6628 = vld [vmem:[#allocation2 + $0x301] sm:$0xff]
    %v6629 = vld [vmem:[#allocation2 + $0x309] sm:$0xff]
    %v6630 = vld [vmem:[#allocation2 + $0x319] sm:$0xff]
    %v6631 = vld [vmem:[#allocation2 + $0x321] sm:$0xff]
    %v6632 = vpack.c.bf16 %v6569, %v6568
    %v6633 = vpack.c.bf16 %v6571, %v6570
    %v6634 = vpack.c.bf16 %v6573, %v6572
    %v6635 = vpack.c.bf16 %v6575, %v6574
    %v6636 = vpack.c.bf16 %v6577, %v6576
    %v6637 = vpack.c.bf16 %v6579, %v6578
    %v6638 = vpack.c.bf16 %v6581, %v6580
    %v6639 = vpack.c.bf16 %v6583, %v6582
    %v6640 = vpack.c.bf16 %v6585, %v6584
    %v6641 = vpack.c.bf16 %v6587, %v6586
    %v6642 = vpack.c.bf16 %v6589, %v6588
    %v6643 = vpack.c.bf16 %v6591, %v6590
    %v6644 = vpack.c.bf16 %v6593, %v6592
    %v6645 = vpack.c.bf16 %v6595, %v6594
    %v6646 = vpack.c.bf16 %v6597, %v6596
    %v6647 = vpack.c.bf16 %v6599, %v6598
    %v6648 = vpack.c.bf16 %v6601, %v6600
    %v6649 = vpack.c.bf16 %v6603, %v6602
    %v6650 = vpack.c.bf16 %v6605, %v6604
    %v6651 = vpack.c.bf16 %v6607, %v6606
    %v6652 = vpack.c.bf16 %v6609, %v6608
    %v6653 = vpack.c.bf16 %v6611, %v6610
    %v6654 = vpack.c.bf16 %v6613, %v6612
    %v6655 = vpack.c.bf16 %v6615, %v6614
    %v6656 = vpack.c.bf16 %v6617, %v6616
    %v6657 = vpack.c.bf16 %v6619, %v6618
    %v6658 = vpack.c.bf16 %v6621, %v6620
    %v6659 = vpack.c.bf16 %v6623, %v6622
    %v6660 = vpack.c.bf16 %v6625, %v6624
    %v6661 = vpack.c.bf16 %v6627, %v6626
    %v6662 = vpack.c.bf16 %v6629, %v6628
    %v6663 = vpack.c.bf16 %v6631, %v6630
    %s6664 = scalar_lea.vmem [#allocation11], 64
    %v6665 = vld [vmem:[%s6664] sm:$0xf]
    %v6666 = vld [vmem:[%s6664 + $0x4] sm:$0xf]
    %v6667 = vld [vmem:[%s6664 + $0x8] sm:$0xf]
    %v6668 = vld [vmem:[%s6664 + $0xc] sm:$0xf]
    %v6669 = vld [vmem:[%s6664 + $0x10] sm:$0xf]
    %v6670 = vld [vmem:[%s6664 + $0x14] sm:$0xf]
    %v6671 = vld [vmem:[%s6664 + $0x18] sm:$0xf]
    %v6672 = vld [vmem:[%s6664 + $0x1c] sm:$0xf]
    %v6673 = vld [vmem:[%s6664 + $0x20] sm:$0xf]
    %v6674 = vld [vmem:[%s6664 + $0x24] sm:$0xf]
    %v6675 = vld [vmem:[%s6664 + $0x28] sm:$0xf]
    %v6676 = vld [vmem:[%s6664 + $0x2c] sm:$0xf]
    %v6677 = vld [vmem:[%s6664 + $0x30] sm:$0xf]
    %v6678 = vld [vmem:[%s6664 + $0x34] sm:$0xf]
    %v6679 = vld [vmem:[%s6664 + $0x38] sm:$0xf]
    %v6680 = vld [vmem:[%s6664 + $0x3c] sm:$0xf]
    %v6697 = vunpack.c.l.b16 %v6665
    %v6698 = vunpack.c.l.b16 %v6666
    %v6699 = vunpack.c.l.b16 %v6667
    %v6700 = vunpack.c.l.b16 %v6668
    %v6701 = vunpack.c.l.b16 %v6669
    %v6702 = vunpack.c.l.b16 %v6670
    %v6703 = vunpack.c.l.b16 %v6671
    %v6704 = vunpack.c.l.b16 %v6672
    %v6705 = vunpack.c.l.b16 %v6673
    %v6706 = vunpack.c.l.b16 %v6674
    %v6707 = vunpack.c.l.b16 %v6675
    %v6708 = vunpack.c.l.b16 %v6676
    %v6709 = vunpack.c.l.b16 %v6677
    %v6710 = vunpack.c.l.b16 %v6678
    %v6711 = vunpack.c.l.b16 %v6679
    %v6712 = vunpack.c.l.b16 %v6680
    %v6713 = vpack.c.b16 %v6698, %v6697
    %v6714 = vpack.c.b16 %v6700, %v6699
    %v6715 = vpack.c.b16 %v6702, %v6701
    %v6716 = vpack.c.b16 %v6704, %v6703
    %v6717 = vpack.c.b16 %v6706, %v6705
    %v6718 = vpack.c.b16 %v6708, %v6707
    %v6719 = vpack.c.b16 %v6710, %v6709
    %v6720 = vpack.c.b16 %v6712, %v6711
    %6729 = vmatprep.subr.bf16.mxu0 0
    %6730 = vmatpush1.bf16.msra.mxu0 %v6713
    %6731 = vmatprep.subr.bf16.mxu0 0
    %6732 = vmatpush1.bf16.msra.mxu0 %v6714
    %6733 = vmatprep.subr.bf16.mxu0 0
    %6734 = vmatpush1.bf16.msra.mxu0 %v6715
    %6735 = vmatprep.subr.bf16.mxu0 0
    %6736 = vmatpush1.bf16.msra.mxu0 %v6716
    %6737 = vmatprep.subr.bf16.mxu0 0
    %6738 = vmatpush1.bf16.msra.mxu0 %v6717
    %6739 = vmatprep.subr.bf16.mxu0 0
    %6740 = vmatpush1.bf16.msra.mxu0 %v6718
    %6741 = vmatprep.subr.bf16.mxu0 0
    %6742 = vmatpush1.bf16.msra.mxu0 %v6719
    %6743 = vmatprep.subr.bf16.mxu0 0
    %6744 = vmatpush1.bf16.msra.mxu0 %v6720
    %6745 = vmatprep.subr.bf16.mxu0 0
    %6746 = vmatpush1.bf16.msra.mxu0 0
    %6747 = vmatprep.subr.bf16.mxu0 0
    %6748 = vmatpush1.bf16.msra.mxu0 0
    %6749 = vmatprep.subr.bf16.mxu0 0
    %6750 = vmatpush1.bf16.msra.mxu0 0
    %6751 = vmatprep.subr.bf16.mxu0 0
    %6752 = vmatpush1.bf16.msra.mxu0 0
    %6753 = vmatprep.subr.bf16.mxu0 0
    %6754 = vmatpush1.bf16.msra.mxu0 0
    %6755 = vmatprep.subr.bf16.mxu0 0
    %6756 = vmatpush1.bf16.msra.mxu0 0
    %6757 = vmatprep.subr.bf16.mxu0 0
    %6758 = vmatpush1.bf16.msra.mxu0 0
    %6759 = vmatprep.subr.bf16.mxu0 0
    %6760 = vmatpush1.bf16.msra.mxu0 0
    %6761 = vmatprep.mubr.bf16.mxu0 0
    %6762 = vmatmul.mubr.bf16.gmra.mrb[0].mxu0 %v6632
    %v6763 = vpop.f32.mrb[0].mxu0
    %v6764 = vadd.f32 0.0, %v6763
    %v6765 = vpop.f32.mrb[0].mxu0
    %v6766 = vpop.f32.mrb[0].mxu0
    %v6767 = vadd.f32 0.0, %v6766
    %v6768 = vpop.f32.mrb[0].mxu0
    %6769 = vmatprep.mubr.bf16.mxu0 0
    %6770 = vmatmul.mubr.bf16.gmra.mrb[0].mxu0 %v6633
    %v6771 = vpop.f32.mrb[0].mxu0
    %v6772 = vadd.f32 0.0, %v6771
    %v6773 = vpop.f32.mrb[0].mxu0
    %v6774 = vpop.f32.mrb[0].mxu0
    %v6775 = vadd.f32 0.0, %v6774
    %v6776 = vpop.f32.mrb[0].mxu0
    %6777 = vmatprep.mubr.bf16.mxu0 0
    %6778 = vmatmul.mubr.bf16.gmra.mrb[0].mxu0 %v6634
    %v6779 = vpop.f32.mrb[0].mxu0
    %v6780 = vadd.f32 0.0, %v6779
    %v6781 = vpop.f32.mrb[0].mxu0
    %v6782 = vpop.f32.mrb[0].mxu0
    %v6783 = vadd.f32 0.0, %v6782
    %v6784 = vpop.f32.mrb[0].mxu0
    %6785 = vmatprep.mubr.bf16.mxu0 0
    %6786 = vmatmul.mubr.bf16.gmra.mrb[0].mxu0 %v6635
    %v6787 = vpop.f32.mrb[0].mxu0
    %v6788 = vadd.f32 0.0, %v6787
    %v6789 = vpop.f32.mrb[0].mxu0
    %v6790 = vpop.f32.mrb[0].mxu0
    %v6791 = vadd.f32 0.0, %v6790
    %v6792 = vpop.f32.mrb[0].mxu0
    %6793 = vmatprep.mubr.bf16.mxu0 0
    %6794 = vmatmul.mubr.bf16.gmra.mrb[0].mxu0 %v6636
    %v6795 = vpop.f32.mrb[0].mxu0
    %v6796 = vadd.f32 0.0, %v6795
    %v6797 = vpop.f32.mrb[0].mxu0
    %v6798 = vpop.f32.mrb[0].mxu0
    %v6799 = vadd.f32 0.0, %v6798
    %v6800 = vpop.f32.mrb[0].mxu0
    %6801 = vmatprep.mubr.bf16.mxu0 0
    %6802 = vmatmul.mubr.bf16.gmra.mrb[0].mxu0 %v6637
    %v6803 = vpop.f32.mrb[0].mxu0
    %v6804 = vadd.f32 0.0, %v6803
    %v6805 = vpop.f32.mrb[0].mxu0
    %v6806 = vpop.f32.mrb[0].mxu0
    %v6807 = vadd.f32 0.0, %v6806
    %v6808 = vpop.f32.mrb[0].mxu0
    %6809 = vmatprep.mubr.bf16.mxu0 0
    %6810 = vmatmul.mubr.bf16.gmra.mrb[0].mxu0 %v6638
    %v6811 = vpop.f32.mrb[0].mxu0
    %v6812 = vadd.f32 0.0, %v6811
    %v6813 = vpop.f32.mrb[0].mxu0
    %v6814 = vpop.f32.mrb[0].mxu0
    %v6815 = vadd.f32 0.0, %v6814
    %v6816 = vpop.f32.mrb[0].mxu0
    %6817 = vmatprep.mubr.bf16.mxu0 0
    %6818 = vmatmul.mubr.bf16.gmra.mrb[0].mxu0 %v6639
    %v6819 = vpop.f32.mrb[0].mxu0
    %v6820 = vadd.f32 0.0, %v6819
    %v6821 = vpop.f32.mrb[0].mxu0
    %v6822 = vpop.f32.mrb[0].mxu0
    %v6823 = vadd.f32 0.0, %v6822
    %v6824 = vpop.f32.mrb[0].mxu0
    %6825 = vmatprep.mubr.bf16.mxu0 0
    %6826 = vmatmul.mubr.bf16.gmra.mrb[0].mxu0 %v6640
    %v6827 = vpop.f32.mrb[0].mxu0
    %v6828 = vadd.f32 0.0, %v6827
    %v6829 = vpop.f32.mrb[0].mxu0
    %v6830 = vpop.f32.mrb[0].mxu0
    %v6831 = vadd.f32 0.0, %v6830
    %v6832 = vpop.f32.mrb[0].mxu0
    %6833 = vmatprep.mubr.bf16.mxu0 0
    %6834 = vmatmul.mubr.bf16.gmra.mrb[0].mxu0 %v6641
    %v6835 = vpop.f32.mrb[0].mxu0
    %v6836 = vadd.f32 0.0, %v6835
    %v6837 = vpop.f32.mrb[0].mxu0
    %v6838 = vpop.f32.mrb[0].mxu0
    %v6839 = vadd.f32 0.0, %v6838
    %v6840 = vpop.f32.mrb[0].mxu0
    %6841 = vmatprep.mubr.bf16.mxu0 0
    %6842 = vmatmul.mubr.bf16.gmra.mrb[0].mxu0 %v6642
    %v6843 = vpop.f32.mrb[0].mxu0
    %v6844 = vadd.f32 0.0, %v6843
    %v6845 = vpop.f32.mrb[0].mxu0
    %v6846 = vpop.f32.mrb[0].mxu0
    %v6847 = vadd.f32 0.0, %v6846
    %v6848 = vpop.f32.mrb[0].mxu0
    %6849 = vmatprep.mubr.bf16.mxu0 0
    %6850 = vmatmul.mubr.bf16.gmra.mrb[0].mxu0 %v6643
    %v6851 = vpop.f32.mrb[0].mxu0
    %v6852 = vadd.f32 0.0, %v6851
    %v6853 = vpop.f32.mrb[0].mxu0
    %v6854 = vpop.f32.mrb[0].mxu0
    %v6855 = vadd.f32 0.0, %v6854
    %v6856 = vpop.f32.mrb[0].mxu0
    %6857 = vmatprep.mubr.bf16.mxu0 0
    %6858 = vmatmul.mubr.bf16.gmra.mrb[0].mxu0 %v6644
    %v6859 = vpop.f32.mrb[0].mxu0
    %v6860 = vadd.f32 0.0, %v6859
    %v6861 = vpop.f32.mrb[0].mxu0
    %v6862 = vpop.f32.mrb[0].mxu0
    %v6863 = vadd.f32 0.0, %v6862
    %v6864 = vpop.f32.mrb[0].mxu0
    %6865 = vmatprep.mubr.bf16.mxu0 0
    %6866 = vmatmul.mubr.bf16.gmra.mrb[0].mxu0 %v6645
    %v6867 = vpop.f32.mrb[0].mxu0
    %v6868 = vadd.f32 0.0, %v6867
    %v6869 = vpop.f32.mrb[0].mxu0
    %v6870 = vpop.f32.mrb[0].mxu0
    %v6871 = vadd.f32 0.0, %v6870
    %v6872 = vpop.f32.mrb[0].mxu0
    %6873 = vmatprep.mubr.bf16.mxu0 0
    %6874 = vmatmul.mubr.bf16.gmra.mrb[0].mxu0 %v6646
    %v6875 = vpop.f32.mrb[0].mxu0
    %v6876 = vadd.f32 0.0, %v6875
    %v6877 = vpop.f32.mrb[0].mxu0
    %v6878 = vpop.f32.mrb[0].mxu0
    %v6879 = vadd.f32 0.0, %v6878
    %v6880 = vpop.f32.mrb[0].mxu0
    %6881 = vmatprep.mubr.bf16.mxu0 0
    %6882 = vmatmul.mubr.bf16.gmra.mrb[0].mxu0 %v6647
    %v6883 = vpop.f32.mrb[0].mxu0
    %v6884 = vadd.f32 0.0, %v6883
    %v6885 = vpop.f32.mrb[0].mxu0
    %v6886 = vpop.f32.mrb[0].mxu0
    %v6887 = vadd.f32 0.0, %v6886
    %v6888 = vpop.f32.mrb[0].mxu0
    %6889 = vmatprep.mubr.bf16.mxu0 0
    %6890 = vmatmul.mubr.bf16.gmra.mrb[0].mxu0 %v6648
    %v6891 = vpop.f32.mrb[0].mxu0
    %v6892 = vadd.f32 0.0, %v6891
    %v6893 = vpop.f32.mrb[0].mxu0
    %v6894 = vpop.f32.mrb[0].mxu0
    %v6895 = vadd.f32 0.0, %v6894
    %v6896 = vpop.f32.mrb[0].mxu0
    %6897 = vmatprep.mubr.bf16.mxu0 0
    %6898 = vmatmul.mubr.bf16.gmra.mrb[0].mxu0 %v6649
    %v6899 = vpop.f32.mrb[0].mxu0
    %v6900 = vadd.f32 0.0, %v6899
    %v6901 = vpop.f32.mrb[0].mxu0
    %v6902 = vpop.f32.mrb[0].mxu0
    %v6903 = vadd.f32 0.0, %v6902
    %v6904 = vpop.f32.mrb[0].mxu0
    %6905 = vmatprep.mubr.bf16.mxu0 0
    %6906 = vmatmul.mubr.bf16.gmra.mrb[0].mxu0 %v6650
    %v6907 = vpop.f32.mrb[0].mxu0
    %v6908 = vadd.f32 0.0, %v6907
    %v6909 = vpop.f32.mrb[0].mxu0
    %v6910 = vpop.f32.mrb[0].mxu0
    %v6911 = vadd.f32 0.0, %v6910
    %v6912 = vpop.f32.mrb[0].mxu0
    %6913 = vmatprep.mubr.bf16.mxu0 0
    %6914 = vmatmul.mubr.bf16.gmra.mrb[0].mxu0 %v6651
    %v6915 = vpop.f32.mrb[0].mxu0
    %v6916 = vadd.f32 0.0, %v6915
    %v6917 = vpop.f32.mrb[0].mxu0
    %v6918 = vpop.f32.mrb[0].mxu0
    %v6919 = vadd.f32 0.0, %v6918
    %v6920 = vpop.f32.mrb[0].mxu0
    %6921 = vmatprep.mubr.bf16.mxu0 0
    %6922 = vmatmul.mubr.bf16.gmra.mrb[0].mxu0 %v6652
    %v6923 = vpop.f32.mrb[0].mxu0
    %v6924 = vadd.f32 0.0, %v6923
    %v6925 = vpop.f32.mrb[0].mxu0
    %v6926 = vpop.f32.mrb[0].mxu0
    %v6927 = vadd.f32 0.0, %v6926
    %v6928 = vpop.f32.mrb[0].mxu0
    %6929 = vmatprep.mubr.bf16.mxu0 0
    %6930 = vmatmul.mubr.bf16.gmra.mrb[0].mxu0 %v6653
    %v6931 = vpop.f32.mrb[0].mxu0
    %v6932 = vadd.f32 0.0, %v6931
    %v6933 = vpop.f32.mrb[0].mxu0
    %v6934 = vpop.f32.mrb[0].mxu0
    %v6935 = vadd.f32 0.0, %v6934
    %v6936 = vpop.f32.mrb[0].mxu0
    %6937 = vmatprep.mubr.bf16.mxu0 0
    %6938 = vmatmul.mubr.bf16.gmra.mrb[0].mxu0 %v6654
    %v6939 = vpop.f32.mrb[0].mxu0
    %v6940 = vadd.f32 0.0, %v6939
    %v6941 = vpop.f32.mrb[0].mxu0
    %v6942 = vpop.f32.mrb[0].mxu0
    %v6943 = vadd.f32 0.0, %v6942
    %v6944 = vpop.f32.mrb[0].mxu0
    %6945 = vmatprep.mubr.bf16.mxu0 0
    %6946 = vmatmul.mubr.bf16.gmra.mrb[0].mxu0 %v6655
    %v6947 = vpop.f32.mrb[0].mxu0
    %v6948 = vadd.f32 0.0, %v6947
    %v6949 = vpop.f32.mrb[0].mxu0
    %v6950 = vpop.f32.mrb[0].mxu0
    %v6951 = vadd.f32 0.0, %v6950
    %v6952 = vpop.f32.mrb[0].mxu0
    %6953 = vmatprep.mubr.bf16.mxu0 0
    %6954 = vmatmul.mubr.bf16.gmra.mrb[0].mxu0 %v6656
    %v6955 = vpop.f32.mrb[0].mxu0
    %v6956 = vadd.f32 0.0, %v6955
    %v6957 = vpop.f32.mrb[0].mxu0
    %v6958 = vpop.f32.mrb[0].mxu0
    %v6959 = vadd.f32 0.0, %v6958
    %v6960 = vpop.f32.mrb[0].mxu0
    %6961 = vmatprep.mubr.bf16.mxu0 0
    %6962 = vmatmul.mubr.bf16.gmra.mrb[0].mxu0 %v6657
    %v6963 = vpop.f32.mrb[0].mxu0
    %v6964 = vadd.f32 0.0, %v6963
    %v6965 = vpop.f32.mrb[0].mxu0
    %v6966 = vpop.f32.mrb[0].mxu0
    %v6967 = vadd.f32 0.0, %v6966
    %v6968 = vpop.f32.mrb[0].mxu0
    %6969 = vmatprep.mubr.bf16.mxu0 0
    %6970 = vmatmul.mubr.bf16.gmra.mrb[0].mxu0 %v6658
    %v6971 = vpop.f32.mrb[0].mxu0
    %v6972 = vadd.f32 0.0, %v6971
    %v6973 = vpop.f32.mrb[0].mxu0
    %v6974 = vpop.f32.mrb[0].mxu0
    %v6975 = vadd.f32 0.0, %v6974
    %v6976 = vpop.f32.mrb[0].mxu0
    %6977 = vmatprep.mubr.bf16.mxu0 0
    %6978 = vmatmul.mubr.bf16.gmra.mrb[0].mxu0 %v6659
    %v6979 = vpop.f32.mrb[0].mxu0
    %v6980 = vadd.f32 0.0, %v6979
    %v6981 = vpop.f32.mrb[0].mxu0
    %v6982 = vpop.f32.mrb[0].mxu0
    %v6983 = vadd.f32 0.0, %v6982
    %v6984 = vpop.f32.mrb[0].mxu0
    %6985 = vmatprep.mubr.bf16.mxu0 0
    %6986 = vmatmul.mubr.bf16.gmra.mrb[0].mxu0 %v6660
    %v6987 = vpop.f32.mrb[0].mxu0
    %v6988 = vadd.f32 0.0, %v6987
    %v6989 = vpop.f32.mrb[0].mxu0
    %v6990 = vpop.f32.mrb[0].mxu0
    %v6991 = vadd.f32 0.0, %v6990
    %v6992 = vpop.f32.mrb[0].mxu0
    %6993 = vmatprep.mubr.bf16.mxu0 0
    %6994 = vmatmul.mubr.bf16.gmra.mrb[0].mxu0 %v6661
    %v6995 = vpop.f32.mrb[0].mxu0
    %v6996 = vadd.f32 0.0, %v6995
    %v6997 = vpop.f32.mrb[0].mxu0
    %v6998 = vpop.f32.mrb[0].mxu0
    %v6999 = vadd.f32 0.0, %v6998
    %v7000 = vpop.f32.mrb[0].mxu0
    %7001 = vmatprep.mubr.bf16.mxu0 0
    %7002 = vmatmul.mubr.bf16.gmra.mrb[0].mxu0 %v6662
    %v7003 = vpop.f32.mrb[0].mxu0
    %v7004 = vadd.f32 0.0, %v7003
    %v7005 = vpop.f32.mrb[0].mxu0
    %v7006 = vpop.f32.mrb[0].mxu0
    %v7007 = vadd.f32 0.0, %v7006
    %v7008 = vpop.f32.mrb[0].mxu0
    %7009 = vmatprep.mubr.bf16.mxu0 0
    %7010 = vmatmul.mubr.bf16.gmra.mrb[0].mxu0 %v6663
    %v7011 = vpop.f32.mrb[0].mxu0
    %v7012 = vadd.f32 0.0, %v7011
    %v7013 = vpop.f32.mrb[0].mxu0
    %v7014 = vpop.f32.mrb[0].mxu0
    %v7015 = vadd.f32 0.0, %v7014
    %v7016 = vpop.f32.mrb[0].mxu0
    %7017 = vdwg.mxu0
    %v7034 = vunpack.c.l.b16 %v6552
    %v7035 = vunpack.c.l.b16 %v6553
    %v7036 = vunpack.c.l.b16 %v6554
    %v7037 = vunpack.c.l.b16 %v6555
    %v7038 = vunpack.c.l.b16 %v6556
    %v7039 = vunpack.c.l.b16 %v6557
    %v7040 = vunpack.c.l.b16 %v6558
    %v7041 = vunpack.c.l.b16 %v6559
    %v7042 = vunpack.c.l.b16 %v6560
    %v7043 = vunpack.c.l.b16 %v6561
    %v7044 = vunpack.c.l.b16 %v6562
    %v7045 = vunpack.c.l.b16 %v6563
    %v7046 = vunpack.c.l.b16 %v6564
    %v7047 = vunpack.c.l.b16 %v6565
    %v7048 = vunpack.c.l.b16 %v6566
    %v7049 = vunpack.c.l.b16 %v6567
    %v7050 = vpack.c.b16 %v7035, %v7034
    %v7051 = vpack.c.b16 %v7037, %v7036
    %v7052 = vpack.c.b16 %v7039, %v7038
    %v7053 = vpack.c.b16 %v7041, %v7040
    %v7054 = vpack.c.b16 %v7043, %v7042
    %v7055 = vpack.c.b16 %v7045, %v7044
    %v7056 = vpack.c.b16 %v7047, %v7046
    %v7057 = vpack.c.b16 %v7049, %v7048
    %7066 = vmatprep.subr.bf16.mxu0 0
    %7067 = vmatpush1.bf16.msra.mxu0 %v7050
    %7068 = vmatprep.subr.bf16.mxu0 0
    %7069 = vmatpush1.bf16.msra.mxu0 %v7051
    %7070 = vmatprep.subr.bf16.mxu0 0
    %7071 = vmatpush1.bf16.msra.mxu0 %v7052
    %7072 = vmatprep.subr.bf16.mxu0 0
    %7073 = vmatpush1.bf16.msra.mxu0 %v7053
    %7074 = vmatprep.subr.bf16.mxu0 0
    %7075 = vmatpush1.bf16.msra.mxu0 %v7054
    %7076 = vmatprep.subr.bf16.mxu0 0
    %7077 = vmatpush1.bf16.msra.mxu0 %v7055
    %7078 = vmatprep.subr.bf16.mxu0 0
    %7079 = vmatpush1.bf16.msra.mxu0 %v7056
    %7080 = vmatprep.subr.bf16.mxu0 0
    %7081 = vmatpush1.bf16.msra.mxu0 %v7057
    %7082 = vmatprep.subr.bf16.mxu0 0
    %7083 = vmatpush1.bf16.msra.mxu0 0
    %7084 = vmatprep.subr.bf16.mxu0 0
    %7085 = vmatpush1.bf16.msra.mxu0 0
    %7086 = vmatprep.subr.bf16.mxu0 0
    %7087 = vmatpush1.bf16.msra.mxu0 0
    %7088 = vmatprep.subr.bf16.mxu0 0
    %7089 = vmatpush1.bf16.msra.mxu0 0
    %7090 = vmatprep.subr.bf16.mxu0 0
    %7091 = vmatpush1.bf16.msra.mxu0 0
    %7092 = vmatprep.subr.bf16.mxu0 0
    %7093 = vmatpush1.bf16.msra.mxu0 0
    %7094 = vmatprep.subr.bf16.mxu0 0
    %7095 = vmatpush1.bf16.msra.mxu0 0
    %7096 = vmatprep.subr.bf16.mxu0 0
    %7097 = vmatpush1.bf16.msra.mxu0 0
    %7098 = vmatprep.mubr.bf16.mxu0 0
    %7099 = vmatmul.mubr.bf16.gmra.mrb[0].mxu0 %v6520
    %v7100 = vpop.f32.mrb[0].mxu0
    %v7101 = vadd.f32 %v6764, %v7100
    %v7102 = vpop.f32.mrb[0].mxu0
    %v7103 = vpop.f32.mrb[0].mxu0
    %v7104 = vadd.f32 %v6767, %v7103
    %v7105 = vpop.f32.mrb[0].mxu0
    %7106 = vmatprep.mubr.bf16.mxu0 0
    %7107 = vmatmul.mubr.bf16.gmra.mrb[0].mxu0 %v6521
    %v7108 = vpop.f32.mrb[0].mxu0
    %v7109 = vadd.f32 %v6772, %v7108
    %v7110 = vpop.f32.mrb[0].mxu0
    %v7111 = vpop.f32.mrb[0].mxu0
    %v7112 = vadd.f32 %v6775, %v7111
    %v7113 = vpop.f32.mrb[0].mxu0
    %7114 = vmatprep.mubr.bf16.mxu0 0
    %7115 = vmatmul.mubr.bf16.gmra.mrb[0].mxu0 %v6522
    %v7116 = vpop.f32.mrb[0].mxu0
    %v7117 = vadd.f32 %v6780, %v7116
    %v7118 = vpop.f32.mrb[0].mxu0
    %v7119 = vpop.f32.mrb[0].mxu0
    %v7120 = vadd.f32 %v6783, %v7119
    %v7121 = vpop.f32.mrb[0].mxu0
    %7122 = vmatprep.mubr.bf16.mxu0 0
    %7123 = vmatmul.mubr.bf16.gmra.mrb[0].mxu0 %v6523
    %v7124 = vpop.f32.mrb[0].mxu0
    %v7125 = vadd.f32 %v6788, %v7124
    %v7126 = vpop.f32.mrb[0].mxu0
    %v7127 = vpop.f32.mrb[0].mxu0
    %v7128 = vadd.f32 %v6791, %v7127
    %v7129 = vpop.f32.mrb[0].mxu0
    %7130 = vmatprep.mubr.bf16.mxu0 0
    %7131 = vmatmul.mubr.bf16.gmra.mrb[0].mxu0 %v6524
    %v7132 = vpop.f32.mrb[0].mxu0
    %v7133 = vadd.f32 %v6796, %v7132
    %v7134 = vpop.f32.mrb[0].mxu0
    %v7135 = vpop.f32.mrb[0].mxu0
    %v7136 = vadd.f32 %v6799, %v7135
    %v7137 = vpop.f32.mrb[0].mxu0
    %7138 = vmatprep.mubr.bf16.mxu0 0
    %7139 = vmatmul.mubr.bf16.gmra.mrb[0].mxu0 %v6525
    %v7140 = vpop.f32.mrb[0].mxu0
    %v7141 = vadd.f32 %v6804, %v7140
    %v7142 = vpop.f32.mrb[0].mxu0
    %v7143 = vpop.f32.mrb[0].mxu0
    %v7144 = vadd.f32 %v6807, %v7143
    %v7145 = vpop.f32.mrb[0].mxu0
    %7146 = vmatprep.mubr.bf16.mxu0 0
    %7147 = vmatmul.mubr.bf16.gmra.mrb[0].mxu0 %v6526
    %v7148 = vpop.f32.mrb[0].mxu0
    %v7149 = vadd.f32 %v6812, %v7148
    %v7150 = vpop.f32.mrb[0].mxu0
    %v7151 = vpop.f32.mrb[0].mxu0
    %v7152 = vadd.f32 %v6815, %v7151
    %v7153 = vpop.f32.mrb[0].mxu0
    %7154 = vmatprep.mubr.bf16.mxu0 0
    %7155 = vmatmul.mubr.bf16.gmra.mrb[0].mxu0 %v6527
    %v7156 = vpop.f32.mrb[0].mxu0
    %v7157 = vadd.f32 %v6820, %v7156
    %v7158 = vpop.f32.mrb[0].mxu0
    %v7159 = vpop.f32.mrb[0].mxu0
    %v7160 = vadd.f32 %v6823, %v7159
    %v7161 = vpop.f32.mrb[0].mxu0
    %7162 = vmatprep.mubr.bf16.mxu0 0
    %7163 = vmatmul.mubr.bf16.gmra.mrb[0].mxu0 %v6528
    %v7164 = vpop.f32.mrb[0].mxu0
    %v7165 = vadd.f32 %v6828, %v7164
    %v7166 = vpop.f32.mrb[0].mxu0
    %v7167 = vpop.f32.mrb[0].mxu0
    %v7168 = vadd.f32 %v6831, %v7167
    %v7169 = vpop.f32.mrb[0].mxu0
    %7170 = vmatprep.mubr.bf16.mxu0 0
    %7171 = vmatmul.mubr.bf16.gmra.mrb[0].mxu0 %v6529
    %v7172 = vpop.f32.mrb[0].mxu0
    %v7173 = vadd.f32 %v6836, %v7172
    %v7174 = vpop.f32.mrb[0].mxu0
    %v7175 = vpop.f32.mrb[0].mxu0
    %v7176 = vadd.f32 %v6839, %v7175
    %v7177 = vpop.f32.mrb[0].mxu0
    %7178 = vmatprep.mubr.bf16.mxu0 0
    %7179 = vmatmul.mubr.bf16.gmra.mrb[0].mxu0 %v6530
    %v7180 = vpop.f32.mrb[0].mxu0
    %v7181 = vadd.f32 %v6844, %v7180
    %v7182 = vpop.f32.mrb[0].mxu0
    %v7183 = vpop.f32.mrb[0].mxu0
    %v7184 = vadd.f32 %v6847, %v7183
    %v7185 = vpop.f32.mrb[0].mxu0
    %7186 = vmatprep.mubr.bf16.mxu0 0
    %7187 = vmatmul.mubr.bf16.gmra.mrb[0].mxu0 %v6531
    %v7188 = vpop.f32.mrb[0].mxu0
    %v7189 = vadd.f32 %v6852, %v7188
    %v7190 = vpop.f32.mrb[0].mxu0
    %v7191 = vpop.f32.mrb[0].mxu0
    %v7192 = vadd.f32 %v6855, %v7191
    %v7193 = vpop.f32.mrb[0].mxu0
    %7194 = vmatprep.mubr.bf16.mxu0 0
    %7195 = vmatmul.mubr.bf16.gmra.mrb[0].mxu0 %v6532
    %v7196 = vpop.f32.mrb[0].mxu0
    %v7197 = vadd.f32 %v6860, %v7196
    %v7198 = vpop.f32.mrb[0].mxu0
    %v7199 = vpop.f32.mrb[0].mxu0
    %v7200 = vadd.f32 %v6863, %v7199
    %v7201 = vpop.f32.mrb[0].mxu0
    %7202 = vmatprep.mubr.bf16.mxu0 0
    %7203 = vmatmul.mubr.bf16.gmra.mrb[0].mxu0 %v6533
    %v7204 = vpop.f32.mrb[0].mxu0
    %v7205 = vadd.f32 %v6868, %v7204
    %v7206 = vpop.f32.mrb[0].mxu0
    %v7207 = vpop.f32.mrb[0].mxu0
    %v7208 = vadd.f32 %v6871, %v7207
    %v7209 = vpop.f32.mrb[0].mxu0
    %7210 = vmatprep.mubr.bf16.mxu0 0
    %7211 = vmatmul.mubr.bf16.gmra.mrb[0].mxu0 %v6534
    %v7212 = vpop.f32.mrb[0].mxu0
    %v7213 = vadd.f32 %v6876, %v7212
    %v7214 = vpop.f32.mrb[0].mxu0
    %v7215 = vpop.f32.mrb[0].mxu0
    %v7216 = vadd.f32 %v6879, %v7215
    %v7217 = vpop.f32.mrb[0].mxu0
    %7218 = vmatprep.mubr.bf16.mxu0 0
    %7219 = vmatmul.mubr.bf16.gmra.mrb[0].mxu0 %v6535
    %v7220 = vpop.f32.mrb[0].mxu0
    %v7221 = vadd.f32 %v6884, %v7220
    %v7222 = vpop.f32.mrb[0].mxu0
    %v7223 = vpop.f32.mrb[0].mxu0
    %v7224 = vadd.f32 %v6887, %v7223
    %v7225 = vpop.f32.mrb[0].mxu0
    %7226 = vmatprep.mubr.bf16.mxu0 0
    %7227 = vmatmul.mubr.bf16.gmra.mrb[0].mxu0 %v6536
    %v7228 = vpop.f32.mrb[0].mxu0
    %v7229 = vadd.f32 %v6892, %v7228
    %v7230 = vpop.f32.mrb[0].mxu0
    %v7231 = vpop.f32.mrb[0].mxu0
    %v7232 = vadd.f32 %v6895, %v7231
    %v7233 = vpop.f32.mrb[0].mxu0
    %7234 = vmatprep.mubr.bf16.mxu0 0
    %7235 = vmatmul.mubr.bf16.gmra.mrb[0].mxu0 %v6537
    %v7236 = vpop.f32.mrb[0].mxu0
    %v7237 = vadd.f32 %v6900, %v7236
    %v7238 = vpop.f32.mrb[0].mxu0
    %v7239 = vpop.f32.mrb[0].mxu0
    %v7240 = vadd.f32 %v6903, %v7239
    %v7241 = vpop.f32.mrb[0].mxu0
    %7242 = vmatprep.mubr.bf16.mxu0 0
    %7243 = vmatmul.mubr.bf16.gmra.mrb[0].mxu0 %v6538
    %v7244 = vpop.f32.mrb[0].mxu0
    %v7245 = vadd.f32 %v6908, %v7244
    %v7246 = vpop.f32.mrb[0].mxu0
    %v7247 = vpop.f32.mrb[0].mxu0
    %v7248 = vadd.f32 %v6911, %v7247
    %v7249 = vpop.f32.mrb[0].mxu0
    %7250 = vmatprep.mubr.bf16.mxu0 0
    %7251 = vmatmul.mubr.bf16.gmra.mrb[0].mxu0 %v6539
    %v7252 = vpop.f32.mrb[0].mxu0
    %v7253 = vadd.f32 %v6916, %v7252
    %v7254 = vpop.f32.mrb[0].mxu0
    %v7255 = vpop.f32.mrb[0].mxu0
    %v7256 = vadd.f32 %v6919, %v7255
    %v7257 = vpop.f32.mrb[0].mxu0
    %7258 = vmatprep.mubr.bf16.mxu0 0
    %7259 = vmatmul.mubr.bf16.gmra.mrb[0].mxu0 %v6540
    %v7260 = vpop.f32.mrb[0].mxu0
    %v7261 = vadd.f32 %v6924, %v7260
    %v7262 = vpop.f32.mrb[0].mxu0
    %v7263 = vpop.f32.mrb[0].mxu0
    %v7264 = vadd.f32 %v6927, %v7263
    %v7265 = vpop.f32.mrb[0].mxu0
    %7266 = vmatprep.mubr.bf16.mxu0 0
    %7267 = vmatmul.mubr.bf16.gmra.mrb[0].mxu0 %v6541
    %v7268 = vpop.f32.mrb[0].mxu0
    %v7269 = vadd.f32 %v6932, %v7268
    %v7270 = vpop.f32.mrb[0].mxu0
    %v7271 = vpop.f32.mrb[0].mxu0
    %v7272 = vadd.f32 %v6935, %v7271
    %v7273 = vpop.f32.mrb[0].mxu0
    %7274 = vmatprep.mubr.bf16.mxu0 0
    %7275 = vmatmul.mubr.bf16.gmra.mrb[0].mxu0 %v6542
    %v7276 = vpop.f32.mrb[0].mxu0
    %v7277 = vadd.f32 %v6940, %v7276
    %v7278 = vpop.f32.mrb[0].mxu0
    %v7279 = vpop.f32.mrb[0].mxu0
    %v7280 = vadd.f32 %v6943, %v7279
    %v7281 = vpop.f32.mrb[0].mxu0
    %7282 = vmatprep.mubr.bf16.mxu0 0
    %7283 = vmatmul.mubr.bf16.gmra.mrb[0].mxu0 %v6543
    %v7284 = vpop.f32.mrb[0].mxu0
    %v7285 = vadd.f32 %v6948, %v7284
    %v7286 = vpop.f32.mrb[0].mxu0
    %v7287 = vpop.f32.mrb[0].mxu0
    %v7288 = vadd.f32 %v6951, %v7287
    %v7289 = vpop.f32.mrb[0].mxu0
    %7290 = vmatprep.mubr.bf16.mxu0 0
    %7291 = vmatmul.mubr.bf16.gmra.mrb[0].mxu0 %v6544
    %v7292 = vpop.f32.mrb[0].mxu0
    %v7293 = vadd.f32 %v6956, %v7292
    %v7294 = vpop.f32.mrb[0].mxu0
    %v7295 = vpop.f32.mrb[0].mxu0
    %v7296 = vadd.f32 %v6959, %v7295
    %v7297 = vpop.f32.mrb[0].mxu0
    %7298 = vmatprep.mubr.bf16.mxu0 0
    %7299 = vmatmul.mubr.bf16.gmra.mrb[0].mxu0 %v6545
    %v7300 = vpop.f32.mrb[0].mxu0
    %v7301 = vadd.f32 %v6964, %v7300
    %v7302 = vpop.f32.mrb[0].mxu0
    %v7303 = vpop.f32.mrb[0].mxu0
    %v7304 = vadd.f32 %v6967, %v7303
    %v7305 = vpop.f32.mrb[0].mxu0
    %7306 = vmatprep.mubr.bf16.mxu0 0
    %7307 = vmatmul.mubr.bf16.gmra.mrb[0].mxu0 %v6546
    %v7308 = vpop.f32.mrb[0].mxu0
    %v7309 = vadd.f32 %v6972, %v7308
    %v7310 = vpop.f32.mrb[0].mxu0
    %v7311 = vpop.f32.mrb[0].mxu0
    %v7312 = vadd.f32 %v6975, %v7311
    %v7313 = vpop.f32.mrb[0].mxu0
    %7314 = vmatprep.mubr.bf16.mxu0 0
    %7315 = vmatmul.mubr.bf16.gmra.mrb[0].mxu0 %v6547
    %v7316 = vpop.f32.mrb[0].mxu0
    %v7317 = vadd.f32 %v6980, %v7316
    %v7318 = vpop.f32.mrb[0].mxu0
    %v7319 = vpop.f32.mrb[0].mxu0
    %v7320 = vadd.f32 %v6983, %v7319
    %v7321 = vpop.f32.mrb[0].mxu0
    %7322 = vmatprep.mubr.bf16.mxu0 0
    %7323 = vmatmul.mubr.bf16.gmra.mrb[0].mxu0 %v6548
    %v7324 = vpop.f32.mrb[0].mxu0
    %v7325 = vadd.f32 %v6988, %v7324
    %v7326 = vpop.f32.mrb[0].mxu0
    %v7327 = vpop.f32.mrb[0].mxu0
    %v7328 = vadd.f32 %v6991, %v7327
    %v7329 = vpop.f32.mrb[0].mxu0
    %7330 = vmatprep.mubr.bf16.mxu0 0
    %7331 = vmatmul.mubr.bf16.gmra.mrb[0].mxu0 %v6549
    %v7332 = vpop.f32.mrb[0].mxu0
    %v7333 = vadd.f32 %v6996, %v7332
    %v7334 = vpop.f32.mrb[0].mxu0
    %v7335 = vpop.f32.mrb[0].mxu0
    %v7336 = vadd.f32 %v6999, %v7335
    %v7337 = vpop.f32.mrb[0].mxu0
    %7338 = vmatprep.mubr.bf16.mxu0 0
    %7339 = vmatmul.mubr.bf16.gmra.mrb[0].mxu0 %v6550
    %v7340 = vpop.f32.mrb[0].mxu0
    %v7341 = vadd.f32 %v7004, %v7340
    %v7342 = vpop.f32.mrb[0].mxu0
    %v7343 = vpop.f32.mrb[0].mxu0
    %v7344 = vadd.f32 %v7007, %v7343
    %v7345 = vpop.f32.mrb[0].mxu0
    %7346 = vmatprep.mubr.bf16.mxu0 0
    %7347 = vmatmul.mubr.bf16.gmra.mrb[0].mxu0 %v6551
    %v7348 = vpop.f32.mrb[0].mxu0
    %v7349 = vadd.f32 %v7012, %v7348
    %v7350 = vpop.f32.mrb[0].mxu0
    %v7351 = vpop.f32.mrb[0].mxu0
    %v7352 = vadd.f32 %v7015, %v7351
    %v7353 = vpop.f32.mrb[0].mxu0
    %7354 = vdwg.mxu0
    %v7355 = vld [vmem:[#allocation2 + $0x2] sm:$0xff]
    %v7356 = vld [vmem:[#allocation2 + $0xa] sm:$0xff]
    %v7357 = vld [vmem:[#allocation2 + $0x1a] sm:$0xff]
    %v7358 = vld [vmem:[#allocation2 + $0x22] sm:$0xff]
    %v7359 = vld [vmem:[#allocation2 + $0x32] sm:$0xff]
    %v7360 = vld [vmem:[#allocation2 + $0x3a] sm:$0xff]
    %v7361 = vld [vmem:[#allocation2 + $0x4a] sm:$0xff]
    %v7362 = vld [vmem:[#allocation2 + $0x52] sm:$0xff]
    %v7363 = vld [vmem:[#allocation2 + $0x62] sm:$0xff]
    %v7364 = vld [vmem:[#allocation2 + $0x6a] sm:$0xff]
    %v7365 = vld [vmem:[#allocation2 + $0x7a] sm:$0xff]
    %v7366 = vld [vmem:[#allocation2 + $0x82] sm:$0xff]
    %v7367 = vld [vmem:[#allocation2 + $0x92] sm:$0xff]
    %v7368 = vld [vmem:[#allocation2 + $0x9a] sm:$0xff]
    %v7369 = vld [vmem:[#allocation2 + $0xaa] sm:$0xff]
    %v7370 = vld [vmem:[#allocation2 + $0xb2] sm:$0xff]
    %v7371 = vld [vmem:[#allocation2 + $0xc2] sm:$0xff]
    %v7372 = vld [vmem:[#allocation2 + $0xca] sm:$0xff]
    %v7373 = vld [vmem:[#allocation2 + $0xda] sm:$0xff]
    %v7374 = vld [vmem:[#allocation2 + $0xe2] sm:$0xff]
    %v7375 = vld [vmem:[#allocation2 + $0xf2] sm:$0xff]
    %v7376 = vld [vmem:[#allocation2 + $0xfa] sm:$0xff]
    %v7377 = vld [vmem:[#allocation2 + $0x10a] sm:$0xff]
    %v7378 = vld [vmem:[#allocation2 + $0x112] sm:$0xff]
    %v7379 = vld [vmem:[#allocation2 + $0x122] sm:$0xff]
    %v7380 = vld [vmem:[#allocation2 + $0x12a] sm:$0xff]
    %v7381 = vld [vmem:[#allocation2 + $0x13a] sm:$0xff]
    %v7382 = vld [vmem:[#allocation2 + $0x142] sm:$0xff]
    %v7383 = vld [vmem:[#allocation2 + $0x152] sm:$0xff]
    %v7384 = vld [vmem:[#allocation2 + $0x15a] sm:$0xff]
    %v7385 = vld [vmem:[#allocation2 + $0x16a] sm:$0xff]
    %v7386 = vld [vmem:[#allocation2 + $0x172] sm:$0xff]
    %v7387 = vld [vmem:[#allocation2 + $0x1b2] sm:$0xff]
    %v7388 = vld [vmem:[#allocation2 + $0x1ba] sm:$0xff]
    %v7389 = vld [vmem:[#allocation2 + $0x1ca] sm:$0xff]
    %v7390 = vld [vmem:[#allocation2 + $0x1d2] sm:$0xff]
    %v7391 = vld [vmem:[#allocation2 + $0x1e2] sm:$0xff]
    %v7392 = vld [vmem:[#allocation2 + $0x1ea] sm:$0xff]
    %v7393 = vld [vmem:[#allocation2 + $0x1fa] sm:$0xff]
    %v7394 = vld [vmem:[#allocation2 + $0x202] sm:$0xff]
    %v7395 = vld [vmem:[#allocation2 + $0x212] sm:$0xff]
    %v7396 = vld [vmem:[#allocation2 + $0x21a] sm:$0xff]
    %v7397 = vld [vmem:[#allocation2 + $0x22a] sm:$0xff]
    %v7398 = vld [vmem:[#allocation2 + $0x232] sm:$0xff]
    %v7399 = vld [vmem:[#allocation2 + $0x242] sm:$0xff]
    %v7400 = vld [vmem:[#allocation2 + $0x24a] sm:$0xff]
    %v7401 = vld [vmem:[#allocation2 + $0x25a] sm:$0xff]
    %v7402 = vld [vmem:[#allocation2 + $0x262] sm:$0xff]
    %v7403 = vld [vmem:[#allocation2 + $0x272] sm:$0xff]
    %v7404 = vld [vmem:[#allocation2 + $0x27a] sm:$0xff]
    %v7405 = vld [vmem:[#allocation2 + $0x28a] sm:$0xff]
    %v7406 = vld [vmem:[#allocation2 + $0x292] sm:$0xff]
    %v7407 = vld [vmem:[#allocation2 + $0x2a2] sm:$0xff]
    %v7408 = vld [vmem:[#allocation2 + $0x2aa] sm:$0xff]
    %v7409 = vld [vmem:[#allocation2 + $0x2ba] sm:$0xff]
    %v7410 = vld [vmem:[#allocation2 + $0x2c2] sm:$0xff]
    %v7411 = vld [vmem:[#allocation2 + $0x2d2] sm:$0xff]
    %v7412 = vld [vmem:[#allocation2 + $0x2da] sm:$0xff]
    %v7413 = vld [vmem:[#allocation2 + $0x2ea] sm:$0xff]
    %v7414 = vld [vmem:[#allocation2 + $0x2f2] sm:$0xff]
    %v7415 = vld [vmem:[#allocation2 + $0x302] sm:$0xff]
    %v7416 = vld [vmem:[#allocation2 + $0x30a] sm:$0xff]
    %v7417 = vld [vmem:[#allocation2 + $0x31a] sm:$0xff]
    %v7418 = vld [vmem:[#allocation2 + $0x322] sm:$0xff]
    %v7419 = vpack.c.bf16 %v7356, %v7355
    %v7420 = vpack.c.bf16 %v7358, %v7357
    %v7421 = vpack.c.bf16 %v7360, %v7359
    %v7422 = vpack.c.bf16 %v7362, %v7361
    %v7423 = vpack.c.bf16 %v7364, %v7363
    %v7424 = vpack.c.bf16 %v7366, %v7365
    %v7425 = vpack.c.bf16 %v7368, %v7367
    %v7426 = vpack.c.bf16 %v7370, %v7369
    %v7427 = vpack.c.bf16 %v7372, %v7371
    %v7428 = vpack.c.bf16 %v7374, %v7373
    %v7429 = vpack.c.bf16 %v7376, %v7375
    %v7430 = vpack.c.bf16 %v7378, %v7377
    %v7431 = vpack.c.bf16 %v7380, %v7379
    %v7432 = vpack.c.bf16 %v7382, %v7381
    %v7433 = vpack.c.bf16 %v7384, %v7383
    %v7434 = vpack.c.bf16 %v7386, %v7385
    %v7435 = vpack.c.bf16 %v7388, %v7387
    %v7436 = vpack.c.bf16 %v7390, %v7389
    %v7437 = vpack.c.bf16 %v7392, %v7391
    %v7438 = vpack.c.bf16 %v7394, %v7393
    %v7439 = vpack.c.bf16 %v7396, %v7395
    %v7440 = vpack.c.bf16 %v7398, %v7397
    %v7441 = vpack.c.bf16 %v7400, %v7399
    %v7442 = vpack.c.bf16 %v7402, %v7401
    %v7443 = vpack.c.bf16 %v7404, %v7403
    %v7444 = vpack.c.bf16 %v7406, %v7405
    %v7445 = vpack.c.bf16 %v7408, %v7407
    %v7446 = vpack.c.bf16 %v7410, %v7409
    %v7447 = vpack.c.bf16 %v7412, %v7411
    %v7448 = vpack.c.bf16 %v7414, %v7413
    %v7449 = vpack.c.bf16 %v7416, %v7415
    %v7450 = vpack.c.bf16 %v7418, %v7417
    %s7451 = scalar_lea.vmem [#allocation11], 128
    %v7452 = vld [vmem:[%s7451] sm:$0xf]
    %v7453 = vld [vmem:[%s7451 + $0x4] sm:$0xf]
    %v7454 = vld [vmem:[%s7451 + $0x8] sm:$0xf]
    %v7455 = vld [vmem:[%s7451 + $0xc] sm:$0xf]
    %v7456 = vld [vmem:[%s7451 + $0x10] sm:$0xf]
    %v7457 = vld [vmem:[%s7451 + $0x14] sm:$0xf]
    %v7458 = vld [vmem:[%s7451 + $0x18] sm:$0xf]
    %v7459 = vld [vmem:[%s7451 + $0x1c] sm:$0xf]
    %v7460 = vld [vmem:[%s7451 + $0x20] sm:$0xf]
    %v7461 = vld [vmem:[%s7451 + $0x24] sm:$0xf]
    %v7462 = vld [vmem:[%s7451 + $0x28] sm:$0xf]
    %v7463 = vld [vmem:[%s7451 + $0x2c] sm:$0xf]
    %v7464 = vld [vmem:[%s7451 + $0x30] sm:$0xf]
    %v7465 = vld [vmem:[%s7451 + $0x34] sm:$0xf]
    %v7466 = vld [vmem:[%s7451 + $0x38] sm:$0xf]
    %v7467 = vld [vmem:[%s7451 + $0x3c] sm:$0xf]
    %v7484 = vunpack.c.l.b16 %v7452
    %v7485 = vunpack.c.l.b16 %v7453
    %v7486 = vunpack.c.l.b16 %v7454
    %v7487 = vunpack.c.l.b16 %v7455
    %v7488 = vunpack.c.l.b16 %v7456
    %v7489 = vunpack.c.l.b16 %v7457
    %v7490 = vunpack.c.l.b16 %v7458
    %v7491 = vunpack.c.l.b16 %v7459
    %v7492 = vunpack.c.l.b16 %v7460
    %v7493 = vunpack.c.l.b16 %v7461
    %v7494 = vunpack.c.l.b16 %v7462
    %v7495 = vunpack.c.l.b16 %v7463
    %v7496 = vunpack.c.l.b16 %v7464
    %v7497 = vunpack.c.l.b16 %v7465
    %v7498 = vunpack.c.l.b16 %v7466
    %v7499 = vunpack.c.l.b16 %v7467
    %v7500 = vpack.c.b16 %v7485, %v7484
    %v7501 = vpack.c.b16 %v7487, %v7486
    %v7502 = vpack.c.b16 %v7489, %v7488
    %v7503 = vpack.c.b16 %v7491, %v7490
    %v7504 = vpack.c.b16 %v7493, %v7492
    %v7505 = vpack.c.b16 %v7495, %v7494
    %v7506 = vpack.c.b16 %v7497, %v7496
    %v7507 = vpack.c.b16 %v7499, %v7498
    %7516 = vmatprep.subr.bf16.mxu0 0
    %7517 = vmatpush1.bf16.msra.mxu0 %v7500
    %7518 = vmatprep.subr.bf16.mxu0 0
    %7519 = vmatpush1.bf16.msra.mxu0 %v7501
    %7520 = vmatprep.subr.bf16.mxu0 0
    %7521 = vmatpush1.bf16.msra.mxu0 %v7502
    %7522 = vmatprep.subr.bf16.mxu0 0
    %7523 = vmatpush1.bf16.msra.mxu0 %v7503
    %7524 = vmatprep.subr.bf16.mxu0 0
    %7525 = vmatpush1.bf16.msra.mxu0 %v7504
    %7526 = vmatprep.subr.bf16.mxu0 0
    %7527 = vmatpush1.bf16.msra.mxu0 %v7505
    %7528 = vmatprep.subr.bf16.mxu0 0
    %7529 = vmatpush1.bf16.msra.mxu0 %v7506
    %7530 = vmatprep.subr.bf16.mxu0 0
    %7531 = vmatpush1.bf16.msra.mxu0 %v7507
    %7532 = vmatprep.subr.bf16.mxu0 0
    %7533 = vmatpush1.bf16.msra.mxu0 0
    %7534 = vmatprep.subr.bf16.mxu0 0
    %7535 = vmatpush1.bf16.msra.mxu0 0
    %7536 = vmatprep.subr.bf16.mxu0 0
    %7537 = vmatpush1.bf16.msra.mxu0 0
    %7538 = vmatprep.subr.bf16.mxu0 0
    %7539 = vmatpush1.bf16.msra.mxu0 0
    %7540 = vmatprep.subr.bf16.mxu0 0
    %7541 = vmatpush1.bf16.msra.mxu0 0
    %7542 = vmatprep.subr.bf16.mxu0 0
    %7543 = vmatpush1.bf16.msra.mxu0 0
    %7544 = vmatprep.subr.bf16.mxu0 0
    %7545 = vmatpush1.bf16.msra.mxu0 0
    %7546 = vmatprep.subr.bf16.mxu0 0
    %7547 = vmatpush1.bf16.msra.mxu0 0
    %7548 = vmatprep.mubr.bf16.mxu0 0
    %7549 = vmatmul.mubr.bf16.gmra.mrb[0].mxu0 %v7419
    %v7550 = vpop.f32.mrb[0].mxu0
    %v7551 = vadd.f32 0.0, %v7550
    %v7552 = vpop.f32.mrb[0].mxu0
    %v7553 = vpop.f32.mrb[0].mxu0
    %v7554 = vadd.f32 0.0, %v7553
    %v7555 = vpop.f32.mrb[0].mxu0
    %7556 = vmatprep.mubr.bf16.mxu0 0
    %7557 = vmatmul.mubr.bf16.gmra.mrb[0].mxu0 %v7420
    %v7558 = vpop.f32.mrb[0].mxu0
    %v7559 = vadd.f32 0.0, %v7558
    %v7560 = vpop.f32.mrb[0].mxu0
    %v7561 = vpop.f32.mrb[0].mxu0
    %v7562 = vadd.f32 0.0, %v7561
    %v7563 = vpop.f32.mrb[0].mxu0
    %7564 = vmatprep.mubr.bf16.mxu0 0
    %7565 = vmatmul.mubr.bf16.gmra.mrb[0].mxu0 %v7421
    %v7566 = vpop.f32.mrb[0].mxu0
    %v7567 = vadd.f32 0.0, %v7566
    %v7568 = vpop.f32.mrb[0].mxu0
    %v7569 = vpop.f32.mrb[0].mxu0
    %v7570 = vadd.f32 0.0, %v7569
    %v7571 = vpop.f32.mrb[0].mxu0
    %7572 = vmatprep.mubr.bf16.mxu0 0
    %7573 = vmatmul.mubr.bf16.gmra.mrb[0].mxu0 %v7422
    %v7574 = vpop.f32.mrb[0].mxu0
    %v7575 = vadd.f32 0.0, %v7574
    %v7576 = vpop.f32.mrb[0].mxu0
    %v7577 = vpop.f32.mrb[0].mxu0
    %v7578 = vadd.f32 0.0, %v7577
    %v7579 = vpop.f32.mrb[0].mxu0
    %7580 = vmatprep.mubr.bf16.mxu0 0
    %7581 = vmatmul.mubr.bf16.gmra.mrb[0].mxu0 %v7423
    %v7582 = vpop.f32.mrb[0].mxu0
    %v7583 = vadd.f32 0.0, %v7582
    %v7584 = vpop.f32.mrb[0].mxu0
    %v7585 = vpop.f32.mrb[0].mxu0
    %v7586 = vadd.f32 0.0, %v7585
    %v7587 = vpop.f32.mrb[0].mxu0
    %7588 = vmatprep.mubr.bf16.mxu0 0
    %7589 = vmatmul.mubr.bf16.gmra.mrb[0].mxu0 %v7424
    %v7590 = vpop.f32.mrb[0].mxu0
    %v7591 = vadd.f32 0.0, %v7590
    %v7592 = vpop.f32.mrb[0].mxu0
    %v7593 = vpop.f32.mrb[0].mxu0
    %v7594 = vadd.f32 0.0, %v7593
    %v7595 = vpop.f32.mrb[0].mxu0
    %7596 = vmatprep.mubr.bf16.mxu0 0
    %7597 = vmatmul.mubr.bf16.gmra.mrb[0].mxu0 %v7425
    %v7598 = vpop.f32.mrb[0].mxu0
    %v7599 = vadd.f32 0.0, %v7598
    %v7600 = vpop.f32.mrb[0].mxu0
    %v7601 = vpop.f32.mrb[0].mxu0
    %v7602 = vadd.f32 0.0, %v7601
    %v7603 = vpop.f32.mrb[0].mxu0
    %7604 = vmatprep.mubr.bf16.mxu0 0
    %7605 = vmatmul.mubr.bf16.gmra.mrb[0].mxu0 %v7426
    %v7606 = vpop.f32.mrb[0].mxu0
    %v7607 = vadd.f32 0.0, %v7606
    %v7608 = vpop.f32.mrb[0].mxu0
    %v7609 = vpop.f32.mrb[0].mxu0
    %v7610 = vadd.f32 0.0, %v7609
    %v7611 = vpop.f32.mrb[0].mxu0
    %7612 = vmatprep.mubr.bf16.mxu0 0
    %7613 = vmatmul.mubr.bf16.gmra.mrb[0].mxu0 %v7427
    %v7614 = vpop.f32.mrb[0].mxu0
    %v7615 = vadd.f32 0.0, %v7614
    %v7616 = vpop.f32.mrb[0].mxu0
    %v7617 = vpop.f32.mrb[0].mxu0
    %v7618 = vadd.f32 0.0, %v7617
    %v7619 = vpop.f32.mrb[0].mxu0
    %7620 = vmatprep.mubr.bf16.mxu0 0
    %7621 = vmatmul.mubr.bf16.gmra.mrb[0].mxu0 %v7428
    %v7622 = vpop.f32.mrb[0].mxu0
    %v7623 = vadd.f32 0.0, %v7622
    %v7624 = vpop.f32.mrb[0].mxu0
    %v7625 = vpop.f32.mrb[0].mxu0
    %v7626 = vadd.f32 0.0, %v7625
    %v7627 = vpop.f32.mrb[0].mxu0
    %7628 = vmatprep.mubr.bf16.mxu0 0
    %7629 = vmatmul.mubr.bf16.gmra.mrb[0].mxu0 %v7429
    %v7630 = vpop.f32.mrb[0].mxu0
    %v7631 = vadd.f32 0.0, %v7630
    %v7632 = vpop.f32.mrb[0].mxu0
    %v7633 = vpop.f32.mrb[0].mxu0
    %v7634 = vadd.f32 0.0, %v7633
    %v7635 = vpop.f32.mrb[0].mxu0
    %7636 = vmatprep.mubr.bf16.mxu0 0
    %7637 = vmatmul.mubr.bf16.gmra.mrb[0].mxu0 %v7430
    %v7638 = vpop.f32.mrb[0].mxu0
    %v7639 = vadd.f32 0.0, %v7638
    %v7640 = vpop.f32.mrb[0].mxu0
    %v7641 = vpop.f32.mrb[0].mxu0
    %v7642 = vadd.f32 0.0, %v7641
    %v7643 = vpop.f32.mrb[0].mxu0
    %7644 = vmatprep.mubr.bf16.mxu0 0
    %7645 = vmatmul.mubr.bf16.gmra.mrb[0].mxu0 %v7431
    %v7646 = vpop.f32.mrb[0].mxu0
    %v7647 = vadd.f32 0.0, %v7646
    %v7648 = vpop.f32.mrb[0].mxu0
    %v7649 = vpop.f32.mrb[0].mxu0
    %v7650 = vadd.f32 0.0, %v7649
    %v7651 = vpop.f32.mrb[0].mxu0
    %7652 = vmatprep.mubr.bf16.mxu0 0
    %7653 = vmatmul.mubr.bf16.gmra.mrb[0].mxu0 %v7432
    %v7654 = vpop.f32.mrb[0].mxu0
    %v7655 = vadd.f32 0.0, %v7654
    %v7656 = vpop.f32.mrb[0].mxu0
    %v7657 = vpop.f32.mrb[0].mxu0
    %v7658 = vadd.f32 0.0, %v7657
    %v7659 = vpop.f32.mrb[0].mxu0
    %7660 = vmatprep.mubr.bf16.mxu0 0
    %7661 = vmatmul.mubr.bf16.gmra.mrb[0].mxu0 %v7433
    %v7662 = vpop.f32.mrb[0].mxu0
    %v7663 = vadd.f32 0.0, %v7662
    %v7664 = vpop.f32.mrb[0].mxu0
    %v7665 = vpop.f32.mrb[0].mxu0
    %v7666 = vadd.f32 0.0, %v7665
    %v7667 = vpop.f32.mrb[0].mxu0
    %7668 = vmatprep.mubr.bf16.mxu0 0
    %7669 = vmatmul.mubr.bf16.gmra.mrb[0].mxu0 %v7434
    %v7670 = vpop.f32.mrb[0].mxu0
    %v7671 = vadd.f32 0.0, %v7670
    %v7672 = vpop.f32.mrb[0].mxu0
    %v7673 = vpop.f32.mrb[0].mxu0
    %v7674 = vadd.f32 0.0, %v7673
    %v7675 = vpop.f32.mrb[0].mxu0
    %7676 = vmatprep.mubr.bf16.mxu0 0
    %7677 = vmatmul.mubr.bf16.gmra.mrb[0].mxu0 %v7435
    %v7678 = vpop.f32.mrb[0].mxu0
    %v7679 = vadd.f32 0.0, %v7678
    %v7680 = vpop.f32.mrb[0].mxu0
    %v7681 = vpop.f32.mrb[0].mxu0
    %v7682 = vadd.f32 0.0, %v7681
    %v7683 = vpop.f32.mrb[0].mxu0
    %7684 = vmatprep.mubr.bf16.mxu0 0
    %7685 = vmatmul.mubr.bf16.gmra.mrb[0].mxu0 %v7436
    %v7686 = vpop.f32.mrb[0].mxu0
    %v7687 = vadd.f32 0.0, %v7686
    %v7688 = vpop.f32.mrb[0].mxu0
    %v7689 = vpop.f32.mrb[0].mxu0
    %v7690 = vadd.f32 0.0, %v7689
    %v7691 = vpop.f32.mrb[0].mxu0
    %7692 = vmatprep.mubr.bf16.mxu0 0
    %7693 = vmatmul.mubr.bf16.gmra.mrb[0].mxu0 %v7437
    %v7694 = vpop.f32.mrb[0].mxu0
    %v7695 = vadd.f32 0.0, %v7694
    %v7696 = vpop.f32.mrb[0].mxu0
    %v7697 = vpop.f32.mrb[0].mxu0
    %v7698 = vadd.f32 0.0, %v7697
    %v7699 = vpop.f32.mrb[0].mxu0
    %7700 = vmatprep.mubr.bf16.mxu0 0
    %7701 = vmatmul.mubr.bf16.gmra.mrb[0].mxu0 %v7438
    %v7702 = vpop.f32.mrb[0].mxu0
    %v7703 = vadd.f32 0.0, %v7702
    %v7704 = vpop.f32.mrb[0].mxu0
    %v7705 = vpop.f32.mrb[0].mxu0
    %v7706 = vadd.f32 0.0, %v7705
    %v7707 = vpop.f32.mrb[0].mxu0
    %7708 = vmatprep.mubr.bf16.mxu0 0
    %7709 = vmatmul.mubr.bf16.gmra.mrb[0].mxu0 %v7439
    %v7710 = vpop.f32.mrb[0].mxu0
    %v7711 = vadd.f32 0.0, %v7710
    %v7712 = vpop.f32.mrb[0].mxu0
    %v7713 = vpop.f32.mrb[0].mxu0
    %v7714 = vadd.f32 0.0, %v7713
    %v7715 = vpop.f32.mrb[0].mxu0
    %7716 = vmatprep.mubr.bf16.mxu0 0
    %7717 = vmatmul.mubr.bf16.gmra.mrb[0].mxu0 %v7440
    %v7718 = vpop.f32.mrb[0].mxu0
    %v7719 = vadd.f32 0.0, %v7718
    %v7720 = vpop.f32.mrb[0].mxu0
    %v7721 = vpop.f32.mrb[0].mxu0
    %v7722 = vadd.f32 0.0, %v7721
    %v7723 = vpop.f32.mrb[0].mxu0
    %7724 = vmatprep.mubr.bf16.mxu0 0
    %7725 = vmatmul.mubr.bf16.gmra.mrb[0].mxu0 %v7441
    %v7726 = vpop.f32.mrb[0].mxu0
    %v7727 = vadd.f32 0.0, %v7726
    %v7728 = vpop.f32.mrb[0].mxu0
    %v7729 = vpop.f32.mrb[0].mxu0
    %v7730 = vadd.f32 0.0, %v7729
    %v7731 = vpop.f32.mrb[0].mxu0
    %7732 = vmatprep.mubr.bf16.mxu0 0
    %7733 = vmatmul.mubr.bf16.gmra.mrb[0].mxu0 %v7442
    %v7734 = vpop.f32.mrb[0].mxu0
    %v7735 = vadd.f32 0.0, %v7734
    %v7736 = vpop.f32.mrb[0].mxu0
    %v7737 = vpop.f32.mrb[0].mxu0
    %v7738 = vadd.f32 0.0, %v7737
    %v7739 = vpop.f32.mrb[0].mxu0
    %7740 = vmatprep.mubr.bf16.mxu0 0
    %7741 = vmatmul.mubr.bf16.gmra.mrb[0].mxu0 %v7443
    %v7742 = vpop.f32.mrb[0].mxu0
    %v7743 = vadd.f32 0.0, %v7742
    %v7744 = vpop.f32.mrb[0].mxu0
    %v7745 = vpop.f32.mrb[0].mxu0
    %v7746 = vadd.f32 0.0, %v7745
    %v7747 = vpop.f32.mrb[0].mxu0
    %7748 = vmatprep.mubr.bf16.mxu0 0
    %7749 = vmatmul.mubr.bf16.gmra.mrb[0].mxu0 %v7444
    %v7750 = vpop.f32.mrb[0].mxu0
    %v7751 = vadd.f32 0.0, %v7750
    %v7752 = vpop.f32.mrb[0].mxu0
    %v7753 = vpop.f32.mrb[0].mxu0
    %v7754 = vadd.f32 0.0, %v7753
    %v7755 = vpop.f32.mrb[0].mxu0
    %7756 = vmatprep.mubr.bf16.mxu0 0
    %7757 = vmatmul.mubr.bf16.gmra.mrb[0].mxu0 %v7445
    %v7758 = vpop.f32.mrb[0].mxu0
    %v7759 = vadd.f32 0.0, %v7758
    %v7760 = vpop.f32.mrb[0].mxu0
    %v7761 = vpop.f32.mrb[0].mxu0
    %v7762 = vadd.f32 0.0, %v7761
    %v7763 = vpop.f32.mrb[0].mxu0
    %7764 = vmatprep.mubr.bf16.mxu0 0
    %7765 = vmatmul.mubr.bf16.gmra.mrb[0].mxu0 %v7446
    %v7766 = vpop.f32.mrb[0].mxu0
    %v7767 = vadd.f32 0.0, %v7766
    %v7768 = vpop.f32.mrb[0].mxu0
    %v7769 = vpop.f32.mrb[0].mxu0
    %v7770 = vadd.f32 0.0, %v7769
    %v7771 = vpop.f32.mrb[0].mxu0
    %7772 = vmatprep.mubr.bf16.mxu0 0
    %7773 = vmatmul.mubr.bf16.gmra.mrb[0].mxu0 %v7447
    %v7774 = vpop.f32.mrb[0].mxu0
    %v7775 = vadd.f32 0.0, %v7774
    %v7776 = vpop.f32.mrb[0].mxu0
    %v7777 = vpop.f32.mrb[0].mxu0
    %v7778 = vadd.f32 0.0, %v7777
    %v7779 = vpop.f32.mrb[0].mxu0
    %7780 = vmatprep.mubr.bf16.mxu0 0
    %7781 = vmatmul.mubr.bf16.gmra.mrb[0].mxu0 %v7448
    %v7782 = vpop.f32.mrb[0].mxu0
    %v7783 = vadd.f32 0.0, %v7782
    %v7784 = vpop.f32.mrb[0].mxu0
    %v7785 = vpop.f32.mrb[0].mxu0
    %v7786 = vadd.f32 0.0, %v7785
    %v7787 = vpop.f32.mrb[0].mxu0
    %7788 = vmatprep.mubr.bf16.mxu0 0
    %7789 = vmatmul.mubr.bf16.gmra.mrb[0].mxu0 %v7449
    %v7790 = vpop.f32.mrb[0].mxu0
    %v7791 = vadd.f32 0.0, %v7790
    %v7792 = vpop.f32.mrb[0].mxu0
    %v7793 = vpop.f32.mrb[0].mxu0
    %v7794 = vadd.f32 0.0, %v7793
    %v7795 = vpop.f32.mrb[0].mxu0
    %7796 = vmatprep.mubr.bf16.mxu0 0
    %7797 = vmatmul.mubr.bf16.gmra.mrb[0].mxu0 %v7450
    %v7798 = vpop.f32.mrb[0].mxu0
    %v7799 = vadd.f32 0.0, %v7798
    %v7800 = vpop.f32.mrb[0].mxu0
    %v7801 = vpop.f32.mrb[0].mxu0
    %v7802 = vadd.f32 0.0, %v7801
    %v7803 = vpop.f32.mrb[0].mxu0
    %7804 = vdwg.mxu0
    %v7805 = vadd.f32 %v7101, %v7551
    %v7806 = vadd.f32 %v7104, %v7554
    %v7807 = vadd.f32 %v7109, %v7559
    %v7808 = vadd.f32 %v7112, %v7562
    %v7809 = vadd.f32 %v7117, %v7567
    %v7810 = vadd.f32 %v7120, %v7570
    %v7811 = vadd.f32 %v7125, %v7575
    %v7812 = vadd.f32 %v7128, %v7578
    %v7813 = vadd.f32 %v7133, %v7583
    %v7814 = vadd.f32 %v7136, %v7586
    %v7815 = vadd.f32 %v7141, %v7591
    %v7816 = vadd.f32 %v7144, %v7594
    %v7817 = vadd.f32 %v7149, %v7599
    %v7818 = vadd.f32 %v7152, %v7602
    %v7819 = vadd.f32 %v7157, %v7607
    %v7820 = vadd.f32 %v7160, %v7610
    %v7821 = vadd.f32 %v7165, %v7615
    %v7822 = vadd.f32 %v7168, %v7618
    %v7823 = vadd.f32 %v7173, %v7623
    %v7824 = vadd.f32 %v7176, %v7626
    %v7825 = vadd.f32 %v7181, %v7631
    %v7826 = vadd.f32 %v7184, %v7634
    %v7827 = vadd.f32 %v7189, %v7639
    %v7828 = vadd.f32 %v7192, %v7642
    %v7829 = vadd.f32 %v7197, %v7647
    %v7830 = vadd.f32 %v7200, %v7650
    %v7831 = vadd.f32 %v7205, %v7655
    %v7832 = vadd.f32 %v7208, %v7658
    %v7833 = vadd.f32 %v7213, %v7663
    %v7834 = vadd.f32 %v7216, %v7666
    %v7835 = vadd.f32 %v7221, %v7671
    %v7836 = vadd.f32 %v7224, %v7674
    %v7837 = vadd.f32 %v7229, %v7679
    %v7838 = vadd.f32 %v7232, %v7682
    %v7839 = vadd.f32 %v7237, %v7687
    %v7840 = vadd.f32 %v7240, %v7690
    %v7841 = vadd.f32 %v7245, %v7695
    %v7842 = vadd.f32 %v7248, %v7698
    %v7843 = vadd.f32 %v7253, %v7703
    %v7844 = vadd.f32 %v7256, %v7706
    %v7845 = vadd.f32 %v7261, %v7711
    %v7846 = vadd.f32 %v7264, %v7714
    %v7847 = vadd.f32 %v7269, %v7719
    %v7848 = vadd.f32 %v7272, %v7722
    %v7849 = vadd.f32 %v7277, %v7727
    %v7850 = vadd.f32 %v7280, %v7730
    %v7851 = vadd.f32 %v7285, %v7735
    %v7852 = vadd.f32 %v7288, %v7738
    %v7853 = vadd.f32 %v7293, %v7743
    %v7854 = vadd.f32 %v7296, %v7746
    %v7855 = vadd.f32 %v7301, %v7751
    %v7856 = vadd.f32 %v7304, %v7754
    %v7857 = vadd.f32 %v7309, %v7759
    %v7858 = vadd.f32 %v7312, %v7762
    %v7859 = vadd.f32 %v7317, %v7767
    %v7860 = vadd.f32 %v7320, %v7770
    %v7861 = vadd.f32 %v7325, %v7775
    %v7862 = vadd.f32 %v7328, %v7778
    %v7863 = vadd.f32 %v7333, %v7783
    %v7864 = vadd.f32 %v7336, %v7786
    %v7865 = vadd.f32 %v7341, %v7791
    %v7866 = vadd.f32 %v7344, %v7794
    %v7867 = vadd.f32 %v7349, %v7799
    %v7868 = vadd.f32 %v7352, %v7802
    %v7869 = vld [vmem:[%s6391] sm:$0xff]
    %v7870 = vld [vmem:[%s6391 + $0x8] sm:$0xff]
    %v7871 = vld [vmem:[%s6391 + $0x18] sm:$0xff]
    %v7872 = vld [vmem:[%s6391 + $0x20] sm:$0xff]
    %v7873 = vld [vmem:[%s6391 + $0x30] sm:$0xff]
    %v7874 = vld [vmem:[%s6391 + $0x38] sm:$0xff]
    %v7875 = vld [vmem:[%s6391 + $0x48] sm:$0xff]
    %v7876 = vld [vmem:[%s6391 + $0x50] sm:$0xff]
    %v7877 = vld [vmem:[%s6391 + $0x60] sm:$0xff]
    %v7878 = vld [vmem:[%s6391 + $0x68] sm:$0xff]
    %v7879 = vld [vmem:[%s6391 + $0x78] sm:$0xff]
    %v7880 = vld [vmem:[%s6391 + $0x80] sm:$0xff]
    %v7881 = vld [vmem:[%s6391 + $0x90] sm:$0xff]
    %v7882 = vld [vmem:[%s6391 + $0x98] sm:$0xff]
    %v7883 = vld [vmem:[%s6391 + $0xa8] sm:$0xff]
    %v7884 = vld [vmem:[%s6391 + $0xb0] sm:$0xff]
    %v7885 = vld [vmem:[%s6391 + $0xc0] sm:$0xff]
    %v7886 = vld [vmem:[%s6391 + $0xc8] sm:$0xff]
    %v7887 = vld [vmem:[%s6391 + $0xd8] sm:$0xff]
    %v7888 = vld [vmem:[%s6391 + $0xe0] sm:$0xff]
    %v7889 = vld [vmem:[%s6391 + $0xf0] sm:$0xff]
    %v7890 = vld [vmem:[%s6391 + $0xf8] sm:$0xff]
    %v7891 = vld [vmem:[%s6391 + $0x108] sm:$0xff]
    %v7892 = vld [vmem:[%s6391 + $0x110] sm:$0xff]
    %v7893 = vld [vmem:[%s6391 + $0x120] sm:$0xff]
    %v7894 = vld [vmem:[%s6391 + $0x128] sm:$0xff]
    %v7895 = vld [vmem:[%s6391 + $0x138] sm:$0xff]
    %v7896 = vld [vmem:[%s6391 + $0x140] sm:$0xff]
    %v7897 = vld [vmem:[%s6391 + $0x150] sm:$0xff]
    %v7898 = vld [vmem:[%s6391 + $0x158] sm:$0xff]
    %v7899 = vld [vmem:[%s6391 + $0x168] sm:$0xff]
    %v7900 = vld [vmem:[%s6391 + $0x170] sm:$0xff]
    %v7901 = vld [vmem:[%s6391 + $0x1b0] sm:$0xff]
    %v7902 = vld [vmem:[%s6391 + $0x1b8] sm:$0xff]
    %v7903 = vld [vmem:[%s6391 + $0x1c8] sm:$0xff]
    %v7904 = vld [vmem:[%s6391 + $0x1d0] sm:$0xff]
    %v7905 = vld [vmem:[%s6391 + $0x1e0] sm:$0xff]
    %v7906 = vld [vmem:[%s6391 + $0x1e8] sm:$0xff]
    %v7907 = vld [vmem:[%s6391 + $0x1f8] sm:$0xff]
    %v7908 = vld [vmem:[%s6391 + $0x200] sm:$0xff]
    %v7909 = vld [vmem:[%s6391 + $0x210] sm:$0xff]
    %v7910 = vld [vmem:[%s6391 + $0x218] sm:$0xff]
    %v7911 = vld [vmem:[%s6391 + $0x228] sm:$0xff]
    %v7912 = vld [vmem:[%s6391 + $0x230] sm:$0xff]
    %v7913 = vld [vmem:[%s6391 + $0x240] sm:$0xff]
    %v7914 = vld [vmem:[%s6391 + $0x248] sm:$0xff]
    %v7915 = vld [vmem:[%s6391 + $0x258] sm:$0xff]
    %v7916 = vld [vmem:[%s6391 + $0x260] sm:$0xff]
    %v7917 = vld [vmem:[%s6391 + $0x270] sm:$0xff]
    %v7918 = vld [vmem:[%s6391 + $0x278] sm:$0xff]
    %v7919 = vld [vmem:[%s6391 + $0x288] sm:$0xff]
    %v7920 = vld [vmem:[%s6391 + $0x290] sm:$0xff]
    %v7921 = vld [vmem:[%s6391 + $0x2a0] sm:$0xff]
    %v7922 = vld [vmem:[%s6391 + $0x2a8] sm:$0xff]
    %v7923 = vld [vmem:[%s6391 + $0x2b8] sm:$0xff]
    %v7924 = vld [vmem:[%s6391 + $0x2c0] sm:$0xff]
    %v7925 = vld [vmem:[%s6391 + $0x2d0] sm:$0xff]
    %v7926 = vld [vmem:[%s6391 + $0x2d8] sm:$0xff]
    %v7927 = vld [vmem:[%s6391 + $0x2e8] sm:$0xff]
    %v7928 = vld [vmem:[%s6391 + $0x2f0] sm:$0xff]
    %v7929 = vld [vmem:[%s6391 + $0x300] sm:$0xff]
    %v7930 = vld [vmem:[%s6391 + $0x308] sm:$0xff]
    %v7931 = vld [vmem:[%s6391 + $0x318] sm:$0xff]
    %v7932 = vld [vmem:[%s6391 + $0x320] sm:$0xff]
    %v7933 = vpack.c.bf16 %v7870, %v7869
    %v7934 = vpack.c.bf16 %v7872, %v7871
    %v7935 = vpack.c.bf16 %v7874, %v7873
    %v7936 = vpack.c.bf16 %v7876, %v7875
    %v7937 = vpack.c.bf16 %v7878, %v7877
    %v7938 = vpack.c.bf16 %v7880, %v7879
    %v7939 = vpack.c.bf16 %v7882, %v7881
    %v7940 = vpack.c.bf16 %v7884, %v7883
    %v7941 = vpack.c.bf16 %v7886, %v7885
    %v7942 = vpack.c.bf16 %v7888, %v7887
    %v7943 = vpack.c.bf16 %v7890, %v7889
    %v7944 = vpack.c.bf16 %v7892, %v7891
    %v7945 = vpack.c.bf16 %v7894, %v7893
    %v7946 = vpack.c.bf16 %v7896, %v7895
    %v7947 = vpack.c.bf16 %v7898, %v7897
    %v7948 = vpack.c.bf16 %v7900, %v7899
    %v7949 = vpack.c.bf16 %v7902, %v7901
    %v7950 = vpack.c.bf16 %v7904, %v7903
    %v7951 = vpack.c.bf16 %v7906, %v7905
    %v7952 = vpack.c.bf16 %v7908, %v7907
    %v7953 = vpack.c.bf16 %v7910, %v7909
    %v7954 = vpack.c.bf16 %v7912, %v7911
    %v7955 = vpack.c.bf16 %v7914, %v7913
    %v7956 = vpack.c.bf16 %v7916, %v7915
    %v7957 = vpack.c.bf16 %v7918, %v7917
    %v7958 = vpack.c.bf16 %v7920, %v7919
    %v7959 = vpack.c.bf16 %v7922, %v7921
    %v7960 = vpack.c.bf16 %v7924, %v7923
    %v7961 = vpack.c.bf16 %v7926, %v7925
    %v7962 = vpack.c.bf16 %v7928, %v7927
    %v7963 = vpack.c.bf16 %v7930, %v7929
    %v7964 = vpack.c.bf16 %v7932, %v7931
    %s7965 = scalar_lea.vmem [#allocation11], 192
    %v7966 = vld [vmem:[%s7965] sm:$0xf]
    %v7967 = vld [vmem:[%s7965 + $0x4] sm:$0xf]
    %v7968 = vld [vmem:[%s7965 + $0x8] sm:$0xf]
    %v7969 = vld [vmem:[%s7965 + $0xc] sm:$0xf]
    %v7970 = vld [vmem:[%s7965 + $0x10] sm:$0xf]
    %v7971 = vld [vmem:[%s7965 + $0x14] sm:$0xf]
    %v7972 = vld [vmem:[%s7965 + $0x18] sm:$0xf]
    %v7973 = vld [vmem:[%s7965 + $0x1c] sm:$0xf]
    %v7974 = vld [vmem:[%s7965 + $0x20] sm:$0xf]
    %v7975 = vld [vmem:[%s7965 + $0x24] sm:$0xf]
    %v7976 = vld [vmem:[%s7965 + $0x28] sm:$0xf]
    %v7977 = vld [vmem:[%s7965 + $0x2c] sm:$0xf]
    %v7978 = vld [vmem:[%s7965 + $0x30] sm:$0xf]
    %v7979 = vld [vmem:[%s7965 + $0x34] sm:$0xf]
    %v7980 = vld [vmem:[%s7965 + $0x38] sm:$0xf]
    %v7981 = vld [vmem:[%s7965 + $0x3c] sm:$0xf]
    %v7998 = vunpack.c.l.b16 %v7966
    %v7999 = vunpack.c.l.b16 %v7967
    %v8000 = vunpack.c.l.b16 %v7968
    %v8001 = vunpack.c.l.b16 %v7969
    %v8002 = vunpack.c.l.b16 %v7970
    %v8003 = vunpack.c.l.b16 %v7971
    %v8004 = vunpack.c.l.b16 %v7972
    %v8005 = vunpack.c.l.b16 %v7973
    %v8006 = vunpack.c.l.b16 %v7974
    %v8007 = vunpack.c.l.b16 %v7975
    %v8008 = vunpack.c.l.b16 %v7976
    %v8009 = vunpack.c.l.b16 %v7977
    %v8010 = vunpack.c.l.b16 %v7978
    %v8011 = vunpack.c.l.b16 %v7979
    %v8012 = vunpack.c.l.b16 %v7980
    %v8013 = vunpack.c.l.b16 %v7981
    %v8014 = vpack.c.b16 %v7999, %v7998
    %v8015 = vpack.c.b16 %v8001, %v8000
    %v8016 = vpack.c.b16 %v8003, %v8002
    %v8017 = vpack.c.b16 %v8005, %v8004
    %v8018 = vpack.c.b16 %v8007, %v8006
    %v8019 = vpack.c.b16 %v8009, %v8008
    %v8020 = vpack.c.b16 %v8011, %v8010
    %v8021 = vpack.c.b16 %v8013, %v8012
    %8030 = vmatprep.subr.bf16.mxu0 0
    %8031 = vmatpush1.bf16.msra.mxu0 %v8014
    %8032 = vmatprep.subr.bf16.mxu0 0
    %8033 = vmatpush1.bf16.msra.mxu0 %v8015
    %8034 = vmatprep.subr.bf16.mxu0 0
    %8035 = vmatpush1.bf16.msra.mxu0 %v8016
    %8036 = vmatprep.subr.bf16.mxu0 0
    %8037 = vmatpush1.bf16.msra.mxu0 %v8017
    %8038 = vmatprep.subr.bf16.mxu0 0
    %8039 = vmatpush1.bf16.msra.mxu0 %v8018
    %8040 = vmatprep.subr.bf16.mxu0 0
    %8041 = vmatpush1.bf16.msra.mxu0 %v8019
    %8042 = vmatprep.subr.bf16.mxu0 0
    %8043 = vmatpush1.bf16.msra.mxu0 %v8020
    %8044 = vmatprep.subr.bf16.mxu0 0
    %8045 = vmatpush1.bf16.msra.mxu0 %v8021
    %8046 = vmatprep.subr.bf16.mxu0 0
    %8047 = vmatpush1.bf16.msra.mxu0 0
    %8048 = vmatprep.subr.bf16.mxu0 0
    %8049 = vmatpush1.bf16.msra.mxu0 0
    %8050 = vmatprep.subr.bf16.mxu0 0
    %8051 = vmatpush1.bf16.msra.mxu0 0
    %8052 = vmatprep.subr.bf16.mxu0 0
    %8053 = vmatpush1.bf16.msra.mxu0 0
    %8054 = vmatprep.subr.bf16.mxu0 0
    %8055 = vmatpush1.bf16.msra.mxu0 0
    %8056 = vmatprep.subr.bf16.mxu0 0
    %8057 = vmatpush1.bf16.msra.mxu0 0
    %8058 = vmatprep.subr.bf16.mxu0 0
    %8059 = vmatpush1.bf16.msra.mxu0 0
    %8060 = vmatprep.subr.bf16.mxu0 0
    %8061 = vmatpush1.bf16.msra.mxu0 0
    %8062 = vmatprep.mubr.bf16.mxu0 0
    %8063 = vmatmul.mubr.bf16.gmra.mrb[0].mxu0 %v7933
    %v8064 = vpop.f32.mrb[0].mxu0
    %v8065 = vadd.f32 0.0, %v8064
    %v8066 = vpop.f32.mrb[0].mxu0
    %v8067 = vpop.f32.mrb[0].mxu0
    %v8068 = vadd.f32 0.0, %v8067
    %v8069 = vpop.f32.mrb[0].mxu0
    %8070 = vmatprep.mubr.bf16.mxu0 0
    %8071 = vmatmul.mubr.bf16.gmra.mrb[0].mxu0 %v7934
    %v8072 = vpop.f32.mrb[0].mxu0
    %v8073 = vadd.f32 0.0, %v8072
    %v8074 = vpop.f32.mrb[0].mxu0
    %v8075 = vpop.f32.mrb[0].mxu0
    %v8076 = vadd.f32 0.0, %v8075
    %v8077 = vpop.f32.mrb[0].mxu0
    %8078 = vmatprep.mubr.bf16.mxu0 0
    %8079 = vmatmul.mubr.bf16.gmra.mrb[0].mxu0 %v7935
    %v8080 = vpop.f32.mrb[0].mxu0
    %v8081 = vadd.f32 0.0, %v8080
    %v8082 = vpop.f32.mrb[0].mxu0
    %v8083 = vpop.f32.mrb[0].mxu0
    %v8084 = vadd.f32 0.0, %v8083
    %v8085 = vpop.f32.mrb[0].mxu0
    %8086 = vmatprep.mubr.bf16.mxu0 0
    %8087 = vmatmul.mubr.bf16.gmra.mrb[0].mxu0 %v7936
    %v8088 = vpop.f32.mrb[0].mxu0
    %v8089 = vadd.f32 0.0, %v8088
    %v8090 = vpop.f32.mrb[0].mxu0
    %v8091 = vpop.f32.mrb[0].mxu0
    %v8092 = vadd.f32 0.0, %v8091
    %v8093 = vpop.f32.mrb[0].mxu0
    %8094 = vmatprep.mubr.bf16.mxu0 0
    %8095 = vmatmul.mubr.bf16.gmra.mrb[0].mxu0 %v7937
    %v8096 = vpop.f32.mrb[0].mxu0
    %v8097 = vadd.f32 0.0, %v8096
    %v8098 = vpop.f32.mrb[0].mxu0
    %v8099 = vpop.f32.mrb[0].mxu0
    %v8100 = vadd.f32 0.0, %v8099
    %v8101 = vpop.f32.mrb[0].mxu0
    %8102 = vmatprep.mubr.bf16.mxu0 0
    %8103 = vmatmul.mubr.bf16.gmra.mrb[0].mxu0 %v7938
    %v8104 = vpop.f32.mrb[0].mxu0
    %v8105 = vadd.f32 0.0, %v8104
    %v8106 = vpop.f32.mrb[0].mxu0
    %v8107 = vpop.f32.mrb[0].mxu0
    %v8108 = vadd.f32 0.0, %v8107
    %v8109 = vpop.f32.mrb[0].mxu0
    %8110 = vmatprep.mubr.bf16.mxu0 0
    %8111 = vmatmul.mubr.bf16.gmra.mrb[0].mxu0 %v7939
    %v8112 = vpop.f32.mrb[0].mxu0
    %v8113 = vadd.f32 0.0, %v8112
    %v8114 = vpop.f32.mrb[0].mxu0
    %v8115 = vpop.f32.mrb[0].mxu0
    %v8116 = vadd.f32 0.0, %v8115
    %v8117 = vpop.f32.mrb[0].mxu0
    %8118 = vmatprep.mubr.bf16.mxu0 0
    %8119 = vmatmul.mubr.bf16.gmra.mrb[0].mxu0 %v7940
    %v8120 = vpop.f32.mrb[0].mxu0
    %v8121 = vadd.f32 0.0, %v8120
    %v8122 = vpop.f32.mrb[0].mxu0
    %v8123 = vpop.f32.mrb[0].mxu0
    %v8124 = vadd.f32 0.0, %v8123
    %v8125 = vpop.f32.mrb[0].mxu0
    %8126 = vmatprep.mubr.bf16.mxu0 0
    %8127 = vmatmul.mubr.bf16.gmra.mrb[0].mxu0 %v7941
    %v8128 = vpop.f32.mrb[0].mxu0
    %v8129 = vadd.f32 0.0, %v8128
    %v8130 = vpop.f32.mrb[0].mxu0
    %v8131 = vpop.f32.mrb[0].mxu0
    %v8132 = vadd.f32 0.0, %v8131
    %v8133 = vpop.f32.mrb[0].mxu0
    %8134 = vmatprep.mubr.bf16.mxu0 0
    %8135 = vmatmul.mubr.bf16.gmra.mrb[0].mxu0 %v7942
    %v8136 = vpop.f32.mrb[0].mxu0
    %v8137 = vadd.f32 0.0, %v8136
    %v8138 = vpop.f32.mrb[0].mxu0
    %v8139 = vpop.f32.mrb[0].mxu0
    %v8140 = vadd.f32 0.0, %v8139
    %v8141 = vpop.f32.mrb[0].mxu0
    %8142 = vmatprep.mubr.bf16.mxu0 0
    %8143 = vmatmul.mubr.bf16.gmra.mrb[0].mxu0 %v7943
    %v8144 = vpop.f32.mrb[0].mxu0
    %v8145 = vadd.f32 0.0, %v8144
    %v8146 = vpop.f32.mrb[0].mxu0
    %v8147 = vpop.f32.mrb[0].mxu0
    %v8148 = vadd.f32 0.0, %v8147
    %v8149 = vpop.f32.mrb[0].mxu0
    %8150 = vmatprep.mubr.bf16.mxu0 0
    %8151 = vmatmul.mubr.bf16.gmra.mrb[0].mxu0 %v7944
    %v8152 = vpop.f32.mrb[0].mxu0
    %v8153 = vadd.f32 0.0, %v8152
    %v8154 = vpop.f32.mrb[0].mxu0
    %v8155 = vpop.f32.mrb[0].mxu0
    %v8156 = vadd.f32 0.0, %v8155
    %v8157 = vpop.f32.mrb[0].mxu0
    %8158 = vmatprep.mubr.bf16.mxu0 0
    %8159 = vmatmul.mubr.bf16.gmra.mrb[0].mxu0 %v7945
    %v8160 = vpop.f32.mrb[0].mxu0
    %v8161 = vadd.f32 0.0, %v8160
    %v8162 = vpop.f32.mrb[0].mxu0
    %v8163 = vpop.f32.mrb[0].mxu0
    %v8164 = vadd.f32 0.0, %v8163
    %v8165 = vpop.f32.mrb[0].mxu0
    %8166 = vmatprep.mubr.bf16.mxu0 0
    %8167 = vmatmul.mubr.bf16.gmra.mrb[0].mxu0 %v7946
    %v8168 = vpop.f32.mrb[0].mxu0
    %v8169 = vadd.f32 0.0, %v8168
    %v8170 = vpop.f32.mrb[0].mxu0
    %v8171 = vpop.f32.mrb[0].mxu0
    %v8172 = vadd.f32 0.0, %v8171
    %v8173 = vpop.f32.mrb[0].mxu0
    %8174 = vmatprep.mubr.bf16.mxu0 0
    %8175 = vmatmul.mubr.bf16.gmra.mrb[0].mxu0 %v7947
    %v8176 = vpop.f32.mrb[0].mxu0
    %v8177 = vadd.f32 0.0, %v8176
    %v8178 = vpop.f32.mrb[0].mxu0
    %v8179 = vpop.f32.mrb[0].mxu0
    %v8180 = vadd.f32 0.0, %v8179
    %v8181 = vpop.f32.mrb[0].mxu0
    %8182 = vmatprep.mubr.bf16.mxu0 0
    %8183 = vmatmul.mubr.bf16.gmra.mrb[0].mxu0 %v7948
    %v8184 = vpop.f32.mrb[0].mxu0
    %v8185 = vadd.f32 0.0, %v8184
    %v8186 = vpop.f32.mrb[0].mxu0
    %v8187 = vpop.f32.mrb[0].mxu0
    %v8188 = vadd.f32 0.0, %v8187
    %v8189 = vpop.f32.mrb[0].mxu0
    %8190 = vmatprep.mubr.bf16.mxu0 0
    %8191 = vmatmul.mubr.bf16.gmra.mrb[0].mxu0 %v7949
    %v8192 = vpop.f32.mrb[0].mxu0
    %v8193 = vadd.f32 0.0, %v8192
    %v8194 = vpop.f32.mrb[0].mxu0
    %v8195 = vpop.f32.mrb[0].mxu0
    %v8196 = vadd.f32 0.0, %v8195
    %v8197 = vpop.f32.mrb[0].mxu0
    %8198 = vmatprep.mubr.bf16.mxu0 0
    %8199 = vmatmul.mubr.bf16.gmra.mrb[0].mxu0 %v7950
    %v8200 = vpop.f32.mrb[0].mxu0
    %v8201 = vadd.f32 0.0, %v8200
    %v8202 = vpop.f32.mrb[0].mxu0
    %v8203 = vpop.f32.mrb[0].mxu0
    %v8204 = vadd.f32 0.0, %v8203
    %v8205 = vpop.f32.mrb[0].mxu0
    %8206 = vmatprep.mubr.bf16.mxu0 0
    %8207 = vmatmul.mubr.bf16.gmra.mrb[0].mxu0 %v7951
    %v8208 = vpop.f32.mrb[0].mxu0
    %v8209 = vadd.f32 0.0, %v8208
    %v8210 = vpop.f32.mrb[0].mxu0
    %v8211 = vpop.f32.mrb[0].mxu0
    %v8212 = vadd.f32 0.0, %v8211
    %v8213 = vpop.f32.mrb[0].mxu0
    %8214 = vmatprep.mubr.bf16.mxu0 0
    %8215 = vmatmul.mubr.bf16.gmra.mrb[0].mxu0 %v7952
    %v8216 = vpop.f32.mrb[0].mxu0
    %v8217 = vadd.f32 0.0, %v8216
    %v8218 = vpop.f32.mrb[0].mxu0
    %v8219 = vpop.f32.mrb[0].mxu0
    %v8220 = vadd.f32 0.0, %v8219
    %v8221 = vpop.f32.mrb[0].mxu0
    %8222 = vmatprep.mubr.bf16.mxu0 0
    %8223 = vmatmul.mubr.bf16.gmra.mrb[0].mxu0 %v7953
    %v8224 = vpop.f32.mrb[0].mxu0
    %v8225 = vadd.f32 0.0, %v8224
    %v8226 = vpop.f32.mrb[0].mxu0
    %v8227 = vpop.f32.mrb[0].mxu0
    %v8228 = vadd.f32 0.0, %v8227
    %v8229 = vpop.f32.mrb[0].mxu0
    %8230 = vmatprep.mubr.bf16.mxu0 0
    %8231 = vmatmul.mubr.bf16.gmra.mrb[0].mxu0 %v7954
    %v8232 = vpop.f32.mrb[0].mxu0
    %v8233 = vadd.f32 0.0, %v8232
    %v8234 = vpop.f32.mrb[0].mxu0
    %v8235 = vpop.f32.mrb[0].mxu0
    %v8236 = vadd.f32 0.0, %v8235
    %v8237 = vpop.f32.mrb[0].mxu0
    %8238 = vmatprep.mubr.bf16.mxu0 0
    %8239 = vmatmul.mubr.bf16.gmra.mrb[0].mxu0 %v7955
    %v8240 = vpop.f32.mrb[0].mxu0
    %v8241 = vadd.f32 0.0, %v8240
    %v8242 = vpop.f32.mrb[0].mxu0
    %v8243 = vpop.f32.mrb[0].mxu0
    %v8244 = vadd.f32 0.0, %v8243
    %v8245 = vpop.f32.mrb[0].mxu0
    %8246 = vmatprep.mubr.bf16.mxu0 0
    %8247 = vmatmul.mubr.bf16.gmra.mrb[0].mxu0 %v7956
    %v8248 = vpop.f32.mrb[0].mxu0
    %v8249 = vadd.f32 0.0, %v8248
    %v8250 = vpop.f32.mrb[0].mxu0
    %v8251 = vpop.f32.mrb[0].mxu0
    %v8252 = vadd.f32 0.0, %v8251
    %v8253 = vpop.f32.mrb[0].mxu0
    %8254 = vmatprep.mubr.bf16.mxu0 0
    %8255 = vmatmul.mubr.bf16.gmra.mrb[0].mxu0 %v7957
    %v8256 = vpop.f32.mrb[0].mxu0
    %v8257 = vadd.f32 0.0, %v8256
    %v8258 = vpop.f32.mrb[0].mxu0
    %v8259 = vpop.f32.mrb[0].mxu0
    %v8260 = vadd.f32 0.0, %v8259
    %v8261 = vpop.f32.mrb[0].mxu0
    %8262 = vmatprep.mubr.bf16.mxu0 0
    %8263 = vmatmul.mubr.bf16.gmra.mrb[0].mxu0 %v7958
    %v8264 = vpop.f32.mrb[0].mxu0
    %v8265 = vadd.f32 0.0, %v8264
    %v8266 = vpop.f32.mrb[0].mxu0
    %v8267 = vpop.f32.mrb[0].mxu0
    %v8268 = vadd.f32 0.0, %v8267
    %v8269 = vpop.f32.mrb[0].mxu0
    %8270 = vmatprep.mubr.bf16.mxu0 0
    %8271 = vmatmul.mubr.bf16.gmra.mrb[0].mxu0 %v7959
    %v8272 = vpop.f32.mrb[0].mxu0
    %v8273 = vadd.f32 0.0, %v8272
    %v8274 = vpop.f32.mrb[0].mxu0
    %v8275 = vpop.f32.mrb[0].mxu0
    %v8276 = vadd.f32 0.0, %v8275
    %v8277 = vpop.f32.mrb[0].mxu0
    %8278 = vmatprep.mubr.bf16.mxu0 0
    %8279 = vmatmul.mubr.bf16.gmra.mrb[0].mxu0 %v7960
    %v8280 = vpop.f32.mrb[0].mxu0
    %v8281 = vadd.f32 0.0, %v8280
    %v8282 = vpop.f32.mrb[0].mxu0
    %v8283 = vpop.f32.mrb[0].mxu0
    %v8284 = vadd.f32 0.0, %v8283
    %v8285 = vpop.f32.mrb[0].mxu0
    %8286 = vmatprep.mubr.bf16.mxu0 0
    %8287 = vmatmul.mubr.bf16.gmra.mrb[0].mxu0 %v7961
    %v8288 = vpop.f32.mrb[0].mxu0
    %v8289 = vadd.f32 0.0, %v8288
    %v8290 = vpop.f32.mrb[0].mxu0
    %v8291 = vpop.f32.mrb[0].mxu0
    %v8292 = vadd.f32 0.0, %v8291
    %v8293 = vpop.f32.mrb[0].mxu0
    %8294 = vmatprep.mubr.bf16.mxu0 0
    %8295 = vmatmul.mubr.bf16.gmra.mrb[0].mxu0 %v7962
    %v8296 = vpop.f32.mrb[0].mxu0
    %v8297 = vadd.f32 0.0, %v8296
    %v8298 = vpop.f32.mrb[0].mxu0
    %v8299 = vpop.f32.mrb[0].mxu0
    %v8300 = vadd.f32 0.0, %v8299
    %v8301 = vpop.f32.mrb[0].mxu0
    %8302 = vmatprep.mubr.bf16.mxu0 0
    %8303 = vmatmul.mubr.bf16.gmra.mrb[0].mxu0 %v7963
    %v8304 = vpop.f32.mrb[0].mxu0
    %v8305 = vadd.f32 0.0, %v8304
    %v8306 = vpop.f32.mrb[0].mxu0
    %v8307 = vpop.f32.mrb[0].mxu0
    %v8308 = vadd.f32 0.0, %v8307
    %v8309 = vpop.f32.mrb[0].mxu0
    %8310 = vmatprep.mubr.bf16.mxu0 0
    %8311 = vmatmul.mubr.bf16.gmra.mrb[0].mxu0 %v7964
    %v8312 = vpop.f32.mrb[0].mxu0
    %v8313 = vadd.f32 0.0, %v8312
    %v8314 = vpop.f32.mrb[0].mxu0
    %v8315 = vpop.f32.mrb[0].mxu0
    %v8316 = vadd.f32 0.0, %v8315
    %v8317 = vpop.f32.mrb[0].mxu0
    %8318 = vdwg.mxu0
    %v8319 = vadd.f32 %v7805, %v8065
    %v8320 = vadd.f32 %v7806, %v8068
    %v8321 = vadd.f32 %v7807, %v8073
    %v8322 = vadd.f32 %v7808, %v8076
    %v8323 = vadd.f32 %v7809, %v8081
    %v8324 = vadd.f32 %v7810, %v8084
    %v8325 = vadd.f32 %v7811, %v8089
    %v8326 = vadd.f32 %v7812, %v8092
    %v8327 = vadd.f32 %v7813, %v8097
    %v8328 = vadd.f32 %v7814, %v8100
    %v8329 = vadd.f32 %v7815, %v8105
    %v8330 = vadd.f32 %v7816, %v8108
    %v8331 = vadd.f32 %v7817, %v8113
    %v8332 = vadd.f32 %v7818, %v8116
    %v8333 = vadd.f32 %v7819, %v8121
    %v8334 = vadd.f32 %v7820, %v8124
    %v8335 = vadd.f32 %v7821, %v8129
    %v8336 = vadd.f32 %v7822, %v8132
    %v8337 = vadd.f32 %v7823, %v8137
    %v8338 = vadd.f32 %v7824, %v8140
    %v8339 = vadd.f32 %v7825, %v8145
    %v8340 = vadd.f32 %v7826, %v8148
    %v8341 = vadd.f32 %v7827, %v8153
    %v8342 = vadd.f32 %v7828, %v8156
    %v8343 = vadd.f32 %v7829, %v8161
    %v8344 = vadd.f32 %v7830, %v8164
    %v8345 = vadd.f32 %v7831, %v8169
    %v8346 = vadd.f32 %v7832, %v8172
    %v8347 = vadd.f32 %v7833, %v8177
    %v8348 = vadd.f32 %v7834, %v8180
    %v8349 = vadd.f32 %v7835, %v8185
    %v8350 = vadd.f32 %v7836, %v8188
    %v8351 = vadd.f32 %v7837, %v8193
    %v8352 = vadd.f32 %v7838, %v8196
    %v8353 = vadd.f32 %v7839, %v8201
    %v8354 = vadd.f32 %v7840, %v8204
    %v8355 = vadd.f32 %v7841, %v8209
    %v8356 = vadd.f32 %v7842, %v8212
    %v8357 = vadd.f32 %v7843, %v8217
    %v8358 = vadd.f32 %v7844, %v8220
    %v8359 = vadd.f32 %v7845, %v8225
    %v8360 = vadd.f32 %v7846, %v8228
    %v8361 = vadd.f32 %v7847, %v8233
    %v8362 = vadd.f32 %v7848, %v8236
    %v8363 = vadd.f32 %v7849, %v8241
    %v8364 = vadd.f32 %v7850, %v8244
    %v8365 = vadd.f32 %v7851, %v8249
    %v8366 = vadd.f32 %v7852, %v8252
    %v8367 = vadd.f32 %v7853, %v8257
    %v8368 = vadd.f32 %v7854, %v8260
    %v8369 = vadd.f32 %v7855, %v8265
    %v8370 = vadd.f32 %v7856, %v8268
    %v8371 = vadd.f32 %v7857, %v8273
    %v8372 = vadd.f32 %v7858, %v8276
    %v8373 = vadd.f32 %v7859, %v8281
    %v8374 = vadd.f32 %v7860, %v8284
    %v8375 = vadd.f32 %v7861, %v8289
    %v8376 = vadd.f32 %v7862, %v8292
    %v8377 = vadd.f32 %v7863, %v8297
    %v8378 = vadd.f32 %v7864, %v8300
    %v8379 = vadd.f32 %v7865, %v8305
    %v8380 = vadd.f32 %v7866, %v8308
    %v8381 = vadd.f32 %v7867, %v8313
    %v8382 = vadd.f32 %v7868, %v8316
    %v8383 = vld [vmem:[%s6391 + $0x1] sm:$0xff]
    %v8384 = vld [vmem:[%s6391 + $0x9] sm:$0xff]
    %v8385 = vld [vmem:[%s6391 + $0x19] sm:$0xff]
    %v8386 = vld [vmem:[%s6391 + $0x21] sm:$0xff]
    %v8387 = vld [vmem:[%s6391 + $0x31] sm:$0xff]
    %v8388 = vld [vmem:[%s6391 + $0x39] sm:$0xff]
    %v8389 = vld [vmem:[%s6391 + $0x49] sm:$0xff]
    %v8390 = vld [vmem:[%s6391 + $0x51] sm:$0xff]
    %v8391 = vld [vmem:[%s6391 + $0x61] sm:$0xff]
    %v8392 = vld [vmem:[%s6391 + $0x69] sm:$0xff]
    %v8393 = vld [vmem:[%s6391 + $0x79] sm:$0xff]
    %v8394 = vld [vmem:[%s6391 + $0x81] sm:$0xff]
    %v8395 = vld [vmem:[%s6391 + $0x91] sm:$0xff]
    %v8396 = vld [vmem:[%s6391 + $0x99] sm:$0xff]
    %v8397 = vld [vmem:[%s6391 + $0xa9] sm:$0xff]
    %v8398 = vld [vmem:[%s6391 + $0xb1] sm:$0xff]
    %v8399 = vld [vmem:[%s6391 + $0xc1] sm:$0xff]
    %v8400 = vld [vmem:[%s6391 + $0xc9] sm:$0xff]
    %v8401 = vld [vmem:[%s6391 + $0xd9] sm:$0xff]
    %v8402 = vld [vmem:[%s6391 + $0xe1] sm:$0xff]
    %v8403 = vld [vmem:[%s6391 + $0xf1] sm:$0xff]
    %v8404 = vld [vmem:[%s6391 + $0xf9] sm:$0xff]
    %v8405 = vld [vmem:[%s6391 + $0x109] sm:$0xff]
    %v8406 = vld [vmem:[%s6391 + $0x111] sm:$0xff]
    %v8407 = vld [vmem:[%s6391 + $0x121] sm:$0xff]
    %v8408 = vld [vmem:[%s6391 + $0x129] sm:$0xff]
    %v8409 = vld [vmem:[%s6391 + $0x139] sm:$0xff]
    %v8410 = vld [vmem:[%s6391 + $0x141] sm:$0xff]
    %v8411 = vld [vmem:[%s6391 + $0x151] sm:$0xff]
    %v8412 = vld [vmem:[%s6391 + $0x159] sm:$0xff]
    %v8413 = vld [vmem:[%s6391 + $0x169] sm:$0xff]
    %v8414 = vld [vmem:[%s6391 + $0x171] sm:$0xff]
    %v8415 = vld [vmem:[%s6391 + $0x1b1] sm:$0xff]
    %v8416 = vld [vmem:[%s6391 + $0x1b9] sm:$0xff]
    %v8417 = vld [vmem:[%s6391 + $0x1c9] sm:$0xff]
    %v8418 = vld [vmem:[%s6391 + $0x1d1] sm:$0xff]
    %v8419 = vld [vmem:[%s6391 + $0x1e1] sm:$0xff]
    %v8420 = vld [vmem:[%s6391 + $0x1e9] sm:$0xff]
    %v8421 = vld [vmem:[%s6391 + $0x1f9] sm:$0xff]
    %v8422 = vld [vmem:[%s6391 + $0x201] sm:$0xff]
    %v8423 = vld [vmem:[%s6391 + $0x211] sm:$0xff]
    %v8424 = vld [vmem:[%s6391 + $0x219] sm:$0xff]
    %v8425 = vld [vmem:[%s6391 + $0x229] sm:$0xff]
    %v8426 = vld [vmem:[%s6391 + $0x231] sm:$0xff]
    %v8427 = vld [vmem:[%s6391 + $0x241] sm:$0xff]
    %v8428 = vld [vmem:[%s6391 + $0x249] sm:$0xff]
    %v8429 = vld [vmem:[%s6391 + $0x259] sm:$0xff]
    %v8430 = vld [vmem:[%s6391 + $0x261] sm:$0xff]
    %v8431 = vld [vmem:[%s6391 + $0x271] sm:$0xff]
    %v8432 = vld [vmem:[%s6391 + $0x279] sm:$0xff]
    %v8433 = vld [vmem:[%s6391 + $0x289] sm:$0xff]
    %v8434 = vld [vmem:[%s6391 + $0x291] sm:$0xff]
    %v8435 = vld [vmem:[%s6391 + $0x2a1] sm:$0xff]
    %v8436 = vld [vmem:[%s6391 + $0x2a9] sm:$0xff]
    %v8437 = vld [vmem:[%s6391 + $0x2b9] sm:$0xff]
    %v8438 = vld [vmem:[%s6391 + $0x2c1] sm:$0xff]
    %v8439 = vld [vmem:[%s6391 + $0x2d1] sm:$0xff]
    %v8440 = vld [vmem:[%s6391 + $0x2d9] sm:$0xff]
    %v8441 = vld [vmem:[%s6391 + $0x2e9] sm:$0xff]
    %v8442 = vld [vmem:[%s6391 + $0x2f1] sm:$0xff]
    %v8443 = vld [vmem:[%s6391 + $0x301] sm:$0xff]
    %v8444 = vld [vmem:[%s6391 + $0x309] sm:$0xff]
    %v8445 = vld [vmem:[%s6391 + $0x319] sm:$0xff]
    %v8446 = vld [vmem:[%s6391 + $0x321] sm:$0xff]
    %v8447 = vpack.c.bf16 %v8384, %v8383
    %v8448 = vpack.c.bf16 %v8386, %v8385
    %v8449 = vpack.c.bf16 %v8388, %v8387
    %v8450 = vpack.c.bf16 %v8390, %v8389
    %v8451 = vpack.c.bf16 %v8392, %v8391
    %v8452 = vpack.c.bf16 %v8394, %v8393
    %v8453 = vpack.c.bf16 %v8396, %v8395
    %v8454 = vpack.c.bf16 %v8398, %v8397
    %v8455 = vpack.c.bf16 %v8400, %v8399
    %v8456 = vpack.c.bf16 %v8402, %v8401
    %v8457 = vpack.c.bf16 %v8404, %v8403
    %v8458 = vpack.c.bf16 %v8406, %v8405
    %v8459 = vpack.c.bf16 %v8408, %v8407
    %v8460 = vpack.c.bf16 %v8410, %v8409
    %v8461 = vpack.c.bf16 %v8412, %v8411
    %v8462 = vpack.c.bf16 %v8414, %v8413
    %v8463 = vpack.c.bf16 %v8416, %v8415
    %v8464 = vpack.c.bf16 %v8418, %v8417
    %v8465 = vpack.c.bf16 %v8420, %v8419
    %v8466 = vpack.c.bf16 %v8422, %v8421
    %v8467 = vpack.c.bf16 %v8424, %v8423
    %v8468 = vpack.c.bf16 %v8426, %v8425
    %v8469 = vpack.c.bf16 %v8428, %v8427
    %v8470 = vpack.c.bf16 %v8430, %v8429
    %v8471 = vpack.c.bf16 %v8432, %v8431
    %v8472 = vpack.c.bf16 %v8434, %v8433
    %v8473 = vpack.c.bf16 %v8436, %v8435
    %v8474 = vpack.c.bf16 %v8438, %v8437
    %v8475 = vpack.c.bf16 %v8440, %v8439
    %v8476 = vpack.c.bf16 %v8442, %v8441
    %v8477 = vpack.c.bf16 %v8444, %v8443
    %v8478 = vpack.c.bf16 %v8446, %v8445
    %s8479 = scalar_lea.vmem [#allocation11], 256
    %v8480 = vld [vmem:[%s8479] sm:$0xf]
    %v8481 = vld [vmem:[%s8479 + $0x4] sm:$0xf]
    %v8482 = vld [vmem:[%s8479 + $0x8] sm:$0xf]
    %v8483 = vld [vmem:[%s8479 + $0xc] sm:$0xf]
    %v8484 = vld [vmem:[%s8479 + $0x10] sm:$0xf]
    %v8485 = vld [vmem:[%s8479 + $0x14] sm:$0xf]
    %v8486 = vld [vmem:[%s8479 + $0x18] sm:$0xf]
    %v8487 = vld [vmem:[%s8479 + $0x1c] sm:$0xf]
    %v8488 = vld [vmem:[%s8479 + $0x20] sm:$0xf]
    %v8489 = vld [vmem:[%s8479 + $0x24] sm:$0xf]
    %v8490 = vld [vmem:[%s8479 + $0x28] sm:$0xf]
    %v8491 = vld [vmem:[%s8479 + $0x2c] sm:$0xf]
    %v8492 = vld [vmem:[%s8479 + $0x30] sm:$0xf]
    %v8493 = vld [vmem:[%s8479 + $0x34] sm:$0xf]
    %v8494 = vld [vmem:[%s8479 + $0x38] sm:$0xf]
    %v8495 = vld [vmem:[%s8479 + $0x3c] sm:$0xf]
    %v8512 = vunpack.c.l.b16 %v8480
    %v8513 = vunpack.c.l.b16 %v8481
    %v8514 = vunpack.c.l.b16 %v8482
    %v8515 = vunpack.c.l.b16 %v8483
    %v8516 = vunpack.c.l.b16 %v8484
    %v8517 = vunpack.c.l.b16 %v8485
    %v8518 = vunpack.c.l.b16 %v8486
    %v8519 = vunpack.c.l.b16 %v8487
    %v8520 = vunpack.c.l.b16 %v8488
    %v8521 = vunpack.c.l.b16 %v8489
    %v8522 = vunpack.c.l.b16 %v8490
    %v8523 = vunpack.c.l.b16 %v8491
    %v8524 = vunpack.c.l.b16 %v8492
    %v8525 = vunpack.c.l.b16 %v8493
    %v8526 = vunpack.c.l.b16 %v8494
    %v8527 = vunpack.c.l.b16 %v8495
    %v8528 = vpack.c.b16 %v8513, %v8512
    %v8529 = vpack.c.b16 %v8515, %v8514
    %v8530 = vpack.c.b16 %v8517, %v8516
    %v8531 = vpack.c.b16 %v8519, %v8518
    %v8532 = vpack.c.b16 %v8521, %v8520
    %v8533 = vpack.c.b16 %v8523, %v8522
    %v8534 = vpack.c.b16 %v8525, %v8524
    %v8535 = vpack.c.b16 %v8527, %v8526
    %8544 = vmatprep.subr.bf16.mxu0 0
    %8545 = vmatpush1.bf16.msra.mxu0 %v8528
    %8546 = vmatprep.subr.bf16.mxu0 0
    %8547 = vmatpush1.bf16.msra.mxu0 %v8529
    %8548 = vmatprep.subr.bf16.mxu0 0
    %8549 = vmatpush1.bf16.msra.mxu0 %v8530
    %8550 = vmatprep.subr.bf16.mxu0 0
    %8551 = vmatpush1.bf16.msra.mxu0 %v8531
    %8552 = vmatprep.subr.bf16.mxu0 0
    %8553 = vmatpush1.bf16.msra.mxu0 %v8532
    %8554 = vmatprep.subr.bf16.mxu0 0
    %8555 = vmatpush1.bf16.msra.mxu0 %v8533
    %8556 = vmatprep.subr.bf16.mxu0 0
    %8557 = vmatpush1.bf16.msra.mxu0 %v8534
    %8558 = vmatprep.subr.bf16.mxu0 0
    %8559 = vmatpush1.bf16.msra.mxu0 %v8535
    %8560 = vmatprep.subr.bf16.mxu0 0
    %8561 = vmatpush1.bf16.msra.mxu0 0
    %8562 = vmatprep.subr.bf16.mxu0 0
    %8563 = vmatpush1.bf16.msra.mxu0 0
    %8564 = vmatprep.subr.bf16.mxu0 0
    %8565 = vmatpush1.bf16.msra.mxu0 0
    %8566 = vmatprep.subr.bf16.mxu0 0
    %8567 = vmatpush1.bf16.msra.mxu0 0
    %8568 = vmatprep.subr.bf16.mxu0 0
    %8569 = vmatpush1.bf16.msra.mxu0 0
    %8570 = vmatprep.subr.bf16.mxu0 0
    %8571 = vmatpush1.bf16.msra.mxu0 0
    %8572 = vmatprep.subr.bf16.mxu0 0
    %8573 = vmatpush1.bf16.msra.mxu0 0
    %8574 = vmatprep.subr.bf16.mxu0 0
    %8575 = vmatpush1.bf16.msra.mxu0 0
    %8576 = vmatprep.mubr.bf16.mxu0 0
    %8577 = vmatmul.mubr.bf16.gmra.mrb[0].mxu0 %v8447
    %v8578 = vpop.f32.mrb[0].mxu0
    %v8579 = vadd.f32 0.0, %v8578
    %v8580 = vpop.f32.mrb[0].mxu0
    %v8581 = vpop.f32.mrb[0].mxu0
    %v8582 = vadd.f32 0.0, %v8581
    %v8583 = vpop.f32.mrb[0].mxu0
    %8584 = vmatprep.mubr.bf16.mxu0 0
    %8585 = vmatmul.mubr.bf16.gmra.mrb[0].mxu0 %v8448
    %v8586 = vpop.f32.mrb[0].mxu0
    %v8587 = vadd.f32 0.0, %v8586
    %v8588 = vpop.f32.mrb[0].mxu0
    %v8589 = vpop.f32.mrb[0].mxu0
    %v8590 = vadd.f32 0.0, %v8589
    %v8591 = vpop.f32.mrb[0].mxu0
    %8592 = vmatprep.mubr.bf16.mxu0 0
    %8593 = vmatmul.mubr.bf16.gmra.mrb[0].mxu0 %v8449
    %v8594 = vpop.f32.mrb[0].mxu0
    %v8595 = vadd.f32 0.0, %v8594
    %v8596 = vpop.f32.mrb[0].mxu0
    %v8597 = vpop.f32.mrb[0].mxu0
    %v8598 = vadd.f32 0.0, %v8597
    %v8599 = vpop.f32.mrb[0].mxu0
    %8600 = vmatprep.mubr.bf16.mxu0 0
    %8601 = vmatmul.mubr.bf16.gmra.mrb[0].mxu0 %v8450
    %v8602 = vpop.f32.mrb[0].mxu0
    %v8603 = vadd.f32 0.0, %v8602
    %v8604 = vpop.f32.mrb[0].mxu0
    %v8605 = vpop.f32.mrb[0].mxu0
    %v8606 = vadd.f32 0.0, %v8605
    %v8607 = vpop.f32.mrb[0].mxu0
    %8608 = vmatprep.mubr.bf16.mxu0 0
    %8609 = vmatmul.mubr.bf16.gmra.mrb[0].mxu0 %v8451
    %v8610 = vpop.f32.mrb[0].mxu0
    %v8611 = vadd.f32 0.0, %v8610
    %v8612 = vpop.f32.mrb[0].mxu0
    %v8613 = vpop.f32.mrb[0].mxu0
    %v8614 = vadd.f32 0.0, %v8613
    %v8615 = vpop.f32.mrb[0].mxu0
    %8616 = vmatprep.mubr.bf16.mxu0 0
    %8617 = vmatmul.mubr.bf16.gmra.mrb[0].mxu0 %v8452
    %v8618 = vpop.f32.mrb[0].mxu0
    %v8619 = vadd.f32 0.0, %v8618
    %v8620 = vpop.f32.mrb[0].mxu0
    %v8621 = vpop.f32.mrb[0].mxu0
    %v8622 = vadd.f32 0.0, %v8621
    %v8623 = vpop.f32.mrb[0].mxu0
    %8624 = vmatprep.mubr.bf16.mxu0 0
    %8625 = vmatmul.mubr.bf16.gmra.mrb[0].mxu0 %v8453
    %v8626 = vpop.f32.mrb[0].mxu0
    %v8627 = vadd.f32 0.0, %v8626
    %v8628 = vpop.f32.mrb[0].mxu0
    %v8629 = vpop.f32.mrb[0].mxu0
    %v8630 = vadd.f32 0.0, %v8629
    %v8631 = vpop.f32.mrb[0].mxu0
    %8632 = vmatprep.mubr.bf16.mxu0 0
    %8633 = vmatmul.mubr.bf16.gmra.mrb[0].mxu0 %v8454
    %v8634 = vpop.f32.mrb[0].mxu0
    %v8635 = vadd.f32 0.0, %v8634
    %v8636 = vpop.f32.mrb[0].mxu0
    %v8637 = vpop.f32.mrb[0].mxu0
    %v8638 = vadd.f32 0.0, %v8637
    %v8639 = vpop.f32.mrb[0].mxu0
    %8640 = vmatprep.mubr.bf16.mxu0 0
    %8641 = vmatmul.mubr.bf16.gmra.mrb[0].mxu0 %v8455
    %v8642 = vpop.f32.mrb[0].mxu0
    %v8643 = vadd.f32 0.0, %v8642
    %v8644 = vpop.f32.mrb[0].mxu0
    %v8645 = vpop.f32.mrb[0].mxu0
    %v8646 = vadd.f32 0.0, %v8645
    %v8647 = vpop.f32.mrb[0].mxu0
    %8648 = vmatprep.mubr.bf16.mxu0 0
    %8649 = vmatmul.mubr.bf16.gmra.mrb[0].mxu0 %v8456
    %v8650 = vpop.f32.mrb[0].mxu0
    %v8651 = vadd.f32 0.0, %v8650
    %v8652 = vpop.f32.mrb[0].mxu0
    %v8653 = vpop.f32.mrb[0].mxu0
    %v8654 = vadd.f32 0.0, %v8653
    %v8655 = vpop.f32.mrb[0].mxu0
    %8656 = vmatprep.mubr.bf16.mxu0 0
    %8657 = vmatmul.mubr.bf16.gmra.mrb[0].mxu0 %v8457
    %v8658 = vpop.f32.mrb[0].mxu0
    %v8659 = vadd.f32 0.0, %v8658
    %v8660 = vpop.f32.mrb[0].mxu0
    %v8661 = vpop.f32.mrb[0].mxu0
    %v8662 = vadd.f32 0.0, %v8661
    %v8663 = vpop.f32.mrb[0].mxu0
    %8664 = vmatprep.mubr.bf16.mxu0 0
    %8665 = vmatmul.mubr.bf16.gmra.mrb[0].mxu0 %v8458
    %v8666 = vpop.f32.mrb[0].mxu0
    %v8667 = vadd.f32 0.0, %v8666
    %v8668 = vpop.f32.mrb[0].mxu0
    %v8669 = vpop.f32.mrb[0].mxu0
    %v8670 = vadd.f32 0.0, %v8669
    %v8671 = vpop.f32.mrb[0].mxu0
    %8672 = vmatprep.mubr.bf16.mxu0 0
    %8673 = vmatmul.mubr.bf16.gmra.mrb[0].mxu0 %v8459
    %v8674 = vpop.f32.mrb[0].mxu0
    %v8675 = vadd.f32 0.0, %v8674
    %v8676 = vpop.f32.mrb[0].mxu0
    %v8677 = vpop.f32.mrb[0].mxu0
    %v8678 = vadd.f32 0.0, %v8677
    %v8679 = vpop.f32.mrb[0].mxu0
    %8680 = vmatprep.mubr.bf16.mxu0 0
    %8681 = vmatmul.mubr.bf16.gmra.mrb[0].mxu0 %v8460
    %v8682 = vpop.f32.mrb[0].mxu0
    %v8683 = vadd.f32 0.0, %v8682
    %v8684 = vpop.f32.mrb[0].mxu0
    %v8685 = vpop.f32.mrb[0].mxu0
    %v8686 = vadd.f32 0.0, %v8685
    %v8687 = vpop.f32.mrb[0].mxu0
    %8688 = vmatprep.mubr.bf16.mxu0 0
    %8689 = vmatmul.mubr.bf16.gmra.mrb[0].mxu0 %v8461
    %v8690 = vpop.f32.mrb[0].mxu0
    %v8691 = vadd.f32 0.0, %v8690
    %v8692 = vpop.f32.mrb[0].mxu0
    %v8693 = vpop.f32.mrb[0].mxu0
    %v8694 = vadd.f32 0.0, %v8693
    %v8695 = vpop.f32.mrb[0].mxu0
    %8696 = vmatprep.mubr.bf16.mxu0 0
    %8697 = vmatmul.mubr.bf16.gmra.mrb[0].mxu0 %v8462
    %v8698 = vpop.f32.mrb[0].mxu0
    %v8699 = vadd.f32 0.0, %v8698
    %v8700 = vpop.f32.mrb[0].mxu0
    %v8701 = vpop.f32.mrb[0].mxu0
    %v8702 = vadd.f32 0.0, %v8701
    %v8703 = vpop.f32.mrb[0].mxu0
    %8704 = vmatprep.mubr.bf16.mxu0 0
    %8705 = vmatmul.mubr.bf16.gmra.mrb[0].mxu0 %v8463
    %v8706 = vpop.f32.mrb[0].mxu0
    %v8707 = vadd.f32 0.0, %v8706
    %v8708 = vpop.f32.mrb[0].mxu0
    %v8709 = vpop.f32.mrb[0].mxu0
    %v8710 = vadd.f32 0.0, %v8709
    %v8711 = vpop.f32.mrb[0].mxu0
    %8712 = vmatprep.mubr.bf16.mxu0 0
    %8713 = vmatmul.mubr.bf16.gmra.mrb[0].mxu0 %v8464
    %v8714 = vpop.f32.mrb[0].mxu0
    %v8715 = vadd.f32 0.0, %v8714
    %v8716 = vpop.f32.mrb[0].mxu0
    %v8717 = vpop.f32.mrb[0].mxu0
    %v8718 = vadd.f32 0.0, %v8717
    %v8719 = vpop.f32.mrb[0].mxu0
    %8720 = vmatprep.mubr.bf16.mxu0 0
    %8721 = vmatmul.mubr.bf16.gmra.mrb[0].mxu0 %v8465
    %v8722 = vpop.f32.mrb[0].mxu0
    %v8723 = vadd.f32 0.0, %v8722
    %v8724 = vpop.f32.mrb[0].mxu0
    %v8725 = vpop.f32.mrb[0].mxu0
    %v8726 = vadd.f32 0.0, %v8725
    %v8727 = vpop.f32.mrb[0].mxu0
    %8728 = vmatprep.mubr.bf16.mxu0 0
    %8729 = vmatmul.mubr.bf16.gmra.mrb[0].mxu0 %v8466
    %v8730 = vpop.f32.mrb[0].mxu0
    %v8731 = vadd.f32 0.0, %v8730
    %v8732 = vpop.f32.mrb[0].mxu0
    %v8733 = vpop.f32.mrb[0].mxu0
    %v8734 = vadd.f32 0.0, %v8733
    %v8735 = vpop.f32.mrb[0].mxu0
    %8736 = vmatprep.mubr.bf16.mxu0 0
    %8737 = vmatmul.mubr.bf16.gmra.mrb[0].mxu0 %v8467
    %v8738 = vpop.f32.mrb[0].mxu0
    %v8739 = vadd.f32 0.0, %v8738
    %v8740 = vpop.f32.mrb[0].mxu0
    %v8741 = vpop.f32.mrb[0].mxu0
    %v8742 = vadd.f32 0.0, %v8741
    %v8743 = vpop.f32.mrb[0].mxu0
    %8744 = vmatprep.mubr.bf16.mxu0 0
    %8745 = vmatmul.mubr.bf16.gmra.mrb[0].mxu0 %v8468
    %v8746 = vpop.f32.mrb[0].mxu0
    %v8747 = vadd.f32 0.0, %v8746
    %v8748 = vpop.f32.mrb[0].mxu0
    %v8749 = vpop.f32.mrb[0].mxu0
    %v8750 = vadd.f32 0.0, %v8749
    %v8751 = vpop.f32.mrb[0].mxu0
    %8752 = vmatprep.mubr.bf16.mxu0 0
    %8753 = vmatmul.mubr.bf16.gmra.mrb[0].mxu0 %v8469
    %v8754 = vpop.f32.mrb[0].mxu0
    %v8755 = vadd.f32 0.0, %v8754
    %v8756 = vpop.f32.mrb[0].mxu0
    %v8757 = vpop.f32.mrb[0].mxu0
    %v8758 = vadd.f32 0.0, %v8757
    %v8759 = vpop.f32.mrb[0].mxu0
    %8760 = vmatprep.mubr.bf16.mxu0 0
    %8761 = vmatmul.mubr.bf16.gmra.mrb[0].mxu0 %v8470
    %v8762 = vpop.f32.mrb[0].mxu0
    %v8763 = vadd.f32 0.0, %v8762
    %v8764 = vpop.f32.mrb[0].mxu0
    %v8765 = vpop.f32.mrb[0].mxu0
    %v8766 = vadd.f32 0.0, %v8765
    %v8767 = vpop.f32.mrb[0].mxu0
    %8768 = vmatprep.mubr.bf16.mxu0 0
    %8769 = vmatmul.mubr.bf16.gmra.mrb[0].mxu0 %v8471
    %v8770 = vpop.f32.mrb[0].mxu0
    %v8771 = vadd.f32 0.0, %v8770
    %v8772 = vpop.f32.mrb[0].mxu0
    %v8773 = vpop.f32.mrb[0].mxu0
    %v8774 = vadd.f32 0.0, %v8773
    %v8775 = vpop.f32.mrb[0].mxu0
    %8776 = vmatprep.mubr.bf16.mxu0 0
    %8777 = vmatmul.mubr.bf16.gmra.mrb[0].mxu0 %v8472
    %v8778 = vpop.f32.mrb[0].mxu0
    %v8779 = vadd.f32 0.0, %v8778
    %v8780 = vpop.f32.mrb[0].mxu0
    %v8781 = vpop.f32.mrb[0].mxu0
    %v8782 = vadd.f32 0.0, %v8781
    %v8783 = vpop.f32.mrb[0].mxu0
    %8784 = vmatprep.mubr.bf16.mxu0 0
    %8785 = vmatmul.mubr.bf16.gmra.mrb[0].mxu0 %v8473
    %v8786 = vpop.f32.mrb[0].mxu0
    %v8787 = vadd.f32 0.0, %v8786
    %v8788 = vpop.f32.mrb[0].mxu0
    %v8789 = vpop.f32.mrb[0].mxu0
    %v8790 = vadd.f32 0.0, %v8789
    %v8791 = vpop.f32.mrb[0].mxu0
    %8792 = vmatprep.mubr.bf16.mxu0 0
    %8793 = vmatmul.mubr.bf16.gmra.mrb[0].mxu0 %v8474
    %v8794 = vpop.f32.mrb[0].mxu0
    %v8795 = vadd.f32 0.0, %v8794
    %v8796 = vpop.f32.mrb[0].mxu0
    %v8797 = vpop.f32.mrb[0].mxu0
    %v8798 = vadd.f32 0.0, %v8797
    %v8799 = vpop.f32.mrb[0].mxu0
    %8800 = vmatprep.mubr.bf16.mxu0 0
    %8801 = vmatmul.mubr.bf16.gmra.mrb[0].mxu0 %v8475
    %v8802 = vpop.f32.mrb[0].mxu0
    %v8803 = vadd.f32 0.0, %v8802
    %v8804 = vpop.f32.mrb[0].mxu0
    %v8805 = vpop.f32.mrb[0].mxu0
    %v8806 = vadd.f32 0.0, %v8805
    %v8807 = vpop.f32.mrb[0].mxu0
    %8808 = vmatprep.mubr.bf16.mxu0 0
    %8809 = vmatmul.mubr.bf16.gmra.mrb[0].mxu0 %v8476
    %v8810 = vpop.f32.mrb[0].mxu0
    %v8811 = vadd.f32 0.0, %v8810
    %v8812 = vpop.f32.mrb[0].mxu0
    %v8813 = vpop.f32.mrb[0].mxu0
    %v8814 = vadd.f32 0.0, %v8813
    %v8815 = vpop.f32.mrb[0].mxu0
    %8816 = vmatprep.mubr.bf16.mxu0 0
    %8817 = vmatmul.mubr.bf16.gmra.mrb[0].mxu0 %v8477
    %v8818 = vpop.f32.mrb[0].mxu0
    %v8819 = vadd.f32 0.0, %v8818
    %v8820 = vpop.f32.mrb[0].mxu0
    %v8821 = vpop.f32.mrb[0].mxu0
    %v8822 = vadd.f32 0.0, %v8821
    %v8823 = vpop.f32.mrb[0].mxu0
    %8824 = vmatprep.mubr.bf16.mxu0 0
    %8825 = vmatmul.mubr.bf16.gmra.mrb[0].mxu0 %v8478
    %v8826 = vpop.f32.mrb[0].mxu0
    %v8827 = vadd.f32 0.0, %v8826
    %v8828 = vpop.f32.mrb[0].mxu0
    %v8829 = vpop.f32.mrb[0].mxu0
    %v8830 = vadd.f32 0.0, %v8829
    %v8831 = vpop.f32.mrb[0].mxu0
    %8832 = vdwg.mxu0
    %v8833 = vadd.f32 %v8319, %v8579
    %v8834 = vadd.f32 %v8320, %v8582
    %v8835 = vadd.f32 %v8321, %v8587
    %v8836 = vadd.f32 %v8322, %v8590
    %v8837 = vadd.f32 %v8323, %v8595
    %v8838 = vadd.f32 %v8324, %v8598
    %v8839 = vadd.f32 %v8325, %v8603
    %v8840 = vadd.f32 %v8326, %v8606
    %v8841 = vadd.f32 %v8327, %v8611
    %v8842 = vadd.f32 %v8328, %v8614
    %v8843 = vadd.f32 %v8329, %v8619
    %v8844 = vadd.f32 %v8330, %v8622
    %v8845 = vadd.f32 %v8331, %v8627
    %v8846 = vadd.f32 %v8332, %v8630
    %v8847 = vadd.f32 %v8333, %v8635
    %v8848 = vadd.f32 %v8334, %v8638
    %v8849 = vadd.f32 %v8335, %v8643
    %v8850 = vadd.f32 %v8336, %v8646
    %v8851 = vadd.f32 %v8337, %v8651
    %v8852 = vadd.f32 %v8338, %v8654
    %v8853 = vadd.f32 %v8339, %v8659
    %v8854 = vadd.f32 %v8340, %v8662
    %v8855 = vadd.f32 %v8341, %v8667
    %v8856 = vadd.f32 %v8342, %v8670
    %v8857 = vadd.f32 %v8343, %v8675
    %v8858 = vadd.f32 %v8344, %v8678
    %v8859 = vadd.f32 %v8345, %v8683
    %v8860 = vadd.f32 %v8346, %v8686
    %v8861 = vadd.f32 %v8347, %v8691
    %v8862 = vadd.f32 %v8348, %v8694
    %v8863 = vadd.f32 %v8349, %v8699
    %v8864 = vadd.f32 %v8350, %v8702
    %v8865 = vadd.f32 %v8351, %v8707
    %v8866 = vadd.f32 %v8352, %v8710
    %v8867 = vadd.f32 %v8353, %v8715
    %v8868 = vadd.f32 %v8354, %v8718
    %v8869 = vadd.f32 %v8355, %v8723
    %v8870 = vadd.f32 %v8356, %v8726
    %v8871 = vadd.f32 %v8357, %v8731
    %v8872 = vadd.f32 %v8358, %v8734
    %v8873 = vadd.f32 %v8359, %v8739
    %v8874 = vadd.f32 %v8360, %v8742
    %v8875 = vadd.f32 %v8361, %v8747
    %v8876 = vadd.f32 %v8362, %v8750
    %v8877 = vadd.f32 %v8363, %v8755
    %v8878 = vadd.f32 %v8364, %v8758
    %v8879 = vadd.f32 %v8365, %v8763
    %v8880 = vadd.f32 %v8366, %v8766
    %v8881 = vadd.f32 %v8367, %v8771
    %v8882 = vadd.f32 %v8368, %v8774
    %v8883 = vadd.f32 %v8369, %v8779
    %v8884 = vadd.f32 %v8370, %v8782
    %v8885 = vadd.f32 %v8371, %v8787
    %v8886 = vadd.f32 %v8372, %v8790
    %v8887 = vadd.f32 %v8373, %v8795
    %v8888 = vadd.f32 %v8374, %v8798
    %v8889 = vadd.f32 %v8375, %v8803
    %v8890 = vadd.f32 %v8376, %v8806
    %v8891 = vadd.f32 %v8377, %v8811
    %v8892 = vadd.f32 %v8378, %v8814
    %v8893 = vadd.f32 %v8379, %v8819
    %v8894 = vadd.f32 %v8380, %v8822
    %v8895 = vadd.f32 %v8381, %v8827
    %v8896 = vadd.f32 %v8382, %v8830
    %v8897 = vld [vmem:[%s6391 + $0x2] sm:$0xff]
    %v8898 = vld [vmem:[%s6391 + $0xa] sm:$0xff]
    %v8899 = vld [vmem:[%s6391 + $0x1a] sm:$0xff]
    %v8900 = vld [vmem:[%s6391 + $0x22] sm:$0xff]
    %v8901 = vld [vmem:[%s6391 + $0x32] sm:$0xff]
    %v8902 = vld [vmem:[%s6391 + $0x3a] sm:$0xff]
    %v8903 = vld [vmem:[%s6391 + $0x4a] sm:$0xff]
    %v8904 = vld [vmem:[%s6391 + $0x52] sm:$0xff]
    %v8905 = vld [vmem:[%s6391 + $0x62] sm:$0xff]
    %v8906 = vld [vmem:[%s6391 + $0x6a] sm:$0xff]
    %v8907 = vld [vmem:[%s6391 + $0x7a] sm:$0xff]
    %v8908 = vld [vmem:[%s6391 + $0x82] sm:$0xff]
    %v8909 = vld [vmem:[%s6391 + $0x92] sm:$0xff]
    %v8910 = vld [vmem:[%s6391 + $0x9a] sm:$0xff]
    %v8911 = vld [vmem:[%s6391 + $0xaa] sm:$0xff]
    %v8912 = vld [vmem:[%s6391 + $0xb2] sm:$0xff]
    %v8913 = vld [vmem:[%s6391 + $0xc2] sm:$0xff]
    %v8914 = vld [vmem:[%s6391 + $0xca] sm:$0xff]
    %v8915 = vld [vmem:[%s6391 + $0xda] sm:$0xff]
    %v8916 = vld [vmem:[%s6391 + $0xe2] sm:$0xff]
    %v8917 = vld [vmem:[%s6391 + $0xf2] sm:$0xff]
    %v8918 = vld [vmem:[%s6391 + $0xfa] sm:$0xff]
    %v8919 = vld [vmem:[%s6391 + $0x10a] sm:$0xff]
    %v8920 = vld [vmem:[%s6391 + $0x112] sm:$0xff]
    %v8921 = vld [vmem:[%s6391 + $0x122] sm:$0xff]
    %v8922 = vld [vmem:[%s6391 + $0x12a] sm:$0xff]
    %v8923 = vld [vmem:[%s6391 + $0x13a] sm:$0xff]
    %v8924 = vld [vmem:[%s6391 + $0x142] sm:$0xff]
    %v8925 = vld [vmem:[%s6391 + $0x152] sm:$0xff]
    %v8926 = vld [vmem:[%s6391 + $0x15a] sm:$0xff]
    %v8927 = vld [vmem:[%s6391 + $0x16a] sm:$0xff]
    %v8928 = vld [vmem:[%s6391 + $0x172] sm:$0xff]
    %v8929 = vld [vmem:[%s6391 + $0x1b2] sm:$0xff]
    %v8930 = vld [vmem:[%s6391 + $0x1ba] sm:$0xff]
    %v8931 = vld [vmem:[%s6391 + $0x1ca] sm:$0xff]
    %v8932 = vld [vmem:[%s6391 + $0x1d2] sm:$0xff]
    %v8933 = vld [vmem:[%s6391 + $0x1e2] sm:$0xff]
    %v8934 = vld [vmem:[%s6391 + $0x1ea] sm:$0xff]
    %v8935 = vld [vmem:[%s6391 + $0x1fa] sm:$0xff]
    %v8936 = vld [vmem:[%s6391 + $0x202] sm:$0xff]
    %v8937 = vld [vmem:[%s6391 + $0x212] sm:$0xff]
    %v8938 = vld [vmem:[%s6391 + $0x21a] sm:$0xff]
    %v8939 = vld [vmem:[%s6391 + $0x22a] sm:$0xff]
    %v8940 = vld [vmem:[%s6391 + $0x232] sm:$0xff]
    %v8941 = vld [vmem:[%s6391 + $0x242] sm:$0xff]
    %v8942 = vld [vmem:[%s6391 + $0x24a] sm:$0xff]
    %v8943 = vld [vmem:[%s6391 + $0x25a] sm:$0xff]
    %v8944 = vld [vmem:[%s6391 + $0x262] sm:$0xff]
    %v8945 = vld [vmem:[%s6391 + $0x272] sm:$0xff]
    %v8946 = vld [vmem:[%s6391 + $0x27a] sm:$0xff]
    %v8947 = vld [vmem:[%s6391 + $0x28a] sm:$0xff]
    %v8948 = vld [vmem:[%s6391 + $0x292] sm:$0xff]
    %v8949 = vld [vmem:[%s6391 + $0x2a2] sm:$0xff]
    %v8950 = vld [vmem:[%s6391 + $0x2aa] sm:$0xff]
    %v8951 = vld [vmem:[%s6391 + $0x2ba] sm:$0xff]
    %v8952 = vld [vmem:[%s6391 + $0x2c2] sm:$0xff]
    %v8953 = vld [vmem:[%s6391 + $0x2d2] sm:$0xff]
    %v8954 = vld [vmem:[%s6391 + $0x2da] sm:$0xff]
    %v8955 = vld [vmem:[%s6391 + $0x2ea] sm:$0xff]
    %v8956 = vld [vmem:[%s6391 + $0x2f2] sm:$0xff]
    %v8957 = vld [vmem:[%s6391 + $0x302] sm:$0xff]
    %v8958 = vld [vmem:[%s6391 + $0x30a] sm:$0xff]
    %v8959 = vld [vmem:[%s6391 + $0x31a] sm:$0xff]
    %v8960 = vld [vmem:[%s6391 + $0x322] sm:$0xff]
    %v8961 = vpack.c.bf16 %v8898, %v8897
    %v8962 = vpack.c.bf16 %v8900, %v8899
    %v8963 = vpack.c.bf16 %v8902, %v8901
    %v8964 = vpack.c.bf16 %v8904, %v8903
    %v8965 = vpack.c.bf16 %v8906, %v8905
    %v8966 = vpack.c.bf16 %v8908, %v8907
    %v8967 = vpack.c.bf16 %v8910, %v8909
    %v8968 = vpack.c.bf16 %v8912, %v8911
    %v8969 = vpack.c.bf16 %v8914, %v8913
    %v8970 = vpack.c.bf16 %v8916, %v8915
    %v8971 = vpack.c.bf16 %v8918, %v8917
    %v8972 = vpack.c.bf16 %v8920, %v8919
    %v8973 = vpack.c.bf16 %v8922, %v8921
    %v8974 = vpack.c.bf16 %v8924, %v8923
    %v8975 = vpack.c.bf16 %v8926, %v8925
    %v8976 = vpack.c.bf16 %v8928, %v8927
    %v8977 = vpack.c.bf16 %v8930, %v8929
    %v8978 = vpack.c.bf16 %v8932, %v8931
    %v8979 = vpack.c.bf16 %v8934, %v8933
    %v8980 = vpack.c.bf16 %v8936, %v8935
    %v8981 = vpack.c.bf16 %v8938, %v8937
    %v8982 = vpack.c.bf16 %v8940, %v8939
    %v8983 = vpack.c.bf16 %v8942, %v8941
    %v8984 = vpack.c.bf16 %v8944, %v8943
    %v8985 = vpack.c.bf16 %v8946, %v8945
    %v8986 = vpack.c.bf16 %v8948, %v8947
    %v8987 = vpack.c.bf16 %v8950, %v8949
    %v8988 = vpack.c.bf16 %v8952, %v8951
    %v8989 = vpack.c.bf16 %v8954, %v8953
    %v8990 = vpack.c.bf16 %v8956, %v8955
    %v8991 = vpack.c.bf16 %v8958, %v8957
    %v8992 = vpack.c.bf16 %v8960, %v8959
    %s8993 = scalar_lea.vmem [#allocation11], 320
    %v8994 = vld [vmem:[%s8993] sm:$0xf]
    %v8995 = vld [vmem:[%s8993 + $0x4] sm:$0xf]
    %v8996 = vld [vmem:[%s8993 + $0x8] sm:$0xf]
    %v8997 = vld [vmem:[%s8993 + $0xc] sm:$0xf]
    %v8998 = vld [vmem:[%s8993 + $0x10] sm:$0xf]
    %v8999 = vld [vmem:[%s8993 + $0x14] sm:$0xf]
    %v9000 = vld [vmem:[%s8993 + $0x18] sm:$0xf]
    %v9001 = vld [vmem:[%s8993 + $0x1c] sm:$0xf]
    %v9002 = vld [vmem:[%s8993 + $0x20] sm:$0xf]
    %v9003 = vld [vmem:[%s8993 + $0x24] sm:$0xf]
    %v9004 = vld [vmem:[%s8993 + $0x28] sm:$0xf]
    %v9005 = vld [vmem:[%s8993 + $0x2c] sm:$0xf]
    %v9006 = vld [vmem:[%s8993 + $0x30] sm:$0xf]
    %v9007 = vld [vmem:[%s8993 + $0x34] sm:$0xf]
    %v9008 = vld [vmem:[%s8993 + $0x38] sm:$0xf]
    %v9009 = vld [vmem:[%s8993 + $0x3c] sm:$0xf]
    %v9026 = vunpack.c.l.b16 %v8994
    %v9027 = vunpack.c.l.b16 %v8995
    %v9028 = vunpack.c.l.b16 %v8996
    %v9029 = vunpack.c.l.b16 %v8997
    %v9030 = vunpack.c.l.b16 %v8998
    %v9031 = vunpack.c.l.b16 %v8999
    %v9032 = vunpack.c.l.b16 %v9000
    %v9033 = vunpack.c.l.b16 %v9001
    %v9034 = vunpack.c.l.b16 %v9002
    %v9035 = vunpack.c.l.b16 %v9003
    %v9036 = vunpack.c.l.b16 %v9004
    %v9037 = vunpack.c.l.b16 %v9005
    %v9038 = vunpack.c.l.b16 %v9006
    %v9039 = vunpack.c.l.b16 %v9007
    %v9040 = vunpack.c.l.b16 %v9008
    %v9041 = vunpack.c.l.b16 %v9009
    %v9042 = vpack.c.b16 %v9027, %v9026
    %v9043 = vpack.c.b16 %v9029, %v9028
    %v9044 = vpack.c.b16 %v9031, %v9030
    %v9045 = vpack.c.b16 %v9033, %v9032
    %v9046 = vpack.c.b16 %v9035, %v9034
    %v9047 = vpack.c.b16 %v9037, %v9036
    %v9048 = vpack.c.b16 %v9039, %v9038
    %v9049 = vpack.c.b16 %v9041, %v9040
    %9058 = vmatprep.subr.bf16.mxu0 0
    %9059 = vmatpush1.bf16.msra.mxu0 %v9042
    %9060 = vmatprep.subr.bf16.mxu0 0
    %9061 = vmatpush1.bf16.msra.mxu0 %v9043
    %9062 = vmatprep.subr.bf16.mxu0 0
    %9063 = vmatpush1.bf16.msra.mxu0 %v9044
    %9064 = vmatprep.subr.bf16.mxu0 0
    %9065 = vmatpush1.bf16.msra.mxu0 %v9045
    %9066 = vmatprep.subr.bf16.mxu0 0
    %9067 = vmatpush1.bf16.msra.mxu0 %v9046
    %9068 = vmatprep.subr.bf16.mxu0 0
    %9069 = vmatpush1.bf16.msra.mxu0 %v9047
    %9070 = vmatprep.subr.bf16.mxu0 0
    %9071 = vmatpush1.bf16.msra.mxu0 %v9048
    %9072 = vmatprep.subr.bf16.mxu0 0
    %9073 = vmatpush1.bf16.msra.mxu0 %v9049
    %9074 = vmatprep.subr.bf16.mxu0 0
    %9075 = vmatpush1.bf16.msra.mxu0 0
    %9076 = vmatprep.subr.bf16.mxu0 0
    %9077 = vmatpush1.bf16.msra.mxu0 0
    %9078 = vmatprep.subr.bf16.mxu0 0
    %9079 = vmatpush1.bf16.msra.mxu0 0
    %9080 = vmatprep.subr.bf16.mxu0 0
    %9081 = vmatpush1.bf16.msra.mxu0 0
    %9082 = vmatprep.subr.bf16.mxu0 0
    %9083 = vmatpush1.bf16.msra.mxu0 0
    %9084 = vmatprep.subr.bf16.mxu0 0
    %9085 = vmatpush1.bf16.msra.mxu0 0
    %9086 = vmatprep.subr.bf16.mxu0 0
    %9087 = vmatpush1.bf16.msra.mxu0 0
    %9088 = vmatprep.subr.bf16.mxu0 0
    %9089 = vmatpush1.bf16.msra.mxu0 0
    %9090 = vmatprep.mubr.bf16.mxu0 0
    %9091 = vmatmul.mubr.bf16.gmra.mrb[0].mxu0 %v8961
    %v9092 = vpop.f32.mrb[0].mxu0
    %v9093 = vadd.f32 0.0, %v9092
    %v9094 = vpop.f32.mrb[0].mxu0
    %v9095 = vpop.f32.mrb[0].mxu0
    %v9096 = vadd.f32 0.0, %v9095
    %v9097 = vpop.f32.mrb[0].mxu0
    %9098 = vmatprep.mubr.bf16.mxu0 0
    %9099 = vmatmul.mubr.bf16.gmra.mrb[0].mxu0 %v8962
    %v9100 = vpop.f32.mrb[0].mxu0
    %v9101 = vadd.f32 0.0, %v9100
    %v9102 = vpop.f32.mrb[0].mxu0
    %v9103 = vpop.f32.mrb[0].mxu0
    %v9104 = vadd.f32 0.0, %v9103
    %v9105 = vpop.f32.mrb[0].mxu0
    %9106 = vmatprep.mubr.bf16.mxu0 0
    %9107 = vmatmul.mubr.bf16.gmra.mrb[0].mxu0 %v8963
    %v9108 = vpop.f32.mrb[0].mxu0
    %v9109 = vadd.f32 0.0, %v9108
    %v9110 = vpop.f32.mrb[0].mxu0
    %v9111 = vpop.f32.mrb[0].mxu0
    %v9112 = vadd.f32 0.0, %v9111
    %v9113 = vpop.f32.mrb[0].mxu0
    %9114 = vmatprep.mubr.bf16.mxu0 0
    %9115 = vmatmul.mubr.bf16.gmra.mrb[0].mxu0 %v8964
    %v9116 = vpop.f32.mrb[0].mxu0
    %v9117 = vadd.f32 0.0, %v9116
    %v9118 = vpop.f32.mrb[0].mxu0
    %v9119 = vpop.f32.mrb[0].mxu0
    %v9120 = vadd.f32 0.0, %v9119
    %v9121 = vpop.f32.mrb[0].mxu0
    %9122 = vmatprep.mubr.bf16.mxu0 0
    %9123 = vmatmul.mubr.bf16.gmra.mrb[0].mxu0 %v8965
    %v9124 = vpop.f32.mrb[0].mxu0
    %v9125 = vadd.f32 0.0, %v9124
    %v9126 = vpop.f32.mrb[0].mxu0
    %v9127 = vpop.f32.mrb[0].mxu0
    %v9128 = vadd.f32 0.0, %v9127
    %v9129 = vpop.f32.mrb[0].mxu0
    %9130 = vmatprep.mubr.bf16.mxu0 0
    %9131 = vmatmul.mubr.bf16.gmra.mrb[0].mxu0 %v8966
    %v9132 = vpop.f32.mrb[0].mxu0
    %v9133 = vadd.f32 0.0, %v9132
    %v9134 = vpop.f32.mrb[0].mxu0
    %v9135 = vpop.f32.mrb[0].mxu0
    %v9136 = vadd.f32 0.0, %v9135
    %v9137 = vpop.f32.mrb[0].mxu0
    %9138 = vmatprep.mubr.bf16.mxu0 0
    %9139 = vmatmul.mubr.bf16.gmra.mrb[0].mxu0 %v8967
    %v9140 = vpop.f32.mrb[0].mxu0
    %v9141 = vadd.f32 0.0, %v9140
    %v9142 = vpop.f32.mrb[0].mxu0
    %v9143 = vpop.f32.mrb[0].mxu0
    %v9144 = vadd.f32 0.0, %v9143
    %v9145 = vpop.f32.mrb[0].mxu0
    %9146 = vmatprep.mubr.bf16.mxu0 0
    %9147 = vmatmul.mubr.bf16.gmra.mrb[0].mxu0 %v8968
    %v9148 = vpop.f32.mrb[0].mxu0
    %v9149 = vadd.f32 0.0, %v9148
    %v9150 = vpop.f32.mrb[0].mxu0
    %v9151 = vpop.f32.mrb[0].mxu0
    %v9152 = vadd.f32 0.0, %v9151
    %v9153 = vpop.f32.mrb[0].mxu0
    %9154 = vmatprep.mubr.bf16.mxu0 0
    %9155 = vmatmul.mubr.bf16.gmra.mrb[0].mxu0 %v8969
    %v9156 = vpop.f32.mrb[0].mxu0
    %v9157 = vadd.f32 0.0, %v9156
    %v9158 = vpop.f32.mrb[0].mxu0
    %v9159 = vpop.f32.mrb[0].mxu0
    %v9160 = vadd.f32 0.0, %v9159
    %v9161 = vpop.f32.mrb[0].mxu0
    %9162 = vmatprep.mubr.bf16.mxu0 0
    %9163 = vmatmul.mubr.bf16.gmra.mrb[0].mxu0 %v8970
    %v9164 = vpop.f32.mrb[0].mxu0
    %v9165 = vadd.f32 0.0, %v9164
    %v9166 = vpop.f32.mrb[0].mxu0
    %v9167 = vpop.f32.mrb[0].mxu0
    %v9168 = vadd.f32 0.0, %v9167
    %v9169 = vpop.f32.mrb[0].mxu0
    %9170 = vmatprep.mubr.bf16.mxu0 0
    %9171 = vmatmul.mubr.bf16.gmra.mrb[0].mxu0 %v8971
    %v9172 = vpop.f32.mrb[0].mxu0
    %v9173 = vadd.f32 0.0, %v9172
    %v9174 = vpop.f32.mrb[0].mxu0
    %v9175 = vpop.f32.mrb[0].mxu0
    %v9176 = vadd.f32 0.0, %v9175
    %v9177 = vpop.f32.mrb[0].mxu0
    %9178 = vmatprep.mubr.bf16.mxu0 0
    %9179 = vmatmul.mubr.bf16.gmra.mrb[0].mxu0 %v8972
    %v9180 = vpop.f32.mrb[0].mxu0
    %v9181 = vadd.f32 0.0, %v9180
    %v9182 = vpop.f32.mrb[0].mxu0
    %v9183 = vpop.f32.mrb[0].mxu0
    %v9184 = vadd.f32 0.0, %v9183
    %v9185 = vpop.f32.mrb[0].mxu0
    %9186 = vmatprep.mubr.bf16.mxu0 0
    %9187 = vmatmul.mubr.bf16.gmra.mrb[0].mxu0 %v8973
    %v9188 = vpop.f32.mrb[0].mxu0
    %v9189 = vadd.f32 0.0, %v9188
    %v9190 = vpop.f32.mrb[0].mxu0
    %v9191 = vpop.f32.mrb[0].mxu0
    %v9192 = vadd.f32 0.0, %v9191
    %v9193 = vpop.f32.mrb[0].mxu0
    %9194 = vmatprep.mubr.bf16.mxu0 0
    %9195 = vmatmul.mubr.bf16.gmra.mrb[0].mxu0 %v8974
    %v9196 = vpop.f32.mrb[0].mxu0
    %v9197 = vadd.f32 0.0, %v9196
    %v9198 = vpop.f32.mrb[0].mxu0
    %v9199 = vpop.f32.mrb[0].mxu0
    %v9200 = vadd.f32 0.0, %v9199
    %v9201 = vpop.f32.mrb[0].mxu0
    %9202 = vmatprep.mubr.bf16.mxu0 0
    %9203 = vmatmul.mubr.bf16.gmra.mrb[0].mxu0 %v8975
    %v9204 = vpop.f32.mrb[0].mxu0
    %v9205 = vadd.f32 0.0, %v9204
    %v9206 = vpop.f32.mrb[0].mxu0
    %v9207 = vpop.f32.mrb[0].mxu0
    %v9208 = vadd.f32 0.0, %v9207
    %v9209 = vpop.f32.mrb[0].mxu0
    %9210 = vmatprep.mubr.bf16.mxu0 0
    %9211 = vmatmul.mubr.bf16.gmra.mrb[0].mxu0 %v8976
    %v9212 = vpop.f32.mrb[0].mxu0
    %v9213 = vadd.f32 0.0, %v9212
    %v9214 = vpop.f32.mrb[0].mxu0
    %v9215 = vpop.f32.mrb[0].mxu0
    %v9216 = vadd.f32 0.0, %v9215
    %v9217 = vpop.f32.mrb[0].mxu0
    %9218 = vmatprep.mubr.bf16.mxu0 0
    %9219 = vmatmul.mubr.bf16.gmra.mrb[0].mxu0 %v8977
    %v9220 = vpop.f32.mrb[0].mxu0
    %v9221 = vadd.f32 0.0, %v9220
    %v9222 = vpop.f32.mrb[0].mxu0
    %v9223 = vpop.f32.mrb[0].mxu0
    %v9224 = vadd.f32 0.0, %v9223
    %v9225 = vpop.f32.mrb[0].mxu0
    %9226 = vmatprep.mubr.bf16.mxu0 0
    %9227 = vmatmul.mubr.bf16.gmra.mrb[0].mxu0 %v8978
    %v9228 = vpop.f32.mrb[0].mxu0
    %v9229 = vadd.f32 0.0, %v9228
    %v9230 = vpop.f32.mrb[0].mxu0
    %v9231 = vpop.f32.mrb[0].mxu0
    %v9232 = vadd.f32 0.0, %v9231
    %v9233 = vpop.f32.mrb[0].mxu0
    %9234 = vmatprep.mubr.bf16.mxu0 0
    %9235 = vmatmul.mubr.bf16.gmra.mrb[0].mxu0 %v8979
    %v9236 = vpop.f32.mrb[0].mxu0
    %v9237 = vadd.f32 0.0, %v9236
    %v9238 = vpop.f32.mrb[0].mxu0
    %v9239 = vpop.f32.mrb[0].mxu0
    %v9240 = vadd.f32 0.0, %v9239
    %v9241 = vpop.f32.mrb[0].mxu0
    %9242 = vmatprep.mubr.bf16.mxu0 0
    %9243 = vmatmul.mubr.bf16.gmra.mrb[0].mxu0 %v8980
    %v9244 = vpop.f32.mrb[0].mxu0
    %v9245 = vadd.f32 0.0, %v9244
    %v9246 = vpop.f32.mrb[0].mxu0
    %v9247 = vpop.f32.mrb[0].mxu0
    %v9248 = vadd.f32 0.0, %v9247
    %v9249 = vpop.f32.mrb[0].mxu0
    %9250 = vmatprep.mubr.bf16.mxu0 0
    %9251 = vmatmul.mubr.bf16.gmra.mrb[0].mxu0 %v8981
    %v9252 = vpop.f32.mrb[0].mxu0
    %v9253 = vadd.f32 0.0, %v9252
    %v9254 = vpop.f32.mrb[0].mxu0
    %v9255 = vpop.f32.mrb[0].mxu0
    %v9256 = vadd.f32 0.0, %v9255
    %v9257 = vpop.f32.mrb[0].mxu0
    %9258 = vmatprep.mubr.bf16.mxu0 0
    %9259 = vmatmul.mubr.bf16.gmra.mrb[0].mxu0 %v8982
    %v9260 = vpop.f32.mrb[0].mxu0
    %v9261 = vadd.f32 0.0, %v9260
    %v9262 = vpop.f32.mrb[0].mxu0
    %v9263 = vpop.f32.mrb[0].mxu0
    %v9264 = vadd.f32 0.0, %v9263
    %v9265 = vpop.f32.mrb[0].mxu0
    %9266 = vmatprep.mubr.bf16.mxu0 0
    %9267 = vmatmul.mubr.bf16.gmra.mrb[0].mxu0 %v8983
    %v9268 = vpop.f32.mrb[0].mxu0
    %v9269 = vadd.f32 0.0, %v9268
    %v9270 = vpop.f32.mrb[0].mxu0
    %v9271 = vpop.f32.mrb[0].mxu0
    %v9272 = vadd.f32 0.0, %v9271
    %v9273 = vpop.f32.mrb[0].mxu0
    %9274 = vmatprep.mubr.bf16.mxu0 0
    %9275 = vmatmul.mubr.bf16.gmra.mrb[0].mxu0 %v8984
    %v9276 = vpop.f32.mrb[0].mxu0
    %v9277 = vadd.f32 0.0, %v9276
    %v9278 = vpop.f32.mrb[0].mxu0
    %v9279 = vpop.f32.mrb[0].mxu0
    %v9280 = vadd.f32 0.0, %v9279
    %v9281 = vpop.f32.mrb[0].mxu0
    %9282 = vmatprep.mubr.bf16.mxu0 0
    %9283 = vmatmul.mubr.bf16.gmra.mrb[0].mxu0 %v8985
    %v9284 = vpop.f32.mrb[0].mxu0
    %v9285 = vadd.f32 0.0, %v9284
    %v9286 = vpop.f32.mrb[0].mxu0
    %v9287 = vpop.f32.mrb[0].mxu0
    %v9288 = vadd.f32 0.0, %v9287
    %v9289 = vpop.f32.mrb[0].mxu0
    %9290 = vmatprep.mubr.bf16.mxu0 0
    %9291 = vmatmul.mubr.bf16.gmra.mrb[0].mxu0 %v8986
    %v9292 = vpop.f32.mrb[0].mxu0
    %v9293 = vadd.f32 0.0, %v9292
    %v9294 = vpop.f32.mrb[0].mxu0
    %v9295 = vpop.f32.mrb[0].mxu0
    %v9296 = vadd.f32 0.0, %v9295
    %v9297 = vpop.f32.mrb[0].mxu0
    %9298 = vmatprep.mubr.bf16.mxu0 0
    %9299 = vmatmul.mubr.bf16.gmra.mrb[0].mxu0 %v8987
    %v9300 = vpop.f32.mrb[0].mxu0
    %v9301 = vadd.f32 0.0, %v9300
    %v9302 = vpop.f32.mrb[0].mxu0
    %v9303 = vpop.f32.mrb[0].mxu0
    %v9304 = vadd.f32 0.0, %v9303
    %v9305 = vpop.f32.mrb[0].mxu0
    %9306 = vmatprep.mubr.bf16.mxu0 0
    %9307 = vmatmul.mubr.bf16.gmra.mrb[0].mxu0 %v8988
    %v9308 = vpop.f32.mrb[0].mxu0
    %v9309 = vadd.f32 0.0, %v9308
    %v9310 = vpop.f32.mrb[0].mxu0
    %v9311 = vpop.f32.mrb[0].mxu0
    %v9312 = vadd.f32 0.0, %v9311
    %v9313 = vpop.f32.mrb[0].mxu0
    %9314 = vmatprep.mubr.bf16.mxu0 0
    %9315 = vmatmul.mubr.bf16.gmra.mrb[0].mxu0 %v8989
    %v9316 = vpop.f32.mrb[0].mxu0
    %v9317 = vadd.f32 0.0, %v9316
    %v9318 = vpop.f32.mrb[0].mxu0
    %v9319 = vpop.f32.mrb[0].mxu0
    %v9320 = vadd.f32 0.0, %v9319
    %v9321 = vpop.f32.mrb[0].mxu0
    %9322 = vmatprep.mubr.bf16.mxu0 0
    %9323 = vmatmul.mubr.bf16.gmra.mrb[0].mxu0 %v8990
    %v9324 = vpop.f32.mrb[0].mxu0
    %v9325 = vadd.f32 0.0, %v9324
    %v9326 = vpop.f32.mrb[0].mxu0
    %v9327 = vpop.f32.mrb[0].mxu0
    %v9328 = vadd.f32 0.0, %v9327
    %v9329 = vpop.f32.mrb[0].mxu0
    %9330 = vmatprep.mubr.bf16.mxu0 0
    %9331 = vmatmul.mubr.bf16.gmra.mrb[0].mxu0 %v8991
    %v9332 = vpop.f32.mrb[0].mxu0
    %v9333 = vadd.f32 0.0, %v9332
    %v9334 = vpop.f32.mrb[0].mxu0
    %v9335 = vpop.f32.mrb[0].mxu0
    %v9336 = vadd.f32 0.0, %v9335
    %v9337 = vpop.f32.mrb[0].mxu0
    %9338 = vmatprep.mubr.bf16.mxu0 0
    %9339 = vmatmul.mubr.bf16.gmra.mrb[0].mxu0 %v8992
    %v9340 = vpop.f32.mrb[0].mxu0
    %v9341 = vadd.f32 0.0, %v9340
    %v9342 = vpop.f32.mrb[0].mxu0
    %v9343 = vpop.f32.mrb[0].mxu0
    %v9344 = vadd.f32 0.0, %v9343
    %v9345 = vpop.f32.mrb[0].mxu0
    %9346 = vdwg.mxu0
    %v9347 = vadd.f32 %v8833, %v9093
    %v9348 = vadd.f32 %v8834, %v9096
    %v9349 = vadd.f32 %v8835, %v9101
    %v9350 = vadd.f32 %v8836, %v9104
    %v9351 = vadd.f32 %v8837, %v9109
    %v9352 = vadd.f32 %v8838, %v9112
    %v9353 = vadd.f32 %v8839, %v9117
    %v9354 = vadd.f32 %v8840, %v9120
    %v9355 = vadd.f32 %v8841, %v9125
    %v9356 = vadd.f32 %v8842, %v9128
    %v9357 = vadd.f32 %v8843, %v9133
    %v9358 = vadd.f32 %v8844, %v9136
    %v9359 = vadd.f32 %v8845, %v9141
    %v9360 = vadd.f32 %v8846, %v9144
    %v9361 = vadd.f32 %v8847, %v9149
    %v9362 = vadd.f32 %v8848, %v9152
    %v9363 = vadd.f32 %v8849, %v9157
    %v9364 = vadd.f32 %v8850, %v9160
    %v9365 = vadd.f32 %v8851, %v9165
    %v9366 = vadd.f32 %v8852, %v9168
    %v9367 = vadd.f32 %v8853, %v9173
    %v9368 = vadd.f32 %v8854, %v9176
    %v9369 = vadd.f32 %v8855, %v9181
    %v9370 = vadd.f32 %v8856, %v9184
    %v9371 = vadd.f32 %v8857, %v9189
    %v9372 = vadd.f32 %v8858, %v9192
    %v9373 = vadd.f32 %v8859, %v9197
    %v9374 = vadd.f32 %v8860, %v9200
    %v9375 = vadd.f32 %v8861, %v9205
    %v9376 = vadd.f32 %v8862, %v9208
    %v9377 = vadd.f32 %v8863, %v9213
    %v9378 = vadd.f32 %v8864, %v9216
    %v9379 = vadd.f32 %v8865, %v9221
    %v9380 = vadd.f32 %v8866, %v9224
    %v9381 = vadd.f32 %v8867, %v9229
    %v9382 = vadd.f32 %v8868, %v9232
    %v9383 = vadd.f32 %v8869, %v9237
    %v9384 = vadd.f32 %v8870, %v9240
    %v9385 = vadd.f32 %v8871, %v9245
    %v9386 = vadd.f32 %v8872, %v9248
    %v9387 = vadd.f32 %v8873, %v9253
    %v9388 = vadd.f32 %v8874, %v9256
    %v9389 = vadd.f32 %v8875, %v9261
    %v9390 = vadd.f32 %v8876, %v9264
    %v9391 = vadd.f32 %v8877, %v9269
    %v9392 = vadd.f32 %v8878, %v9272
    %v9393 = vadd.f32 %v8879, %v9277
    %v9394 = vadd.f32 %v8880, %v9280
    %v9395 = vadd.f32 %v8881, %v9285
    %v9396 = vadd.f32 %v8882, %v9288
    %v9397 = vadd.f32 %v8883, %v9293
    %v9398 = vadd.f32 %v8884, %v9296
    %v9399 = vadd.f32 %v8885, %v9301
    %v9400 = vadd.f32 %v8886, %v9304
    %v9401 = vadd.f32 %v8887, %v9309
    %v9402 = vadd.f32 %v8888, %v9312
    %v9403 = vadd.f32 %v8889, %v9317
    %v9404 = vadd.f32 %v8890, %v9320
    %v9405 = vadd.f32 %v8891, %v9325
    %v9406 = vadd.f32 %v8892, %v9328
    %v9407 = vadd.f32 %v8893, %v9333
    %v9408 = vadd.f32 %v8894, %v9336
    %v9409 = vadd.f32 %v8895, %v9341
    %v9410 = vadd.f32 %v8896, %v9344
    %s9411 = scalar_lea.vmem [#allocation2], 48
    %v9412 = vld [vmem:[%s9411] sm:$0xff]
    %v9413 = vld [vmem:[%s9411 + $0x8] sm:$0xff]
    %v9414 = vld [vmem:[%s9411 + $0x18] sm:$0xff]
    %v9415 = vld [vmem:[%s9411 + $0x20] sm:$0xff]
    %v9416 = vld [vmem:[%s9411 + $0x30] sm:$0xff]
    %v9417 = vld [vmem:[%s9411 + $0x38] sm:$0xff]
    %v9418 = vld [vmem:[%s9411 + $0x48] sm:$0xff]
    %v9419 = vld [vmem:[%s9411 + $0x50] sm:$0xff]
    %v9420 = vld [vmem:[%s9411 + $0x60] sm:$0xff]
    %v9421 = vld [vmem:[%s9411 + $0x68] sm:$0xff]
    %v9422 = vld [vmem:[%s9411 + $0x78] sm:$0xff]
    %v9423 = vld [vmem:[%s9411 + $0x80] sm:$0xff]
    %v9424 = vld [vmem:[%s9411 + $0x90] sm:$0xff]
    %v9425 = vld [vmem:[%s9411 + $0x98] sm:$0xff]
    %v9426 = vld [vmem:[%s9411 + $0xa8] sm:$0xff]
    %v9427 = vld [vmem:[%s9411 + $0xb0] sm:$0xff]
    %v9428 = vld [vmem:[%s9411 + $0xc0] sm:$0xff]
    %v9429 = vld [vmem:[%s9411 + $0xc8] sm:$0xff]
    %v9430 = vld [vmem:[%s9411 + $0xd8] sm:$0xff]
    %v9431 = vld [vmem:[%s9411 + $0xe0] sm:$0xff]
    %v9432 = vld [vmem:[%s9411 + $0xf0] sm:$0xff]
    %v9433 = vld [vmem:[%s9411 + $0xf8] sm:$0xff]
    %v9434 = vld [vmem:[%s9411 + $0x108] sm:$0xff]
    %v9435 = vld [vmem:[%s9411 + $0x110] sm:$0xff]
    %v9436 = vld [vmem:[%s9411 + $0x120] sm:$0xff]
    %v9437 = vld [vmem:[%s9411 + $0x128] sm:$0xff]
    %v9438 = vld [vmem:[%s9411 + $0x138] sm:$0xff]
    %v9439 = vld [vmem:[%s9411 + $0x140] sm:$0xff]
    %v9440 = vld [vmem:[%s9411 + $0x150] sm:$0xff]
    %v9441 = vld [vmem:[%s9411 + $0x158] sm:$0xff]
    %v9442 = vld [vmem:[%s9411 + $0x168] sm:$0xff]
    %v9443 = vld [vmem:[%s9411 + $0x170] sm:$0xff]
    %v9444 = vld [vmem:[%s9411 + $0x1b0] sm:$0xff]
    %v9445 = vld [vmem:[%s9411 + $0x1b8] sm:$0xff]
    %v9446 = vld [vmem:[%s9411 + $0x1c8] sm:$0xff]
    %v9447 = vld [vmem:[%s9411 + $0x1d0] sm:$0xff]
    %v9448 = vld [vmem:[%s9411 + $0x1e0] sm:$0xff]
    %v9449 = vld [vmem:[%s9411 + $0x1e8] sm:$0xff]
    %v9450 = vld [vmem:[%s9411 + $0x1f8] sm:$0xff]
    %v9451 = vld [vmem:[%s9411 + $0x200] sm:$0xff]
    %v9452 = vld [vmem:[%s9411 + $0x210] sm:$0xff]
    %v9453 = vld [vmem:[%s9411 + $0x218] sm:$0xff]
    %v9454 = vld [vmem:[%s9411 + $0x228] sm:$0xff]
    %v9455 = vld [vmem:[%s9411 + $0x230] sm:$0xff]
    %v9456 = vld [vmem:[%s9411 + $0x240] sm:$0xff]
    %v9457 = vld [vmem:[%s9411 + $0x248] sm:$0xff]
    %v9458 = vld [vmem:[%s9411 + $0x258] sm:$0xff]
    %v9459 = vld [vmem:[%s9411 + $0x260] sm:$0xff]
    %v9460 = vld [vmem:[%s9411 + $0x270] sm:$0xff]
    %v9461 = vld [vmem:[%s9411 + $0x278] sm:$0xff]
    %v9462 = vld [vmem:[%s9411 + $0x288] sm:$0xff]
    %v9463 = vld [vmem:[%s9411 + $0x290] sm:$0xff]
    %v9464 = vld [vmem:[%s9411 + $0x2a0] sm:$0xff]
    %v9465 = vld [vmem:[%s9411 + $0x2a8] sm:$0xff]
    %v9466 = vld [vmem:[%s9411 + $0x2b8] sm:$0xff]
    %v9467 = vld [vmem:[%s9411 + $0x2c0] sm:$0xff]
    %v9468 = vld [vmem:[%s9411 + $0x2d0] sm:$0xff]
    %v9469 = vld [vmem:[%s9411 + $0x2d8] sm:$0xff]
    %v9470 = vld [vmem:[%s9411 + $0x2e8] sm:$0xff]
    %v9471 = vld [vmem:[%s9411 + $0x2f0] sm:$0xff]
    %v9472 = vld [vmem:[%s9411 + $0x300] sm:$0xff]
    %v9473 = vld [vmem:[%s9411 + $0x308] sm:$0xff]
    %v9474 = vld [vmem:[%s9411 + $0x318] sm:$0xff]
    %v9475 = vld [vmem:[%s9411 + $0x320] sm:$0xff]
    %v9476 = vpack.c.bf16 %v9413, %v9412
    %v9477 = vpack.c.bf16 %v9415, %v9414
    %v9478 = vpack.c.bf16 %v9417, %v9416
    %v9479 = vpack.c.bf16 %v9419, %v9418
    %v9480 = vpack.c.bf16 %v9421, %v9420
    %v9481 = vpack.c.bf16 %v9423, %v9422
    %v9482 = vpack.c.bf16 %v9425, %v9424
    %v9483 = vpack.c.bf16 %v9427, %v9426
    %v9484 = vpack.c.bf16 %v9429, %v9428
    %v9485 = vpack.c.bf16 %v9431, %v9430
    %v9486 = vpack.c.bf16 %v9433, %v9432
    %v9487 = vpack.c.bf16 %v9435, %v9434
    %v9488 = vpack.c.bf16 %v9437, %v9436
    %v9489 = vpack.c.bf16 %v9439, %v9438
    %v9490 = vpack.c.bf16 %v9441, %v9440
    %v9491 = vpack.c.bf16 %v9443, %v9442
    %v9492 = vpack.c.bf16 %v9445, %v9444
    %v9493 = vpack.c.bf16 %v9447, %v9446
    %v9494 = vpack.c.bf16 %v9449, %v9448
    %v9495 = vpack.c.bf16 %v9451, %v9450
    %v9496 = vpack.c.bf16 %v9453, %v9452
    %v9497 = vpack.c.bf16 %v9455, %v9454
    %v9498 = vpack.c.bf16 %v9457, %v9456
    %v9499 = vpack.c.bf16 %v9459, %v9458
    %v9500 = vpack.c.bf16 %v9461, %v9460
    %v9501 = vpack.c.bf16 %v9463, %v9462
    %v9502 = vpack.c.bf16 %v9465, %v9464
    %v9503 = vpack.c.bf16 %v9467, %v9466
    %v9504 = vpack.c.bf16 %v9469, %v9468
    %v9505 = vpack.c.bf16 %v9471, %v9470
    %v9506 = vpack.c.bf16 %v9473, %v9472
    %v9507 = vpack.c.bf16 %v9475, %v9474
    %s9508 = scalar_lea.vmem [#allocation11], 384
    %v9509 = vld [vmem:[%s9508] sm:$0xf]
    %v9510 = vld [vmem:[%s9508 + $0x4] sm:$0xf]
    %v9511 = vld [vmem:[%s9508 + $0x8] sm:$0xf]
    %v9512 = vld [vmem:[%s9508 + $0xc] sm:$0xf]
    %v9513 = vld [vmem:[%s9508 + $0x10] sm:$0xf]
    %v9514 = vld [vmem:[%s9508 + $0x14] sm:$0xf]
    %v9515 = vld [vmem:[%s9508 + $0x18] sm:$0xf]
    %v9516 = vld [vmem:[%s9508 + $0x1c] sm:$0xf]
    %v9517 = vld [vmem:[%s9508 + $0x20] sm:$0xf]
    %v9518 = vld [vmem:[%s9508 + $0x24] sm:$0xf]
    %v9519 = vld [vmem:[%s9508 + $0x28] sm:$0xf]
    %v9520 = vld [vmem:[%s9508 + $0x2c] sm:$0xf]
    %v9521 = vld [vmem:[%s9508 + $0x30] sm:$0xf]
    %v9522 = vld [vmem:[%s9508 + $0x34] sm:$0xf]
    %v9523 = vld [vmem:[%s9508 + $0x38] sm:$0xf]
    %v9524 = vld [vmem:[%s9508 + $0x3c] sm:$0xf]
    %v9541 = vunpack.c.l.b16 %v9509
    %v9542 = vunpack.c.l.b16 %v9510
    %v9543 = vunpack.c.l.b16 %v9511
    %v9544 = vunpack.c.l.b16 %v9512
    %v9545 = vunpack.c.l.b16 %v9513
    %v9546 = vunpack.c.l.b16 %v9514
    %v9547 = vunpack.c.l.b16 %v9515
    %v9548 = vunpack.c.l.b16 %v9516
    %v9549 = vunpack.c.l.b16 %v9517
    %v9550 = vunpack.c.l.b16 %v9518
    %v9551 = vunpack.c.l.b16 %v9519
    %v9552 = vunpack.c.l.b16 %v9520
    %v9553 = vunpack.c.l.b16 %v9521
    %v9554 = vunpack.c.l.b16 %v9522
    %v9555 = vunpack.c.l.b16 %v9523
    %v9556 = vunpack.c.l.b16 %v9524
    %v9557 = vpack.c.b16 %v9542, %v9541
    %v9558 = vpack.c.b16 %v9544, %v9543
    %v9559 = vpack.c.b16 %v9546, %v9545
    %v9560 = vpack.c.b16 %v9548, %v9547
    %v9561 = vpack.c.b16 %v9550, %v9549
    %v9562 = vpack.c.b16 %v9552, %v9551
    %v9563 = vpack.c.b16 %v9554, %v9553
    %v9564 = vpack.c.b16 %v9556, %v9555
    %9573 = vmatprep.subr.bf16.mxu0 0
    %9574 = vmatpush1.bf16.msra.mxu0 %v9557
    %9575 = vmatprep.subr.bf16.mxu0 0
    %9576 = vmatpush1.bf16.msra.mxu0 %v9558
    %9577 = vmatprep.subr.bf16.mxu0 0
    %9578 = vmatpush1.bf16.msra.mxu0 %v9559
    %9579 = vmatprep.subr.bf16.mxu0 0
    %9580 = vmatpush1.bf16.msra.mxu0 %v9560
    %9581 = vmatprep.subr.bf16.mxu0 0
    %9582 = vmatpush1.bf16.msra.mxu0 %v9561
    %9583 = vmatprep.subr.bf16.mxu0 0
    %9584 = vmatpush1.bf16.msra.mxu0 %v9562
    %9585 = vmatprep.subr.bf16.mxu0 0
    %9586 = vmatpush1.bf16.msra.mxu0 %v9563
    %9587 = vmatprep.subr.bf16.mxu0 0
    %9588 = vmatpush1.bf16.msra.mxu0 %v9564
    %9589 = vmatprep.subr.bf16.mxu0 0
    %9590 = vmatpush1.bf16.msra.mxu0 0
    %9591 = vmatprep.subr.bf16.mxu0 0
    %9592 = vmatpush1.bf16.msra.mxu0 0
    %9593 = vmatprep.subr.bf16.mxu0 0
    %9594 = vmatpush1.bf16.msra.mxu0 0
    %9595 = vmatprep.subr.bf16.mxu0 0
    %9596 = vmatpush1.bf16.msra.mxu0 0
    %9597 = vmatprep.subr.bf16.mxu0 0
    %9598 = vmatpush1.bf16.msra.mxu0 0
    %9599 = vmatprep.subr.bf16.mxu0 0
    %9600 = vmatpush1.bf16.msra.mxu0 0
    %9601 = vmatprep.subr.bf16.mxu0 0
    %9602 = vmatpush1.bf16.msra.mxu0 0
    %9603 = vmatprep.subr.bf16.mxu0 0
    %9604 = vmatpush1.bf16.msra.mxu0 0
    %9605 = vmatprep.mubr.bf16.mxu0 0
    %9606 = vmatmul.mubr.bf16.gmra.mrb[0].mxu0 %v9476
    %v9607 = vpop.f32.mrb[0].mxu0
    %v9608 = vadd.f32 0.0, %v9607
    %v9609 = vpop.f32.mrb[0].mxu0
    %v9610 = vpop.f32.mrb[0].mxu0
    %v9611 = vadd.f32 0.0, %v9610
    %v9612 = vpop.f32.mrb[0].mxu0
    %9613 = vmatprep.mubr.bf16.mxu0 0
    %9614 = vmatmul.mubr.bf16.gmra.mrb[0].mxu0 %v9477
    %v9615 = vpop.f32.mrb[0].mxu0
    %v9616 = vadd.f32 0.0, %v9615
    %v9617 = vpop.f32.mrb[0].mxu0
    %v9618 = vpop.f32.mrb[0].mxu0
    %v9619 = vadd.f32 0.0, %v9618
    %v9620 = vpop.f32.mrb[0].mxu0
    %9621 = vmatprep.mubr.bf16.mxu0 0
    %9622 = vmatmul.mubr.bf16.gmra.mrb[0].mxu0 %v9478
    %v9623 = vpop.f32.mrb[0].mxu0
    %v9624 = vadd.f32 0.0, %v9623
    %v9625 = vpop.f32.mrb[0].mxu0
    %v9626 = vpop.f32.mrb[0].mxu0
    %v9627 = vadd.f32 0.0, %v9626
    %v9628 = vpop.f32.mrb[0].mxu0
    %9629 = vmatprep.mubr.bf16.mxu0 0
    %9630 = vmatmul.mubr.bf16.gmra.mrb[0].mxu0 %v9479
    %v9631 = vpop.f32.mrb[0].mxu0
    %v9632 = vadd.f32 0.0, %v9631
    %v9633 = vpop.f32.mrb[0].mxu0
    %v9634 = vpop.f32.mrb[0].mxu0
    %v9635 = vadd.f32 0.0, %v9634
    %v9636 = vpop.f32.mrb[0].mxu0
    %9637 = vmatprep.mubr.bf16.mxu0 0
    %9638 = vmatmul.mubr.bf16.gmra.mrb[0].mxu0 %v9480
    %v9639 = vpop.f32.mrb[0].mxu0
    %v9640 = vadd.f32 0.0, %v9639
    %v9641 = vpop.f32.mrb[0].mxu0
    %v9642 = vpop.f32.mrb[0].mxu0
    %v9643 = vadd.f32 0.0, %v9642
    %v9644 = vpop.f32.mrb[0].mxu0
    %9645 = vmatprep.mubr.bf16.mxu0 0
    %9646 = vmatmul.mubr.bf16.gmra.mrb[0].mxu0 %v9481
    %v9647 = vpop.f32.mrb[0].mxu0
    %v9648 = vadd.f32 0.0, %v9647
    %v9649 = vpop.f32.mrb[0].mxu0
    %v9650 = vpop.f32.mrb[0].mxu0
    %v9651 = vadd.f32 0.0, %v9650
    %v9652 = vpop.f32.mrb[0].mxu0
    %9653 = vmatprep.mubr.bf16.mxu0 0
    %9654 = vmatmul.mubr.bf16.gmra.mrb[0].mxu0 %v9482
    %v9655 = vpop.f32.mrb[0].mxu0
    %v9656 = vadd.f32 0.0, %v9655
    %v9657 = vpop.f32.mrb[0].mxu0
    %v9658 = vpop.f32.mrb[0].mxu0
    %v9659 = vadd.f32 0.0, %v9658
    %v9660 = vpop.f32.mrb[0].mxu0
    %9661 = vmatprep.mubr.bf16.mxu0 0
    %9662 = vmatmul.mubr.bf16.gmra.mrb[0].mxu0 %v9483
    %v9663 = vpop.f32.mrb[0].mxu0
    %v9664 = vadd.f32 0.0, %v9663
    %v9665 = vpop.f32.mrb[0].mxu0
    %v9666 = vpop.f32.mrb[0].mxu0
    %v9667 = vadd.f32 0.0, %v9666
    %v9668 = vpop.f32.mrb[0].mxu0
    %9669 = vmatprep.mubr.bf16.mxu0 0
    %9670 = vmatmul.mubr.bf16.gmra.mrb[0].mxu0 %v9484
    %v9671 = vpop.f32.mrb[0].mxu0
    %v9672 = vadd.f32 0.0, %v9671
    %v9673 = vpop.f32.mrb[0].mxu0
    %v9674 = vpop.f32.mrb[0].mxu0
    %v9675 = vadd.f32 0.0, %v9674
    %v9676 = vpop.f32.mrb[0].mxu0
    %9677 = vmatprep.mubr.bf16.mxu0 0
    %9678 = vmatmul.mubr.bf16.gmra.mrb[0].mxu0 %v9485
    %v9679 = vpop.f32.mrb[0].mxu0
    %v9680 = vadd.f32 0.0, %v9679
    %v9681 = vpop.f32.mrb[0].mxu0
    %v9682 = vpop.f32.mrb[0].mxu0
    %v9683 = vadd.f32 0.0, %v9682
    %v9684 = vpop.f32.mrb[0].mxu0
    %9685 = vmatprep.mubr.bf16.mxu0 0
    %9686 = vmatmul.mubr.bf16.gmra.mrb[0].mxu0 %v9486
    %v9687 = vpop.f32.mrb[0].mxu0
    %v9688 = vadd.f32 0.0, %v9687
    %v9689 = vpop.f32.mrb[0].mxu0
    %v9690 = vpop.f32.mrb[0].mxu0
    %v9691 = vadd.f32 0.0, %v9690
    %v9692 = vpop.f32.mrb[0].mxu0
    %9693 = vmatprep.mubr.bf16.mxu0 0
    %9694 = vmatmul.mubr.bf16.gmra.mrb[0].mxu0 %v9487
    %v9695 = vpop.f32.mrb[0].mxu0
    %v9696 = vadd.f32 0.0, %v9695
    %v9697 = vpop.f32.mrb[0].mxu0
    %v9698 = vpop.f32.mrb[0].mxu0
    %v9699 = vadd.f32 0.0, %v9698
    %v9700 = vpop.f32.mrb[0].mxu0
    %9701 = vmatprep.mubr.bf16.mxu0 0
    %9702 = vmatmul.mubr.bf16.gmra.mrb[0].mxu0 %v9488
    %v9703 = vpop.f32.mrb[0].mxu0
    %v9704 = vadd.f32 0.0, %v9703
    %v9705 = vpop.f32.mrb[0].mxu0
    %v9706 = vpop.f32.mrb[0].mxu0
    %v9707 = vadd.f32 0.0, %v9706
    %v9708 = vpop.f32.mrb[0].mxu0
    %9709 = vmatprep.mubr.bf16.mxu0 0
    %9710 = vmatmul.mubr.bf16.gmra.mrb[0].mxu0 %v9489
    %v9711 = vpop.f32.mrb[0].mxu0
    %v9712 = vadd.f32 0.0, %v9711
    %v9713 = vpop.f32.mrb[0].mxu0
    %v9714 = vpop.f32.mrb[0].mxu0
    %v9715 = vadd.f32 0.0, %v9714
    %v9716 = vpop.f32.mrb[0].mxu0
    %9717 = vmatprep.mubr.bf16.mxu0 0
    %9718 = vmatmul.mubr.bf16.gmra.mrb[0].mxu0 %v9490
    %v9719 = vpop.f32.mrb[0].mxu0
    %v9720 = vadd.f32 0.0, %v9719
    %v9721 = vpop.f32.mrb[0].mxu0
    %v9722 = vpop.f32.mrb[0].mxu0
    %v9723 = vadd.f32 0.0, %v9722
    %v9724 = vpop.f32.mrb[0].mxu0
    %9725 = vmatprep.mubr.bf16.mxu0 0
    %9726 = vmatmul.mubr.bf16.gmra.mrb[0].mxu0 %v9491
    %v9727 = vpop.f32.mrb[0].mxu0
    %v9728 = vadd.f32 0.0, %v9727
    %v9729 = vpop.f32.mrb[0].mxu0
    %v9730 = vpop.f32.mrb[0].mxu0
    %v9731 = vadd.f32 0.0, %v9730
    %v9732 = vpop.f32.mrb[0].mxu0
    %9733 = vmatprep.mubr.bf16.mxu0 0
    %9734 = vmatmul.mubr.bf16.gmra.mrb[0].mxu0 %v9492
    %v9735 = vpop.f32.mrb[0].mxu0
    %v9736 = vadd.f32 0.0, %v9735
    %v9737 = vpop.f32.mrb[0].mxu0
    %v9738 = vpop.f32.mrb[0].mxu0
    %v9739 = vadd.f32 0.0, %v9738
    %v9740 = vpop.f32.mrb[0].mxu0
    %9741 = vmatprep.mubr.bf16.mxu0 0
    %9742 = vmatmul.mubr.bf16.gmra.mrb[0].mxu0 %v9493
    %v9743 = vpop.f32.mrb[0].mxu0
    %v9744 = vadd.f32 0.0, %v9743
    %v9745 = vpop.f32.mrb[0].mxu0
    %v9746 = vpop.f32.mrb[0].mxu0
    %v9747 = vadd.f32 0.0, %v9746
    %v9748 = vpop.f32.mrb[0].mxu0
    %9749 = vmatprep.mubr.bf16.mxu0 0
    %9750 = vmatmul.mubr.bf16.gmra.mrb[0].mxu0 %v9494
    %v9751 = vpop.f32.mrb[0].mxu0
    %v9752 = vadd.f32 0.0, %v9751
    %v9753 = vpop.f32.mrb[0].mxu0
    %v9754 = vpop.f32.mrb[0].mxu0
    %v9755 = vadd.f32 0.0, %v9754
    %v9756 = vpop.f32.mrb[0].mxu0
    %9757 = vmatprep.mubr.bf16.mxu0 0
    %9758 = vmatmul.mubr.bf16.gmra.mrb[0].mxu0 %v9495
    %v9759 = vpop.f32.mrb[0].mxu0
    %v9760 = vadd.f32 0.0, %v9759
    %v9761 = vpop.f32.mrb[0].mxu0
    %v9762 = vpop.f32.mrb[0].mxu0
    %v9763 = vadd.f32 0.0, %v9762
    %v9764 = vpop.f32.mrb[0].mxu0
    %9765 = vmatprep.mubr.bf16.mxu0 0
    %9766 = vmatmul.mubr.bf16.gmra.mrb[0].mxu0 %v9496
    %v9767 = vpop.f32.mrb[0].mxu0
    %v9768 = vadd.f32 0.0, %v9767
    %v9769 = vpop.f32.mrb[0].mxu0
    %v9770 = vpop.f32.mrb[0].mxu0
    %v9771 = vadd.f32 0.0, %v9770
    %v9772 = vpop.f32.mrb[0].mxu0
    %9773 = vmatprep.mubr.bf16.mxu0 0
    %9774 = vmatmul.mubr.bf16.gmra.mrb[0].mxu0 %v9497
    %v9775 = vpop.f32.mrb[0].mxu0
    %v9776 = vadd.f32 0.0, %v9775
    %v9777 = vpop.f32.mrb[0].mxu0
    %v9778 = vpop.f32.mrb[0].mxu0
    %v9779 = vadd.f32 0.0, %v9778
    %v9780 = vpop.f32.mrb[0].mxu0
    %9781 = vmatprep.mubr.bf16.mxu0 0
    %9782 = vmatmul.mubr.bf16.gmra.mrb[0].mxu0 %v9498
    %v9783 = vpop.f32.mrb[0].mxu0
    %v9784 = vadd.f32 0.0, %v9783
    %v9785 = vpop.f32.mrb[0].mxu0
    %v9786 = vpop.f32.mrb[0].mxu0
    %v9787 = vadd.f32 0.0, %v9786
    %v9788 = vpop.f32.mrb[0].mxu0
    %9789 = vmatprep.mubr.bf16.mxu0 0
    %9790 = vmatmul.mubr.bf16.gmra.mrb[0].mxu0 %v9499
    %v9791 = vpop.f32.mrb[0].mxu0
    %v9792 = vadd.f32 0.0, %v9791
    %v9793 = vpop.f32.mrb[0].mxu0
    %v9794 = vpop.f32.mrb[0].mxu0
    %v9795 = vadd.f32 0.0, %v9794
    %v9796 = vpop.f32.mrb[0].mxu0
    %9797 = vmatprep.mubr.bf16.mxu0 0
    %9798 = vmatmul.mubr.bf16.gmra.mrb[0].mxu0 %v9500
    %v9799 = vpop.f32.mrb[0].mxu0
    %v9800 = vadd.f32 0.0, %v9799
    %v9801 = vpop.f32.mrb[0].mxu0
    %v9802 = vpop.f32.mrb[0].mxu0
    %v9803 = vadd.f32 0.0, %v9802
    %v9804 = vpop.f32.mrb[0].mxu0
    %9805 = vmatprep.mubr.bf16.mxu0 0
    %9806 = vmatmul.mubr.bf16.gmra.mrb[0].mxu0 %v9501
    %v9807 = vpop.f32.mrb[0].mxu0
    %v9808 = vadd.f32 0.0, %v9807
    %v9809 = vpop.f32.mrb[0].mxu0
    %v9810 = vpop.f32.mrb[0].mxu0
    %v9811 = vadd.f32 0.0, %v9810
    %v9812 = vpop.f32.mrb[0].mxu0
    %9813 = vmatprep.mubr.bf16.mxu0 0
    %9814 = vmatmul.mubr.bf16.gmra.mrb[0].mxu0 %v9502
    %v9815 = vpop.f32.mrb[0].mxu0
    %v9816 = vadd.f32 0.0, %v9815
    %v9817 = vpop.f32.mrb[0].mxu0
    %v9818 = vpop.f32.mrb[0].mxu0
    %v9819 = vadd.f32 0.0, %v9818
    %v9820 = vpop.f32.mrb[0].mxu0
    %9821 = vmatprep.mubr.bf16.mxu0 0
    %9822 = vmatmul.mubr.bf16.gmra.mrb[0].mxu0 %v9503
    %v9823 = vpop.f32.mrb[0].mxu0
    %v9824 = vadd.f32 0.0, %v9823
    %v9825 = vpop.f32.mrb[0].mxu0
    %v9826 = vpop.f32.mrb[0].mxu0
    %v9827 = vadd.f32 0.0, %v9826
    %v9828 = vpop.f32.mrb[0].mxu0
    %9829 = vmatprep.mubr.bf16.mxu0 0
    %9830 = vmatmul.mubr.bf16.gmra.mrb[0].mxu0 %v9504
    %v9831 = vpop.f32.mrb[0].mxu0
    %v9832 = vadd.f32 0.0, %v9831
    %v9833 = vpop.f32.mrb[0].mxu0
    %v9834 = vpop.f32.mrb[0].mxu0
    %v9835 = vadd.f32 0.0, %v9834
    %v9836 = vpop.f32.mrb[0].mxu0
    %9837 = vmatprep.mubr.bf16.mxu0 0
    %9838 = vmatmul.mubr.bf16.gmra.mrb[0].mxu0 %v9505
    %v9839 = vpop.f32.mrb[0].mxu0
    %v9840 = vadd.f32 0.0, %v9839
    %v9841 = vpop.f32.mrb[0].mxu0
    %v9842 = vpop.f32.mrb[0].mxu0
    %v9843 = vadd.f32 0.0, %v9842
    %v9844 = vpop.f32.mrb[0].mxu0
    %9845 = vmatprep.mubr.bf16.mxu0 0
    %9846 = vmatmul.mubr.bf16.gmra.mrb[0].mxu0 %v9506
    %v9847 = vpop.f32.mrb[0].mxu0
    %v9848 = vadd.f32 0.0, %v9847
    %v9849 = vpop.f32.mrb[0].mxu0
    %v9850 = vpop.f32.mrb[0].mxu0
    %v9851 = vadd.f32 0.0, %v9850
    %v9852 = vpop.f32.mrb[0].mxu0
    %9853 = vmatprep.mubr.bf16.mxu0 0
    %9854 = vmatmul.mubr.bf16.gmra.mrb[0].mxu0 %v9507
    %v9855 = vpop.f32.mrb[0].mxu0
    %v9856 = vadd.f32 0.0, %v9855
    %v9857 = vpop.f32.mrb[0].mxu0
    %v9858 = vpop.f32.mrb[0].mxu0
    %v9859 = vadd.f32 0.0, %v9858
    %v9860 = vpop.f32.mrb[0].mxu0
    %9861 = vdwg.mxu0
    %v9862 = vadd.f32 %v9347, %v9608
    %v9863 = vadd.f32 %v9348, %v9611
    %v9864 = vadd.f32 %v9349, %v9616
    %v9865 = vadd.f32 %v9350, %v9619
    %v9866 = vadd.f32 %v9351, %v9624
    %v9867 = vadd.f32 %v9352, %v9627
    %v9868 = vadd.f32 %v9353, %v9632
    %v9869 = vadd.f32 %v9354, %v9635
    %v9870 = vadd.f32 %v9355, %v9640
    %v9871 = vadd.f32 %v9356, %v9643
    %v9872 = vadd.f32 %v9357, %v9648
    %v9873 = vadd.f32 %v9358, %v9651
    %v9874 = vadd.f32 %v9359, %v9656
    %v9875 = vadd.f32 %v9360, %v9659
    %v9876 = vadd.f32 %v9361, %v9664
    %v9877 = vadd.f32 %v9362, %v9667
    %v9878 = vadd.f32 %v9363, %v9672
    %v9879 = vadd.f32 %v9364, %v9675
    %v9880 = vadd.f32 %v9365, %v9680
    %v9881 = vadd.f32 %v9366, %v9683
    %v9882 = vadd.f32 %v9367, %v9688
    %v9883 = vadd.f32 %v9368, %v9691
    %v9884 = vadd.f32 %v9369, %v9696
    %v9885 = vadd.f32 %v9370, %v9699
    %v9886 = vadd.f32 %v9371, %v9704
    %v9887 = vadd.f32 %v9372, %v9707
    %v9888 = vadd.f32 %v9373, %v9712
    %v9889 = vadd.f32 %v9374, %v9715
    %v9890 = vadd.f32 %v9375, %v9720
    %v9891 = vadd.f32 %v9376, %v9723
    %v9892 = vadd.f32 %v9377, %v9728
    %v9893 = vadd.f32 %v9378, %v9731
    %v9894 = vadd.f32 %v9379, %v9736
    %v9895 = vadd.f32 %v9380, %v9739
    %v9896 = vadd.f32 %v9381, %v9744
    %v9897 = vadd.f32 %v9382, %v9747
    %v9898 = vadd.f32 %v9383, %v9752
    %v9899 = vadd.f32 %v9384, %v9755
    %v9900 = vadd.f32 %v9385, %v9760
    %v9901 = vadd.f32 %v9386, %v9763
    %v9902 = vadd.f32 %v9387, %v9768
    %v9903 = vadd.f32 %v9388, %v9771
    %v9904 = vadd.f32 %v9389, %v9776
    %v9905 = vadd.f32 %v9390, %v9779
    %v9906 = vadd.f32 %v9391, %v9784
    %v9907 = vadd.f32 %v9392, %v9787
    %v9908 = vadd.f32 %v9393, %v9792
    %v9909 = vadd.f32 %v9394, %v9795
    %v9910 = vadd.f32 %v9395, %v9800
    %v9911 = vadd.f32 %v9396, %v9803
    %v9912 = vadd.f32 %v9397, %v9808
    %v9913 = vadd.f32 %v9398, %v9811
    %v9914 = vadd.f32 %v9399, %v9816
    %v9915 = vadd.f32 %v9400, %v9819
    %v9916 = vadd.f32 %v9401, %v9824
    %v9917 = vadd.f32 %v9402, %v9827
    %v9918 = vadd.f32 %v9403, %v9832
    %v9919 = vadd.f32 %v9404, %v9835
    %v9920 = vadd.f32 %v9405, %v9840
    %v9921 = vadd.f32 %v9406, %v9843
    %v9922 = vadd.f32 %v9407, %v9848
    %v9923 = vadd.f32 %v9408, %v9851
    %v9924 = vadd.f32 %v9409, %v9856
    %v9925 = vadd.f32 %v9410, %v9859
    %v9926 = vld [vmem:[%s9411 + $0x1] sm:$0xff]
    %v9927 = vld [vmem:[%s9411 + $0x9] sm:$0xff]
    %v9928 = vld [vmem:[%s9411 + $0x19] sm:$0xff]
    %v9929 = vld [vmem:[%s9411 + $0x21] sm:$0xff]
    %v9930 = vld [vmem:[%s9411 + $0x31] sm:$0xff]
    %v9931 = vld [vmem:[%s9411 + $0x39] sm:$0xff]
    %v9932 = vld [vmem:[%s9411 + $0x49] sm:$0xff]
    %v9933 = vld [vmem:[%s9411 + $0x51] sm:$0xff]
    %v9934 = vld [vmem:[%s9411 + $0x61] sm:$0xff]
    %v9935 = vld [vmem:[%s9411 + $0x69] sm:$0xff]
    %v9936 = vld [vmem:[%s9411 + $0x79] sm:$0xff]
    %v9937 = vld [vmem:[%s9411 + $0x81] sm:$0xff]
    %v9938 = vld [vmem:[%s9411 + $0x91] sm:$0xff]
    %v9939 = vld [vmem:[%s9411 + $0x99] sm:$0xff]
    %v9940 = vld [vmem:[%s9411 + $0xa9] sm:$0xff]
    %v9941 = vld [vmem:[%s9411 + $0xb1] sm:$0xff]
    %v9942 = vld [vmem:[%s9411 + $0xc1] sm:$0xff]
    %v9943 = vld [vmem:[%s9411 + $0xc9] sm:$0xff]
    %v9944 = vld [vmem:[%s9411 + $0xd9] sm:$0xff]
    %v9945 = vld [vmem:[%s9411 + $0xe1] sm:$0xff]
    %v9946 = vld [vmem:[%s9411 + $0xf1] sm:$0xff]
    %v9947 = vld [vmem:[%s9411 + $0xf9] sm:$0xff]
    %v9948 = vld [vmem:[%s9411 + $0x109] sm:$0xff]
    %v9949 = vld [vmem:[%s9411 + $0x111] sm:$0xff]
    %v9950 = vld [vmem:[%s9411 + $0x121] sm:$0xff]
    %v9951 = vld [vmem:[%s9411 + $0x129] sm:$0xff]
    %v9952 = vld [vmem:[%s9411 + $0x139] sm:$0xff]
    %v9953 = vld [vmem:[%s9411 + $0x141] sm:$0xff]
    %v9954 = vld [vmem:[%s9411 + $0x151] sm:$0xff]
    %v9955 = vld [vmem:[%s9411 + $0x159] sm:$0xff]
    %v9956 = vld [vmem:[%s9411 + $0x169] sm:$0xff]
    %v9957 = vld [vmem:[%s9411 + $0x171] sm:$0xff]
    %v9958 = vld [vmem:[%s9411 + $0x1b1] sm:$0xff]
    %v9959 = vld [vmem:[%s9411 + $0x1b9] sm:$0xff]
    %v9960 = vld [vmem:[%s9411 + $0x1c9] sm:$0xff]
    %v9961 = vld [vmem:[%s9411 + $0x1d1] sm:$0xff]
    %v9962 = vld [vmem:[%s9411 + $0x1e1] sm:$0xff]
    %v9963 = vld [vmem:[%s9411 + $0x1e9] sm:$0xff]
    %v9964 = vld [vmem:[%s9411 + $0x1f9] sm:$0xff]
    %v9965 = vld [vmem:[%s9411 + $0x201] sm:$0xff]
    %v9966 = vld [vmem:[%s9411 + $0x211] sm:$0xff]
    %v9967 = vld [vmem:[%s9411 + $0x219] sm:$0xff]
    %v9968 = vld [vmem:[%s9411 + $0x229] sm:$0xff]
    %v9969 = vld [vmem:[%s9411 + $0x231] sm:$0xff]
    %v9970 = vld [vmem:[%s9411 + $0x241] sm:$0xff]
    %v9971 = vld [vmem:[%s9411 + $0x249] sm:$0xff]
    %v9972 = vld [vmem:[%s9411 + $0x259] sm:$0xff]
    %v9973 = vld [vmem:[%s9411 + $0x261] sm:$0xff]
    %v9974 = vld [vmem:[%s9411 + $0x271] sm:$0xff]
    %v9975 = vld [vmem:[%s9411 + $0x279] sm:$0xff]
    %v9976 = vld [vmem:[%s9411 + $0x289] sm:$0xff]
    %v9977 = vld [vmem:[%s9411 + $0x291] sm:$0xff]
    %v9978 = vld [vmem:[%s9411 + $0x2a1] sm:$0xff]
    %v9979 = vld [vmem:[%s9411 + $0x2a9] sm:$0xff]
    %v9980 = vld [vmem:[%s9411 + $0x2b9] sm:$0xff]
    %v9981 = vld [vmem:[%s9411 + $0x2c1] sm:$0xff]
    %v9982 = vld [vmem:[%s9411 + $0x2d1] sm:$0xff]
    %v9983 = vld [vmem:[%s9411 + $0x2d9] sm:$0xff]
    %v9984 = vld [vmem:[%s9411 + $0x2e9] sm:$0xff]
    %v9985 = vld [vmem:[%s9411 + $0x2f1] sm:$0xff]
    %v9986 = vld [vmem:[%s9411 + $0x301] sm:$0xff]
    %v9987 = vld [vmem:[%s9411 + $0x309] sm:$0xff]
    %v9988 = vld [vmem:[%s9411 + $0x319] sm:$0xff]
    %v9989 = vld [vmem:[%s9411 + $0x321] sm:$0xff]
    %v9990 = vpack.c.bf16 %v9927, %v9926
    %v9991 = vpack.c.bf16 %v9929, %v9928
    %v9992 = vpack.c.bf16 %v9931, %v9930
    %v9993 = vpack.c.bf16 %v9933, %v9932
    %v9994 = vpack.c.bf16 %v9935, %v9934
    %v9995 = vpack.c.bf16 %v9937, %v9936
    %v9996 = vpack.c.bf16 %v9939, %v9938
    %v9997 = vpack.c.bf16 %v9941, %v9940
    %v9998 = vpack.c.bf16 %v9943, %v9942
    %v9999 = vpack.c.bf16 %v9945, %v9944
    %v10000 = vpack.c.bf16 %v9947, %v9946
    %v10001 = vpack.c.bf16 %v9949, %v9948
    %v10002 = vpack.c.bf16 %v9951, %v9950
    %v10003 = vpack.c.bf16 %v9953, %v9952
    %v10004 = vpack.c.bf16 %v9955, %v9954
    %v10005 = vpack.c.bf16 %v9957, %v9956
    %v10006 = vpack.c.bf16 %v9959, %v9958
    %v10007 = vpack.c.bf16 %v9961, %v9960
    %v10008 = vpack.c.bf16 %v9963, %v9962
    %v10009 = vpack.c.bf16 %v9965, %v9964
    %v10010 = vpack.c.bf16 %v9967, %v9966
    %v10011 = vpack.c.bf16 %v9969, %v9968
    %v10012 = vpack.c.bf16 %v9971, %v9970
    %v10013 = vpack.c.bf16 %v9973, %v9972
    %v10014 = vpack.c.bf16 %v9975, %v9974
    %v10015 = vpack.c.bf16 %v9977, %v9976
    %v10016 = vpack.c.bf16 %v9979, %v9978
    %v10017 = vpack.c.bf16 %v9981, %v9980
    %v10018 = vpack.c.bf16 %v9983, %v9982
    %v10019 = vpack.c.bf16 %v9985, %v9984
    %v10020 = vpack.c.bf16 %v9987, %v9986
    %v10021 = vpack.c.bf16 %v9989, %v9988
    %s10022 = scalar_lea.vmem [#allocation11], 448
    %v10023 = vld [vmem:[%s10022] sm:$0xf]
    %v10024 = vld [vmem:[%s10022 + $0x4] sm:$0xf]
    %v10025 = vld [vmem:[%s10022 + $0x8] sm:$0xf]
    %v10026 = vld [vmem:[%s10022 + $0xc] sm:$0xf]
    %v10027 = vld [vmem:[%s10022 + $0x10] sm:$0xf]
    %v10028 = vld [vmem:[%s10022 + $0x14] sm:$0xf]
    %v10029 = vld [vmem:[%s10022 + $0x18] sm:$0xf]
    %v10030 = vld [vmem:[%s10022 + $0x1c] sm:$0xf]
    %v10031 = vld [vmem:[%s10022 + $0x20] sm:$0xf]
    %v10032 = vld [vmem:[%s10022 + $0x24] sm:$0xf]
    %v10033 = vld [vmem:[%s10022 + $0x28] sm:$0xf]
    %v10034 = vld [vmem:[%s10022 + $0x2c] sm:$0xf]
    %v10035 = vld [vmem:[%s10022 + $0x30] sm:$0xf]
    %v10036 = vld [vmem:[%s10022 + $0x34] sm:$0xf]
    %v10037 = vld [vmem:[%s10022 + $0x38] sm:$0xf]
    %v10038 = vld [vmem:[%s10022 + $0x3c] sm:$0xf]
    %v10055 = vunpack.c.l.b16 %v10023
    %v10056 = vunpack.c.l.b16 %v10024
    %v10057 = vunpack.c.l.b16 %v10025
    %v10058 = vunpack.c.l.b16 %v10026
    %v10059 = vunpack.c.l.b16 %v10027
    %v10060 = vunpack.c.l.b16 %v10028
    %v10061 = vunpack.c.l.b16 %v10029
    %v10062 = vunpack.c.l.b16 %v10030
    %v10063 = vunpack.c.l.b16 %v10031
    %v10064 = vunpack.c.l.b16 %v10032
    %v10065 = vunpack.c.l.b16 %v10033
    %v10066 = vunpack.c.l.b16 %v10034
    %v10067 = vunpack.c.l.b16 %v10035
    %v10068 = vunpack.c.l.b16 %v10036
    %v10069 = vunpack.c.l.b16 %v10037
    %v10070 = vunpack.c.l.b16 %v10038
    %v10071 = vpack.c.b16 %v10056, %v10055
    %v10072 = vpack.c.b16 %v10058, %v10057
    %v10073 = vpack.c.b16 %v10060, %v10059
    %v10074 = vpack.c.b16 %v10062, %v10061
    %v10075 = vpack.c.b16 %v10064, %v10063
    %v10076 = vpack.c.b16 %v10066, %v10065
    %v10077 = vpack.c.b16 %v10068, %v10067
    %v10078 = vpack.c.b16 %v10070, %v10069
    %10087 = vmatprep.subr.bf16.mxu0 0
    %10088 = vmatpush1.bf16.msra.mxu0 %v10071
    %10089 = vmatprep.subr.bf16.mxu0 0
    %10090 = vmatpush1.bf16.msra.mxu0 %v10072
    %10091 = vmatprep.subr.bf16.mxu0 0
    %10092 = vmatpush1.bf16.msra.mxu0 %v10073
    %10093 = vmatprep.subr.bf16.mxu0 0
    %10094 = vmatpush1.bf16.msra.mxu0 %v10074
    %10095 = vmatprep.subr.bf16.mxu0 0
    %10096 = vmatpush1.bf16.msra.mxu0 %v10075
    %10097 = vmatprep.subr.bf16.mxu0 0
    %10098 = vmatpush1.bf16.msra.mxu0 %v10076
    %10099 = vmatprep.subr.bf16.mxu0 0
    %10100 = vmatpush1.bf16.msra.mxu0 %v10077
    %10101 = vmatprep.subr.bf16.mxu0 0
    %10102 = vmatpush1.bf16.msra.mxu0 %v10078
    %10103 = vmatprep.subr.bf16.mxu0 0
    %10104 = vmatpush1.bf16.msra.mxu0 0
    %10105 = vmatprep.subr.bf16.mxu0 0
    %10106 = vmatpush1.bf16.msra.mxu0 0
    %10107 = vmatprep.subr.bf16.mxu0 0
    %10108 = vmatpush1.bf16.msra.mxu0 0
    %10109 = vmatprep.subr.bf16.mxu0 0
    %10110 = vmatpush1.bf16.msra.mxu0 0
    %10111 = vmatprep.subr.bf16.mxu0 0
    %10112 = vmatpush1.bf16.msra.mxu0 0
    %10113 = vmatprep.subr.bf16.mxu0 0
    %10114 = vmatpush1.bf16.msra.mxu0 0
    %10115 = vmatprep.subr.bf16.mxu0 0
    %10116 = vmatpush1.bf16.msra.mxu0 0
    %10117 = vmatprep.subr.bf16.mxu0 0
    %10118 = vmatpush1.bf16.msra.mxu0 0
    %10119 = vmatprep.mubr.bf16.mxu0 0
    %10120 = vmatmul.mubr.bf16.gmra.mrb[0].mxu0 %v9990
    %v10121 = vpop.f32.mrb[0].mxu0
    %v10122 = vadd.f32 0.0, %v10121
    %v10123 = vpop.f32.mrb[0].mxu0
    %v10124 = vpop.f32.mrb[0].mxu0
    %v10125 = vadd.f32 0.0, %v10124
    %v10126 = vpop.f32.mrb[0].mxu0
    %10127 = vmatprep.mubr.bf16.mxu0 0
    %10128 = vmatmul.mubr.bf16.gmra.mrb[0].mxu0 %v9991
    %v10129 = vpop.f32.mrb[0].mxu0
    %v10130 = vadd.f32 0.0, %v10129
    %v10131 = vpop.f32.mrb[0].mxu0
    %v10132 = vpop.f32.mrb[0].mxu0
    %v10133 = vadd.f32 0.0, %v10132
    %v10134 = vpop.f32.mrb[0].mxu0
    %10135 = vmatprep.mubr.bf16.mxu0 0
    %10136 = vmatmul.mubr.bf16.gmra.mrb[0].mxu0 %v9992
    %v10137 = vpop.f32.mrb[0].mxu0
    %v10138 = vadd.f32 0.0, %v10137
    %v10139 = vpop.f32.mrb[0].mxu0
    %v10140 = vpop.f32.mrb[0].mxu0
    %v10141 = vadd.f32 0.0, %v10140
    %v10142 = vpop.f32.mrb[0].mxu0
    %10143 = vmatprep.mubr.bf16.mxu0 0
    %10144 = vmatmul.mubr.bf16.gmra.mrb[0].mxu0 %v9993
    %v10145 = vpop.f32.mrb[0].mxu0
    %v10146 = vadd.f32 0.0, %v10145
    %v10147 = vpop.f32.mrb[0].mxu0
    %v10148 = vpop.f32.mrb[0].mxu0
    %v10149 = vadd.f32 0.0, %v10148
    %v10150 = vpop.f32.mrb[0].mxu0
    %10151 = vmatprep.mubr.bf16.mxu0 0
    %10152 = vmatmul.mubr.bf16.gmra.mrb[0].mxu0 %v9994
    %v10153 = vpop.f32.mrb[0].mxu0
    %v10154 = vadd.f32 0.0, %v10153
    %v10155 = vpop.f32.mrb[0].mxu0
    %v10156 = vpop.f32.mrb[0].mxu0
    %v10157 = vadd.f32 0.0, %v10156
    %v10158 = vpop.f32.mrb[0].mxu0
    %10159 = vmatprep.mubr.bf16.mxu0 0
    %10160 = vmatmul.mubr.bf16.gmra.mrb[0].mxu0 %v9995
    %v10161 = vpop.f32.mrb[0].mxu0
    %v10162 = vadd.f32 0.0, %v10161
    %v10163 = vpop.f32.mrb[0].mxu0
    %v10164 = vpop.f32.mrb[0].mxu0
    %v10165 = vadd.f32 0.0, %v10164
    %v10166 = vpop.f32.mrb[0].mxu0
    %10167 = vmatprep.mubr.bf16.mxu0 0
    %10168 = vmatmul.mubr.bf16.gmra.mrb[0].mxu0 %v9996
    %v10169 = vpop.f32.mrb[0].mxu0
    %v10170 = vadd.f32 0.0, %v10169
    %v10171 = vpop.f32.mrb[0].mxu0
    %v10172 = vpop.f32.mrb[0].mxu0
    %v10173 = vadd.f32 0.0, %v10172
    %v10174 = vpop.f32.mrb[0].mxu0
    %10175 = vmatprep.mubr.bf16.mxu0 0
    %10176 = vmatmul.mubr.bf16.gmra.mrb[0].mxu0 %v9997
    %v10177 = vpop.f32.mrb[0].mxu0
    %v10178 = vadd.f32 0.0, %v10177
    %v10179 = vpop.f32.mrb[0].mxu0
    %v10180 = vpop.f32.mrb[0].mxu0
    %v10181 = vadd.f32 0.0, %v10180
    %v10182 = vpop.f32.mrb[0].mxu0
    %10183 = vmatprep.mubr.bf16.mxu0 0
    %10184 = vmatmul.mubr.bf16.gmra.mrb[0].mxu0 %v9998
    %v10185 = vpop.f32.mrb[0].mxu0
    %v10186 = vadd.f32 0.0, %v10185
    %v10187 = vpop.f32.mrb[0].mxu0
    %v10188 = vpop.f32.mrb[0].mxu0
    %v10189 = vadd.f32 0.0, %v10188
    %v10190 = vpop.f32.mrb[0].mxu0
    %10191 = vmatprep.mubr.bf16.mxu0 0
    %10192 = vmatmul.mubr.bf16.gmra.mrb[0].mxu0 %v9999
    %v10193 = vpop.f32.mrb[0].mxu0
    %v10194 = vadd.f32 0.0, %v10193
    %v10195 = vpop.f32.mrb[0].mxu0
    %v10196 = vpop.f32.mrb[0].mxu0
    %v10197 = vadd.f32 0.0, %v10196
    %v10198 = vpop.f32.mrb[0].mxu0
    %10199 = vmatprep.mubr.bf16.mxu0 0
    %10200 = vmatmul.mubr.bf16.gmra.mrb[0].mxu0 %v10000
    %v10201 = vpop.f32.mrb[0].mxu0
    %v10202 = vadd.f32 0.0, %v10201
    %v10203 = vpop.f32.mrb[0].mxu0
    %v10204 = vpop.f32.mrb[0].mxu0
    %v10205 = vadd.f32 0.0, %v10204
    %v10206 = vpop.f32.mrb[0].mxu0
    %10207 = vmatprep.mubr.bf16.mxu0 0
    %10208 = vmatmul.mubr.bf16.gmra.mrb[0].mxu0 %v10001
    %v10209 = vpop.f32.mrb[0].mxu0
    %v10210 = vadd.f32 0.0, %v10209
    %v10211 = vpop.f32.mrb[0].mxu0
    %v10212 = vpop.f32.mrb[0].mxu0
    %v10213 = vadd.f32 0.0, %v10212
    %v10214 = vpop.f32.mrb[0].mxu0
    %10215 = vmatprep.mubr.bf16.mxu0 0
    %10216 = vmatmul.mubr.bf16.gmra.mrb[0].mxu0 %v10002
    %v10217 = vpop.f32.mrb[0].mxu0
    %v10218 = vadd.f32 0.0, %v10217
    %v10219 = vpop.f32.mrb[0].mxu0
    %v10220 = vpop.f32.mrb[0].mxu0
    %v10221 = vadd.f32 0.0, %v10220
    %v10222 = vpop.f32.mrb[0].mxu0
    %10223 = vmatprep.mubr.bf16.mxu0 0
    %10224 = vmatmul.mubr.bf16.gmra.mrb[0].mxu0 %v10003
    %v10225 = vpop.f32.mrb[0].mxu0
    %v10226 = vadd.f32 0.0, %v10225
    %v10227 = vpop.f32.mrb[0].mxu0
    %v10228 = vpop.f32.mrb[0].mxu0
    %v10229 = vadd.f32 0.0, %v10228
    %v10230 = vpop.f32.mrb[0].mxu0
    %10231 = vmatprep.mubr.bf16.mxu0 0
    %10232 = vmatmul.mubr.bf16.gmra.mrb[0].mxu0 %v10004
    %v10233 = vpop.f32.mrb[0].mxu0
    %v10234 = vadd.f32 0.0, %v10233
    %v10235 = vpop.f32.mrb[0].mxu0
    %v10236 = vpop.f32.mrb[0].mxu0
    %v10237 = vadd.f32 0.0, %v10236
    %v10238 = vpop.f32.mrb[0].mxu0
    %10239 = vmatprep.mubr.bf16.mxu0 0
    %10240 = vmatmul.mubr.bf16.gmra.mrb[0].mxu0 %v10005
    %v10241 = vpop.f32.mrb[0].mxu0
    %v10242 = vadd.f32 0.0, %v10241
    %v10243 = vpop.f32.mrb[0].mxu0
    %v10244 = vpop.f32.mrb[0].mxu0
    %v10245 = vadd.f32 0.0, %v10244
    %v10246 = vpop.f32.mrb[0].mxu0
    %10247 = vmatprep.mubr.bf16.mxu0 0
    %10248 = vmatmul.mubr.bf16.gmra.mrb[0].mxu0 %v10006
    %v10249 = vpop.f32.mrb[0].mxu0
    %v10250 = vadd.f32 0.0, %v10249
    %v10251 = vpop.f32.mrb[0].mxu0
    %v10252 = vpop.f32.mrb[0].mxu0
    %v10253 = vadd.f32 0.0, %v10252
    %v10254 = vpop.f32.mrb[0].mxu0
    %10255 = vmatprep.mubr.bf16.mxu0 0
    %10256 = vmatmul.mubr.bf16.gmra.mrb[0].mxu0 %v10007
    %v10257 = vpop.f32.mrb[0].mxu0
    %v10258 = vadd.f32 0.0, %v10257
    %v10259 = vpop.f32.mrb[0].mxu0
    %v10260 = vpop.f32.mrb[0].mxu0
    %v10261 = vadd.f32 0.0, %v10260
    %v10262 = vpop.f32.mrb[0].mxu0
    %10263 = vmatprep.mubr.bf16.mxu0 0
    %10264 = vmatmul.mubr.bf16.gmra.mrb[0].mxu0 %v10008
    %v10265 = vpop.f32.mrb[0].mxu0
    %v10266 = vadd.f32 0.0, %v10265
    %v10267 = vpop.f32.mrb[0].mxu0
    %v10268 = vpop.f32.mrb[0].mxu0
    %v10269 = vadd.f32 0.0, %v10268
    %v10270 = vpop.f32.mrb[0].mxu0
    %10271 = vmatprep.mubr.bf16.mxu0 0
    %10272 = vmatmul.mubr.bf16.gmra.mrb[0].mxu0 %v10009
    %v10273 = vpop.f32.mrb[0].mxu0
    %v10274 = vadd.f32 0.0, %v10273
    %v10275 = vpop.f32.mrb[0].mxu0
    %v10276 = vpop.f32.mrb[0].mxu0
    %v10277 = vadd.f32 0.0, %v10276
    %v10278 = vpop.f32.mrb[0].mxu0
    %10279 = vmatprep.mubr.bf16.mxu0 0
    %10280 = vmatmul.mubr.bf16.gmra.mrb[0].mxu0 %v10010
    %v10281 = vpop.f32.mrb[0].mxu0
    %v10282 = vadd.f32 0.0, %v10281
    %v10283 = vpop.f32.mrb[0].mxu0
    %v10284 = vpop.f32.mrb[0].mxu0
    %v10285 = vadd.f32 0.0, %v10284
    %v10286 = vpop.f32.mrb[0].mxu0
    %10287 = vmatprep.mubr.bf16.mxu0 0
    %10288 = vmatmul.mubr.bf16.gmra.mrb[0].mxu0 %v10011
    %v10289 = vpop.f32.mrb[0].mxu0
    %v10290 = vadd.f32 0.0, %v10289
    %v10291 = vpop.f32.mrb[0].mxu0
    %v10292 = vpop.f32.mrb[0].mxu0
    %v10293 = vadd.f32 0.0, %v10292
    %v10294 = vpop.f32.mrb[0].mxu0
    %10295 = vmatprep.mubr.bf16.mxu0 0
    %10296 = vmatmul.mubr.bf16.gmra.mrb[0].mxu0 %v10012
    %v10297 = vpop.f32.mrb[0].mxu0
    %v10298 = vadd.f32 0.0, %v10297
    %v10299 = vpop.f32.mrb[0].mxu0
    %v10300 = vpop.f32.mrb[0].mxu0
    %v10301 = vadd.f32 0.0, %v10300
    %v10302 = vpop.f32.mrb[0].mxu0
    %10303 = vmatprep.mubr.bf16.mxu0 0
    %10304 = vmatmul.mubr.bf16.gmra.mrb[0].mxu0 %v10013
    %v10305 = vpop.f32.mrb[0].mxu0
    %v10306 = vadd.f32 0.0, %v10305
    %v10307 = vpop.f32.mrb[0].mxu0
    %v10308 = vpop.f32.mrb[0].mxu0
    %v10309 = vadd.f32 0.0, %v10308
    %v10310 = vpop.f32.mrb[0].mxu0
    %10311 = vmatprep.mubr.bf16.mxu0 0
    %10312 = vmatmul.mubr.bf16.gmra.mrb[0].mxu0 %v10014
    %v10313 = vpop.f32.mrb[0].mxu0
    %v10314 = vadd.f32 0.0, %v10313
    %v10315 = vpop.f32.mrb[0].mxu0
    %v10316 = vpop.f32.mrb[0].mxu0
    %v10317 = vadd.f32 0.0, %v10316
    %v10318 = vpop.f32.mrb[0].mxu0
    %10319 = vmatprep.mubr.bf16.mxu0 0
    %10320 = vmatmul.mubr.bf16.gmra.mrb[0].mxu0 %v10015
    %v10321 = vpop.f32.mrb[0].mxu0
    %v10322 = vadd.f32 0.0, %v10321
    %v10323 = vpop.f32.mrb[0].mxu0
    %v10324 = vpop.f32.mrb[0].mxu0
    %v10325 = vadd.f32 0.0, %v10324
    %v10326 = vpop.f32.mrb[0].mxu0
    %10327 = vmatprep.mubr.bf16.mxu0 0
    %10328 = vmatmul.mubr.bf16.gmra.mrb[0].mxu0 %v10016
    %v10329 = vpop.f32.mrb[0].mxu0
    %v10330 = vadd.f32 0.0, %v10329
    %v10331 = vpop.f32.mrb[0].mxu0
    %v10332 = vpop.f32.mrb[0].mxu0
    %v10333 = vadd.f32 0.0, %v10332
    %v10334 = vpop.f32.mrb[0].mxu0
    %10335 = vmatprep.mubr.bf16.mxu0 0
    %10336 = vmatmul.mubr.bf16.gmra.mrb[0].mxu0 %v10017
    %v10337 = vpop.f32.mrb[0].mxu0
    %v10338 = vadd.f32 0.0, %v10337
    %v10339 = vpop.f32.mrb[0].mxu0
    %v10340 = vpop.f32.mrb[0].mxu0
    %v10341 = vadd.f32 0.0, %v10340
    %v10342 = vpop.f32.mrb[0].mxu0
    %10343 = vmatprep.mubr.bf16.mxu0 0
    %10344 = vmatmul.mubr.bf16.gmra.mrb[0].mxu0 %v10018
    %v10345 = vpop.f32.mrb[0].mxu0
    %v10346 = vadd.f32 0.0, %v10345
    %v10347 = vpop.f32.mrb[0].mxu0
    %v10348 = vpop.f32.mrb[0].mxu0
    %v10349 = vadd.f32 0.0, %v10348
    %v10350 = vpop.f32.mrb[0].mxu0
    %10351 = vmatprep.mubr.bf16.mxu0 0
    %10352 = vmatmul.mubr.bf16.gmra.mrb[0].mxu0 %v10019
    %v10353 = vpop.f32.mrb[0].mxu0
    %v10354 = vadd.f32 0.0, %v10353
    %v10355 = vpop.f32.mrb[0].mxu0
    %v10356 = vpop.f32.mrb[0].mxu0
    %v10357 = vadd.f32 0.0, %v10356
    %v10358 = vpop.f32.mrb[0].mxu0
    %10359 = vmatprep.mubr.bf16.mxu0 0
    %10360 = vmatmul.mubr.bf16.gmra.mrb[0].mxu0 %v10020
    %v10361 = vpop.f32.mrb[0].mxu0
    %v10362 = vadd.f32 0.0, %v10361
    %v10363 = vpop.f32.mrb[0].mxu0
    %v10364 = vpop.f32.mrb[0].mxu0
    %v10365 = vadd.f32 0.0, %v10364
    %v10366 = vpop.f32.mrb[0].mxu0
    %10367 = vmatprep.mubr.bf16.mxu0 0
    %10368 = vmatmul.mubr.bf16.gmra.mrb[0].mxu0 %v10021
    %v10369 = vpop.f32.mrb[0].mxu0
    %v10370 = vadd.f32 0.0, %v10369
    %v10371 = vpop.f32.mrb[0].mxu0
    %v10372 = vpop.f32.mrb[0].mxu0
    %v10373 = vadd.f32 0.0, %v10372
    %v10374 = vpop.f32.mrb[0].mxu0
    %10375 = vdwg.mxu0
    %v10376 = vadd.f32 %v9862, %v10122
    %v10377 = vadd.f32 %v9863, %v10125
    %v10378 = vadd.f32 %v9864, %v10130
    %v10379 = vadd.f32 %v9865, %v10133
    %v10380 = vadd.f32 %v9866, %v10138
    %v10381 = vadd.f32 %v9867, %v10141
    %v10382 = vadd.f32 %v9868, %v10146
    %v10383 = vadd.f32 %v9869, %v10149
    %v10384 = vadd.f32 %v9870, %v10154
    %v10385 = vadd.f32 %v9871, %v10157
    %v10386 = vadd.f32 %v9872, %v10162
    %v10387 = vadd.f32 %v9873, %v10165
    %v10388 = vadd.f32 %v9874, %v10170
    %v10389 = vadd.f32 %v9875, %v10173
    %v10390 = vadd.f32 %v9876, %v10178
    %v10391 = vadd.f32 %v9877, %v10181
    %v10392 = vadd.f32 %v9878, %v10186
    %v10393 = vadd.f32 %v9879, %v10189
    %v10394 = vadd.f32 %v9880, %v10194
    %v10395 = vadd.f32 %v9881, %v10197
    %v10396 = vadd.f32 %v9882, %v10202
    %v10397 = vadd.f32 %v9883, %v10205
    %v10398 = vadd.f32 %v9884, %v10210
    %v10399 = vadd.f32 %v9885, %v10213
    %v10400 = vadd.f32 %v9886, %v10218
    %v10401 = vadd.f32 %v9887, %v10221
    %v10402 = vadd.f32 %v9888, %v10226
    %v10403 = vadd.f32 %v9889, %v10229
    %v10404 = vadd.f32 %v9890, %v10234
    %v10405 = vadd.f32 %v9891, %v10237
    %v10406 = vadd.f32 %v9892, %v10242
    %v10407 = vadd.f32 %v9893, %v10245
    %v10408 = vadd.f32 %v9894, %v10250
    %v10409 = vadd.f32 %v9895, %v10253
    %v10410 = vadd.f32 %v9896, %v10258
    %v10411 = vadd.f32 %v9897, %v10261
    %v10412 = vadd.f32 %v9898, %v10266
    %v10413 = vadd.f32 %v9899, %v10269
    %v10414 = vadd.f32 %v9900, %v10274
    %v10415 = vadd.f32 %v9901, %v10277
    %v10416 = vadd.f32 %v9902, %v10282
    %v10417 = vadd.f32 %v9903, %v10285
    %v10418 = vadd.f32 %v9904, %v10290
    %v10419 = vadd.f32 %v9905, %v10293
    %v10420 = vadd.f32 %v9906, %v10298
    %v10421 = vadd.f32 %v9907, %v10301
    %v10422 = vadd.f32 %v9908, %v10306
    %v10423 = vadd.f32 %v9909, %v10309
    %v10424 = vadd.f32 %v9910, %v10314
    %v10425 = vadd.f32 %v9911, %v10317
    %v10426 = vadd.f32 %v9912, %v10322
    %v10427 = vadd.f32 %v9913, %v10325
    %v10428 = vadd.f32 %v9914, %v10330
    %v10429 = vadd.f32 %v9915, %v10333
    %v10430 = vadd.f32 %v9916, %v10338
    %v10431 = vadd.f32 %v9917, %v10341
    %v10432 = vadd.f32 %v9918, %v10346
    %v10433 = vadd.f32 %v9919, %v10349
    %v10434 = vadd.f32 %v9920, %v10354
    %v10435 = vadd.f32 %v9921, %v10357
    %v10436 = vadd.f32 %v9922, %v10362
    %v10437 = vadd.f32 %v9923, %v10365
    %v10438 = vadd.f32 %v9924, %v10370
    %v10439 = vadd.f32 %v9925, %v10373
    %v10440 = vld [vmem:[%s9411 + $0x2] sm:$0xff]
    %v10441 = vld [vmem:[%s9411 + $0xa] sm:$0xff]
    %v10442 = vld [vmem:[%s9411 + $0x1a] sm:$0xff]
    %v10443 = vld [vmem:[%s9411 + $0x22] sm:$0xff]
    %v10444 = vld [vmem:[%s9411 + $0x32] sm:$0xff]
    %v10445 = vld [vmem:[%s9411 + $0x3a] sm:$0xff]
    %v10446 = vld [vmem:[%s9411 + $0x4a] sm:$0xff]
    %v10447 = vld [vmem:[%s9411 + $0x52] sm:$0xff]
    %v10448 = vld [vmem:[%s9411 + $0x62] sm:$0xff]
    %v10449 = vld [vmem:[%s9411 + $0x6a] sm:$0xff]
    %v10450 = vld [vmem:[%s9411 + $0x7a] sm:$0xff]
    %v10451 = vld [vmem:[%s9411 + $0x82] sm:$0xff]
    %v10452 = vld [vmem:[%s9411 + $0x92] sm:$0xff]
    %v10453 = vld [vmem:[%s9411 + $0x9a] sm:$0xff]
    %v10454 = vld [vmem:[%s9411 + $0xaa] sm:$0xff]
    %v10455 = vld [vmem:[%s9411 + $0xb2] sm:$0xff]
    %v10456 = vld [vmem:[%s9411 + $0xc2] sm:$0xff]
    %v10457 = vld [vmem:[%s9411 + $0xca] sm:$0xff]
    %v10458 = vld [vmem:[%s9411 + $0xda] sm:$0xff]
    %v10459 = vld [vmem:[%s9411 + $0xe2] sm:$0xff]
    %v10460 = vld [vmem:[%s9411 + $0xf2] sm:$0xff]
    %v10461 = vld [vmem:[%s9411 + $0xfa] sm:$0xff]
    %v10462 = vld [vmem:[%s9411 + $0x10a] sm:$0xff]
    %v10463 = vld [vmem:[%s9411 + $0x112] sm:$0xff]
    %v10464 = vld [vmem:[%s9411 + $0x122] sm:$0xff]
    %v10465 = vld [vmem:[%s9411 + $0x12a] sm:$0xff]
    %v10466 = vld [vmem:[%s9411 + $0x13a] sm:$0xff]
    %v10467 = vld [vmem:[%s9411 + $0x142] sm:$0xff]
    %v10468 = vld [vmem:[%s9411 + $0x152] sm:$0xff]
    %v10469 = vld [vmem:[%s9411 + $0x15a] sm:$0xff]
    %v10470 = vld [vmem:[%s9411 + $0x16a] sm:$0xff]
    %v10471 = vld [vmem:[%s9411 + $0x172] sm:$0xff]
    %v10472 = vld [vmem:[%s9411 + $0x1b2] sm:$0xff]
    %v10473 = vld [vmem:[%s9411 + $0x1ba] sm:$0xff]
    %v10474 = vld [vmem:[%s9411 + $0x1ca] sm:$0xff]
    %v10475 = vld [vmem:[%s9411 + $0x1d2] sm:$0xff]
    %v10476 = vld [vmem:[%s9411 + $0x1e2] sm:$0xff]
    %v10477 = vld [vmem:[%s9411 + $0x1ea] sm:$0xff]
    %v10478 = vld [vmem:[%s9411 + $0x1fa] sm:$0xff]
    %v10479 = vld [vmem:[%s9411 + $0x202] sm:$0xff]
    %v10480 = vld [vmem:[%s9411 + $0x212] sm:$0xff]
    %v10481 = vld [vmem:[%s9411 + $0x21a] sm:$0xff]
    %v10482 = vld [vmem:[%s9411 + $0x22a] sm:$0xff]
    %v10483 = vld [vmem:[%s9411 + $0x232] sm:$0xff]
    %v10484 = vld [vmem:[%s9411 + $0x242] sm:$0xff]
    %v10485 = vld [vmem:[%s9411 + $0x24a] sm:$0xff]
    %v10486 = vld [vmem:[%s9411 + $0x25a] sm:$0xff]
    %v10487 = vld [vmem:[%s9411 + $0x262] sm:$0xff]
    %v10488 = vld [vmem:[%s9411 + $0x272] sm:$0xff]
    %v10489 = vld [vmem:[%s9411 + $0x27a] sm:$0xff]
    %v10490 = vld [vmem:[%s9411 + $0x28a] sm:$0xff]
    %v10491 = vld [vmem:[%s9411 + $0x292] sm:$0xff]
    %v10492 = vld [vmem:[%s9411 + $0x2a2] sm:$0xff]
    %v10493 = vld [vmem:[%s9411 + $0x2aa] sm:$0xff]
    %v10494 = vld [vmem:[%s9411 + $0x2ba] sm:$0xff]
    %v10495 = vld [vmem:[%s9411 + $0x2c2] sm:$0xff]
    %v10496 = vld [vmem:[%s9411 + $0x2d2] sm:$0xff]
    %v10497 = vld [vmem:[%s9411 + $0x2da] sm:$0xff]
    %v10498 = vld [vmem:[%s9411 + $0x2ea] sm:$0xff]
    %v10499 = vld [vmem:[%s9411 + $0x2f2] sm:$0xff]
    %v10500 = vld [vmem:[%s9411 + $0x302] sm:$0xff]
    %v10501 = vld [vmem:[%s9411 + $0x30a] sm:$0xff]
    %v10502 = vld [vmem:[%s9411 + $0x31a] sm:$0xff]
    %v10503 = vld [vmem:[%s9411 + $0x322] sm:$0xff]
    %v10504 = vpack.c.bf16 %v10441, %v10440
    %v10505 = vpack.c.bf16 %v10443, %v10442
    %v10506 = vpack.c.bf16 %v10445, %v10444
    %v10507 = vpack.c.bf16 %v10447, %v10446
    %v10508 = vpack.c.bf16 %v10449, %v10448
    %v10509 = vpack.c.bf16 %v10451, %v10450
    %v10510 = vpack.c.bf16 %v10453, %v10452
    %v10511 = vpack.c.bf16 %v10455, %v10454
    %v10512 = vpack.c.bf16 %v10457, %v10456
    %v10513 = vpack.c.bf16 %v10459, %v10458
    %v10514 = vpack.c.bf16 %v10461, %v10460
    %v10515 = vpack.c.bf16 %v10463, %v10462
    %v10516 = vpack.c.bf16 %v10465, %v10464
    %v10517 = vpack.c.bf16 %v10467, %v10466
    %v10518 = vpack.c.bf16 %v10469, %v10468
    %v10519 = vpack.c.bf16 %v10471, %v10470
    %v10520 = vpack.c.bf16 %v10473, %v10472
    %v10521 = vpack.c.bf16 %v10475, %v10474
    %v10522 = vpack.c.bf16 %v10477, %v10476
    %v10523 = vpack.c.bf16 %v10479, %v10478
    %v10524 = vpack.c.bf16 %v10481, %v10480
    %v10525 = vpack.c.bf16 %v10483, %v10482
    %v10526 = vpack.c.bf16 %v10485, %v10484
    %v10527 = vpack.c.bf16 %v10487, %v10486
    %v10528 = vpack.c.bf16 %v10489, %v10488
    %v10529 = vpack.c.bf16 %v10491, %v10490
    %v10530 = vpack.c.bf16 %v10493, %v10492
    %v10531 = vpack.c.bf16 %v10495, %v10494
    %v10532 = vpack.c.bf16 %v10497, %v10496
    %v10533 = vpack.c.bf16 %v10499, %v10498
    %v10534 = vpack.c.bf16 %v10501, %v10500
    %v10535 = vpack.c.bf16 %v10503, %v10502
    %s10536 = scalar_lea.vmem [#allocation11], 512
    %v10537 = vld [vmem:[%s10536] sm:$0xf]
    %v10538 = vld [vmem:[%s10536 + $0x4] sm:$0xf]
    %v10539 = vld [vmem:[%s10536 + $0x8] sm:$0xf]
    %v10540 = vld [vmem:[%s10536 + $0xc] sm:$0xf]
    %v10541 = vld [vmem:[%s10536 + $0x10] sm:$0xf]
    %v10542 = vld [vmem:[%s10536 + $0x14] sm:$0xf]
    %v10543 = vld [vmem:[%s10536 + $0x18] sm:$0xf]
    %v10544 = vld [vmem:[%s10536 + $0x1c] sm:$0xf]
    %v10545 = vld [vmem:[%s10536 + $0x20] sm:$0xf]
    %v10546 = vld [vmem:[%s10536 + $0x24] sm:$0xf]
    %v10547 = vld [vmem:[%s10536 + $0x28] sm:$0xf]
    %v10548 = vld [vmem:[%s10536 + $0x2c] sm:$0xf]
    %v10549 = vld [vmem:[%s10536 + $0x30] sm:$0xf]
    %v10550 = vld [vmem:[%s10536 + $0x34] sm:$0xf]
    %v10551 = vld [vmem:[%s10536 + $0x38] sm:$0xf]
    %v10552 = vld [vmem:[%s10536 + $0x3c] sm:$0xf]
    %v10569 = vunpack.c.l.b16 %v10537
    %v10570 = vunpack.c.l.b16 %v10538
    %v10571 = vunpack.c.l.b16 %v10539
    %v10572 = vunpack.c.l.b16 %v10540
    %v10573 = vunpack.c.l.b16 %v10541
    %v10574 = vunpack.c.l.b16 %v10542
    %v10575 = vunpack.c.l.b16 %v10543
    %v10576 = vunpack.c.l.b16 %v10544
    %v10577 = vunpack.c.l.b16 %v10545
    %v10578 = vunpack.c.l.b16 %v10546
    %v10579 = vunpack.c.l.b16 %v10547
    %v10580 = vunpack.c.l.b16 %v10548
    %v10581 = vunpack.c.l.b16 %v10549
    %v10582 = vunpack.c.l.b16 %v10550
    %v10583 = vunpack.c.l.b16 %v10551
    %v10584 = vunpack.c.l.b16 %v10552
    %v10585 = vpack.c.b16 %v10570, %v10569
    %v10586 = vpack.c.b16 %v10572, %v10571
    %v10587 = vpack.c.b16 %v10574, %v10573
    %v10588 = vpack.c.b16 %v10576, %v10575
    %v10589 = vpack.c.b16 %v10578, %v10577
    %v10590 = vpack.c.b16 %v10580, %v10579
    %v10591 = vpack.c.b16 %v10582, %v10581
    %v10592 = vpack.c.b16 %v10584, %v10583
    %10601 = vmatprep.subr.bf16.mxu0 0
    %10602 = vmatpush1.bf16.msra.mxu0 %v10585
    %10603 = vmatprep.subr.bf16.mxu0 0
    %10604 = vmatpush1.bf16.msra.mxu0 %v10586
    %10605 = vmatprep.subr.bf16.mxu0 0
    %10606 = vmatpush1.bf16.msra.mxu0 %v10587
    %10607 = vmatprep.subr.bf16.mxu0 0
    %10608 = vmatpush1.bf16.msra.mxu0 %v10588
    %10609 = vmatprep.subr.bf16.mxu0 0
    %10610 = vmatpush1.bf16.msra.mxu0 %v10589
    %10611 = vmatprep.subr.bf16.mxu0 0
    %10612 = vmatpush1.bf16.msra.mxu0 %v10590
    %10613 = vmatprep.subr.bf16.mxu0 0
    %10614 = vmatpush1.bf16.msra.mxu0 %v10591
    %10615 = vmatprep.subr.bf16.mxu0 0
    %10616 = vmatpush1.bf16.msra.mxu0 %v10592
    %10617 = vmatprep.subr.bf16.mxu0 0
    %10618 = vmatpush1.bf16.msra.mxu0 0
    %10619 = vmatprep.subr.bf16.mxu0 0
    %10620 = vmatpush1.bf16.msra.mxu0 0
    %10621 = vmatprep.subr.bf16.mxu0 0
    %10622 = vmatpush1.bf16.msra.mxu0 0
    %10623 = vmatprep.subr.bf16.mxu0 0
    %10624 = vmatpush1.bf16.msra.mxu0 0
    %10625 = vmatprep.subr.bf16.mxu0 0
    %10626 = vmatpush1.bf16.msra.mxu0 0
    %10627 = vmatprep.subr.bf16.mxu0 0
    %10628 = vmatpush1.bf16.msra.mxu0 0
    %10629 = vmatprep.subr.bf16.mxu0 0
    %10630 = vmatpush1.bf16.msra.mxu0 0
    %10631 = vmatprep.subr.bf16.mxu0 0
    %10632 = vmatpush1.bf16.msra.mxu0 0
    %10633 = vmatprep.mubr.bf16.mxu0 0
    %10634 = vmatmul.mubr.bf16.gmra.mrb[0].mxu0 %v10504
    %v10635 = vpop.f32.mrb[0].mxu0
    %v10636 = vadd.f32 0.0, %v10635
    %v10637 = vpop.f32.mrb[0].mxu0
    %v10638 = vpop.f32.mrb[0].mxu0
    %v10639 = vadd.f32 0.0, %v10638
    %v10640 = vpop.f32.mrb[0].mxu0
    %10641 = vmatprep.mubr.bf16.mxu0 0
    %10642 = vmatmul.mubr.bf16.gmra.mrb[0].mxu0 %v10505
    %v10643 = vpop.f32.mrb[0].mxu0
    %v10644 = vadd.f32 0.0, %v10643
    %v10645 = vpop.f32.mrb[0].mxu0
    %v10646 = vpop.f32.mrb[0].mxu0
    %v10647 = vadd.f32 0.0, %v10646
    %v10648 = vpop.f32.mrb[0].mxu0
    %10649 = vmatprep.mubr.bf16.mxu0 0
    %10650 = vmatmul.mubr.bf16.gmra.mrb[0].mxu0 %v10506
    %v10651 = vpop.f32.mrb[0].mxu0
    %v10652 = vadd.f32 0.0, %v10651
    %v10653 = vpop.f32.mrb[0].mxu0
    %v10654 = vpop.f32.mrb[0].mxu0
    %v10655 = vadd.f32 0.0, %v10654
    %v10656 = vpop.f32.mrb[0].mxu0
    %10657 = vmatprep.mubr.bf16.mxu0 0
    %10658 = vmatmul.mubr.bf16.gmra.mrb[0].mxu0 %v10507
    %v10659 = vpop.f32.mrb[0].mxu0
    %v10660 = vadd.f32 0.0, %v10659
    %v10661 = vpop.f32.mrb[0].mxu0
    %v10662 = vpop.f32.mrb[0].mxu0
    %v10663 = vadd.f32 0.0, %v10662
    %v10664 = vpop.f32.mrb[0].mxu0
    %10665 = vmatprep.mubr.bf16.mxu0 0
    %10666 = vmatmul.mubr.bf16.gmra.mrb[0].mxu0 %v10508
    %v10667 = vpop.f32.mrb[0].mxu0
    %v10668 = vadd.f32 0.0, %v10667
    %v10669 = vpop.f32.mrb[0].mxu0
    %v10670 = vpop.f32.mrb[0].mxu0
    %v10671 = vadd.f32 0.0, %v10670
    %v10672 = vpop.f32.mrb[0].mxu0
    %10673 = vmatprep.mubr.bf16.mxu0 0
    %10674 = vmatmul.mubr.bf16.gmra.mrb[0].mxu0 %v10509
    %v10675 = vpop.f32.mrb[0].mxu0
    %v10676 = vadd.f32 0.0, %v10675
    %v10677 = vpop.f32.mrb[0].mxu0
    %v10678 = vpop.f32.mrb[0].mxu0
    %v10679 = vadd.f32 0.0, %v10678
    %v10680 = vpop.f32.mrb[0].mxu0
    %10681 = vmatprep.mubr.bf16.mxu0 0
    %10682 = vmatmul.mubr.bf16.gmra.mrb[0].mxu0 %v10510
    %v10683 = vpop.f32.mrb[0].mxu0
    %v10684 = vadd.f32 0.0, %v10683
    %v10685 = vpop.f32.mrb[0].mxu0
    %v10686 = vpop.f32.mrb[0].mxu0
    %v10687 = vadd.f32 0.0, %v10686
    %v10688 = vpop.f32.mrb[0].mxu0
    %10689 = vmatprep.mubr.bf16.mxu0 0
    %10690 = vmatmul.mubr.bf16.gmra.mrb[0].mxu0 %v10511
    %v10691 = vpop.f32.mrb[0].mxu0
    %v10692 = vadd.f32 0.0, %v10691
    %v10693 = vpop.f32.mrb[0].mxu0
    %v10694 = vpop.f32.mrb[0].mxu0
    %v10695 = vadd.f32 0.0, %v10694
    %v10696 = vpop.f32.mrb[0].mxu0
    %10697 = vmatprep.mubr.bf16.mxu0 0
    %10698 = vmatmul.mubr.bf16.gmra.mrb[0].mxu0 %v10512
    %v10699 = vpop.f32.mrb[0].mxu0
    %v10700 = vadd.f32 0.0, %v10699
    %v10701 = vpop.f32.mrb[0].mxu0
    %v10702 = vpop.f32.mrb[0].mxu0
    %v10703 = vadd.f32 0.0, %v10702
    %v10704 = vpop.f32.mrb[0].mxu0
    %10705 = vmatprep.mubr.bf16.mxu0 0
    %10706 = vmatmul.mubr.bf16.gmra.mrb[0].mxu0 %v10513
    %v10707 = vpop.f32.mrb[0].mxu0
    %v10708 = vadd.f32 0.0, %v10707
    %v10709 = vpop.f32.mrb[0].mxu0
    %v10710 = vpop.f32.mrb[0].mxu0
    %v10711 = vadd.f32 0.0, %v10710
    %v10712 = vpop.f32.mrb[0].mxu0
    %10713 = vmatprep.mubr.bf16.mxu0 0
    %10714 = vmatmul.mubr.bf16.gmra.mrb[0].mxu0 %v10514
    %v10715 = vpop.f32.mrb[0].mxu0
    %v10716 = vadd.f32 0.0, %v10715
    %v10717 = vpop.f32.mrb[0].mxu0
    %v10718 = vpop.f32.mrb[0].mxu0
    %v10719 = vadd.f32 0.0, %v10718
    %v10720 = vpop.f32.mrb[0].mxu0
    %10721 = vmatprep.mubr.bf16.mxu0 0
    %10722 = vmatmul.mubr.bf16.gmra.mrb[0].mxu0 %v10515
    %v10723 = vpop.f32.mrb[0].mxu0
    %v10724 = vadd.f32 0.0, %v10723
    %v10725 = vpop.f32.mrb[0].mxu0
    %v10726 = vpop.f32.mrb[0].mxu0
    %v10727 = vadd.f32 0.0, %v10726
    %v10728 = vpop.f32.mrb[0].mxu0
    %10729 = vmatprep.mubr.bf16.mxu0 0
    %10730 = vmatmul.mubr.bf16.gmra.mrb[0].mxu0 %v10516
    %v10731 = vpop.f32.mrb[0].mxu0
    %v10732 = vadd.f32 0.0, %v10731
    %v10733 = vpop.f32.mrb[0].mxu0
    %v10734 = vpop.f32.mrb[0].mxu0
    %v10735 = vadd.f32 0.0, %v10734
    %v10736 = vpop.f32.mrb[0].mxu0
    %10737 = vmatprep.mubr.bf16.mxu0 0
    %10738 = vmatmul.mubr.bf16.gmra.mrb[0].mxu0 %v10517
    %v10739 = vpop.f32.mrb[0].mxu0
    %v10740 = vadd.f32 0.0, %v10739
    %v10741 = vpop.f32.mrb[0].mxu0
    %v10742 = vpop.f32.mrb[0].mxu0
    %v10743 = vadd.f32 0.0, %v10742
    %v10744 = vpop.f32.mrb[0].mxu0
    %10745 = vmatprep.mubr.bf16.mxu0 0
    %10746 = vmatmul.mubr.bf16.gmra.mrb[0].mxu0 %v10518
    %v10747 = vpop.f32.mrb[0].mxu0
    %v10748 = vadd.f32 0.0, %v10747
    %v10749 = vpop.f32.mrb[0].mxu0
    %v10750 = vpop.f32.mrb[0].mxu0
    %v10751 = vadd.f32 0.0, %v10750
    %v10752 = vpop.f32.mrb[0].mxu0
    %10753 = vmatprep.mubr.bf16.mxu0 0
    %10754 = vmatmul.mubr.bf16.gmra.mrb[0].mxu0 %v10519
    %v10755 = vpop.f32.mrb[0].mxu0
    %v10756 = vadd.f32 0.0, %v10755
    %v10757 = vpop.f32.mrb[0].mxu0
    %v10758 = vpop.f32.mrb[0].mxu0
    %v10759 = vadd.f32 0.0, %v10758
    %v10760 = vpop.f32.mrb[0].mxu0
    %10761 = vmatprep.mubr.bf16.mxu0 0
    %10762 = vmatmul.mubr.bf16.gmra.mrb[0].mxu0 %v10520
    %v10763 = vpop.f32.mrb[0].mxu0
    %v10764 = vadd.f32 0.0, %v10763
    %v10765 = vpop.f32.mrb[0].mxu0
    %v10766 = vpop.f32.mrb[0].mxu0
    %v10767 = vadd.f32 0.0, %v10766
    %v10768 = vpop.f32.mrb[0].mxu0
    %10769 = vmatprep.mubr.bf16.mxu0 0
    %10770 = vmatmul.mubr.bf16.gmra.mrb[0].mxu0 %v10521
    %v10771 = vpop.f32.mrb[0].mxu0
    %v10772 = vadd.f32 0.0, %v10771
    %v10773 = vpop.f32.mrb[0].mxu0
    %v10774 = vpop.f32.mrb[0].mxu0
    %v10775 = vadd.f32 0.0, %v10774
    %v10776 = vpop.f32.mrb[0].mxu0
    %10777 = vmatprep.mubr.bf16.mxu0 0
    %10778 = vmatmul.mubr.bf16.gmra.mrb[0].mxu0 %v10522
    %v10779 = vpop.f32.mrb[0].mxu0
    %v10780 = vadd.f32 0.0, %v10779
    %v10781 = vpop.f32.mrb[0].mxu0
    %v10782 = vpop.f32.mrb[0].mxu0
    %v10783 = vadd.f32 0.0, %v10782
    %v10784 = vpop.f32.mrb[0].mxu0
    %10785 = vmatprep.mubr.bf16.mxu0 0
    %10786 = vmatmul.mubr.bf16.gmra.mrb[0].mxu0 %v10523
    %v10787 = vpop.f32.mrb[0].mxu0
    %v10788 = vadd.f32 0.0, %v10787
    %v10789 = vpop.f32.mrb[0].mxu0
    %v10790 = vpop.f32.mrb[0].mxu0
    %v10791 = vadd.f32 0.0, %v10790
    %v10792 = vpop.f32.mrb[0].mxu0
    %10793 = vmatprep.mubr.bf16.mxu0 0
    %10794 = vmatmul.mubr.bf16.gmra.mrb[0].mxu0 %v10524
    %v10795 = vpop.f32.mrb[0].mxu0
    %v10796 = vadd.f32 0.0, %v10795
    %v10797 = vpop.f32.mrb[0].mxu0
    %v10798 = vpop.f32.mrb[0].mxu0
    %v10799 = vadd.f32 0.0, %v10798
    %v10800 = vpop.f32.mrb[0].mxu0
    %10801 = vmatprep.mubr.bf16.mxu0 0
    %10802 = vmatmul.mubr.bf16.gmra.mrb[0].mxu0 %v10525
    %v10803 = vpop.f32.mrb[0].mxu0
    %v10804 = vadd.f32 0.0, %v10803
    %v10805 = vpop.f32.mrb[0].mxu0
    %v10806 = vpop.f32.mrb[0].mxu0
    %v10807 = vadd.f32 0.0, %v10806
    %v10808 = vpop.f32.mrb[0].mxu0
    %10809 = vmatprep.mubr.bf16.mxu0 0
    %10810 = vmatmul.mubr.bf16.gmra.mrb[0].mxu0 %v10526
    %v10811 = vpop.f32.mrb[0].mxu0
    %v10812 = vadd.f32 0.0, %v10811
    %v10813 = vpop.f32.mrb[0].mxu0
    %v10814 = vpop.f32.mrb[0].mxu0
    %v10815 = vadd.f32 0.0, %v10814
    %v10816 = vpop.f32.mrb[0].mxu0
    %10817 = vmatprep.mubr.bf16.mxu0 0
    %10818 = vmatmul.mubr.bf16.gmra.mrb[0].mxu0 %v10527
    %v10819 = vpop.f32.mrb[0].mxu0
    %v10820 = vadd.f32 0.0, %v10819
    %v10821 = vpop.f32.mrb[0].mxu0
    %v10822 = vpop.f32.mrb[0].mxu0
    %v10823 = vadd.f32 0.0, %v10822
    %v10824 = vpop.f32.mrb[0].mxu0
    %10825 = vmatprep.mubr.bf16.mxu0 0
    %10826 = vmatmul.mubr.bf16.gmra.mrb[0].mxu0 %v10528
    %v10827 = vpop.f32.mrb[0].mxu0
    %v10828 = vadd.f32 0.0, %v10827
    %v10829 = vpop.f32.mrb[0].mxu0
    %v10830 = vpop.f32.mrb[0].mxu0
    %v10831 = vadd.f32 0.0, %v10830
    %v10832 = vpop.f32.mrb[0].mxu0
    %10833 = vmatprep.mubr.bf16.mxu0 0
    %10834 = vmatmul.mubr.bf16.gmra.mrb[0].mxu0 %v10529
    %v10835 = vpop.f32.mrb[0].mxu0
    %v10836 = vadd.f32 0.0, %v10835
    %v10837 = vpop.f32.mrb[0].mxu0
    %v10838 = vpop.f32.mrb[0].mxu0
    %v10839 = vadd.f32 0.0, %v10838
    %v10840 = vpop.f32.mrb[0].mxu0
    %10841 = vmatprep.mubr.bf16.mxu0 0
    %10842 = vmatmul.mubr.bf16.gmra.mrb[0].mxu0 %v10530
    %v10843 = vpop.f32.mrb[0].mxu0
    %v10844 = vadd.f32 0.0, %v10843
    %v10845 = vpop.f32.mrb[0].mxu0
    %v10846 = vpop.f32.mrb[0].mxu0
    %v10847 = vadd.f32 0.0, %v10846
    %v10848 = vpop.f32.mrb[0].mxu0
    %10849 = vmatprep.mubr.bf16.mxu0 0
    %10850 = vmatmul.mubr.bf16.gmra.mrb[0].mxu0 %v10531
    %v10851 = vpop.f32.mrb[0].mxu0
    %v10852 = vadd.f32 0.0, %v10851
    %v10853 = vpop.f32.mrb[0].mxu0
    %v10854 = vpop.f32.mrb[0].mxu0
    %v10855 = vadd.f32 0.0, %v10854
    %v10856 = vpop.f32.mrb[0].mxu0
    %10857 = vmatprep.mubr.bf16.mxu0 0
    %10858 = vmatmul.mubr.bf16.gmra.mrb[0].mxu0 %v10532
    %v10859 = vpop.f32.mrb[0].mxu0
    %v10860 = vadd.f32 0.0, %v10859
    %v10861 = vpop.f32.mrb[0].mxu0
    %v10862 = vpop.f32.mrb[0].mxu0
    %v10863 = vadd.f32 0.0, %v10862
    %v10864 = vpop.f32.mrb[0].mxu0
    %10865 = vmatprep.mubr.bf16.mxu0 0
    %10866 = vmatmul.mubr.bf16.gmra.mrb[0].mxu0 %v10533
    %v10867 = vpop.f32.mrb[0].mxu0
    %v10868 = vadd.f32 0.0, %v10867
    %v10869 = vpop.f32.mrb[0].mxu0
    %v10870 = vpop.f32.mrb[0].mxu0
    %v10871 = vadd.f32 0.0, %v10870
    %v10872 = vpop.f32.mrb[0].mxu0
    %10873 = vmatprep.mubr.bf16.mxu0 0
    %10874 = vmatmul.mubr.bf16.gmra.mrb[0].mxu0 %v10534
    %v10875 = vpop.f32.mrb[0].mxu0
    %v10876 = vadd.f32 0.0, %v10875
    %v10877 = vpop.f32.mrb[0].mxu0
    %v10878 = vpop.f32.mrb[0].mxu0
    %v10879 = vadd.f32 0.0, %v10878
    %v10880 = vpop.f32.mrb[0].mxu0
    %10881 = vmatprep.mubr.bf16.mxu0 0
    %10882 = vmatmul.mubr.bf16.gmra.mrb[0].mxu0 %v10535
    %v10883 = vpop.f32.mrb[0].mxu0
    %v10884 = vadd.f32 0.0, %v10883
    %v10885 = vpop.f32.mrb[0].mxu0
    %v10886 = vpop.f32.mrb[0].mxu0
    %v10887 = vadd.f32 0.0, %v10886
    %v10888 = vpop.f32.mrb[0].mxu0
    %10889 = vdwg.mxu0
    %v10890 = vadd.f32 %v10376, %v10636
    %v10891 = vadd.f32 %v10377, %v10639
    %v10892 = vadd.f32 %v10378, %v10644
    %v10893 = vadd.f32 %v10379, %v10647
    %v10894 = vadd.f32 %v10380, %v10652
    %v10895 = vadd.f32 %v10381, %v10655
    %v10896 = vadd.f32 %v10382, %v10660
    %v10897 = vadd.f32 %v10383, %v10663
    %v10898 = vadd.f32 %v10384, %v10668
    %v10899 = vadd.f32 %v10385, %v10671
    %v10900 = vadd.f32 %v10386, %v10676
    %v10901 = vadd.f32 %v10387, %v10679
    %v10902 = vadd.f32 %v10388, %v10684
    %v10903 = vadd.f32 %v10389, %v10687
    %v10904 = vadd.f32 %v10390, %v10692
    %v10905 = vadd.f32 %v10391, %v10695
    %v10906 = vadd.f32 %v10392, %v10700
    %v10907 = vadd.f32 %v10393, %v10703
    %v10908 = vadd.f32 %v10394, %v10708
    %v10909 = vadd.f32 %v10395, %v10711
    %v10910 = vadd.f32 %v10396, %v10716
    %v10911 = vadd.f32 %v10397, %v10719
    %v10912 = vadd.f32 %v10398, %v10724
    %v10913 = vadd.f32 %v10399, %v10727
    %v10914 = vadd.f32 %v10400, %v10732
    %v10915 = vadd.f32 %v10401, %v10735
    %v10916 = vadd.f32 %v10402, %v10740
    %v10917 = vadd.f32 %v10403, %v10743
    %v10918 = vadd.f32 %v10404, %v10748
    %v10919 = vadd.f32 %v10405, %v10751
    %v10920 = vadd.f32 %v10406, %v10756
    %v10921 = vadd.f32 %v10407, %v10759
    %v10922 = vadd.f32 %v10408, %v10764
    %v10923 = vadd.f32 %v10409, %v10767
    %v10924 = vadd.f32 %v10410, %v10772
    %v10925 = vadd.f32 %v10411, %v10775
    %v10926 = vadd.f32 %v10412, %v10780
    %v10927 = vadd.f32 %v10413, %v10783
    %v10928 = vadd.f32 %v10414, %v10788
    %v10929 = vadd.f32 %v10415, %v10791
    %v10930 = vadd.f32 %v10416, %v10796
    %v10931 = vadd.f32 %v10417, %v10799
    %v10932 = vadd.f32 %v10418, %v10804
    %v10933 = vadd.f32 %v10419, %v10807
    %v10934 = vadd.f32 %v10420, %v10812
    %v10935 = vadd.f32 %v10421, %v10815
    %v10936 = vadd.f32 %v10422, %v10820
    %v10937 = vadd.f32 %v10423, %v10823
    %v10938 = vadd.f32 %v10424, %v10828
    %v10939 = vadd.f32 %v10425, %v10831
    %v10940 = vadd.f32 %v10426, %v10836
    %v10941 = vadd.f32 %v10427, %v10839
    %v10942 = vadd.f32 %v10428, %v10844
    %v10943 = vadd.f32 %v10429, %v10847
    %v10944 = vadd.f32 %v10430, %v10852
    %v10945 = vadd.f32 %v10431, %v10855
    %v10946 = vadd.f32 %v10432, %v10860
    %v10947 = vadd.f32 %v10433, %v10863
    %v10948 = vadd.f32 %v10434, %v10868
    %v10949 = vadd.f32 %v10435, %v10871
    %v10950 = vadd.f32 %v10436, %v10876
    %v10951 = vadd.f32 %v10437, %v10879
    %v10952 = vadd.f32 %v10438, %v10884
    %v10953 = vadd.f32 %v10439, %v10887
    %v10954 = vld [vmem:[#allocation12] sm:$0x1]
    %v10956 = vlaneseq
    %v10957 = vshrl.u32 %v10956, 7
    %v10958 = vsub.s32 0, %v10957
    %v10959 = vrot.slane %v10954, %v10958
    %v10961 = vmul.f32 %v10890, %v10959
    %v10962 = vmul.f32 %v10891, %v10959
    %v10963 = vmul.f32 %v10892, %v10959
    %v10964 = vmul.f32 %v10893, %v10959
    %v10965 = vmul.f32 %v10894, %v10959
    %v10966 = vmul.f32 %v10895, %v10959
    %v10967 = vmul.f32 %v10896, %v10959
    %v10968 = vmul.f32 %v10897, %v10959
    %v10969 = vmul.f32 %v10898, %v10959
    %v10970 = vmul.f32 %v10899, %v10959
    %v10971 = vmul.f32 %v10900, %v10959
    %v10972 = vmul.f32 %v10901, %v10959
    %v10973 = vmul.f32 %v10902, %v10959
    %v10974 = vmul.f32 %v10903, %v10959
    %v10975 = vmul.f32 %v10904, %v10959
    %v10976 = vmul.f32 %v10905, %v10959
    %v10977 = vmul.f32 %v10906, %v10959
    %v10978 = vmul.f32 %v10907, %v10959
    %v10979 = vmul.f32 %v10908, %v10959
    %v10980 = vmul.f32 %v10909, %v10959
    %v10981 = vmul.f32 %v10910, %v10959
    %v10982 = vmul.f32 %v10911, %v10959
    %v10983 = vmul.f32 %v10912, %v10959
    %v10984 = vmul.f32 %v10913, %v10959
    %v10985 = vmul.f32 %v10914, %v10959
    %v10986 = vmul.f32 %v10915, %v10959
    %v10987 = vmul.f32 %v10916, %v10959
    %v10988 = vmul.f32 %v10917, %v10959
    %v10989 = vmul.f32 %v10918, %v10959
    %v10990 = vmul.f32 %v10919, %v10959
    %v10991 = vmul.f32 %v10920, %v10959
    %v10992 = vmul.f32 %v10921, %v10959
    %v10993 = vmul.f32 %v10922, %v10959
    %v10994 = vmul.f32 %v10923, %v10959
    %v10995 = vmul.f32 %v10924, %v10959
    %v10996 = vmul.f32 %v10925, %v10959
    %v10997 = vmul.f32 %v10926, %v10959
    %v10998 = vmul.f32 %v10927, %v10959
    %v10999 = vmul.f32 %v10928, %v10959
    %v11000 = vmul.f32 %v10929, %v10959
    %v11001 = vmul.f32 %v10930, %v10959
    %v11002 = vmul.f32 %v10931, %v10959
    %v11003 = vmul.f32 %v10932, %v10959
    %v11004 = vmul.f32 %v10933, %v10959
    %v11005 = vmul.f32 %v10934, %v10959
    %v11006 = vmul.f32 %v10935, %v10959
    %v11007 = vmul.f32 %v10936, %v10959
    %v11008 = vmul.f32 %v10937, %v10959
    %v11009 = vmul.f32 %v10938, %v10959
    %v11010 = vmul.f32 %v10939, %v10959
    %v11011 = vmul.f32 %v10940, %v10959
    %v11012 = vmul.f32 %v10941, %v10959
    %v11013 = vmul.f32 %v10942, %v10959
    %v11014 = vmul.f32 %v10943, %v10959
    %v11015 = vmul.f32 %v10944, %v10959
    %v11016 = vmul.f32 %v10945, %v10959
    %v11017 = vmul.f32 %v10946, %v10959
    %v11018 = vmul.f32 %v10947, %v10959
    %v11019 = vmul.f32 %v10948, %v10959
    %v11020 = vmul.f32 %v10949, %v10959
    %v11021 = vmul.f32 %v10950, %v10959
    %v11022 = vmul.f32 %v10951, %v10959
    %v11023 = vmul.f32 %v10952, %v10959
    %v11024 = vmul.f32 %v10953, %v10959
    %v11025 = vld [vmem:[#allocation14] sm:$0x1]
    %v11027 = vlaneseq
    %v11028 = vshrl.u32 %v11027, 7
    %v11029 = vsub.s32 0, %v11028
    %v11030 = vrot.slane %v11025, %v11029
    %v11032 = vadd.f32 %v10961, %v11030
    %v11033 = vadd.f32 %v10962, %v11030
    %v11034 = vadd.f32 %v10963, %v11030
    %v11035 = vadd.f32 %v10964, %v11030
    %v11036 = vadd.f32 %v10965, %v11030
    %v11037 = vadd.f32 %v10966, %v11030
    %v11038 = vadd.f32 %v10967, %v11030
    %v11039 = vadd.f32 %v10968, %v11030
    %v11040 = vadd.f32 %v10969, %v11030
    %v11041 = vadd.f32 %v10970, %v11030
    %v11042 = vadd.f32 %v10971, %v11030
    %v11043 = vadd.f32 %v10972, %v11030
    %v11044 = vadd.f32 %v10973, %v11030
    %v11045 = vadd.f32 %v10974, %v11030
    %v11046 = vadd.f32 %v10975, %v11030
    %v11047 = vadd.f32 %v10976, %v11030
    %v11048 = vadd.f32 %v10977, %v11030
    %v11049 = vadd.f32 %v10978, %v11030
    %v11050 = vadd.f32 %v10979, %v11030
    %v11051 = vadd.f32 %v10980, %v11030
    %v11052 = vadd.f32 %v10981, %v11030
    %v11053 = vadd.f32 %v10982, %v11030
    %v11054 = vadd.f32 %v10983, %v11030
    %v11055 = vadd.f32 %v10984, %v11030
    %v11056 = vadd.f32 %v10985, %v11030
    %v11057 = vadd.f32 %v10986, %v11030
    %v11058 = vadd.f32 %v10987, %v11030
    %v11059 = vadd.f32 %v10988, %v11030
    %v11060 = vadd.f32 %v10989, %v11030
    %v11061 = vadd.f32 %v10990, %v11030
    %v11062 = vadd.f32 %v10991, %v11030
    %v11063 = vadd.f32 %v10992, %v11030
    %v11064 = vadd.f32 %v10993, %v11030
    %v11065 = vadd.f32 %v10994, %v11030
    %v11066 = vadd.f32 %v10995, %v11030
    %v11067 = vadd.f32 %v10996, %v11030
    %v11068 = vadd.f32 %v10997, %v11030
    %v11069 = vadd.f32 %v10998, %v11030
    %v11070 = vadd.f32 %v10999, %v11030
    %v11071 = vadd.f32 %v11000, %v11030
    %v11072 = vadd.f32 %v11001, %v11030
    %v11073 = vadd.f32 %v11002, %v11030
    %v11074 = vadd.f32 %v11003, %v11030
    %v11075 = vadd.f32 %v11004, %v11030
    %v11076 = vadd.f32 %v11005, %v11030
    %v11077 = vadd.f32 %v11006, %v11030
    %v11078 = vadd.f32 %v11007, %v11030
    %v11079 = vadd.f32 %v11008, %v11030
    %v11080 = vadd.f32 %v11009, %v11030
    %v11081 = vadd.f32 %v11010, %v11030
    %v11082 = vadd.f32 %v11011, %v11030
    %v11083 = vadd.f32 %v11012, %v11030
    %v11084 = vadd.f32 %v11013, %v11030
    %v11085 = vadd.f32 %v11014, %v11030
    %v11086 = vadd.f32 %v11015, %v11030
    %v11087 = vadd.f32 %v11016, %v11030
    %v11088 = vadd.f32 %v11017, %v11030
    %v11089 = vadd.f32 %v11018, %v11030
    %v11090 = vadd.f32 %v11019, %v11030
    %v11091 = vadd.f32 %v11020, %v11030
    %v11092 = vadd.f32 %v11021, %v11030
    %v11093 = vadd.f32 %v11022, %v11030
    %v11094 = vadd.f32 %v11023, %v11030
    %v11095 = vadd.f32 %v11024, %v11030
    %v11096 = vld [vmem:[#allocation15] sm:$0xff]
    %v11097 = vld [vmem:[#allocation15 + $0x8] sm:$0xff]
    %v11098 = vld [vmem:[#allocation15 + $0x10] sm:$0xff]
    %v11099 = vld [vmem:[#allocation15 + $0x18] sm:$0xff]
    %v11100 = vld [vmem:[#allocation15 + $0x20] sm:$0xff]
    %v11101 = vld [vmem:[#allocation15 + $0x28] sm:$0xff]
    %v11102 = vld [vmem:[#allocation15 + $0x30] sm:$0xff]
    %v11103 = vld [vmem:[#allocation15 + $0x38] sm:$0xff]
    %v11104 = vld [vmem:[#allocation15 + $0x40] sm:$0xff]
    %v11105 = vld [vmem:[#allocation15 + $0x48] sm:$0xff]
    %v11106 = vld [vmem:[#allocation15 + $0x50] sm:$0xff]
    %v11107 = vld [vmem:[#allocation15 + $0x58] sm:$0xff]
    %v11108 = vld [vmem:[#allocation15 + $0x60] sm:$0xff]
    %v11109 = vld [vmem:[#allocation15 + $0x68] sm:$0xff]
    %v11110 = vld [vmem:[#allocation15 + $0x70] sm:$0xff]
    %v11111 = vld [vmem:[#allocation15 + $0x78] sm:$0xff]
    %v11112 = vld [vmem:[#allocation15 + $0x80] sm:$0xff]
    %v11113 = vld [vmem:[#allocation15 + $0x88] sm:$0xff]
    %v11114 = vld [vmem:[#allocation15 + $0x90] sm:$0xff]
    %v11115 = vld [vmem:[#allocation15 + $0x98] sm:$0xff]
    %v11116 = vld [vmem:[#allocation15 + $0xa0] sm:$0xff]
    %v11117 = vld [vmem:[#allocation15 + $0xa8] sm:$0xff]
    %v11118 = vld [vmem:[#allocation15 + $0xb0] sm:$0xff]
    %v11119 = vld [vmem:[#allocation15 + $0xb8] sm:$0xff]
    %v11120 = vld [vmem:[#allocation15 + $0xc0] sm:$0xff]
    %v11121 = vld [vmem:[#allocation15 + $0xc8] sm:$0xff]
    %v11122 = vld [vmem:[#allocation15 + $0xd0] sm:$0xff]
    %v11123 = vld [vmem:[#allocation15 + $0xd8] sm:$0xff]
    %v11124 = vld [vmem:[#allocation15 + $0xe0] sm:$0xff]
    %v11125 = vld [vmem:[#allocation15 + $0xe8] sm:$0xff]
    %v11126 = vld [vmem:[#allocation15 + $0xf0] sm:$0xff]
    %v11127 = vld [vmem:[#allocation15 + $0xf8] sm:$0xff]
    %v11128 = vld [vmem:[#allocation15 + $0x100] sm:$0xff]
    %v11129 = vld [vmem:[#allocation15 + $0x108] sm:$0xff]
    %v11130 = vld [vmem:[#allocation15 + $0x110] sm:$0xff]
    %v11131 = vld [vmem:[#allocation15 + $0x118] sm:$0xff]
    %v11132 = vld [vmem:[#allocation15 + $0x120] sm:$0xff]
    %v11133 = vld [vmem:[#allocation15 + $0x128] sm:$0xff]
    %v11134 = vld [vmem:[#allocation15 + $0x130] sm:$0xff]
    %v11135 = vld [vmem:[#allocation15 + $0x138] sm:$0xff]
    %v11136 = vld [vmem:[#allocation15 + $0x140] sm:$0xff]
    %v11137 = vld [vmem:[#allocation15 + $0x148] sm:$0xff]
    %v11138 = vld [vmem:[#allocation15 + $0x150] sm:$0xff]
    %v11139 = vld [vmem:[#allocation15 + $0x158] sm:$0xff]
    %v11140 = vld [vmem:[#allocation15 + $0x160] sm:$0xff]
    %v11141 = vld [vmem:[#allocation15 + $0x168] sm:$0xff]
    %v11142 = vld [vmem:[#allocation15 + $0x170] sm:$0xff]
    %v11143 = vld [vmem:[#allocation15 + $0x178] sm:$0xff]
    %v11144 = vld [vmem:[#allocation15 + $0x180] sm:$0xff]
    %v11145 = vld [vmem:[#allocation15 + $0x188] sm:$0xff]
    %v11146 = vld [vmem:[#allocation15 + $0x190] sm:$0xff]
    %v11147 = vld [vmem:[#allocation15 + $0x198] sm:$0xff]
    %v11148 = vld [vmem:[#allocation15 + $0x1a0] sm:$0xff]
    %v11149 = vld [vmem:[#allocation15 + $0x1a8] sm:$0xff]
    %v11150 = vld [vmem:[#allocation15 + $0x1b0] sm:$0xff]
    %v11151 = vld [vmem:[#allocation15 + $0x1b8] sm:$0xff]
    %v11152 = vld [vmem:[#allocation15 + $0x1c0] sm:$0xff]
    %v11153 = vld [vmem:[#allocation15 + $0x1c8] sm:$0xff]
    %v11154 = vld [vmem:[#allocation15 + $0x1d0] sm:$0xff]
    %v11155 = vld [vmem:[#allocation15 + $0x1d8] sm:$0xff]
    %v11156 = vld [vmem:[#allocation15 + $0x1e0] sm:$0xff]
    %v11157 = vld [vmem:[#allocation15 + $0x1e8] sm:$0xff]
    %v11158 = vld [vmem:[#allocation15 + $0x1f0] sm:$0xff]
    %v11159 = vld [vmem:[#allocation15 + $0x1f8] sm:$0xff]
    %v11160 = vadd.f32 %v11032, %v11096
    %v11161 = vadd.f32 %v11033, %v11097
    %v11162 = vadd.f32 %v11034, %v11098
    %v11163 = vadd.f32 %v11035, %v11099
    %v11164 = vadd.f32 %v11036, %v11100
    %v11165 = vadd.f32 %v11037, %v11101
    %v11166 = vadd.f32 %v11038, %v11102
    %v11167 = vadd.f32 %v11039, %v11103
    %v11168 = vadd.f32 %v11040, %v11104
    %v11169 = vadd.f32 %v11041, %v11105
    %v11170 = vadd.f32 %v11042, %v11106
    %v11171 = vadd.f32 %v11043, %v11107
    %v11172 = vadd.f32 %v11044, %v11108
    %v11173 = vadd.f32 %v11045, %v11109
    %v11174 = vadd.f32 %v11046, %v11110
    %v11175 = vadd.f32 %v11047, %v11111
    %v11176 = vadd.f32 %v11048, %v11112
    %v11177 = vadd.f32 %v11049, %v11113
    %v11178 = vadd.f32 %v11050, %v11114
    %v11179 = vadd.f32 %v11051, %v11115
    %v11180 = vadd.f32 %v11052, %v11116
    %v11181 = vadd.f32 %v11053, %v11117
    %v11182 = vadd.f32 %v11054, %v11118
    %v11183 = vadd.f32 %v11055, %v11119
    %v11184 = vadd.f32 %v11056, %v11120
    %v11185 = vadd.f32 %v11057, %v11121
    %v11186 = vadd.f32 %v11058, %v11122
    %v11187 = vadd.f32 %v11059, %v11123
    %v11188 = vadd.f32 %v11060, %v11124
    %v11189 = vadd.f32 %v11061, %v11125
    %v11190 = vadd.f32 %v11062, %v11126
    %v11191 = vadd.f32 %v11063, %v11127
    %v11192 = vadd.f32 %v11064, %v11128
    %v11193 = vadd.f32 %v11065, %v11129
    %v11194 = vadd.f32 %v11066, %v11130
    %v11195 = vadd.f32 %v11067, %v11131
    %v11196 = vadd.f32 %v11068, %v11132
    %v11197 = vadd.f32 %v11069, %v11133
    %v11198 = vadd.f32 %v11070, %v11134
    %v11199 = vadd.f32 %v11071, %v11135
    %v11200 = vadd.f32 %v11072, %v11136
    %v11201 = vadd.f32 %v11073, %v11137
    %v11202 = vadd.f32 %v11074, %v11138
    %v11203 = vadd.f32 %v11075, %v11139
    %v11204 = vadd.f32 %v11076, %v11140
    %v11205 = vadd.f32 %v11077, %v11141
    %v11206 = vadd.f32 %v11078, %v11142
    %v11207 = vadd.f32 %v11079, %v11143
    %v11208 = vadd.f32 %v11080, %v11144
    %v11209 = vadd.f32 %v11081, %v11145
    %v11210 = vadd.f32 %v11082, %v11146
    %v11211 = vadd.f32 %v11083, %v11147
    %v11212 = vadd.f32 %v11084, %v11148
    %v11213 = vadd.f32 %v11085, %v11149
    %v11214 = vadd.f32 %v11086, %v11150
    %v11215 = vadd.f32 %v11087, %v11151
    %v11216 = vadd.f32 %v11088, %v11152
    %v11217 = vadd.f32 %v11089, %v11153
    %v11218 = vadd.f32 %v11090, %v11154
    %v11219 = vadd.f32 %v11091, %v11155
    %v11220 = vadd.f32 %v11092, %v11156
    %v11221 = vadd.f32 %v11093, %v11157
    %v11222 = vadd.f32 %v11094, %v11158
    %v11223 = vadd.f32 %v11095, %v11159
    %v11224 = vmax.f32 %v11160, 0.0
    %v11225 = vmax.f32 %v11161, 0.0
    %v11226 = vmax.f32 %v11162, 0.0
    %v11227 = vmax.f32 %v11163, 0.0
    %v11228 = vmax.f32 %v11164, 0.0
    %v11229 = vmax.f32 %v11165, 0.0
    %v11230 = vmax.f32 %v11166, 0.0
    %v11231 = vmax.f32 %v11167, 0.0
    %v11232 = vmax.f32 %v11168, 0.0
    %v11233 = vmax.f32 %v11169, 0.0
    %v11234 = vmax.f32 %v11170, 0.0
    %v11235 = vmax.f32 %v11171, 0.0
    %v11236 = vmax.f32 %v11172, 0.0
    %v11237 = vmax.f32 %v11173, 0.0
    %v11238 = vmax.f32 %v11174, 0.0
    %v11239 = vmax.f32 %v11175, 0.0
    %v11240 = vmax.f32 %v11176, 0.0
    %v11241 = vmax.f32 %v11177, 0.0
    %v11242 = vmax.f32 %v11178, 0.0
    %v11243 = vmax.f32 %v11179, 0.0
    %v11244 = vmax.f32 %v11180, 0.0
    %v11245 = vmax.f32 %v11181, 0.0
    %v11246 = vmax.f32 %v11182, 0.0
    %v11247 = vmax.f32 %v11183, 0.0
    %v11248 = vmax.f32 %v11184, 0.0
    %v11249 = vmax.f32 %v11185, 0.0
    %v11250 = vmax.f32 %v11186, 0.0
    %v11251 = vmax.f32 %v11187, 0.0
    %v11252 = vmax.f32 %v11188, 0.0
    %v11253 = vmax.f32 %v11189, 0.0
    %v11254 = vmax.f32 %v11190, 0.0
    %v11255 = vmax.f32 %v11191, 0.0
    %v11256 = vmax.f32 %v11192, 0.0
    %v11257 = vmax.f32 %v11193, 0.0
    %v11258 = vmax.f32 %v11194, 0.0
    %v11259 = vmax.f32 %v11195, 0.0
    %v11260 = vmax.f32 %v11196, 0.0
    %v11261 = vmax.f32 %v11197, 0.0
    %v11262 = vmax.f32 %v11198, 0.0
    %v11263 = vmax.f32 %v11199, 0.0
    %v11264 = vmax.f32 %v11200, 0.0
    %v11265 = vmax.f32 %v11201, 0.0
    %v11266 = vmax.f32 %v11202, 0.0
    %v11267 = vmax.f32 %v11203, 0.0
    %v11268 = vmax.f32 %v11204, 0.0
    %v11269 = vmax.f32 %v11205, 0.0
    %v11270 = vmax.f32 %v11206, 0.0
    %v11271 = vmax.f32 %v11207, 0.0
    %v11272 = vmax.f32 %v11208, 0.0
    %v11273 = vmax.f32 %v11209, 0.0
    %v11274 = vmax.f32 %v11210, 0.0
    %v11275 = vmax.f32 %v11211, 0.0
    %v11276 = vmax.f32 %v11212, 0.0
    %v11277 = vmax.f32 %v11213, 0.0
    %v11278 = vmax.f32 %v11214, 0.0
    %v11279 = vmax.f32 %v11215, 0.0
    %v11280 = vmax.f32 %v11216, 0.0
    %v11281 = vmax.f32 %v11217, 0.0
    %v11282 = vmax.f32 %v11218, 0.0
    %v11283 = vmax.f32 %v11219, 0.0
    %v11284 = vmax.f32 %v11220, 0.0
    %v11285 = vmax.f32 %v11221, 0.0
    %v11286 = vmax.f32 %v11222, 0.0
    %v11287 = vmax.f32 %v11223, 0.0
    %11288 = vst [vmem:[#allocation17] sm:$0xff] %v11224
    %11289 = vst [vmem:[#allocation17 + $0x8] sm:$0xff] %v11225
    %11290 = vst [vmem:[#allocation17 + $0x10] sm:$0xff] %v11226
    %11291 = vst [vmem:[#allocation17 + $0x18] sm:$0xff] %v11227
    %11292 = vst [vmem:[#allocation17 + $0x20] sm:$0xff] %v11228
    %11293 = vst [vmem:[#allocation17 + $0x28] sm:$0xff] %v11229
    %11294 = vst [vmem:[#allocation17 + $0x30] sm:$0xff] %v11230
    %11295 = vst [vmem:[#allocation17 + $0x38] sm:$0xff] %v11231
    %11296 = vst [vmem:[#allocation17 + $0x40] sm:$0xff] %v11232
    %11297 = vst [vmem:[#allocation17 + $0x48] sm:$0xff] %v11233
    %11298 = vst [vmem:[#allocation17 + $0x50] sm:$0xff] %v11234
    %11299 = vst [vmem:[#allocation17 + $0x58] sm:$0xff] %v11235
    %11300 = vst [vmem:[#allocation17 + $0x60] sm:$0xff] %v11236
    %11301 = vst [vmem:[#allocation17 + $0x68] sm:$0xff] %v11237
    %11302 = vst [vmem:[#allocation17 + $0x70] sm:$0xff] %v11238
    %11303 = vst [vmem:[#allocation17 + $0x78] sm:$0xff] %v11239
    %11304 = vst [vmem:[#allocation17 + $0x80] sm:$0xff] %v11240
    %11305 = vst [vmem:[#allocation17 + $0x88] sm:$0xff] %v11241
    %11306 = vst [vmem:[#allocation17 + $0x90] sm:$0xff] %v11242
    %11307 = vst [vmem:[#allocation17 + $0x98] sm:$0xff] %v11243
    %11308 = vst [vmem:[#allocation17 + $0xa0] sm:$0xff] %v11244
    %11309 = vst [vmem:[#allocation17 + $0xa8] sm:$0xff] %v11245
    %11310 = vst [vmem:[#allocation17 + $0xb0] sm:$0xff] %v11246
    %11311 = vst [vmem:[#allocation17 + $0xb8] sm:$0xff] %v11247
    %11312 = vst [vmem:[#allocation17 + $0xc0] sm:$0xff] %v11248
    %11313 = vst [vmem:[#allocation17 + $0xc8] sm:$0xff] %v11249
    %11314 = vst [vmem:[#allocation17 + $0xd0] sm:$0xff] %v11250
    %11315 = vst [vmem:[#allocation17 + $0xd8] sm:$0xff] %v11251
    %11316 = vst [vmem:[#allocation17 + $0xe0] sm:$0xff] %v11252
    %11317 = vst [vmem:[#allocation17 + $0xe8] sm:$0xff] %v11253
    %11318 = vst [vmem:[#allocation17 + $0xf0] sm:$0xff] %v11254
    %11319 = vst [vmem:[#allocation17 + $0xf8] sm:$0xff] %v11255
    %11320 = vst [vmem:[#allocation17 + $0x100] sm:$0xff] %v11256
    %11321 = vst [vmem:[#allocation17 + $0x108] sm:$0xff] %v11257
    %11322 = vst [vmem:[#allocation17 + $0x110] sm:$0xff] %v11258
    %11323 = vst [vmem:[#allocation17 + $0x118] sm:$0xff] %v11259
    %11324 = vst [vmem:[#allocation17 + $0x120] sm:$0xff] %v11260
    %11325 = vst [vmem:[#allocation17 + $0x128] sm:$0xff] %v11261
    %11326 = vst [vmem:[#allocation17 + $0x130] sm:$0xff] %v11262
    %11327 = vst [vmem:[#allocation17 + $0x138] sm:$0xff] %v11263
    %11328 = vst [vmem:[#allocation17 + $0x140] sm:$0xff] %v11264
    %11329 = vst [vmem:[#allocation17 + $0x148] sm:$0xff] %v11265
    %11330 = vst [vmem:[#allocation17 + $0x150] sm:$0xff] %v11266
    %11331 = vst [vmem:[#allocation17 + $0x158] sm:$0xff] %v11267
    %11332 = vst [vmem:[#allocation17 + $0x160] sm:$0xff] %v11268
    %11333 = vst [vmem:[#allocation17 + $0x168] sm:$0xff] %v11269
    %11334 = vst [vmem:[#allocation17 + $0x170] sm:$0xff] %v11270
    %11335 = vst [vmem:[#allocation17 + $0x178] sm:$0xff] %v11271
    %11336 = vst [vmem:[#allocation17 + $0x180] sm:$0xff] %v11272
    %11337 = vst [vmem:[#allocation17 + $0x188] sm:$0xff] %v11273
    %11338 = vst [vmem:[#allocation17 + $0x190] sm:$0xff] %v11274
    %11339 = vst [vmem:[#allocation17 + $0x198] sm:$0xff] %v11275
    %11340 = vst [vmem:[#allocation17 + $0x1a0] sm:$0xff] %v11276
    %11341 = vst [vmem:[#allocation17 + $0x1a8] sm:$0xff] %v11277
    %11342 = vst [vmem:[#allocation17 + $0x1b0] sm:$0xff] %v11278
    %11343 = vst [vmem:[#allocation17 + $0x1b8] sm:$0xff] %v11279
    %11344 = vst [vmem:[#allocation17 + $0x1c0] sm:$0xff] %v11280
    %11345 = vst [vmem:[#allocation17 + $0x1c8] sm:$0xff] %v11281
    %11346 = vst [vmem:[#allocation17 + $0x1d0] sm:$0xff] %v11282
    %11347 = vst [vmem:[#allocation17 + $0x1d8] sm:$0xff] %v11283
    %11348 = vst [vmem:[#allocation17 + $0x1e0] sm:$0xff] %v11284
    %11349 = vst [vmem:[#allocation17 + $0x1e8] sm:$0xff] %v11285
    %11350 = vst [vmem:[#allocation17 + $0x1f0] sm:$0xff] %v11286
    %11351 = vst [vmem:[#allocation17 + $0x1f8] sm:$0xff] %v11287
    // Predicated region
    $region66: #{tpu_custom_call.1} parent=1 // pred_check
      _
    $region67: #{tpu_custom_call.1} parent=1 // pred_check_branch
      %11353 = sbr.rel (0) target = $region69
    $region68: #{tpu_custom_call.1} parent=1 // pred_region
      %s11355 = ssub.s32 8192, 8192
      %11356 = vsyncadd [#allocation5], %s11355
      %s11357 = sshll.u32 [#allocation17], 4
      %s11358 = int_to_ptr.vmem [resolvable:$true] %s11357
      %11363 = dma.vmem_to_hbm [thread:$0]  %s11358, 8192, %s8, [#allocation5], 128, 128, 8
    $region69: #{tpu_custom_call.1} parent=1 // pred_fallthru
      _
    // Predicated region
    $region70: #{tpu_custom_call.1} parent=1 // pred_check
      _
    $region71: #{tpu_custom_call.1} parent=1 // pred_check_branch
      %11365 = sbr.rel (0) target = $region73
    $region72: #{tpu_custom_call.1} parent=1 // pred_region
      %11366 = dma.done [#allocation5], 8192
    $region73: #{tpu_custom_call.1} parent=1 // pred_fallthru
      _
    %11367 = vsyncpa [#allocation4], 1
    %11368 = vsyncpa [#allocation7], 1
    %11369 = vsyncpa [#allocation10], 1
    %11370 = vsyncpa [#allocation13], 1
    %11371 = vsyncpa [#allocation16], 1
    %11372 = vsyncpa [#allocation5], 1

</llo_original>
